<compile_context>
chip_gen: v7x
topology: tpu7x:2x2x1
jax: 0.10.0
libtpu: 0.0.40
codegen_flags: <defaults>
</compile_context>

<pallas_src>
import functools
import math

import jax
import jax.numpy as jnp
from jax import lax
from jax.experimental import pallas as pl
from jax.experimental.pallas import tpu as pltpu

EMBED_DIM = 128
HIDDEN_DIM = 256
NUM_CLASSES = 6
NUM_HEADS = 4
HEAD_DIM = EMBED_DIM // NUM_HEADS
FFN_DIM = 2048            # nn.TransformerEncoderLayer default dim_feedforward
LN_EPS = 1e-5             # nn.LayerNorm default eps
LANE = 128                # lane-padded FC output width


def _layer_norm(x, gamma, beta):
    mu = jnp.mean(x, axis=-1, keepdims=True)
    xc = x - mu
    var = jnp.mean(xc * xc, axis=-1, keepdims=True)
    return xc * lax.rsqrt(var + LN_EPS) * gamma + beta


def _mm(x, w_bf16):
    """x @ w on the MXU with bf16 operands and f32 accumulation."""
    return jnp.dot(x.astype(jnp.bfloat16), w_bf16,
                   preferred_element_type=jnp.float32)


# --------------------------------------------------------------------------
# Fused kernel: TransformerEncoderLayer (post-LN, ReLU FFN) + LSTM + FC + sigmoid
# --------------------------------------------------------------------------
def fused_transformer_lstm_kernel(
        x_ref,
        wqkv_ref, bqkv_ref, rrep_ref,
        wo_ref, bo_ref, ln1g_ref, ln1b_ref,
        w1_ref, b1_ref, w2_ref, b2_ref, ln2g_ref, ln2b_ref,
        wih_ref, whh_ref, bl_ref, fcw_ref, fcb_ref,
        out_ref, *, batch):
    BS, E = x_ref.shape            # (B*S, E), b-major rows (row = b*S + s)
    B = batch
    S = BS // B
    H = HIDDEN_DIM

    x2 = x_ref[...]                                        # (BS, E) f32

    # ---------------- Transformer encoder layer (post-LN) ----------------
    # Fused Q/K/V projection: one matmul, 128-aligned lane slices.
    qkv = _mm(x2, wqkv_ref[...]) + bqkv_ref[...]           # (BS, 3E)
    q, k, v = qkv[:, 0:E], qkv[:, E:2 * E], qkv[:, 2 * E:3 * E]

    # batch_first=False semantics on a (B,S,E) input: attention over the B axis
    # (length 2) for every (s, head).  b-major layout => the b=0 / b=1 halves
    # are contiguous 8-row sublane slices — no strided extraction, no reshape.
    q0, q1 = q[0:S], q[S:BS]
    k0, k1 = k[0:S], k[S:BS]
    v0, v1 = v[0:S], v[S:BS]

    # Per-head dot products: VPU elementwise products, then one matmul with the
    # 32x32 block-diagonal ones matrix which both segment-sums each head's 32
    # lanes and broadcasts the sum back across those lanes (heads stay packed).
    e = jnp.concatenate([q0 * k0, q0 * k1, q1 * k0, q1 * k1], axis=0)  # (4S,E)
    s_rep = _mm(e, rrep_ref[...])                          # (4S, E)
    s00, s01 = s_rep[0:S], s_rep[S:2 * S]
    s10, s11 = s_rep[2 * S:3 * S], s_rep[3 * S:4 * S]

    # 2-way softmax == sigmoid of the scaled score difference (EUP; no
    # max / exp / divide needed).
    scale = 1.0 / math.sqrt(HEAD_DIM)
    p00 = jax.nn.sigmoid((s00 - s01) * scale)              # weight on v0 for b=0
    p10 = jax.nn.sigmoid((s10 - s11) * scale)              # weight on v0 for b=1
    ctx0 = p00 * v0 + (1.0 - p00) * v1
    ctx1 = p10 * v0 + (1.0 - p10) * v1
    ctx = jnp.concatenate([ctx0, ctx1], axis=0)            # (BS, E), b-major

    attn_out = _mm(ctx, wo_ref[...]) + bo_ref[...]
    x = _layer_norm(x2 + attn_out, ln1g_ref[...], ln1b_ref[...])

    ff = jnp.maximum(_mm(x, w1_ref[...]) + b1_ref[...], 0.0)
    ff = _mm(ff, w2_ref[...]) + b2_ref[...]
    x = _layer_norm(x + ff, ln2g_ref[...], ln2b_ref[...])

    # ---------------- LSTM (batch_first, zero init state) ----------------
    # Input projection for ALL timesteps hoisted into one matmul; recurrence
    # only does the small (B,H)@(H,4H) matmul with the bf16 RHS loaded once.
    gates_x = _mm(x, wih_ref[...]) + bl_ref[...]           # (BS, 4H), b-major
    gx0, gx1 = gates_x[0:S], gates_x[S:BS]                 # (S, 4H) per batch row

    whh = whh_ref[...]                                     # hoisted recurrent RHS
    h = jnp.zeros((B, H), jnp.float32)
    c = jnp.zeros((B, H), jnp.float32)
    for t in range(S):                                     # small static S: unroll
        gx_t = jnp.concatenate([gx0[t:t + 1], gx1[t:t + 1]], axis=0)  # (B, 4H)
        gates = gx_t + _mm(h, whh)                         # order i, f, g, o
        i_g = jax.nn.sigmoid(gates[:, 0:H])
        f_g = jax.nn.sigmoid(gates[:, H:2 * H])
        g_g = jnp.tanh(gates[:, 2 * H:3 * H])
        o_g = jax.nn.sigmoid(gates[:, 3 * H:4 * H])
        c = f_g * c + i_g * g_g
        h = o_g * jnp.tanh(c)

    # Last-step hidden -> FC -> sigmoid, stored lane-dense as (B, 128).
    logits = _mm(h, fcw_ref[...]) + fcb_ref[...]
    out_ref[...] = jax.nn.sigmoid(logits)


# --------------------------------------------------------------------------
# Wrapper
# --------------------------------------------------------------------------
def transformer_lstm_forward(tokens, kp):
    """tokens: (B, S) int32; kp: kernel-layout params from prepare_params."""
    B, S = tokens.shape
    assert B == 2, "attention path is specialized for the 2-way softmax (B=2)"
    # Gather directly into the b-major (B*S, E) layout used end-to-end.
    emb = jnp.take(kp['embedding'], tokens.reshape(-1), axis=0)   # (B*S, E) f32

    vspec = pl.BlockSpec(memory_space=pltpu.MemorySpace.VMEM)
    inputs = (emb,
              kp['wqkv'], kp['bqkv'], kp['rrep'],
              kp['wo'], kp['bo'], kp['ln1_g'], kp['ln1_b'],
              kp['ff_w1'], kp['ff_b1'], kp['ff_w2'], kp['ff_b2'],
              kp['ln2_g'], kp['ln2_b'],
              kp['w_ih'], kp['w_hh'], kp['b_lstm'], kp['fc_w'], kp['fc_b'])

    out = pl.pallas_call(
        functools.partial(fused_transformer_lstm_kernel, batch=B),
        out_shape=jax.ShapeDtypeStruct((B, LANE), jnp.float32),
        in_specs=[vspec] * len(inputs),
        out_specs=vspec,
        compiler_params=pltpu.CompilerParams(
            vmem_limit_bytes=32 * 1024 * 1024),
    )(*inputs)
    return out[:, :NUM_CLASSES]                            # strip lane padding


def init_params(key, vocab_size):
    """Parameters in PyTorch convention (Linear weights are (out, in))."""
    E, H, C, F = EMBED_DIM, HIDDEN_DIM, NUM_CLASSES, FFN_DIM

    def nrm(k, shape, scale=0.02):
        return (scale * jax.random.normal(k, shape)).astype(jnp.float32)

    ks = jax.random.split(key, 12)
    b_ih = nrm(ks[9], (1, 4 * H))
    b_hh = nrm(ks[10], (1, 4 * H))
    return dict(
        embedding=nrm(ks[0], (vocab_size, E), 1.0),
        # in_proj_weight (3E, E) split into q/k/v chunks; same semantics.
        wq=nrm(ks[1], (E, E)), wk=nrm(ks[2], (E, E)), wv=nrm(ks[3], (E, E)),
        bq=jnp.zeros((1, E), jnp.float32),
        bk=jnp.zeros((1, E), jnp.float32),
        bv=jnp.zeros((1, E), jnp.float32),
        wo=nrm(ks[4], (E, E)), bo=jnp.zeros((1, E), jnp.float32),
        ln1_g=jnp.ones((1, E), jnp.float32), ln1_b=jnp.zeros((1, E), jnp.float32),
        ff_w1=nrm(ks[5], (F, E)), ff_b1=jnp.zeros((1, F), jnp.float32),
        ff_w2=nrm(ks[6], (E, F)), ff_b2=jnp.zeros((1, E), jnp.float32),
        ln2_g=jnp.ones((1, E), jnp.float32), ln2_b=jnp.zeros((1, E), jnp.float32),
        w_ih=nrm(ks[7], (4 * H, E)), w_hh=nrm(ks[8], (4 * H, H)),
        b_lstm=b_ih + b_hh,                                # PyTorch adds both biases
        fc_w=nrm(ks[11], (C, H)), fc_b=jnp.zeros((1, C), jnp.float32),
    )


def prepare_params(p):
    """One-time host-side conversion to kernel layout: fused+pre-transposed
    x @ W bf16 matmul weights, head segment-sum matrix, lane-padded FC."""
    bf16 = jnp.bfloat16
    E, H, C = EMBED_DIM, HIDDEN_DIM, NUM_CLASSES

    wqkv = jnp.concatenate([p['wq'].T, p['wk'].T, p['wv'].T], axis=1)  # (E, 3E)
    bqkv = jnp.concatenate([p['bq'], p['bk'], p['bv']], axis=1)        # (1, 3E)

    # 32x32 block-diagonal ones: segment-sum + broadcast per attention head.
    lane_head = jnp.arange(E) // HEAD_DIM
    rrep = (lane_head[:, None] == lane_head[None, :]).astype(bf16)     # (E, E)

    fc_w = jnp.zeros((H, LANE), jnp.float32).at[:, :C].set(p['fc_w'].T)
    fc_b = jnp.zeros((1, LANE), jnp.float32).at[:, :C].set(p['fc_b'])
    return dict(
        embedding=p['embedding'],                          # f32 gather table
        wqkv=wqkv.astype(bf16), bqkv=bqkv, rrep=rrep,
        wo=p['wo'].T.astype(bf16), bo=p['bo'],
        ln1_g=p['ln1_g'], ln1_b=p['ln1_b'],
        ff_w1=p['ff_w1'].T.astype(bf16), ff_b1=p['ff_b1'],
        ff_w2=p['ff_w2'].T.astype(bf16), ff_b2=p['ff_b2'],
        ln2_g=p['ln2_g'], ln2_b=p['ln2_b'],
        w_ih=p['w_ih'].T.astype(bf16),                     # (E, 4H)
        w_hh=p['w_hh'].T.astype(bf16),                     # (H, 4H)
        b_lstm=p['b_lstm'],
        fc_w=fc_w.astype(bf16), fc_b=fc_b,
    )


if __name__ == "__main__":
    vocab_size = 100
    B, S = 2, 8

    key = jax.random.PRNGKey(0)
    k_tok, k_par = jax.random.split(key)
    tokens = jax.random.randint(k_tok, (B, S), 0, vocab_size, dtype=jnp.int32)
    params = prepare_params(init_params(k_par, vocab_size))

    out = jax.jit(transformer_lstm_forward)(tokens, params)
    out = jax.block_until_ready(out)

    assert out.shape == (B, NUM_CLASSES), out.shape
    assert bool(jnp.all((out >= 0.0) & (out <= 1.0)))
    print("KERNEL_OK")
</pallas_src>

<mosaic_0001>
module attributes {stable_mosaic.version = 11 : i64} {
  func.func @fused_transformer_lstm_kernel(%arg0: memref<16x128xf32, #tpu.memory_space<vmem>>, %arg1: memref<128x384xbf16, #tpu.memory_space<vmem>>, %arg2: memref<1x384xf32, #tpu.memory_space<vmem>>, %arg3: memref<128x128xbf16, #tpu.memory_space<vmem>>, %arg4: memref<128x128xbf16, #tpu.memory_space<vmem>>, %arg5: memref<1x128xf32, #tpu.memory_space<vmem>>, %arg6: memref<1x128xf32, #tpu.memory_space<vmem>>, %arg7: memref<1x128xf32, #tpu.memory_space<vmem>>, %arg8: memref<128x2048xbf16, #tpu.memory_space<vmem>>, %arg9: memref<1x2048xf32, #tpu.memory_space<vmem>>, %arg10: memref<2048x128xbf16, #tpu.memory_space<vmem>>, %arg11: memref<1x128xf32, #tpu.memory_space<vmem>>, %arg12: memref<1x128xf32, #tpu.memory_space<vmem>>, %arg13: memref<1x128xf32, #tpu.memory_space<vmem>>, %arg14: memref<128x1024xbf16, #tpu.memory_space<vmem>>, %arg15: memref<256x1024xbf16, #tpu.memory_space<vmem>>, %arg16: memref<1x1024xf32, #tpu.memory_space<vmem>>, %arg17: memref<256x128xbf16, #tpu.memory_space<vmem>>, %arg18: memref<1x128xf32, #tpu.memory_space<vmem>>, %arg19: memref<2x128xf32, #tpu.memory_space<vmem>>) attributes {dimension_semantics = [], scalar_prefetch = 0 : i64, scratch_operands = 0 : i64, tpu.core_type = #tpu.core_type<tc>} {
    %c0 = arith.constant 0 : index
    %c0_0 = arith.constant 0 : index
    %0 = vector.load %arg0[%c0, %c0_0] : memref<16x128xf32, #tpu.memory_space<vmem>>, vector<16x128xf32>
    %c0_1 = arith.constant 0 : index
    %c0_2 = arith.constant 0 : index
    %1 = vector.load %arg1[%c0_1, %c0_2] : memref<128x384xbf16, #tpu.memory_space<vmem>>, vector<128x384xbf16>
    %2 = arith.truncf %0 : vector<16x128xf32> to vector<16x128xbf16>
    %cst = arith.constant dense<0.000000e+00> : vector<16x384xf32>
    %3 = tpu.matmul %2, %1, %cst {dimension_numbers = #tpu.dot_dimension_numbers<[1], [0], [0], [1], [0, 0, 1, 1], [], []>} : vector<16x128xbf16>, vector<128x384xbf16>, vector<16x384xf32> -> vector<16x384xf32>
    %c0_3 = arith.constant 0 : index
    %c0_4 = arith.constant 0 : index
    %4 = vector.load %arg2[%c0_3, %c0_4] : memref<1x384xf32, #tpu.memory_space<vmem>>, vector<1x384xf32>
    %5 = vector.broadcast %4 : vector<1x384xf32> to vector<16x384xf32>
    %6 = arith.addf %3, %5 : vector<16x384xf32>
    %7 = vector.extract_strided_slice %6 {offsets = [0, 0], sizes = [16, 128], strides = [1, 1]} : vector<16x384xf32> to vector<16x128xf32>
    %8 = vector.extract_strided_slice %6 {offsets = [0, 128], sizes = [16, 128], strides = [1, 1]} : vector<16x384xf32> to vector<16x128xf32>
    %9 = vector.extract_strided_slice %6 {offsets = [0, 256], sizes = [16, 128], strides = [1, 1]} : vector<16x384xf32> to vector<16x128xf32>
    %10 = vector.extract_strided_slice %7 {offsets = [0, 0], sizes = [8, 128], strides = [1, 1]} : vector<16x128xf32> to vector<8x128xf32>
    %11 = vector.extract_strided_slice %7 {offsets = [8, 0], sizes = [8, 128], strides = [1, 1]} : vector<16x128xf32> to vector<8x128xf32>
    %12 = vector.extract_strided_slice %8 {offsets = [0, 0], sizes = [8, 128], strides = [1, 1]} : vector<16x128xf32> to vector<8x128xf32>
    %13 = vector.extract_strided_slice %8 {offsets = [8, 0], sizes = [8, 128], strides = [1, 1]} : vector<16x128xf32> to vector<8x128xf32>
    %14 = vector.extract_strided_slice %9 {offsets = [0, 0], sizes = [8, 128], strides = [1, 1]} : vector<16x128xf32> to vector<8x128xf32>
    %15 = vector.extract_strided_slice %9 {offsets = [8, 0], sizes = [8, 128], strides = [1, 1]} : vector<16x128xf32> to vector<8x128xf32>
    %16 = arith.mulf %10, %12 : vector<8x128xf32>
    %17 = arith.mulf %10, %13 : vector<8x128xf32>
    %18 = arith.mulf %11, %12 : vector<8x128xf32>
    %19 = arith.mulf %11, %13 : vector<8x128xf32>
    %20 = tpu.concatenate %16, %17, %18, %19 in 0 : vector<8x128xf32>, vector<8x128xf32>, vector<8x128xf32>, vector<8x128xf32> -> vector<32x128xf32>
    %c0_5 = arith.constant 0 : index
    %c0_6 = arith.constant 0 : index
    %21 = vector.load %arg3[%c0_5, %c0_6] : memref<128x128xbf16, #tpu.memory_space<vmem>>, vector<128x128xbf16>
    %22 = arith.truncf %20 : vector<32x128xf32> to vector<32x128xbf16>
    %cst_7 = arith.constant dense<0.000000e+00> : vector<32x128xf32>
    %23 = tpu.matmul %22, %21, %cst_7 {dimension_numbers = #tpu.dot_dimension_numbers<[1], [0], [0], [1], [0, 0, 1, 1], [], []>} : vector<32x128xbf16>, vector<128x128xbf16>, vector<32x128xf32> -> vector<32x128xf32>
    %24 = vector.extract_strided_slice %23 {offsets = [0, 0], sizes = [8, 128], strides = [1, 1]} : vector<32x128xf32> to vector<8x128xf32>
    %25 = vector.extract_strided_slice %23 {offsets = [8, 0], sizes = [8, 128], strides = [1, 1]} : vector<32x128xf32> to vector<8x128xf32>
    %26 = vector.extract_strided_slice %23 {offsets = [16, 0], sizes = [8, 128], strides = [1, 1]} : vector<32x128xf32> to vector<8x128xf32>
    %27 = vector.extract_strided_slice %23 {offsets = [24, 0], sizes = [8, 128], strides = [1, 1]} : vector<32x128xf32> to vector<8x128xf32>
    %28 = arith.subf %24, %25 : vector<8x128xf32>
    %cst_8 = arith.constant 0.176776692 : f32
    %29 = vector.broadcast %cst_8 : f32 to vector<8x128xf32>
    %30 = arith.mulf %28, %29 : vector<8x128xf32>
    %31 = arith.negf %30 : vector<8x128xf32>
    %32 = math.exp %31 : vector<8x128xf32>
    %cst_9 = arith.constant 1.000000e+00 : f32
    %33 = vector.broadcast %cst_9 : f32 to vector<8x128xf32>
    %34 = arith.addf %33, %32 : vector<8x128xf32>
    %35 = arith.divf %33, %34 : vector<8x128xf32>
    %36 = arith.subf %26, %27 : vector<8x128xf32>
    %cst_10 = arith.constant 0.176776692 : f32
    %37 = vector.broadcast %cst_10 : f32 to vector<8x128xf32>
    %38 = arith.mulf %36, %37 : vector<8x128xf32>
    %39 = arith.negf %38 : vector<8x128xf32>
    %40 = math.exp %39 : vector<8x128xf32>
    %cst_11 = arith.constant 1.000000e+00 : f32
    %41 = vector.broadcast %cst_11 : f32 to vector<8x128xf32>
    %42 = arith.addf %41, %40 : vector<8x128xf32>
    %43 = arith.divf %41, %42 : vector<8x128xf32>
    %44 = arith.mulf %35, %14 : vector<8x128xf32>
    %cst_12 = arith.constant 1.000000e+00 : f32
    %45 = vector.broadcast %cst_12 : f32 to vector<8x128xf32>
    %46 = arith.subf %45, %35 : vector<8x128xf32>
    %47 = arith.mulf %46, %15 : vector<8x128xf32>
    %48 = arith.addf %44, %47 : vector<8x128xf32>
    %49 = arith.mulf %43, %14 : vector<8x128xf32>
    %cst_13 = arith.constant 1.000000e+00 : f32
    %50 = vector.broadcast %cst_13 : f32 to vector<8x128xf32>
    %51 = arith.subf %50, %43 : vector<8x128xf32>
    %52 = arith.mulf %51, %15 : vector<8x128xf32>
    %53 = arith.addf %49, %52 : vector<8x128xf32>
    %54 = tpu.concatenate %48, %53 in 0 : vector<8x128xf32>, vector<8x128xf32> -> vector<16x128xf32>
    %c0_14 = arith.constant 0 : index
    %c0_15 = arith.constant 0 : index
    %55 = vector.load %arg4[%c0_14, %c0_15] : memref<128x128xbf16, #tpu.memory_space<vmem>>, vector<128x128xbf16>
    %56 = arith.truncf %54 : vector<16x128xf32> to vector<16x128xbf16>
    %cst_16 = arith.constant dense<0.000000e+00> : vector<16x128xf32>
    %57 = tpu.matmul %56, %55, %cst_16 {dimension_numbers = #tpu.dot_dimension_numbers<[1], [0], [0], [1], [0, 0, 1, 1], [], []>} : vector<16x128xbf16>, vector<128x128xbf16>, vector<16x128xf32> -> vector<16x128xf32>
    %c0_17 = arith.constant 0 : index
    %c0_18 = arith.constant 0 : index
    %58 = vector.load %arg5[%c0_17, %c0_18] : memref<1x128xf32, #tpu.memory_space<vmem>>, vector<1x128xf32>
    %59 = vector.broadcast %58 : vector<1x128xf32> to vector<16x128xf32>
    %60 = arith.addf %57, %59 : vector<16x128xf32>
    %61 = arith.addf %0, %60 : vector<16x128xf32>
    %c0_19 = arith.constant 0 : index
    %c0_20 = arith.constant 0 : index
    %62 = vector.load %arg6[%c0_19, %c0_20] : memref<1x128xf32, #tpu.memory_space<vmem>>, vector<1x128xf32>
    %c0_21 = arith.constant 0 : index
    %c0_22 = arith.constant 0 : index
    %63 = vector.load %arg7[%c0_21, %c0_22] : memref<1x128xf32, #tpu.memory_space<vmem>>, vector<1x128xf32>
    %cst_23 = arith.constant dense<0.000000e+00> : vector<16xf32>
    %64 = vector.multi_reduction <add>, %61, %cst_23 [1] : vector<16x128xf32> to vector<16xf32>
    %65 = vector.shape_cast %64 : vector<16xf32> to vector<16x1xf32>
    %cst_24 = arith.constant 1.280000e+02 : f32
    %66 = vector.broadcast %cst_24 : f32 to vector<16x1xf32>
    %67 = arith.divf %65, %66 : vector<16x1xf32>
    %68 = vector.broadcast %67 : vector<16x1xf32> to vector<16x128xf32>
    %69 = arith.subf %61, %68 : vector<16x128xf32>
    %70 = arith.mulf %69, %69 : vector<16x128xf32>
    %cst_25 = arith.constant dense<0.000000e+00> : vector<16xf32>
    %71 = vector.multi_reduction <add>, %70, %cst_25 [1] : vector<16x128xf32> to vector<16xf32>
    %72 = vector.shape_cast %71 : vector<16xf32> to vector<16x1xf32>
    %cst_26 = arith.constant 1.280000e+02 : f32
    %73 = vector.broadcast %cst_26 : f32 to vector<16x1xf32>
    %74 = arith.divf %72, %73 : vector<16x1xf32>
    %cst_27 = arith.constant 9.99999974E-6 : f32
    %75 = vector.broadcast %cst_27 : f32 to vector<16x1xf32>
    %76 = arith.addf %74, %75 : vector<16x1xf32>
    %77 = math.rsqrt %76 : vector<16x1xf32>
    %78 = vector.broadcast %77 : vector<16x1xf32> to vector<16x128xf32>
    %79 = arith.mulf %69, %78 : vector<16x128xf32>
    %80 = vector.broadcast %62 : vector<1x128xf32> to vector<16x128xf32>
    %81 = arith.mulf %79, %80 : vector<16x128xf32>
    %82 = vector.broadcast %63 : vector<1x128xf32> to vector<16x128xf32>
    %83 = arith.addf %81, %82 : vector<16x128xf32>
    %c0_28 = arith.constant 0 : index
    %c0_29 = arith.constant 0 : index
    %84 = vector.load %arg8[%c0_28, %c0_29] : memref<128x2048xbf16, #tpu.memory_space<vmem>>, vector<128x2048xbf16>
    %85 = arith.truncf %83 : vector<16x128xf32> to vector<16x128xbf16>
    %cst_30 = arith.constant dense<0.000000e+00> : vector<16x2048xf32>
    %86 = tpu.matmul %85, %84, %cst_30 {dimension_numbers = #tpu.dot_dimension_numbers<[1], [0], [0], [1], [0, 0, 1, 1], [], []>} : vector<16x128xbf16>, vector<128x2048xbf16>, vector<16x2048xf32> -> vector<16x2048xf32>
    %c0_31 = arith.constant 0 : index
    %c0_32 = arith.constant 0 : index
    %87 = vector.load %arg9[%c0_31, %c0_32] : memref<1x2048xf32, #tpu.memory_space<vmem>>, vector<1x2048xf32>
    %88 = vector.broadcast %87 : vector<1x2048xf32> to vector<16x2048xf32>
    %89 = arith.addf %86, %88 : vector<16x2048xf32>
    %cst_33 = arith.constant 0.000000e+00 : f32
    %90 = vector.broadcast %cst_33 : f32 to vector<16x2048xf32>
    %91 = arith.maximumf %89, %90 : vector<16x2048xf32>
    %c0_34 = arith.constant 0 : index
    %c0_35 = arith.constant 0 : index
    %92 = vector.load %arg10[%c0_34, %c0_35] : memref<2048x128xbf16, #tpu.memory_space<vmem>>, vector<2048x128xbf16>
    %93 = arith.truncf %91 : vector<16x2048xf32> to vector<16x2048xbf16>
    %cst_36 = arith.constant dense<0.000000e+00> : vector<16x128xf32>
    %94 = tpu.matmul %93, %92, %cst_36 {dimension_numbers = #tpu.dot_dimension_numbers<[1], [0], [0], [1], [0, 0, 1, 1], [], []>} : vector<16x2048xbf16>, vector<2048x128xbf16>, vector<16x128xf32> -> vector<16x128xf32>
    %c0_37 = arith.constant 0 : index
    %c0_38 = arith.constant 0 : index
    %95 = vector.load %arg11[%c0_37, %c0_38] : memref<1x128xf32, #tpu.memory_space<vmem>>, vector<1x128xf32>
    %96 = vector.broadcast %95 : vector<1x128xf32> to vector<16x128xf32>
    %97 = arith.addf %94, %96 : vector<16x128xf32>
    %98 = arith.addf %83, %97 : vector<16x128xf32>
    %c0_39 = arith.constant 0 : index
    %c0_40 = arith.constant 0 : index
    %99 = vector.load %arg12[%c0_39, %c0_40] : memref<1x128xf32, #tpu.memory_space<vmem>>, vector<1x128xf32>
    %c0_41 = arith.constant 0 : index
    %c0_42 = arith.constant 0 : index
    %100 = vector.load %arg13[%c0_41, %c0_42] : memref<1x128xf32, #tpu.memory_space<vmem>>, vector<1x128xf32>
    %cst_43 = arith.constant dense<0.000000e+00> : vector<16xf32>
    %101 = vector.multi_reduction <add>, %98, %cst_43 [1] : vector<16x128xf32> to vector<16xf32>
    %102 = vector.shape_cast %101 : vector<16xf32> to vector<16x1xf32>
    %cst_44 = arith.constant 1.280000e+02 : f32
    %103 = vector.broadcast %cst_44 : f32 to vector<16x1xf32>
    %104 = arith.divf %102, %103 : vector<16x1xf32>
    %105 = vector.broadcast %104 : vector<16x1xf32> to vector<16x128xf32>
    %106 = arith.subf %98, %105 : vector<16x128xf32>
    %107 = arith.mulf %106, %106 : vector<16x128xf32>
    %cst_45 = arith.constant dense<0.000000e+00> : vector<16xf32>
    %108 = vector.multi_reduction <add>, %107, %cst_45 [1] : vector<16x128xf32> to vector<16xf32>
    %109 = vector.shape_cast %108 : vector<16xf32> to vector<16x1xf32>
    %cst_46 = arith.constant 1.280000e+02 : f32
    %110 = vector.broadcast %cst_46 : f32 to vector<16x1xf32>
    %111 = arith.divf %109, %110 : vector<16x1xf32>
    %cst_47 = arith.constant 9.99999974E-6 : f32
    %112 = vector.broadcast %cst_47 : f32 to vector<16x1xf32>
    %113 = arith.addf %111, %112 : vector<16x1xf32>
    %114 = math.rsqrt %113 : vector<16x1xf32>
    %115 = vector.broadcast %114 : vector<16x1xf32> to vector<16x128xf32>
    %116 = arith.mulf %106, %115 : vector<16x128xf32>
    %117 = vector.broadcast %99 : vector<1x128xf32> to vector<16x128xf32>
    %118 = arith.mulf %116, %117 : vector<16x128xf32>
    %119 = vector.broadcast %100 : vector<1x128xf32> to vector<16x128xf32>
    %120 = arith.addf %118, %119 : vector<16x128xf32>
    %c0_48 = arith.constant 0 : index
    %c0_49 = arith.constant 0 : index
    %121 = vector.load %arg14[%c0_48, %c0_49] : memref<128x1024xbf16, #tpu.memory_space<vmem>>, vector<128x1024xbf16>
    %122 = arith.truncf %120 : vector<16x128xf32> to vector<16x128xbf16>
    %cst_50 = arith.constant dense<0.000000e+00> : vector<16x1024xf32>
    %123 = tpu.matmul %122, %121, %cst_50 {dimension_numbers = #tpu.dot_dimension_numbers<[1], [0], [0], [1], [0, 0, 1, 1], [], []>} : vector<16x128xbf16>, vector<128x1024xbf16>, vector<16x1024xf32> -> vector<16x1024xf32>
    %c0_51 = arith.constant 0 : index
    %c0_52 = arith.constant 0 : index
    %124 = vector.load %arg16[%c0_51, %c0_52] : memref<1x1024xf32, #tpu.memory_space<vmem>>, vector<1x1024xf32>
    %125 = vector.broadcast %124 : vector<1x1024xf32> to vector<16x1024xf32>
    %126 = arith.addf %123, %125 : vector<16x1024xf32>
    %127 = vector.extract_strided_slice %126 {offsets = [0, 0], sizes = [8, 1024], strides = [1, 1]} : vector<16x1024xf32> to vector<8x1024xf32>
    %128 = vector.extract_strided_slice %126 {offsets = [8, 0], sizes = [8, 1024], strides = [1, 1]} : vector<16x1024xf32> to vector<8x1024xf32>
    %c0_53 = arith.constant 0 : index
    %c0_54 = arith.constant 0 : index
    %129 = vector.load %arg15[%c0_53, %c0_54] : memref<256x1024xbf16, #tpu.memory_space<vmem>>, vector<256x1024xbf16>
    %cst_55 = arith.constant 0.000000e+00 : f32
    %130 = vector.broadcast %cst_55 : f32 to vector<2x256xf32>
    %cst_56 = arith.constant 0.000000e+00 : f32
    %131 = vector.broadcast %cst_56 : f32 to vector<2x256xf32>
    %132 = vector.extract_strided_slice %127 {offsets = [0, 0], sizes = [1, 1024], strides = [1, 1]} : vector<8x1024xf32> to vector<1x1024xf32>
    %133 = vector.extract_strided_slice %128 {offsets = [0, 0], sizes = [1, 1024], strides = [1, 1]} : vector<8x1024xf32> to vector<1x1024xf32>
    %134 = tpu.concatenate %132, %133 in 0 : vector<1x1024xf32>, vector<1x1024xf32> -> vector<2x1024xf32>
    %135 = arith.truncf %130 : vector<2x256xf32> to vector<2x256xbf16>
    %cst_57 = arith.constant dense<0.000000e+00> : vector<2x1024xf32>
    %136 = tpu.matmul %135, %129, %cst_57 {dimension_numbers = #tpu.dot_dimension_numbers<[1], [0], [0], [1], [0, 0, 1, 1], [], []>} : vector<2x256xbf16>, vector<256x1024xbf16>, vector<2x1024xf32> -> vector<2x1024xf32>
    %137 = arith.addf %134, %136 : vector<2x1024xf32>
    %138 = vector.extract_strided_slice %137 {offsets = [0, 0], sizes = [2, 256], strides = [1, 1]} : vector<2x1024xf32> to vector<2x256xf32>
    %139 = arith.negf %138 : vector<2x256xf32>
    %140 = math.exp %139 : vector<2x256xf32>
    %cst_58 = arith.constant 1.000000e+00 : f32
    %141 = vector.broadcast %cst_58 : f32 to vector<2x256xf32>
    %142 = arith.addf %141, %140 : vector<2x256xf32>
    %143 = arith.divf %141, %142 : vector<2x256xf32>
    %144 = vector.extract_strided_slice %137 {offsets = [0, 256], sizes = [2, 256], strides = [1, 1]} : vector<2x1024xf32> to vector<2x256xf32>
    %145 = arith.negf %144 : vector<2x256xf32>
    %146 = math.exp %145 : vector<2x256xf32>
    %cst_59 = arith.constant 1.000000e+00 : f32
    %147 = vector.broadcast %cst_59 : f32 to vector<2x256xf32>
    %148 = arith.addf %147, %146 : vector<2x256xf32>
    %149 = arith.divf %147, %148 : vector<2x256xf32>
    %150 = vector.extract_strided_slice %137 {offsets = [0, 512], sizes = [2, 256], strides = [1, 1]} : vector<2x1024xf32> to vector<2x256xf32>
    %151 = math.tanh %150 : vector<2x256xf32>
    %152 = vector.extract_strided_slice %137 {offsets = [0, 768], sizes = [2, 256], strides = [1, 1]} : vector<2x1024xf32> to vector<2x256xf32>
    %153 = arith.negf %152 : vector<2x256xf32>
    %154 = math.exp %153 : vector<2x256xf32>
    %cst_60 = arith.constant 1.000000e+00 : f32
    %155 = vector.broadcast %cst_60 : f32 to vector<2x256xf32>
    %156 = arith.addf %155, %154 : vector<2x256xf32>
    %157 = arith.divf %155, %156 : vector<2x256xf32>
    %158 = arith.mulf %149, %131 : vector<2x256xf32>
    %159 = arith.mulf %143, %151 : vector<2x256xf32>
    %160 = arith.addf %158, %159 : vector<2x256xf32>
    %161 = math.tanh %160 : vector<2x256xf32>
    %162 = arith.mulf %157, %161 : vector<2x256xf32>
    %163 = vector.extract_strided_slice %127 {offsets = [1, 0], sizes = [1, 1024], strides = [1, 1]} : vector<8x1024xf32> to vector<1x1024xf32>
    %164 = vector.extract_strided_slice %128 {offsets = [1, 0], sizes = [1, 1024], strides = [1, 1]} : vector<8x1024xf32> to vector<1x1024xf32>
    %165 = tpu.concatenate %163, %164 in 0 : vector<1x1024xf32>, vector<1x1024xf32> -> vector<2x1024xf32>
    %166 = arith.truncf %162 : vector<2x256xf32> to vector<2x256xbf16>
    %cst_61 = arith.constant dense<0.000000e+00> : vector<2x1024xf32>
    %167 = tpu.matmul %166, %129, %cst_61 {dimension_numbers = #tpu.dot_dimension_numbers<[1], [0], [0], [1], [0, 0, 1, 1], [], []>} : vector<2x256xbf16>, vector<256x1024xbf16>, vector<2x1024xf32> -> vector<2x1024xf32>
    %168 = arith.addf %165, %167 : vector<2x1024xf32>
    %169 = vector.extract_strided_slice %168 {offsets = [0, 0], sizes = [2, 256], strides = [1, 1]} : vector<2x1024xf32> to vector<2x256xf32>
    %170 = arith.negf %169 : vector<2x256xf32>
    %171 = math.exp %170 : vector<2x256xf32>
    %cst_62 = arith.constant 1.000000e+00 : f32
    %172 = vector.broadcast %cst_62 : f32 to vector<2x256xf32>
    %173 = arith.addf %172, %171 : vector<2x256xf32>
    %174 = arith.divf %172, %173 : vector<2x256xf32>
    %175 = vector.extract_strided_slice %168 {offsets = [0, 256], sizes = [2, 256], strides = [1, 1]} : vector<2x1024xf32> to vector<2x256xf32>
    %176 = arith.negf %175 : vector<2x256xf32>
    %177 = math.exp %176 : vector<2x256xf32>
    %cst_63 = arith.constant 1.000000e+00 : f32
    %178 = vector.broadcast %cst_63 : f32 to vector<2x256xf32>
    %179 = arith.addf %178, %177 : vector<2x256xf32>
    %180 = arith.divf %178, %179 : vector<2x256xf32>
    %181 = vector.extract_strided_slice %168 {offsets = [0, 512], sizes = [2, 256], strides = [1, 1]} : vector<2x1024xf32> to vector<2x256xf32>
    %182 = math.tanh %181 : vector<2x256xf32>
    %183 = vector.extract_strided_slice %168 {offsets = [0, 768], sizes = [2, 256], strides = [1, 1]} : vector<2x1024xf32> to vector<2x256xf32>
    %184 = arith.negf %183 : vector<2x256xf32>
    %185 = math.exp %184 : vector<2x256xf32>
    %cst_64 = arith.constant 1.000000e+00 : f32
    %186 = vector.broadcast %cst_64 : f32 to vector<2x256xf32>
    %187 = arith.addf %186, %185 : vector<2x256xf32>
    %188 = arith.divf %186, %187 : vector<2x256xf32>
    %189 = arith.mulf %180, %160 : vector<2x256xf32>
    %190 = arith.mulf %174, %182 : vector<2x256xf32>
    %191 = arith.addf %189, %190 : vector<2x256xf32>
    %192 = math.tanh %191 : vector<2x256xf32>
    %193 = arith.mulf %188, %192 : vector<2x256xf32>
    %194 = vector.extract_strided_slice %127 {offsets = [2, 0], sizes = [1, 1024], strides = [1, 1]} : vector<8x1024xf32> to vector<1x1024xf32>
    %195 = vector.extract_strided_slice %128 {offsets = [2, 0], sizes = [1, 1024], strides = [1, 1]} : vector<8x1024xf32> to vector<1x1024xf32>
    %196 = tpu.concatenate %194, %195 in 0 : vector<1x1024xf32>, vector<1x1024xf32> -> vector<2x1024xf32>
    %197 = arith.truncf %193 : vector<2x256xf32> to vector<2x256xbf16>
    %cst_65 = arith.constant dense<0.000000e+00> : vector<2x1024xf32>
    %198 = tpu.matmul %197, %129, %cst_65 {dimension_numbers = #tpu.dot_dimension_numbers<[1], [0], [0], [1], [0, 0, 1, 1], [], []>} : vector<2x256xbf16>, vector<256x1024xbf16>, vector<2x1024xf32> -> vector<2x1024xf32>
    %199 = arith.addf %196, %198 : vector<2x1024xf32>
    %200 = vector.extract_strided_slice %199 {offsets = [0, 0], sizes = [2, 256], strides = [1, 1]} : vector<2x1024xf32> to vector<2x256xf32>
    %201 = arith.negf %200 : vector<2x256xf32>
    %202 = math.exp %201 : vector<2x256xf32>
    %cst_66 = arith.constant 1.000000e+00 : f32
    %203 = vector.broadcast %cst_66 : f32 to vector<2x256xf32>
    %204 = arith.addf %203, %202 : vector<2x256xf32>
    %205 = arith.divf %203, %204 : vector<2x256xf32>
    %206 = vector.extract_strided_slice %199 {offsets = [0, 256], sizes = [2, 256], strides = [1, 1]} : vector<2x1024xf32> to vector<2x256xf32>
    %207 = arith.negf %206 : vector<2x256xf32>
    %208 = math.exp %207 : vector<2x256xf32>
    %cst_67 = arith.constant 1.000000e+00 : f32
    %209 = vector.broadcast %cst_67 : f32 to vector<2x256xf32>
    %210 = arith.addf %209, %208 : vector<2x256xf32>
    %211 = arith.divf %209, %210 : vector<2x256xf32>
    %212 = vector.extract_strided_slice %199 {offsets = [0, 512], sizes = [2, 256], strides = [1, 1]} : vector<2x1024xf32> to vector<2x256xf32>
    %213 = math.tanh %212 : vector<2x256xf32>
    %214 = vector.extract_strided_slice %199 {offsets = [0, 768], sizes = [2, 256], strides = [1, 1]} : vector<2x1024xf32> to vector<2x256xf32>
    %215 = arith.negf %214 : vector<2x256xf32>
    %216 = math.exp %215 : vector<2x256xf32>
    %cst_68 = arith.constant 1.000000e+00 : f32
    %217 = vector.broadcast %cst_68 : f32 to vector<2x256xf32>
    %218 = arith.addf %217, %216 : vector<2x256xf32>
    %219 = arith.divf %217, %218 : vector<2x256xf32>
    %220 = arith.mulf %211, %191 : vector<2x256xf32>
    %221 = arith.mulf %205, %213 : vector<2x256xf32>
    %222 = arith.addf %220, %221 : vector<2x256xf32>
    %223 = math.tanh %222 : vector<2x256xf32>
    %224 = arith.mulf %219, %223 : vector<2x256xf32>
    %225 = vector.extract_strided_slice %127 {offsets = [3, 0], sizes = [1, 1024], strides = [1, 1]} : vector<8x1024xf32> to vector<1x1024xf32>
    %226 = vector.extract_strided_slice %128 {offsets = [3, 0], sizes = [1, 1024], strides = [1, 1]} : vector<8x1024xf32> to vector<1x1024xf32>
    %227 = tpu.concatenate %225, %226 in 0 : vector<1x1024xf32>, vector<1x1024xf32> -> vector<2x1024xf32>
    %228 = arith.truncf %224 : vector<2x256xf32> to vector<2x256xbf16>
    %cst_69 = arith.constant dense<0.000000e+00> : vector<2x1024xf32>
    %229 = tpu.matmul %228, %129, %cst_69 {dimension_numbers = #tpu.dot_dimension_numbers<[1], [0], [0], [1], [0, 0, 1, 1], [], []>} : vector<2x256xbf16>, vector<256x1024xbf16>, vector<2x1024xf32> -> vector<2x1024xf32>
    %230 = arith.addf %227, %229 : vector<2x1024xf32>
    %231 = vector.extract_strided_slice %230 {offsets = [0, 0], sizes = [2, 256], strides = [1, 1]} : vector<2x1024xf32> to vector<2x256xf32>
    %232 = arith.negf %231 : vector<2x256xf32>
    %233 = math.exp %232 : vector<2x256xf32>
    %cst_70 = arith.constant 1.000000e+00 : f32
    %234 = vector.broadcast %cst_70 : f32 to vector<2x256xf32>
    %235 = arith.addf %234, %233 : vector<2x256xf32>
    %236 = arith.divf %234, %235 : vector<2x256xf32>
    %237 = vector.extract_strided_slice %230 {offsets = [0, 256], sizes = [2, 256], strides = [1, 1]} : vector<2x1024xf32> to vector<2x256xf32>
    %238 = arith.negf %237 : vector<2x256xf32>
    %239 = math.exp %238 : vector<2x256xf32>
    %cst_71 = arith.constant 1.000000e+00 : f32
    %240 = vector.broadcast %cst_71 : f32 to vector<2x256xf32>
    %241 = arith.addf %240, %239 : vector<2x256xf32>
    %242 = arith.divf %240, %241 : vector<2x256xf32>
    %243 = vector.extract_strided_slice %230 {offsets = [0, 512], sizes = [2, 256], strides = [1, 1]} : vector<2x1024xf32> to vector<2x256xf32>
    %244 = math.tanh %243 : vector<2x256xf32>
    %245 = vector.extract_strided_slice %230 {offsets = [0, 768], sizes = [2, 256], strides = [1, 1]} : vector<2x1024xf32> to vector<2x256xf32>
    %246 = arith.negf %245 : vector<2x256xf32>
    %247 = math.exp %246 : vector<2x256xf32>
    %cst_72 = arith.constant 1.000000e+00 : f32
    %248 = vector.broadcast %cst_72 : f32 to vector<2x256xf32>
    %249 = arith.addf %248, %247 : vector<2x256xf32>
    %250 = arith.divf %248, %249 : vector<2x256xf32>
    %251 = arith.mulf %242, %222 : vector<2x256xf32>
    %252 = arith.mulf %236, %244 : vector<2x256xf32>
    %253 = arith.addf %251, %252 : vector<2x256xf32>
    %254 = math.tanh %253 : vector<2x256xf32>
    %255 = arith.mulf %250, %254 : vector<2x256xf32>
    %256 = vector.extract_strided_slice %127 {offsets = [4, 0], sizes = [1, 1024], strides = [1, 1]} : vector<8x1024xf32> to vector<1x1024xf32>
    %257 = vector.extract_strided_slice %128 {offsets = [4, 0], sizes = [1, 1024], strides = [1, 1]} : vector<8x1024xf32> to vector<1x1024xf32>
    %258 = tpu.concatenate %256, %257 in 0 : vector<1x1024xf32>, vector<1x1024xf32> -> vector<2x1024xf32>
    %259 = arith.truncf %255 : vector<2x256xf32> to vector<2x256xbf16>
    %cst_73 = arith.constant dense<0.000000e+00> : vector<2x1024xf32>
    %260 = tpu.matmul %259, %129, %cst_73 {dimension_numbers = #tpu.dot_dimension_numbers<[1], [0], [0], [1], [0, 0, 1, 1], [], []>} : vector<2x256xbf16>, vector<256x1024xbf16>, vector<2x1024xf32> -> vector<2x1024xf32>
    %261 = arith.addf %258, %260 : vector<2x1024xf32>
    %262 = vector.extract_strided_slice %261 {offsets = [0, 0], sizes = [2, 256], strides = [1, 1]} : vector<2x1024xf32> to vector<2x256xf32>
    %263 = arith.negf %262 : vector<2x256xf32>
    %264 = math.exp %263 : vector<2x256xf32>
    %cst_74 = arith.constant 1.000000e+00 : f32
    %265 = vector.broadcast %cst_74 : f32 to vector<2x256xf32>
    %266 = arith.addf %265, %264 : vector<2x256xf32>
    %267 = arith.divf %265, %266 : vector<2x256xf32>
    %268 = vector.extract_strided_slice %261 {offsets = [0, 256], sizes = [2, 256], strides = [1, 1]} : vector<2x1024xf32> to vector<2x256xf32>
    %269 = arith.negf %268 : vector<2x256xf32>
    %270 = math.exp %269 : vector<2x256xf32>
    %cst_75 = arith.constant 1.000000e+00 : f32
    %271 = vector.broadcast %cst_75 : f32 to vector<2x256xf32>
    %272 = arith.addf %271, %270 : vector<2x256xf32>
    %273 = arith.divf %271, %272 : vector<2x256xf32>
    %274 = vector.extract_strided_slice %261 {offsets = [0, 512], sizes = [2, 256], strides = [1, 1]} : vector<2x1024xf32> to vector<2x256xf32>
    %275 = math.tanh %274 : vector<2x256xf32>
    %276 = vector.extract_strided_slice %261 {offsets = [0, 768], sizes = [2, 256], strides = [1, 1]} : vector<2x1024xf32> to vector<2x256xf32>
    %277 = arith.negf %276 : vector<2x256xf32>
    %278 = math.exp %277 : vector<2x256xf32>
    %cst_76 = arith.constant 1.000000e+00 : f32
    %279 = vector.broadcast %cst_76 : f32 to vector<2x256xf32>
    %280 = arith.addf %279, %278 : vector<2x256xf32>
    %281 = arith.divf %279, %280 : vector<2x256xf32>
    %282 = arith.mulf %273, %253 : vector<2x256xf32>
    %283 = arith.mulf %267, %275 : vector<2x256xf32>
    %284 = arith.addf %282, %283 : vector<2x256xf32>
    %285 = math.tanh %284 : vector<2x256xf32>
    %286 = arith.mulf %281, %285 : vector<2x256xf32>
    %287 = vector.extract_strided_slice %127 {offsets = [5, 0], sizes = [1, 1024], strides = [1, 1]} : vector<8x1024xf32> to vector<1x1024xf32>
    %288 = vector.extract_strided_slice %128 {offsets = [5, 0], sizes = [1, 1024], strides = [1, 1]} : vector<8x1024xf32> to vector<1x1024xf32>
    %289 = tpu.concatenate %287, %288 in 0 : vector<1x1024xf32>, vector<1x1024xf32> -> vector<2x1024xf32>
    %290 = arith.truncf %286 : vector<2x256xf32> to vector<2x256xbf16>
    %cst_77 = arith.constant dense<0.000000e+00> : vector<2x1024xf32>
    %291 = tpu.matmul %290, %129, %cst_77 {dimension_numbers = #tpu.dot_dimension_numbers<[1], [0], [0], [1], [0, 0, 1, 1], [], []>} : vector<2x256xbf16>, vector<256x1024xbf16>, vector<2x1024xf32> -> vector<2x1024xf32>
    %292 = arith.addf %289, %291 : vector<2x1024xf32>
    %293 = vector.extract_strided_slice %292 {offsets = [0, 0], sizes = [2, 256], strides = [1, 1]} : vector<2x1024xf32> to vector<2x256xf32>
    %294 = arith.negf %293 : vector<2x256xf32>
    %295 = math.exp %294 : vector<2x256xf32>
    %cst_78 = arith.constant 1.000000e+00 : f32
    %296 = vector.broadcast %cst_78 : f32 to vector<2x256xf32>
    %297 = arith.addf %296, %295 : vector<2x256xf32>
    %298 = arith.divf %296, %297 : vector<2x256xf32>
    %299 = vector.extract_strided_slice %292 {offsets = [0, 256], sizes = [2, 256], strides = [1, 1]} : vector<2x1024xf32> to vector<2x256xf32>
    %300 = arith.negf %299 : vector<2x256xf32>
    %301 = math.exp %300 : vector<2x256xf32>
    %cst_79 = arith.constant 1.000000e+00 : f32
    %302 = vector.broadcast %cst_79 : f32 to vector<2x256xf32>
    %303 = arith.addf %302, %301 : vector<2x256xf32>
    %304 = arith.divf %302, %303 : vector<2x256xf32>
    %305 = vector.extract_strided_slice %292 {offsets = [0, 512], sizes = [2, 256], strides = [1, 1]} : vector<2x1024xf32> to vector<2x256xf32>
    %306 = math.tanh %305 : vector<2x256xf32>
    %307 = vector.extract_strided_slice %292 {offsets = [0, 768], sizes = [2, 256], strides = [1, 1]} : vector<2x1024xf32> to vector<2x256xf32>
    %308 = arith.negf %307 : vector<2x256xf32>
    %309 = math.exp %308 : vector<2x256xf32>
    %cst_80 = arith.constant 1.000000e+00 : f32
    %310 = vector.broadcast %cst_80 : f32 to vector<2x256xf32>
    %311 = arith.addf %310, %309 : vector<2x256xf32>
    %312 = arith.divf %310, %311 : vector<2x256xf32>
    %313 = arith.mulf %304, %284 : vector<2x256xf32>
    %314 = arith.mulf %298, %306 : vector<2x256xf32>
    %315 = arith.addf %313, %314 : vector<2x256xf32>
    %316 = math.tanh %315 : vector<2x256xf32>
    %317 = arith.mulf %312, %316 : vector<2x256xf32>
    %318 = vector.extract_strided_slice %127 {offsets = [6, 0], sizes = [1, 1024], strides = [1, 1]} : vector<8x1024xf32> to vector<1x1024xf32>
    %319 = vector.extract_strided_slice %128 {offsets = [6, 0], sizes = [1, 1024], strides = [1, 1]} : vector<8x1024xf32> to vector<1x1024xf32>
    %320 = tpu.concatenate %318, %319 in 0 : vector<1x1024xf32>, vector<1x1024xf32> -> vector<2x1024xf32>
    %321 = arith.truncf %317 : vector<2x256xf32> to vector<2x256xbf16>
    %cst_81 = arith.constant dense<0.000000e+00> : vector<2x1024xf32>
    %322 = tpu.matmul %321, %129, %cst_81 {dimension_numbers = #tpu.dot_dimension_numbers<[1], [0], [0], [1], [0, 0, 1, 1], [], []>} : vector<2x256xbf16>, vector<256x1024xbf16>, vector<2x1024xf32> -> vector<2x1024xf32>
    %323 = arith.addf %320, %322 : vector<2x1024xf32>
    %324 = vector.extract_strided_slice %323 {offsets = [0, 0], sizes = [2, 256], strides = [1, 1]} : vector<2x1024xf32> to vector<2x256xf32>
    %325 = arith.negf %324 : vector<2x256xf32>
    %326 = math.exp %325 : vector<2x256xf32>
    %cst_82 = arith.constant 1.000000e+00 : f32
    %327 = vector.broadcast %cst_82 : f32 to vector<2x256xf32>
    %328 = arith.addf %327, %326 : vector<2x256xf32>
    %329 = arith.divf %327, %328 : vector<2x256xf32>
    %330 = vector.extract_strided_slice %323 {offsets = [0, 256], sizes = [2, 256], strides = [1, 1]} : vector<2x1024xf32> to vector<2x256xf32>
    %331 = arith.negf %330 : vector<2x256xf32>
    %332 = math.exp %331 : vector<2x256xf32>
    %cst_83 = arith.constant 1.000000e+00 : f32
    %333 = vector.broadcast %cst_83 : f32 to vector<2x256xf32>
    %334 = arith.addf %333, %332 : vector<2x256xf32>
    %335 = arith.divf %333, %334 : vector<2x256xf32>
    %336 = vector.extract_strided_slice %323 {offsets = [0, 512], sizes = [2, 256], strides = [1, 1]} : vector<2x1024xf32> to vector<2x256xf32>
    %337 = math.tanh %336 : vector<2x256xf32>
    %338 = vector.extract_strided_slice %323 {offsets = [0, 768], sizes = [2, 256], strides = [1, 1]} : vector<2x1024xf32> to vector<2x256xf32>
    %339 = arith.negf %338 : vector<2x256xf32>
    %340 = math.exp %339 : vector<2x256xf32>
    %cst_84 = arith.constant 1.000000e+00 : f32
    %341 = vector.broadcast %cst_84 : f32 to vector<2x256xf32>
    %342 = arith.addf %341, %340 : vector<2x256xf32>
    %343 = arith.divf %341, %342 : vector<2x256xf32>
    %344 = arith.mulf %335, %315 : vector<2x256xf32>
    %345 = arith.mulf %329, %337 : vector<2x256xf32>
    %346 = arith.addf %344, %345 : vector<2x256xf32>
    %347 = math.tanh %346 : vector<2x256xf32>
    %348 = arith.mulf %343, %347 : vector<2x256xf32>
    %349 = vector.extract_strided_slice %127 {offsets = [7, 0], sizes = [1, 1024], strides = [1, 1]} : vector<8x1024xf32> to vector<1x1024xf32>
    %350 = vector.extract_strided_slice %128 {offsets = [7, 0], sizes = [1, 1024], strides = [1, 1]} : vector<8x1024xf32> to vector<1x1024xf32>
    %351 = tpu.concatenate %349, %350 in 0 : vector<1x1024xf32>, vector<1x1024xf32> -> vector<2x1024xf32>
    %352 = arith.truncf %348 : vector<2x256xf32> to vector<2x256xbf16>
    %cst_85 = arith.constant dense<0.000000e+00> : vector<2x1024xf32>
    %353 = tpu.matmul %352, %129, %cst_85 {dimension_numbers = #tpu.dot_dimension_numbers<[1], [0], [0], [1], [0, 0, 1, 1], [], []>} : vector<2x256xbf16>, vector<256x1024xbf16>, vector<2x1024xf32> -> vector<2x1024xf32>
    %354 = arith.addf %351, %353 : vector<2x1024xf32>
    %355 = vector.extract_strided_slice %354 {offsets = [0, 0], sizes = [2, 256], strides = [1, 1]} : vector<2x1024xf32> to vector<2x256xf32>
    %356 = arith.negf %355 : vector<2x256xf32>
    %357 = math.exp %356 : vector<2x256xf32>
    %cst_86 = arith.constant 1.000000e+00 : f32
    %358 = vector.broadcast %cst_86 : f32 to vector<2x256xf32>
    %359 = arith.addf %358, %357 : vector<2x256xf32>
    %360 = arith.divf %358, %359 : vector<2x256xf32>
    %361 = vector.extract_strided_slice %354 {offsets = [0, 256], sizes = [2, 256], strides = [1, 1]} : vector<2x1024xf32> to vector<2x256xf32>
    %362 = arith.negf %361 : vector<2x256xf32>
    %363 = math.exp %362 : vector<2x256xf32>
    %cst_87 = arith.constant 1.000000e+00 : f32
    %364 = vector.broadcast %cst_87 : f32 to vector<2x256xf32>
    %365 = arith.addf %364, %363 : vector<2x256xf32>
    %366 = arith.divf %364, %365 : vector<2x256xf32>
    %367 = vector.extract_strided_slice %354 {offsets = [0, 512], sizes = [2, 256], strides = [1, 1]} : vector<2x1024xf32> to vector<2x256xf32>
    %368 = math.tanh %367 : vector<2x256xf32>
    %369 = vector.extract_strided_slice %354 {offsets = [0, 768], sizes = [2, 256], strides = [1, 1]} : vector<2x1024xf32> to vector<2x256xf32>
    %370 = arith.negf %369 : vector<2x256xf32>
    %371 = math.exp %370 : vector<2x256xf32>
    %cst_88 = arith.constant 1.000000e+00 : f32
    %372 = vector.broadcast %cst_88 : f32 to vector<2x256xf32>
    %373 = arith.addf %372, %371 : vector<2x256xf32>
    %374 = arith.divf %372, %373 : vector<2x256xf32>
    %375 = arith.mulf %366, %346 : vector<2x256xf32>
    %376 = arith.mulf %360, %368 : vector<2x256xf32>
    %377 = arith.addf %375, %376 : vector<2x256xf32>
    %378 = math.tanh %377 : vector<2x256xf32>
    %379 = arith.mulf %374, %378 : vector<2x256xf32>
    %c0_89 = arith.constant 0 : index
    %c0_90 = arith.constant 0 : index
    %380 = vector.load %arg17[%c0_89, %c0_90] : memref<256x128xbf16, #tpu.memory_space<vmem>>, vector<256x128xbf16>
    %381 = arith.truncf %379 : vector<2x256xf32> to vector<2x256xbf16>
    %cst_91 = arith.constant dense<0.000000e+00> : vector<2x128xf32>
    %382 = tpu.matmul %381, %380, %cst_91 {dimension_numbers = #tpu.dot_dimension_numbers<[1], [0], [0], [1], [0, 0, 1, 1], [], []>} : vector<2x256xbf16>, vector<256x128xbf16>, vector<2x128xf32> -> vector<2x128xf32>
    %c0_92 = arith.constant 0 : index
    %c0_93 = arith.constant 0 : index
    %383 = vector.load %arg18[%c0_92, %c0_93] : memref<1x128xf32, #tpu.memory_space<vmem>>, vector<1x128xf32>
    %384 = vector.broadcast %383 : vector<1x128xf32> to vector<2x128xf32>
    %385 = arith.addf %382, %384 : vector<2x128xf32>
    %386 = arith.negf %385 : vector<2x128xf32>
    %387 = math.exp %386 : vector<2x128xf32>
    %cst_94 = arith.constant 1.000000e+00 : f32
    %388 = vector.broadcast %cst_94 : f32 to vector<2x128xf32>
    %389 = arith.addf %388, %387 : vector<2x128xf32>
    %390 = arith.divf %388, %389 : vector<2x128xf32>
    %c0_95 = arith.constant 0 : index
    %c0_96 = arith.constant 0 : index
    %391 = vector.load %arg19[%c0_95, %c0_96] : memref<2x128xf32, #tpu.memory_space<vmem>>, vector<2x128xf32>
    tpu.vector_store %arg19[%c0_95, %c0_96], %390 {strides = array<i32>} : memref<2x128xf32, #tpu.memory_space<vmem>>, vector<2x128xf32>,
    return
  }
}

</mosaic_0001>

<llo_original>
// kernel: transformer_lstm_forward.1
$region0: #{transformer_lstm_forward.1}
  #allocation0 [shape = 'u32[]', space=smem, size = 0x4, offset = 0x4, fixed_abs, tag = 'smem constant byte address 0x4 - core index']
  #allocation1 [shape = 'u32[144,128]{1,0:T(1,128)}', space=vmem, size = 0x12000, scoped, tag = 'internal scratch']
  %s0 = inlined_call_operand.vmem [shape: f32[16,128], index: 0, kind: input, shape index: {}]
  %s1 = inlined_call_operand.vmem [shape: bf16[128,384], index: 1, kind: input, shape index: {}]
  %s2 = inlined_call_operand.vmem [shape: f32[1,384], index: 2, kind: input, shape index: {}]
  %s3 = inlined_call_operand.hbm [shape: bf16[128,128], index: 3, kind: input, shape index: {}]
  %s4 = inlined_call_operand.hbm [shape: bf16[128,128], index: 4, kind: input, shape index: {}]
  %s5 = inlined_call_operand.vmem [shape: f32[1,128], index: 5, kind: input, shape index: {}]
  %s6 = inlined_call_operand.vmem [shape: f32[1,128], index: 6, kind: input, shape index: {}]
  %s7 = inlined_call_operand.vmem [shape: f32[1,128], index: 7, kind: input, shape index: {}]
  %s8 = inlined_call_operand.hbm [shape: bf16[128,2048], index: 8, kind: input, shape index: {}]
  %s9 = inlined_call_operand.vmem [shape: f32[1,2048], index: 9, kind: input, shape index: {}]
  %s10 = inlined_call_operand.hbm [shape: bf16[2048,128], index: 10, kind: input, shape index: {}]
  %s11 = inlined_call_operand.vmem [shape: f32[1,128], index: 11, kind: input, shape index: {}]
  %s12 = inlined_call_operand.hbm [shape: f32[1,128], index: 12, kind: input, shape index: {}]
  %s13 = inlined_call_operand.vmem [shape: f32[1,128], index: 13, kind: input, shape index: {}]
  %s14 = inlined_call_operand.hbm [shape: bf16[128,1024], index: 14, kind: input, shape index: {}]
  %s15 = inlined_call_operand.hbm [shape: bf16[256,1024], index: 15, kind: input, shape index: {}]
  %s16 = inlined_call_operand.vmem [shape: f32[1,1024], index: 16, kind: input, shape index: {}]
  %s17 = inlined_call_operand.hbm [shape: bf16[256,128], index: 17, kind: input, shape index: {}]
  %s18 = inlined_call_operand.vmem [shape: f32[1,128], index: 18, kind: input, shape index: {}]
  %s19 = inlined_call_operand.hbm [shape: f32[2,128], index: 19, kind: output, shape index: {}]
  %s20 = sld [smem:[#allocation0]]
  $region118: #{transformer_lstm_forward.1} parent=0
    _
  %s22 = ssub.s32 1, %s20
  %s23 = scalar_select 0, %s22, %s20
  $region1: #{transformer_lstm_forward.1} parent=0
    #allocation2 [shape = 'u8[32768]{0}', space=vmem, size = 0x8000, scoped, tag = 'input window, operand 3, single buffered']
    #allocation3 [shape = 's32[1]{0}', space=sflag, size = 0x4, scoped, tag = 'scoped memory for transformer_lstm_forward.1']
    #allocation4 [shape = 's32[1]{0}', space=sflag, size = 0x4, scoped, tag = 'scoped memory for transformer_lstm_forward.1']
    #allocation5 [shape = 'u8[32768]{0}', space=vmem, size = 0x8000, scoped, tag = 'input window, operand 4, single buffered']
    #allocation6 [shape = 's32[1]{0}', space=sflag, size = 0x4, scoped, tag = 'scoped memory for transformer_lstm_forward.1']
    #allocation7 [shape = 'u8[524288]{0}', space=vmem, size = 0x80000, scoped, tag = 'input window, operand 8, single buffered']
    #allocation8 [shape = 'u8[524288]{0}', space=vmem, size = 0x80000, scoped, tag = 'input window, operand 10, single buffered']
    #allocation9 [shape = 's32[1]{0}', space=sflag, size = 0x4, scoped, tag = 'scoped memory for transformer_lstm_forward.1']
    #allocation10 [shape = 'u8[512]{0}', space=vmem, size = 0x400, scoped, tag = 'input window, operand 12, single buffered']
    #allocation11 [shape = 'u8[262144]{0}', space=vmem, size = 0x40000, scoped, tag = 'input window, operand 14, single buffered']
    #allocation12 [shape = 's32[1]{0}', space=sflag, size = 0x4, scoped, tag = 'scoped memory for transformer_lstm_forward.1']
    #allocation13 [shape = 'u8[524288]{0}', space=vmem, size = 0x80000, scoped, tag = 'input window, operand 15, single buffered']
    #allocation14 [shape = 'u8[65536]{0}', space=vmem, size = 0x10000, scoped, tag = 'input window, operand 17, single buffered']
    #allocation15 [shape = 's32[1]{0}', space=sflag, size = 0x4, scoped, tag = 'scoped memory for transformer_lstm_forward.1']
    #allocation16 [shape = 'u8[1024]{0}', space=vmem, size = 0x400, scoped, tag = 'output window, operand 0, single buffered']
    %24 = vsyncpa [#allocation3], 0
    %25 = vsyncpa [#allocation6], 0
    %26 = vsyncpa [#allocation9], 0
    %27 = vsyncpa [#allocation12], 0
    %28 = vsyncpa [#allocation15], 0
    %29 = vsyncpa [#allocation4], 0
    // Predicated region
    $region2: #{transformer_lstm_forward.1} parent=1 // pred_check
      _
    $region3: #{transformer_lstm_forward.1} parent=1 // pred_check_branch
      %31 = sbr.rel (0) target = $region5
    $region4: #{transformer_lstm_forward.1} parent=1 // pred_region
      _
    $region5: #{transformer_lstm_forward.1} parent=1 // pred_fallthru
      _
    // Predicated region
    $region6: #{transformer_lstm_forward.1} parent=1 // pred_check
      _
    $region7: #{transformer_lstm_forward.1} parent=1 // pred_check_branch
      %33 = sbr.rel (0) target = $region9
    $region8: #{transformer_lstm_forward.1} parent=1 // pred_region
      _
    $region9: #{transformer_lstm_forward.1} parent=1 // pred_fallthru
      _
    // Predicated region
    $region10: #{transformer_lstm_forward.1} parent=1 // pred_check
      _
    $region11: #{transformer_lstm_forward.1} parent=1 // pred_check_branch
      %35 = sbr.rel (0) target = $region13
    $region12: #{transformer_lstm_forward.1} parent=1 // pred_region
      _
    $region13: #{transformer_lstm_forward.1} parent=1 // pred_fallthru
      _
    // Predicated region
    $region14: #{transformer_lstm_forward.1} parent=1 // pred_check
      _
    $region15: #{transformer_lstm_forward.1} parent=1 // pred_check_branch
      %37 = sbr.rel (0) target = $region17
    $region16: #{transformer_lstm_forward.1} parent=1 // pred_region
      %s39 = ssub.s32 1024, 1024
      %40 = vsyncadd [#allocation3], %s39
      %s41 = sshll.u32 [#allocation2], 4
      %s42 = int_to_ptr.vmem [resolvable:$true] %s41
      %47 = dma.hbm_to_vmem [thread:$0]  %s3, 1024, %s42, [#allocation3], 64, 64, 4
    $region17: #{transformer_lstm_forward.1} parent=1 // pred_fallthru
      _
    // Predicated region
    $region18: #{transformer_lstm_forward.1} parent=1 // pred_check
      _
    $region19: #{transformer_lstm_forward.1} parent=1 // pred_check_branch
      %49 = sbr.rel (0) target = $region21
    $region20: #{transformer_lstm_forward.1} parent=1 // pred_region
      %s51 = ssub.s32 1024, 1024
      %52 = vsyncadd [#allocation6], %s51
      %s53 = sshll.u32 [#allocation5], 4
      %s54 = int_to_ptr.vmem [resolvable:$true] %s53
      %59 = dma.hbm_to_vmem [thread:$0]  %s4, 1024, %s54, [#allocation6], 64, 64, 4
    $region21: #{transformer_lstm_forward.1} parent=1 // pred_fallthru
      _
    // Predicated region
    $region22: #{transformer_lstm_forward.1} parent=1 // pred_check
      _
    $region23: #{transformer_lstm_forward.1} parent=1 // pred_check_branch
      %61 = sbr.rel (0) target = $region25
    $region24: #{transformer_lstm_forward.1} parent=1 // pred_region
      _
    $region25: #{transformer_lstm_forward.1} parent=1 // pred_fallthru
      _
    // Predicated region
    $region26: #{transformer_lstm_forward.1} parent=1 // pred_check
      _
    $region27: #{transformer_lstm_forward.1} parent=1 // pred_check_branch
      %63 = sbr.rel (0) target = $region29
    $region28: #{transformer_lstm_forward.1} parent=1 // pred_region
      _
    $region29: #{transformer_lstm_forward.1} parent=1 // pred_fallthru
      _
    // Predicated region
    $region30: #{transformer_lstm_forward.1} parent=1 // pred_check
      _
    $region31: #{transformer_lstm_forward.1} parent=1 // pred_check_branch
      %65 = sbr.rel (0) target = $region33
    $region32: #{transformer_lstm_forward.1} parent=1 // pred_region
      _
    $region33: #{transformer_lstm_forward.1} parent=1 // pred_fallthru
      _
    // Predicated region
    $region34: #{transformer_lstm_forward.1} parent=1 // pred_check
      _
    $region35: #{transformer_lstm_forward.1} parent=1 // pred_check_branch
      %67 = sbr.rel (0) target = $region37
    $region36: #{transformer_lstm_forward.1} parent=1 // pred_region
      %s69 = ssub.s32 16384, 16384
      %70 = vsyncadd [#allocation6], %s69
      %s71 = sshll.u32 [#allocation7], 4
      %s72 = int_to_ptr.vmem [resolvable:$true] %s71
      %77 = dma.hbm_to_vmem [thread:$0]  %s8, 16384, %s72, [#allocation6], 1024, 1024, 64
    $region37: #{transformer_lstm_forward.1} parent=1 // pred_fallthru
      _
    // Predicated region
    $region38: #{transformer_lstm_forward.1} parent=1 // pred_check
      _
    $region39: #{transformer_lstm_forward.1} parent=1 // pred_check_branch
      %79 = sbr.rel (0) target = $region41
    $region40: #{transformer_lstm_forward.1} parent=1 // pred_region
      _
    $region41: #{transformer_lstm_forward.1} parent=1 // pred_fallthru
      _
    // Predicated region
    $region42: #{transformer_lstm_forward.1} parent=1 // pred_check
      _
    $region43: #{transformer_lstm_forward.1} parent=1 // pred_check_branch
      %81 = sbr.rel (0) target = $region45
    $region44: #{transformer_lstm_forward.1} parent=1 // pred_region
      %s83 = ssub.s32 16384, 16384
      %84 = vsyncadd [#allocation9], %s83
      %s85 = sshll.u32 [#allocation8], 4
      %s86 = int_to_ptr.vmem [resolvable:$true] %s85
      %91 = dma.hbm_to_vmem [thread:$0]  %s10, 16384, %s86, [#allocation9], 64, 64, 4
    $region45: #{transformer_lstm_forward.1} parent=1 // pred_fallthru
      _
    // Predicated region
    $region46: #{transformer_lstm_forward.1} parent=1 // pred_check
      _
    $region47: #{transformer_lstm_forward.1} parent=1 // pred_check_branch
      %93 = sbr.rel (0) target = $region49
    $region48: #{transformer_lstm_forward.1} parent=1 // pred_region
      _
    $region49: #{transformer_lstm_forward.1} parent=1 // pred_fallthru
      _
    // Predicated region
    $region50: #{transformer_lstm_forward.1} parent=1 // pred_check
      _
    $region51: #{transformer_lstm_forward.1} parent=1 // pred_check_branch
      %95 = sbr.rel (0) target = $region53
    $region52: #{transformer_lstm_forward.1} parent=1 // pred_region
      %s97 = ssub.s32 16, 16
      %98 = vsyncadd [#allocation9], %s97
      %s100 = sshll.u32 [#allocation10], 4
      %s101 = int_to_ptr.vmem [resolvable:$true] %s100
      %103 = dma.hbm_to_vmem [thread:$0]  %s12, 16, %s101, [#allocation9]
    $region53: #{transformer_lstm_forward.1} parent=1 // pred_fallthru
      _
    // Predicated region
    $region54: #{transformer_lstm_forward.1} parent=1 // pred_check
      _
    $region55: #{transformer_lstm_forward.1} parent=1 // pred_check_branch
      %105 = sbr.rel (0) target = $region57
    $region56: #{transformer_lstm_forward.1} parent=1 // pred_region
      _
    $region57: #{transformer_lstm_forward.1} parent=1 // pred_fallthru
      _
    // Predicated region
    $region58: #{transformer_lstm_forward.1} parent=1 // pred_check
      _
    $region59: #{transformer_lstm_forward.1} parent=1 // pred_check_branch
      %107 = sbr.rel (0) target = $region61
    $region60: #{transformer_lstm_forward.1} parent=1 // pred_region
      %s109 = ssub.s32 8192, 8192
      %110 = vsyncadd [#allocation12], %s109
      %s111 = sshll.u32 [#allocation11], 4
      %s112 = int_to_ptr.vmem [resolvable:$true] %s111
      %117 = dma.hbm_to_vmem [thread:$0]  %s14, 8192, %s112, [#allocation12], 512, 512, 32
    $region61: #{transformer_lstm_forward.1} parent=1 // pred_fallthru
      _
    // Predicated region
    $region62: #{transformer_lstm_forward.1} parent=1 // pred_check
      _
    $region63: #{transformer_lstm_forward.1} parent=1 // pred_check_branch
      %119 = sbr.rel (0) target = $region65
    $region64: #{transformer_lstm_forward.1} parent=1 // pred_region
      %s121 = ssub.s32 16384, 16384
      %122 = vsyncadd [#allocation12], %s121
      %s123 = sshll.u32 [#allocation13], 4
      %s124 = int_to_ptr.vmem [resolvable:$true] %s123
      %129 = dma.hbm_to_vmem [thread:$0]  %s15, 16384, %s124, [#allocation12], 512, 512, 32
    $region65: #{transformer_lstm_forward.1} parent=1 // pred_fallthru
      _
    // Predicated region
    $region66: #{transformer_lstm_forward.1} parent=1 // pred_check
      _
    $region67: #{transformer_lstm_forward.1} parent=1 // pred_check_branch
      %131 = sbr.rel (0) target = $region69
    $region68: #{transformer_lstm_forward.1} parent=1 // pred_region
      _
    $region69: #{transformer_lstm_forward.1} parent=1 // pred_fallthru
      _
    // Predicated region
    $region70: #{transformer_lstm_forward.1} parent=1 // pred_check
      _
    $region71: #{transformer_lstm_forward.1} parent=1 // pred_check_branch
      %133 = sbr.rel (0) target = $region73
    $region72: #{transformer_lstm_forward.1} parent=1 // pred_region
      %s135 = ssub.s32 2048, 2048
      %136 = vsyncadd [#allocation15], %s135
      %s137 = sshll.u32 [#allocation14], 4
      %s138 = int_to_ptr.vmem [resolvable:$true] %s137
      %143 = dma.hbm_to_vmem [thread:$0]  %s17, 2048, %s138, [#allocation15], 64, 64, 4
    $region73: #{transformer_lstm_forward.1} parent=1 // pred_fallthru
      _
    // Predicated region
    $region74: #{transformer_lstm_forward.1} parent=1 // pred_check
      _
    $region75: #{transformer_lstm_forward.1} parent=1 // pred_check_branch
      %145 = sbr.rel (0) target = $region77
    $region76: #{transformer_lstm_forward.1} parent=1 // pred_region
      _
    $region77: #{transformer_lstm_forward.1} parent=1 // pred_fallthru
      _
    // Predicated region
    $region78: #{transformer_lstm_forward.1} parent=1 // pred_check
      _
    $region79: #{transformer_lstm_forward.1} parent=1 // pred_check_branch
      %147 = sbr.rel (0) target = $region81
    $region80: #{transformer_lstm_forward.1} parent=1 // pred_region
      %148 = dma.done [#allocation3], 1024
    $region81: #{transformer_lstm_forward.1} parent=1 // pred_fallthru
      _
    // Predicated region
    $region82: #{transformer_lstm_forward.1} parent=1 // pred_check
      _
    $region83: #{transformer_lstm_forward.1} parent=1 // pred_check_branch
      %150 = sbr.rel (0) target = $region85
    $region84: #{transformer_lstm_forward.1} parent=1 // pred_region
      %151 = dma.done [#allocation6], 1024
    $region85: #{transformer_lstm_forward.1} parent=1 // pred_fallthru
      _
    // Predicated region
    $region86: #{transformer_lstm_forward.1} parent=1 // pred_check
      _
    $region87: #{transformer_lstm_forward.1} parent=1 // pred_check_branch
      %153 = sbr.rel (0) target = $region89
    $region88: #{transformer_lstm_forward.1} parent=1 // pred_region
      %154 = dma.done [#allocation6], 16384
    $region89: #{transformer_lstm_forward.1} parent=1 // pred_fallthru
      _
    // Predicated region
    $region90: #{transformer_lstm_forward.1} parent=1 // pred_check
      _
    $region91: #{transformer_lstm_forward.1} parent=1 // pred_check_branch
      %156 = sbr.rel (0) target = $region93
    $region92: #{transformer_lstm_forward.1} parent=1 // pred_region
      %157 = dma.done [#allocation9], 16384
    $region93: #{transformer_lstm_forward.1} parent=1 // pred_fallthru
      _
    // Predicated region
    $region94: #{transformer_lstm_forward.1} parent=1 // pred_check
      _
    $region95: #{transformer_lstm_forward.1} parent=1 // pred_check_branch
      %159 = sbr.rel (0) target = $region97
    $region96: #{transformer_lstm_forward.1} parent=1 // pred_region
      %160 = dma.done [#allocation9], 16
    $region97: #{transformer_lstm_forward.1} parent=1 // pred_fallthru
      _
    // Predicated region
    $region98: #{transformer_lstm_forward.1} parent=1 // pred_check
      _
    $region99: #{transformer_lstm_forward.1} parent=1 // pred_check_branch
      %162 = sbr.rel (0) target = $region101
    $region100: #{transformer_lstm_forward.1} parent=1 // pred_region
      %163 = dma.done [#allocation12], 8192
    $region101: #{transformer_lstm_forward.1} parent=1 // pred_fallthru
      _
    // Predicated region
    $region102: #{transformer_lstm_forward.1} parent=1 // pred_check
      _
    $region103: #{transformer_lstm_forward.1} parent=1 // pred_check_branch
      %165 = sbr.rel (0) target = $region105
    $region104: #{transformer_lstm_forward.1} parent=1 // pred_region
      %166 = dma.done [#allocation12], 16384
    $region105: #{transformer_lstm_forward.1} parent=1 // pred_fallthru
      _
    // Predicated region
    $region106: #{transformer_lstm_forward.1} parent=1 // pred_check
      _
    $region107: #{transformer_lstm_forward.1} parent=1 // pred_check_branch
      %168 = sbr.rel (0) target = $region109
    $region108: #{transformer_lstm_forward.1} parent=1 // pred_region
      %169 = dma.done [#allocation15], 2048
    $region109: #{transformer_lstm_forward.1} parent=1 // pred_fallthru
      _
    %v171 = vld [vmem:[%s0] sm:$0xff]
    %v172 = vld [vmem:[%s0 + $0x8] sm:$0xff]
    %v173 = vld [vmem:[%s1] sm:$0xff]
    %v174 = vld [vmem:[%s1 + $0x8] sm:$0xf]
    %v175 = vld [vmem:[%s1 + $0xc] sm:$0xff]
    %v176 = vld [vmem:[%s1 + $0x14] sm:$0xf]
    %v177 = vld [vmem:[%s1 + $0x18] sm:$0xff]
    %v178 = vld [vmem:[%s1 + $0x20] sm:$0xf]
    %v179 = vld [vmem:[%s1 + $0x24] sm:$0xff]
    %v180 = vld [vmem:[%s1 + $0x2c] sm:$0xf]
    %v181 = vld [vmem:[%s1 + $0x30] sm:$0xff]
    %v182 = vld [vmem:[%s1 + $0x38] sm:$0xf]
    %v183 = vld [vmem:[%s1 + $0x3c] sm:$0xff]
    %v184 = vld [vmem:[%s1 + $0x44] sm:$0xf]
    %v185 = vld [vmem:[%s1 + $0x48] sm:$0xff]
    %v186 = vld [vmem:[%s1 + $0x50] sm:$0xf]
    %v187 = vld [vmem:[%s1 + $0x54] sm:$0xff]
    %v188 = vld [vmem:[%s1 + $0x5c] sm:$0xf]
    %v189 = vld [vmem:[%s1 + $0x60] sm:$0xff]
    %v190 = vld [vmem:[%s1 + $0x68] sm:$0xf]
    %v191 = vld [vmem:[%s1 + $0x6c] sm:$0xff]
    %v192 = vld [vmem:[%s1 + $0x74] sm:$0xf]
    %v193 = vld [vmem:[%s1 + $0x78] sm:$0xff]
    %v194 = vld [vmem:[%s1 + $0x80] sm:$0xf]
    %v195 = vld [vmem:[%s1 + $0x84] sm:$0xff]
    %v196 = vld [vmem:[%s1 + $0x8c] sm:$0xf]
    %v197 = vld [vmem:[%s1 + $0x90] sm:$0xff]
    %v198 = vld [vmem:[%s1 + $0x98] sm:$0xf]
    %v199 = vld [vmem:[%s1 + $0x9c] sm:$0xff]
    %v200 = vld [vmem:[%s1 + $0xa4] sm:$0xf]
    %v201 = vld [vmem:[%s1 + $0xa8] sm:$0xff]
    %v202 = vld [vmem:[%s1 + $0xb0] sm:$0xf]
    %v203 = vld [vmem:[%s1 + $0xb4] sm:$0xff]
    %v204 = vld [vmem:[%s1 + $0xbc] sm:$0xf]
    %v205 = vpack.c.bf16 %v172, %v171
    %v206 = vld [vmem:[%s2] sm:$0x7]
    %v208 = vlaneseq
    %v209 = vshrl.u32 %v208, 7
    %v210 = vsub.s32 0, %v209
    %v211 = vrot.slane %v206, %v210
    %v212 = vlaneseq
    %v213 = vshrl.u32 %v212, 7
    %v214 = vsub.s32 1, %v213
    %v215 = vrot.slane %v206, %v214
    %v216 = vlaneseq
    %v217 = vshrl.u32 %v216, 7
    %v218 = vsub.s32 2, %v217
    %v219 = vrot.slane %v206, %v218
    %v255 = vunpack.c.l.b16 %v173
    %v256 = vunpack.c.h.b16 %v173
    %v257 = vunpack.c.l.b16 %v174
    %v258 = vunpack.c.l.b16 %v175
    %v259 = vunpack.c.h.b16 %v175
    %v260 = vunpack.c.l.b16 %v176
    %v261 = vunpack.c.l.b16 %v177
    %v262 = vunpack.c.h.b16 %v177
    %v263 = vunpack.c.l.b16 %v178
    %v264 = vunpack.c.l.b16 %v179
    %v265 = vunpack.c.h.b16 %v179
    %v266 = vunpack.c.l.b16 %v180
    %v267 = vunpack.c.l.b16 %v181
    %v268 = vunpack.c.h.b16 %v181
    %v269 = vunpack.c.l.b16 %v182
    %v270 = vunpack.c.l.b16 %v183
    %v271 = vunpack.c.h.b16 %v183
    %v272 = vunpack.c.l.b16 %v184
    %v273 = vunpack.c.l.b16 %v185
    %v274 = vunpack.c.h.b16 %v185
    %v275 = vunpack.c.l.b16 %v186
    %v276 = vunpack.c.l.b16 %v187
    %v277 = vunpack.c.h.b16 %v187
    %v278 = vunpack.c.l.b16 %v188
    %v279 = vunpack.c.l.b16 %v189
    %v280 = vunpack.c.h.b16 %v189
    %v281 = vunpack.c.l.b16 %v190
    %v282 = vunpack.c.l.b16 %v191
    %v283 = vunpack.c.h.b16 %v191
    %v284 = vunpack.c.l.b16 %v192
    %v285 = vunpack.c.l.b16 %v193
    %v286 = vunpack.c.h.b16 %v193
    %v287 = vunpack.c.l.b16 %v194
    %v288 = vunpack.c.l.b16 %v195
    %v289 = vunpack.c.h.b16 %v195
    %v290 = vunpack.c.l.b16 %v196
    %v291 = vunpack.c.l.b16 %v197
    %v292 = vunpack.c.h.b16 %v197
    %v293 = vunpack.c.l.b16 %v198
    %v294 = vunpack.c.l.b16 %v199
    %v295 = vunpack.c.h.b16 %v199
    %v296 = vunpack.c.l.b16 %v200
    %v297 = vunpack.c.l.b16 %v201
    %v298 = vunpack.c.h.b16 %v201
    %v299 = vunpack.c.l.b16 %v202
    %v300 = vunpack.c.l.b16 %v203
    %v301 = vunpack.c.h.b16 %v203
    %v302 = vunpack.c.l.b16 %v204
    %v303 = vpack.c.b16 %v258, %v255
    %v304 = vpack.c.b16 %v259, %v256
    %v305 = vpack.c.b16 %v260, %v257
    %v306 = vpack.c.b16 %v264, %v261
    %v307 = vpack.c.b16 %v265, %v262
    %v308 = vpack.c.b16 %v266, %v263
    %v309 = vpack.c.b16 %v270, %v267
    %v310 = vpack.c.b16 %v271, %v268
    %v311 = vpack.c.b16 %v272, %v269
    %v312 = vpack.c.b16 %v276, %v273
    %v313 = vpack.c.b16 %v277, %v274
    %v314 = vpack.c.b16 %v278, %v275
    %v315 = vpack.c.b16 %v282, %v279
    %v316 = vpack.c.b16 %v283, %v280
    %v317 = vpack.c.b16 %v284, %v281
    %v318 = vpack.c.b16 %v288, %v285
    %v319 = vpack.c.b16 %v289, %v286
    %v320 = vpack.c.b16 %v290, %v287
    %v321 = vpack.c.b16 %v294, %v291
    %v322 = vpack.c.b16 %v295, %v292
    %v323 = vpack.c.b16 %v296, %v293
    %v324 = vpack.c.b16 %v300, %v297
    %v325 = vpack.c.b16 %v301, %v298
    %v326 = vpack.c.b16 %v302, %v299
    %351 = vmatprep.subr.bf16.mxu0 %v304
    %352 = vmatpush1.bf16.msra.mxu0 %v303
    %353 = vmatprep.subr.bf16.mxu0 %v307
    %354 = vmatpush1.bf16.msra.mxu0 %v306
    %355 = vmatprep.subr.bf16.mxu0 %v310
    %356 = vmatpush1.bf16.msra.mxu0 %v309
    %357 = vmatprep.subr.bf16.mxu0 %v313
    %358 = vmatpush1.bf16.msra.mxu0 %v312
    %359 = vmatprep.subr.bf16.mxu0 %v316
    %360 = vmatpush1.bf16.msra.mxu0 %v315
    %361 = vmatprep.subr.bf16.mxu0 %v319
    %362 = vmatpush1.bf16.msra.mxu0 %v318
    %363 = vmatprep.subr.bf16.mxu0 %v322
    %364 = vmatpush1.bf16.msra.mxu0 %v321
    %365 = vmatprep.subr.bf16.mxu0 %v325
    %366 = vmatpush1.bf16.msra.mxu0 %v324
    %367 = vmatprep.subr.bf16.mxu0 0
    %368 = vmatpush1.bf16.msra.mxu0 0
    %369 = vmatprep.subr.bf16.mxu0 0
    %370 = vmatpush1.bf16.msra.mxu0 0
    %371 = vmatprep.subr.bf16.mxu0 0
    %372 = vmatpush1.bf16.msra.mxu0 0
    %373 = vmatprep.subr.bf16.mxu0 0
    %374 = vmatpush1.bf16.msra.mxu0 0
    %375 = vmatprep.subr.bf16.mxu0 0
    %376 = vmatpush1.bf16.msra.mxu0 0
    %377 = vmatprep.subr.bf16.mxu0 0
    %378 = vmatpush1.bf16.msra.mxu0 0
    %379 = vmatprep.subr.bf16.mxu0 0
    %380 = vmatpush1.bf16.msra.mxu0 0
    %381 = vmatprep.subr.bf16.mxu0 0
    %382 = vmatpush1.bf16.msra.mxu0 0
    %383 = vmatprep.mubr.bf16.mxu0 0
    %384 = vmatmul.mubr.bf16.gmra.mrb[0].mxu0 %v205
    %v385 = vpop.f32.mrb[0].mxu0
    %v386 = vadd.f32 %v211, %v385
    %v387 = vpop.f32.mrb[0].mxu0
    %v388 = vadd.f32 %v215, %v387
    %v389 = vpop.f32.mrb[0].mxu0
    %v390 = vadd.f32 %v211, %v389
    %v391 = vpop.f32.mrb[0].mxu0
    %v392 = vadd.f32 %v215, %v391
    %393 = vdwg.mxu0
    %394 = vmatprep.subr.bf16.mxu0 0
    %395 = vmatpush1.bf16.msra.mxu0 %v305
    %396 = vmatprep.subr.bf16.mxu0 0
    %397 = vmatpush1.bf16.msra.mxu0 %v308
    %398 = vmatprep.subr.bf16.mxu0 0
    %399 = vmatpush1.bf16.msra.mxu0 %v311
    %400 = vmatprep.subr.bf16.mxu0 0
    %401 = vmatpush1.bf16.msra.mxu0 %v314
    %402 = vmatprep.subr.bf16.mxu0 0
    %403 = vmatpush1.bf16.msra.mxu0 %v317
    %404 = vmatprep.subr.bf16.mxu0 0
    %405 = vmatpush1.bf16.msra.mxu0 %v320
    %406 = vmatprep.subr.bf16.mxu0 0
    %407 = vmatpush1.bf16.msra.mxu0 %v323
    %408 = vmatprep.subr.bf16.mxu0 0
    %409 = vmatpush1.bf16.msra.mxu0 %v326
    %410 = vmatprep.subr.bf16.mxu0 0
    %411 = vmatpush1.bf16.msra.mxu0 0
    %412 = vmatprep.subr.bf16.mxu0 0
    %413 = vmatpush1.bf16.msra.mxu0 0
    %414 = vmatprep.subr.bf16.mxu0 0
    %415 = vmatpush1.bf16.msra.mxu0 0
    %416 = vmatprep.subr.bf16.mxu0 0
    %417 = vmatpush1.bf16.msra.mxu0 0
    %418 = vmatprep.subr.bf16.mxu0 0
    %419 = vmatpush1.bf16.msra.mxu0 0
    %420 = vmatprep.subr.bf16.mxu0 0
    %421 = vmatpush1.bf16.msra.mxu0 0
    %422 = vmatprep.subr.bf16.mxu0 0
    %423 = vmatpush1.bf16.msra.mxu0 0
    %424 = vmatprep.subr.bf16.mxu0 0
    %425 = vmatpush1.bf16.msra.mxu0 0
    %426 = vmatprep.mubr.bf16.mxu0 0
    %427 = vmatmul.mubr.bf16.gmra.mrb[0].mxu0 %v205
    %v428 = vpop.f32.mrb[0].mxu0
    %v429 = vadd.f32 %v219, %v428
    %v430 = vpop.f32.mrb[0].mxu0
    %v431 = vpop.f32.mrb[0].mxu0
    %v432 = vadd.f32 %v219, %v431
    %v433 = vpop.f32.mrb[0].mxu0
    %434 = vdwg.mxu0
    %v435 = vmul.f32 %v386, %v388
    %v436 = vmul.f32 %v386, %v392
    %v437 = vmul.f32 %v390, %v388
    %v438 = vmul.f32 %v390, %v392
    %v439 = vld [vmem:[#allocation2] sm:$0xf]
    %v440 = vld [vmem:[#allocation2 + $0x4] sm:$0xf]
    %v441 = vld [vmem:[#allocation2 + $0x8] sm:$0xf]
    %v442 = vld [vmem:[#allocation2 + $0xc] sm:$0xf]
    %v443 = vld [vmem:[#allocation2 + $0x10] sm:$0xf]
    %v444 = vld [vmem:[#allocation2 + $0x14] sm:$0xf]
    %v445 = vld [vmem:[#allocation2 + $0x18] sm:$0xf]
    %v446 = vld [vmem:[#allocation2 + $0x1c] sm:$0xf]
    %v447 = vld [vmem:[#allocation2 + $0x20] sm:$0xf]
    %v448 = vld [vmem:[#allocation2 + $0x24] sm:$0xf]
    %v449 = vld [vmem:[#allocation2 + $0x28] sm:$0xf]
    %v450 = vld [vmem:[#allocation2 + $0x2c] sm:$0xf]
    %v451 = vld [vmem:[#allocation2 + $0x30] sm:$0xf]
    %v452 = vld [vmem:[#allocation2 + $0x34] sm:$0xf]
    %v453 = vld [vmem:[#allocation2 + $0x38] sm:$0xf]
    %v454 = vld [vmem:[#allocation2 + $0x3c] sm:$0xf]
    %v455 = vpack.c.bf16 %v436, %v435
    %v456 = vpack.c.bf16 %v438, %v437
    %v473 = vunpack.c.l.b16 %v439
    %v474 = vunpack.c.l.b16 %v440
    %v475 = vunpack.c.l.b16 %v441
    %v476 = vunpack.c.l.b16 %v442
    %v477 = vunpack.c.l.b16 %v443
    %v478 = vunpack.c.l.b16 %v444
    %v479 = vunpack.c.l.b16 %v445
    %v480 = vunpack.c.l.b16 %v446
    %v481 = vunpack.c.l.b16 %v447
    %v482 = vunpack.c.l.b16 %v448
    %v483 = vunpack.c.l.b16 %v449
    %v484 = vunpack.c.l.b16 %v450
    %v485 = vunpack.c.l.b16 %v451
    %v486 = vunpack.c.l.b16 %v452
    %v487 = vunpack.c.l.b16 %v453
    %v488 = vunpack.c.l.b16 %v454
    %v489 = vpack.c.b16 %v474, %v473
    %v490 = vpack.c.b16 %v476, %v475
    %v491 = vpack.c.b16 %v478, %v477
    %v492 = vpack.c.b16 %v480, %v479
    %v493 = vpack.c.b16 %v482, %v481
    %v494 = vpack.c.b16 %v484, %v483
    %v495 = vpack.c.b16 %v486, %v485
    %v496 = vpack.c.b16 %v488, %v487
    %505 = vmatprep.subr.bf16.mxu0 0
    %506 = vmatpush1.bf16.msra.mxu0 %v489
    %507 = vmatprep.subr.bf16.mxu0 0
    %508 = vmatpush1.bf16.msra.mxu0 %v490
    %509 = vmatprep.subr.bf16.mxu0 0
    %510 = vmatpush1.bf16.msra.mxu0 %v491
    %511 = vmatprep.subr.bf16.mxu0 0
    %512 = vmatpush1.bf16.msra.mxu0 %v492
    %513 = vmatprep.subr.bf16.mxu0 0
    %514 = vmatpush1.bf16.msra.mxu0 %v493
    %515 = vmatprep.subr.bf16.mxu0 0
    %516 = vmatpush1.bf16.msra.mxu0 %v494
    %517 = vmatprep.subr.bf16.mxu0 0
    %518 = vmatpush1.bf16.msra.mxu0 %v495
    %519 = vmatprep.subr.bf16.mxu0 0
    %520 = vmatpush1.bf16.msra.mxu0 %v496
    %521 = vmatprep.subr.bf16.mxu0 0
    %522 = vmatpush1.bf16.msra.mxu0 0
    %523 = vmatprep.subr.bf16.mxu0 0
    %524 = vmatpush1.bf16.msra.mxu0 0
    %525 = vmatprep.subr.bf16.mxu0 0
    %526 = vmatpush1.bf16.msra.mxu0 0
    %527 = vmatprep.subr.bf16.mxu0 0
    %528 = vmatpush1.bf16.msra.mxu0 0
    %529 = vmatprep.subr.bf16.mxu0 0
    %530 = vmatpush1.bf16.msra.mxu0 0
    %531 = vmatprep.subr.bf16.mxu0 0
    %532 = vmatpush1.bf16.msra.mxu0 0
    %533 = vmatprep.subr.bf16.mxu0 0
    %534 = vmatpush1.bf16.msra.mxu0 0
    %535 = vmatprep.subr.bf16.mxu0 0
    %536 = vmatpush1.bf16.msra.mxu0 0
    %537 = vmatprep.mubr.bf16.mxu0 0
    %538 = vmatmul.mubr.bf16.gmra.mrb[0].mxu0 %v455
    %v539 = vpop.f32.mrb[0].mxu0
    %v540 = vadd.f32 0.0, %v539
    %v541 = vpop.f32.mrb[0].mxu0
    %v542 = vpop.f32.mrb[0].mxu0
    %v543 = vadd.f32 0.0, %v542
    %v544 = vpop.f32.mrb[0].mxu0
    %545 = vmatprep.mubr.bf16.mxu0 0
    %546 = vmatmul.mubr.bf16.gmra.mrb[0].mxu0 %v456
    %v547 = vpop.f32.mrb[0].mxu0
    %v548 = vadd.f32 0.0, %v547
    %v549 = vpop.f32.mrb[0].mxu0
    %v550 = vpop.f32.mrb[0].mxu0
    %v551 = vadd.f32 0.0, %v550
    %v552 = vpop.f32.mrb[0].mxu0
    %553 = vdwg.mxu0
    %v554 = vsub.f32 %v540, %v543
    %v555 = vmul.f32 %v554, 0.17677669
    %v556 = vxor.u32 %v555, 2147483648
    %v557 = vmul.f32 %v556, 1.442695
    %v558 = vpow.pop %v557
    %v559 = vadd.f32 %v558, 1.0
    %v560 = vrcp.pop %v559
    %v561 = vmul.f32 1.0, %v560
    %v562 = vsub.f32 %v548, %v551
    %v563 = vmul.f32 %v562, 0.17677669
    %v564 = vxor.u32 %v563, 2147483648
    %v565 = vmul.f32 %v564, 1.442695
    %v566 = vpow.pop %v565
    %v567 = vadd.f32 %v566, 1.0
    %v568 = vrcp.pop %v567
    %v569 = vmul.f32 1.0, %v568
    %v570 = vmul.f32 %v561, %v429
    %v571 = vsub.f32 1.0, %v561
    %v572 = vmul.f32 %v571, %v432
    %v573 = vadd.f32 %v570, %v572
    %v574 = vmul.f32 %v569, %v429
    %v575 = vsub.f32 1.0, %v569
    %v576 = vmul.f32 %v575, %v432
    %v577 = vadd.f32 %v574, %v576
    %v578 = vld [vmem:[#allocation5] sm:$0xf]
    %v579 = vld [vmem:[#allocation5 + $0x4] sm:$0xf]
    %v580 = vld [vmem:[#allocation5 + $0x8] sm:$0xf]
    %v581 = vld [vmem:[#allocation5 + $0xc] sm:$0xf]
    %v582 = vld [vmem:[#allocation5 + $0x10] sm:$0xf]
    %v583 = vld [vmem:[#allocation5 + $0x14] sm:$0xf]
    %v584 = vld [vmem:[#allocation5 + $0x18] sm:$0xf]
    %v585 = vld [vmem:[#allocation5 + $0x1c] sm:$0xf]
    %v586 = vld [vmem:[#allocation5 + $0x20] sm:$0xf]
    %v587 = vld [vmem:[#allocation5 + $0x24] sm:$0xf]
    %v588 = vld [vmem:[#allocation5 + $0x28] sm:$0xf]
    %v589 = vld [vmem:[#allocation5 + $0x2c] sm:$0xf]
    %v590 = vld [vmem:[#allocation5 + $0x30] sm:$0xf]
    %v591 = vld [vmem:[#allocation5 + $0x34] sm:$0xf]
    %v592 = vld [vmem:[#allocation5 + $0x38] sm:$0xf]
    %v593 = vld [vmem:[#allocation5 + $0x3c] sm:$0xf]
    %v594 = vpack.c.bf16 %v577, %v573
    %v595 = vld [vmem:[%s5] sm:$0x1]
    %v597 = vlaneseq
    %v598 = vshrl.u32 %v597, 7
    %v599 = vsub.s32 0, %v598
    %v600 = vrot.slane %v595, %v599
    %v618 = vunpack.c.l.b16 %v578
    %v619 = vunpack.c.l.b16 %v579
    %v620 = vunpack.c.l.b16 %v580
    %v621 = vunpack.c.l.b16 %v581
    %v622 = vunpack.c.l.b16 %v582
    %v623 = vunpack.c.l.b16 %v583
    %v624 = vunpack.c.l.b16 %v584
    %v625 = vunpack.c.l.b16 %v585
    %v626 = vunpack.c.l.b16 %v586
    %v627 = vunpack.c.l.b16 %v587
    %v628 = vunpack.c.l.b16 %v588
    %v629 = vunpack.c.l.b16 %v589
    %v630 = vunpack.c.l.b16 %v590
    %v631 = vunpack.c.l.b16 %v591
    %v632 = vunpack.c.l.b16 %v592
    %v633 = vunpack.c.l.b16 %v593
    %v634 = vpack.c.b16 %v619, %v618
    %v635 = vpack.c.b16 %v621, %v620
    %v636 = vpack.c.b16 %v623, %v622
    %v637 = vpack.c.b16 %v625, %v624
    %v638 = vpack.c.b16 %v627, %v626
    %v639 = vpack.c.b16 %v629, %v628
    %v640 = vpack.c.b16 %v631, %v630
    %v641 = vpack.c.b16 %v633, %v632
    %650 = vmatprep.subr.bf16.mxu0 0
    %651 = vmatpush1.bf16.msra.mxu0 %v634
    %652 = vmatprep.subr.bf16.mxu0 0
    %653 = vmatpush1.bf16.msra.mxu0 %v635
    %654 = vmatprep.subr.bf16.mxu0 0
    %655 = vmatpush1.bf16.msra.mxu0 %v636
    %656 = vmatprep.subr.bf16.mxu0 0
    %657 = vmatpush1.bf16.msra.mxu0 %v637
    %658 = vmatprep.subr.bf16.mxu0 0
    %659 = vmatpush1.bf16.msra.mxu0 %v638
    %660 = vmatprep.subr.bf16.mxu0 0
    %661 = vmatpush1.bf16.msra.mxu0 %v639
    %662 = vmatprep.subr.bf16.mxu0 0
    %663 = vmatpush1.bf16.msra.mxu0 %v640
    %664 = vmatprep.subr.bf16.mxu0 0
    %665 = vmatpush1.bf16.msra.mxu0 %v641
    %666 = vmatprep.subr.bf16.mxu0 0
    %667 = vmatpush1.bf16.msra.mxu0 0
    %668 = vmatprep.subr.bf16.mxu0 0
    %669 = vmatpush1.bf16.msra.mxu0 0
    %670 = vmatprep.subr.bf16.mxu0 0
    %671 = vmatpush1.bf16.msra.mxu0 0
    %672 = vmatprep.subr.bf16.mxu0 0
    %673 = vmatpush1.bf16.msra.mxu0 0
    %674 = vmatprep.subr.bf16.mxu0 0
    %675 = vmatpush1.bf16.msra.mxu0 0
    %676 = vmatprep.subr.bf16.mxu0 0
    %677 = vmatpush1.bf16.msra.mxu0 0
    %678 = vmatprep.subr.bf16.mxu0 0
    %679 = vmatpush1.bf16.msra.mxu0 0
    %680 = vmatprep.subr.bf16.mxu0 0
    %681 = vmatpush1.bf16.msra.mxu0 0
    %682 = vmatprep.mubr.bf16.mxu0 0
    %683 = vmatmul.mubr.bf16.gmra.mrb[0].mxu0 %v594
    %v684 = vpop.f32.mrb[0].mxu0
    %v685 = vadd.f32 %v600, %v684
    %v686 = vpop.f32.mrb[0].mxu0
    %v687 = vpop.f32.mrb[0].mxu0
    %v688 = vadd.f32 %v600, %v687
    %v689 = vpop.f32.mrb[0].mxu0
    %690 = vdwg.mxu0
    %v691 = vadd.f32 %v171, %v685
    %v692 = vadd.f32 %v172, %v688
    %v693 = vld [vmem:[%s6] sm:$0x1]
    %v694 = vld [vmem:[%s7] sm:$0x1]
    %695 = vadd.xlane.f32.xlu0 %v691
    %v696 = vpop.xlane.xlu0 %695
    %697 = vadd.xlane.f32.xlu0 %v692
    %v698 = vpop.xlane.xlu0 %697
    %v699 = vrcp.pop 128.0
    %v700 = vmul.f32 %v696, %v699
    %v701 = vmul.f32 %v698, %v699
    %v702 = vsub.f32 %v691, %v700
    %v703 = vsub.f32 %v692, %v701
    %v704 = vmul.f32 %v702, %v702
    %v705 = vmul.f32 %v703, %v703
    %706 = vadd.xlane.f32.xlu0 %v704
    %v707 = vpop.xlane.xlu0 %706
    %708 = vadd.xlane.f32.xlu0 %v705
    %v709 = vpop.xlane.xlu0 %708
    %v710 = vmul.f32 %v707, %v699
    %v711 = vmul.f32 %v709, %v699
    %v712 = vadd.f32 %v710, 1e-05
    %v713 = vadd.f32 %v711, 1e-05
    %v714 = vrsqrt.pop %v712
    %v715 = vrsqrt.pop %v713
    %v716 = vmul.f32 %v702, %v714
    %v717 = vmul.f32 %v703, %v715
    %v719 = vlaneseq
    %v720 = vshrl.u32 %v719, 7
    %v721 = vsub.s32 0, %v720
    %v722 = vrot.slane %v693, %v721
    %v724 = vmul.f32 %v716, %v722
    %v725 = vmul.f32 %v717, %v722
    %v727 = vlaneseq
    %v728 = vshrl.u32 %v727, 7
    %v729 = vsub.s32 0, %v728
    %v730 = vrot.slane %v694, %v729
    %v732 = vadd.f32 %v724, %v730
    %v733 = vadd.f32 %v725, %v730
    %v734 = vld [vmem:[#allocation7] sm:$0xff]
    %v735 = vld [vmem:[#allocation7 + $0x8] sm:$0xff]
    %v736 = vld [vmem:[#allocation7 + $0x10] sm:$0xff]
    %v737 = vld [vmem:[#allocation7 + $0x18] sm:$0xff]
    %v738 = vld [vmem:[#allocation7 + $0x20] sm:$0xff]
    %v739 = vld [vmem:[#allocation7 + $0x28] sm:$0xff]
    %v740 = vld [vmem:[#allocation7 + $0x30] sm:$0xff]
    %v741 = vld [vmem:[#allocation7 + $0x38] sm:$0xff]
    %v742 = vld [vmem:[#allocation7 + $0x40] sm:$0xff]
    %v743 = vld [vmem:[#allocation7 + $0x48] sm:$0xff]
    %v744 = vld [vmem:[#allocation7 + $0x50] sm:$0xff]
    %v745 = vld [vmem:[#allocation7 + $0x58] sm:$0xff]
    %v746 = vld [vmem:[#allocation7 + $0x60] sm:$0xff]
    %v747 = vld [vmem:[#allocation7 + $0x68] sm:$0xff]
    %v748 = vld [vmem:[#allocation7 + $0x70] sm:$0xff]
    %v749 = vld [vmem:[#allocation7 + $0x78] sm:$0xff]
    %v750 = vld [vmem:[#allocation7 + $0x80] sm:$0xff]
    %v751 = vld [vmem:[#allocation7 + $0x88] sm:$0xff]
    %v752 = vld [vmem:[#allocation7 + $0x90] sm:$0xff]
    %v753 = vld [vmem:[#allocation7 + $0x98] sm:$0xff]
    %v754 = vld [vmem:[#allocation7 + $0xa0] sm:$0xff]
    %v755 = vld [vmem:[#allocation7 + $0xa8] sm:$0xff]
    %v756 = vld [vmem:[#allocation7 + $0xb0] sm:$0xff]
    %v757 = vld [vmem:[#allocation7 + $0xb8] sm:$0xff]
    %v758 = vld [vmem:[#allocation7 + $0xc0] sm:$0xff]
    %v759 = vld [vmem:[#allocation7 + $0xc8] sm:$0xff]
    %v760 = vld [vmem:[#allocation7 + $0xd0] sm:$0xff]
    %v761 = vld [vmem:[#allocation7 + $0xd8] sm:$0xff]
    %v762 = vld [vmem:[#allocation7 + $0xe0] sm:$0xff]
    %v763 = vld [vmem:[#allocation7 + $0xe8] sm:$0xff]
    %v764 = vld [vmem:[#allocation7 + $0xf0] sm:$0xff]
    %v765 = vld [vmem:[#allocation7 + $0xf8] sm:$0xff]
    %v766 = vld [vmem:[#allocation7 + $0x100] sm:$0xff]
    %v767 = vld [vmem:[#allocation7 + $0x108] sm:$0xff]
    %v768 = vld [vmem:[#allocation7 + $0x110] sm:$0xff]
    %v769 = vld [vmem:[#allocation7 + $0x118] sm:$0xff]
    %v770 = vld [vmem:[#allocation7 + $0x120] sm:$0xff]
    %v771 = vld [vmem:[#allocation7 + $0x128] sm:$0xff]
    %v772 = vld [vmem:[#allocation7 + $0x130] sm:$0xff]
    %v773 = vld [vmem:[#allocation7 + $0x138] sm:$0xff]
    %v774 = vld [vmem:[#allocation7 + $0x140] sm:$0xff]
    %v775 = vld [vmem:[#allocation7 + $0x148] sm:$0xff]
    %v776 = vld [vmem:[#allocation7 + $0x150] sm:$0xff]
    %v777 = vld [vmem:[#allocation7 + $0x158] sm:$0xff]
    %v778 = vld [vmem:[#allocation7 + $0x160] sm:$0xff]
    %v779 = vld [vmem:[#allocation7 + $0x168] sm:$0xff]
    %v780 = vld [vmem:[#allocation7 + $0x170] sm:$0xff]
    %v781 = vld [vmem:[#allocation7 + $0x178] sm:$0xff]
    %v782 = vld [vmem:[#allocation7 + $0x180] sm:$0xff]
    %v783 = vld [vmem:[#allocation7 + $0x188] sm:$0xff]
    %v784 = vld [vmem:[#allocation7 + $0x190] sm:$0xff]
    %v785 = vld [vmem:[#allocation7 + $0x198] sm:$0xff]
    %v786 = vld [vmem:[#allocation7 + $0x1a0] sm:$0xff]
    %v787 = vld [vmem:[#allocation7 + $0x1a8] sm:$0xff]
    %v788 = vld [vmem:[#allocation7 + $0x1b0] sm:$0xff]
    %v789 = vld [vmem:[#allocation7 + $0x1b8] sm:$0xff]
    %v790 = vld [vmem:[#allocation7 + $0x1c0] sm:$0xff]
    %v791 = vld [vmem:[#allocation7 + $0x1c8] sm:$0xff]
    %v792 = vld [vmem:[#allocation7 + $0x1d0] sm:$0xff]
    %v793 = vld [vmem:[#allocation7 + $0x1d8] sm:$0xff]
    %v794 = vld [vmem:[#allocation7 + $0x1e0] sm:$0xff]
    %v795 = vld [vmem:[#allocation7 + $0x1e8] sm:$0xff]
    %v796 = vld [vmem:[#allocation7 + $0x1f0] sm:$0xff]
    %v797 = vld [vmem:[#allocation7 + $0x1f8] sm:$0xff]
    %v798 = vld [vmem:[#allocation7 + $0x200] sm:$0xff]
    %v799 = vld [vmem:[#allocation7 + $0x208] sm:$0xff]
    %v800 = vld [vmem:[#allocation7 + $0x210] sm:$0xff]
    %v801 = vld [vmem:[#allocation7 + $0x218] sm:$0xff]
    %v802 = vld [vmem:[#allocation7 + $0x220] sm:$0xff]
    %v803 = vld [vmem:[#allocation7 + $0x228] sm:$0xff]
    %v804 = vld [vmem:[#allocation7 + $0x230] sm:$0xff]
    %v805 = vld [vmem:[#allocation7 + $0x238] sm:$0xff]
    %v806 = vld [vmem:[#allocation7 + $0x240] sm:$0xff]
    %v807 = vld [vmem:[#allocation7 + $0x248] sm:$0xff]
    %v808 = vld [vmem:[#allocation7 + $0x250] sm:$0xff]
    %v809 = vld [vmem:[#allocation7 + $0x258] sm:$0xff]
    %v810 = vld [vmem:[#allocation7 + $0x260] sm:$0xff]
    %v811 = vld [vmem:[#allocation7 + $0x268] sm:$0xff]
    %v812 = vld [vmem:[#allocation7 + $0x270] sm:$0xff]
    %v813 = vld [vmem:[#allocation7 + $0x278] sm:$0xff]
    %v814 = vld [vmem:[#allocation7 + $0x280] sm:$0xff]
    %v815 = vld [vmem:[#allocation7 + $0x288] sm:$0xff]
    %v816 = vld [vmem:[#allocation7 + $0x290] sm:$0xff]
    %v817 = vld [vmem:[#allocation7 + $0x298] sm:$0xff]
    %v818 = vld [vmem:[#allocation7 + $0x2a0] sm:$0xff]
    %v819 = vld [vmem:[#allocation7 + $0x2a8] sm:$0xff]
    %v820 = vld [vmem:[#allocation7 + $0x2b0] sm:$0xff]
    %v821 = vld [vmem:[#allocation7 + $0x2b8] sm:$0xff]
    %v822 = vld [vmem:[#allocation7 + $0x2c0] sm:$0xff]
    %v823 = vld [vmem:[#allocation7 + $0x2c8] sm:$0xff]
    %v824 = vld [vmem:[#allocation7 + $0x2d0] sm:$0xff]
    %v825 = vld [vmem:[#allocation7 + $0x2d8] sm:$0xff]
    %v826 = vld [vmem:[#allocation7 + $0x2e0] sm:$0xff]
    %v827 = vld [vmem:[#allocation7 + $0x2e8] sm:$0xff]
    %v828 = vld [vmem:[#allocation7 + $0x2f0] sm:$0xff]
    %v829 = vld [vmem:[#allocation7 + $0x2f8] sm:$0xff]
    %v830 = vld [vmem:[#allocation7 + $0x300] sm:$0xff]
    %v831 = vld [vmem:[#allocation7 + $0x308] sm:$0xff]
    %v832 = vld [vmem:[#allocation7 + $0x310] sm:$0xff]
    %v833 = vld [vmem:[#allocation7 + $0x318] sm:$0xff]
    %v834 = vld [vmem:[#allocation7 + $0x320] sm:$0xff]
    %v835 = vld [vmem:[#allocation7 + $0x328] sm:$0xff]
    %v836 = vld [vmem:[#allocation7 + $0x330] sm:$0xff]
    %v837 = vld [vmem:[#allocation7 + $0x338] sm:$0xff]
    %v838 = vld [vmem:[#allocation7 + $0x340] sm:$0xff]
    %v839 = vld [vmem:[#allocation7 + $0x348] sm:$0xff]
    %v840 = vld [vmem:[#allocation7 + $0x350] sm:$0xff]
    %v841 = vld [vmem:[#allocation7 + $0x358] sm:$0xff]
    %v842 = vld [vmem:[#allocation7 + $0x360] sm:$0xff]
    %v843 = vld [vmem:[#allocation7 + $0x368] sm:$0xff]
    %v844 = vld [vmem:[#allocation7 + $0x370] sm:$0xff]
    %v845 = vld [vmem:[#allocation7 + $0x378] sm:$0xff]
    %v846 = vld [vmem:[#allocation7 + $0x380] sm:$0xff]
    %v847 = vld [vmem:[#allocation7 + $0x388] sm:$0xff]
    %v848 = vld [vmem:[#allocation7 + $0x390] sm:$0xff]
    %v849 = vld [vmem:[#allocation7 + $0x398] sm:$0xff]
    %v850 = vld [vmem:[#allocation7 + $0x3a0] sm:$0xff]
    %v851 = vld [vmem:[#allocation7 + $0x3a8] sm:$0xff]
    %v852 = vld [vmem:[#allocation7 + $0x3b0] sm:$0xff]
    %v853 = vld [vmem:[#allocation7 + $0x3b8] sm:$0xff]
    %v854 = vld [vmem:[#allocation7 + $0x3c0] sm:$0xff]
    %v855 = vld [vmem:[#allocation7 + $0x3c8] sm:$0xff]
    %v856 = vld [vmem:[#allocation7 + $0x3d0] sm:$0xff]
    %v857 = vld [vmem:[#allocation7 + $0x3d8] sm:$0xff]
    %v858 = vld [vmem:[#allocation7 + $0x3e0] sm:$0xff]
    %v859 = vld [vmem:[#allocation7 + $0x3e8] sm:$0xff]
    %v860 = vld [vmem:[#allocation7 + $0x3f0] sm:$0xff]
    %v861 = vld [vmem:[#allocation7 + $0x3f8] sm:$0xff]
    %v862 = vpack.c.bf16 %v733, %v732
    %v863 = vld [vmem:[%s9] sm:$0xff]
    %v864 = vld [vmem:[%s9 + $0x8] sm:$0xff]
    %v867 = vlaneseq
    %v868 = vshrl.u32 %v867, 7
    %v869 = vsub.s32 0, %v868
    %v870 = vrot.slane %v863, %v869
    %v871 = vlaneseq
    %v872 = vshrl.u32 %v871, 7
    %v873 = vsub.s32 1, %v872
    %v874 = vrot.slane %v863, %v873
    %v875 = vlaneseq
    %v876 = vshrl.u32 %v875, 7
    %v877 = vsub.s32 2, %v876
    %v878 = vrot.slane %v863, %v877
    %v879 = vlaneseq
    %v880 = vshrl.u32 %v879, 7
    %v881 = vsub.s32 3, %v880
    %v882 = vrot.slane %v863, %v881
    %v883 = vlaneseq
    %v884 = vshrl.u32 %v883, 7
    %v885 = vsub.s32 4, %v884
    %v886 = vrot.slane %v863, %v885
    %v887 = vlaneseq
    %v888 = vshrl.u32 %v887, 7
    %v889 = vsub.s32 5, %v888
    %v890 = vrot.slane %v863, %v889
    %v891 = vlaneseq
    %v892 = vshrl.u32 %v891, 7
    %v893 = vsub.s32 6, %v892
    %v894 = vrot.slane %v863, %v893
    %v895 = vlaneseq
    %v896 = vshrl.u32 %v895, 7
    %v897 = vsub.s32 7, %v896
    %v898 = vrot.slane %v863, %v897
    %v899 = vlaneseq
    %v900 = vshrl.u32 %v899, 7
    %v901 = vsub.s32 0, %v900
    %v902 = vrot.slane %v864, %v901
    %v903 = vlaneseq
    %v904 = vshrl.u32 %v903, 7
    %v905 = vsub.s32 1, %v904
    %v906 = vrot.slane %v864, %v905
    %v907 = vlaneseq
    %v908 = vshrl.u32 %v907, 7
    %v909 = vsub.s32 2, %v908
    %v910 = vrot.slane %v864, %v909
    %v911 = vlaneseq
    %v912 = vshrl.u32 %v911, 7
    %v913 = vsub.s32 3, %v912
    %v914 = vrot.slane %v864, %v913
    %v915 = vlaneseq
    %v916 = vshrl.u32 %v915, 7
    %v917 = vsub.s32 4, %v916
    %v918 = vrot.slane %v864, %v917
    %v919 = vlaneseq
    %v920 = vshrl.u32 %v919, 7
    %v921 = vsub.s32 5, %v920
    %v922 = vrot.slane %v864, %v921
    %v923 = vlaneseq
    %v924 = vshrl.u32 %v923, 7
    %v925 = vsub.s32 6, %v924
    %v926 = vrot.slane %v864, %v925
    %v927 = vlaneseq
    %v928 = vshrl.u32 %v927, 7
    %v929 = vsub.s32 7, %v928
    %v930 = vrot.slane %v864, %v929
    %v1075 = vunpack.c.l.b16 %v734
    %v1076 = vunpack.c.h.b16 %v734
    %v1077 = vunpack.c.l.b16 %v735
    %v1078 = vunpack.c.h.b16 %v735
    %v1079 = vunpack.c.l.b16 %v736
    %v1080 = vunpack.c.h.b16 %v736
    %v1081 = vunpack.c.l.b16 %v737
    %v1082 = vunpack.c.h.b16 %v737
    %v1083 = vunpack.c.l.b16 %v738
    %v1084 = vunpack.c.h.b16 %v738
    %v1085 = vunpack.c.l.b16 %v739
    %v1086 = vunpack.c.h.b16 %v739
    %v1087 = vunpack.c.l.b16 %v740
    %v1088 = vunpack.c.h.b16 %v740
    %v1089 = vunpack.c.l.b16 %v741
    %v1090 = vunpack.c.h.b16 %v741
    %v1091 = vunpack.c.l.b16 %v742
    %v1092 = vunpack.c.h.b16 %v742
    %v1093 = vunpack.c.l.b16 %v743
    %v1094 = vunpack.c.h.b16 %v743
    %v1095 = vunpack.c.l.b16 %v744
    %v1096 = vunpack.c.h.b16 %v744
    %v1097 = vunpack.c.l.b16 %v745
    %v1098 = vunpack.c.h.b16 %v745
    %v1099 = vunpack.c.l.b16 %v746
    %v1100 = vunpack.c.h.b16 %v746
    %v1101 = vunpack.c.l.b16 %v747
    %v1102 = vunpack.c.h.b16 %v747
    %v1103 = vunpack.c.l.b16 %v748
    %v1104 = vunpack.c.h.b16 %v748
    %v1105 = vunpack.c.l.b16 %v749
    %v1106 = vunpack.c.h.b16 %v749
    %v1107 = vunpack.c.l.b16 %v750
    %v1108 = vunpack.c.h.b16 %v750
    %v1109 = vunpack.c.l.b16 %v751
    %v1110 = vunpack.c.h.b16 %v751
    %v1111 = vunpack.c.l.b16 %v752
    %v1112 = vunpack.c.h.b16 %v752
    %v1113 = vunpack.c.l.b16 %v753
    %v1114 = vunpack.c.h.b16 %v753
    %v1115 = vunpack.c.l.b16 %v754
    %v1116 = vunpack.c.h.b16 %v754
    %v1117 = vunpack.c.l.b16 %v755
    %v1118 = vunpack.c.h.b16 %v755
    %v1119 = vunpack.c.l.b16 %v756
    %v1120 = vunpack.c.h.b16 %v756
    %v1121 = vunpack.c.l.b16 %v757
    %v1122 = vunpack.c.h.b16 %v757
    %v1123 = vunpack.c.l.b16 %v758
    %v1124 = vunpack.c.h.b16 %v758
    %v1125 = vunpack.c.l.b16 %v759
    %v1126 = vunpack.c.h.b16 %v759
    %v1127 = vunpack.c.l.b16 %v760
    %v1128 = vunpack.c.h.b16 %v760
    %v1129 = vunpack.c.l.b16 %v761
    %v1130 = vunpack.c.h.b16 %v761
    %v1131 = vunpack.c.l.b16 %v762
    %v1132 = vunpack.c.h.b16 %v762
    %v1133 = vunpack.c.l.b16 %v763
    %v1134 = vunpack.c.h.b16 %v763
    %v1135 = vunpack.c.l.b16 %v764
    %v1136 = vunpack.c.h.b16 %v764
    %v1137 = vunpack.c.l.b16 %v765
    %v1138 = vunpack.c.h.b16 %v765
    %v1139 = vunpack.c.l.b16 %v766
    %v1140 = vunpack.c.h.b16 %v766
    %v1141 = vunpack.c.l.b16 %v767
    %v1142 = vunpack.c.h.b16 %v767
    %v1143 = vunpack.c.l.b16 %v768
    %v1144 = vunpack.c.h.b16 %v768
    %v1145 = vunpack.c.l.b16 %v769
    %v1146 = vunpack.c.h.b16 %v769
    %v1147 = vunpack.c.l.b16 %v770
    %v1148 = vunpack.c.h.b16 %v770
    %v1149 = vunpack.c.l.b16 %v771
    %v1150 = vunpack.c.h.b16 %v771
    %v1151 = vunpack.c.l.b16 %v772
    %v1152 = vunpack.c.h.b16 %v772
    %v1153 = vunpack.c.l.b16 %v773
    %v1154 = vunpack.c.h.b16 %v773
    %v1155 = vunpack.c.l.b16 %v774
    %v1156 = vunpack.c.h.b16 %v774
    %v1157 = vunpack.c.l.b16 %v775
    %v1158 = vunpack.c.h.b16 %v775
    %v1159 = vunpack.c.l.b16 %v776
    %v1160 = vunpack.c.h.b16 %v776
    %v1161 = vunpack.c.l.b16 %v777
    %v1162 = vunpack.c.h.b16 %v777
    %v1163 = vunpack.c.l.b16 %v778
    %v1164 = vunpack.c.h.b16 %v778
    %v1165 = vunpack.c.l.b16 %v779
    %v1166 = vunpack.c.h.b16 %v779
    %v1167 = vunpack.c.l.b16 %v780
    %v1168 = vunpack.c.h.b16 %v780
    %v1169 = vunpack.c.l.b16 %v781
    %v1170 = vunpack.c.h.b16 %v781
    %v1171 = vunpack.c.l.b16 %v782
    %v1172 = vunpack.c.h.b16 %v782
    %v1173 = vunpack.c.l.b16 %v783
    %v1174 = vunpack.c.h.b16 %v783
    %v1175 = vunpack.c.l.b16 %v784
    %v1176 = vunpack.c.h.b16 %v784
    %v1177 = vunpack.c.l.b16 %v785
    %v1178 = vunpack.c.h.b16 %v785
    %v1179 = vunpack.c.l.b16 %v786
    %v1180 = vunpack.c.h.b16 %v786
    %v1181 = vunpack.c.l.b16 %v787
    %v1182 = vunpack.c.h.b16 %v787
    %v1183 = vunpack.c.l.b16 %v788
    %v1184 = vunpack.c.h.b16 %v788
    %v1185 = vunpack.c.l.b16 %v789
    %v1186 = vunpack.c.h.b16 %v789
    %v1187 = vunpack.c.l.b16 %v790
    %v1188 = vunpack.c.h.b16 %v790
    %v1189 = vunpack.c.l.b16 %v791
    %v1190 = vunpack.c.h.b16 %v791
    %v1191 = vunpack.c.l.b16 %v792
    %v1192 = vunpack.c.h.b16 %v792
    %v1193 = vunpack.c.l.b16 %v793
    %v1194 = vunpack.c.h.b16 %v793
    %v1195 = vunpack.c.l.b16 %v794
    %v1196 = vunpack.c.h.b16 %v794
    %v1197 = vunpack.c.l.b16 %v795
    %v1198 = vunpack.c.h.b16 %v795
    %v1199 = vunpack.c.l.b16 %v796
    %v1200 = vunpack.c.h.b16 %v796
    %v1201 = vunpack.c.l.b16 %v797
    %v1202 = vunpack.c.h.b16 %v797
    %v1203 = vunpack.c.l.b16 %v798
    %v1204 = vunpack.c.h.b16 %v798
    %v1205 = vunpack.c.l.b16 %v799
    %v1206 = vunpack.c.h.b16 %v799
    %v1207 = vunpack.c.l.b16 %v800
    %v1208 = vunpack.c.h.b16 %v800
    %v1209 = vunpack.c.l.b16 %v801
    %v1210 = vunpack.c.h.b16 %v801
    %v1211 = vunpack.c.l.b16 %v802
    %v1212 = vunpack.c.h.b16 %v802
    %v1213 = vunpack.c.l.b16 %v803
    %v1214 = vunpack.c.h.b16 %v803
    %v1215 = vunpack.c.l.b16 %v804
    %v1216 = vunpack.c.h.b16 %v804
    %v1217 = vunpack.c.l.b16 %v805
    %v1218 = vunpack.c.h.b16 %v805
    %v1219 = vunpack.c.l.b16 %v806
    %v1220 = vunpack.c.h.b16 %v806
    %v1221 = vunpack.c.l.b16 %v807
    %v1222 = vunpack.c.h.b16 %v807
    %v1223 = vunpack.c.l.b16 %v808
    %v1224 = vunpack.c.h.b16 %v808
    %v1225 = vunpack.c.l.b16 %v809
    %v1226 = vunpack.c.h.b16 %v809
    %v1227 = vunpack.c.l.b16 %v810
    %v1228 = vunpack.c.h.b16 %v810
    %v1229 = vunpack.c.l.b16 %v811
    %v1230 = vunpack.c.h.b16 %v811
    %v1231 = vunpack.c.l.b16 %v812
    %v1232 = vunpack.c.h.b16 %v812
    %v1233 = vunpack.c.l.b16 %v813
    %v1234 = vunpack.c.h.b16 %v813
    %v1235 = vunpack.c.l.b16 %v814
    %v1236 = vunpack.c.h.b16 %v814
    %v1237 = vunpack.c.l.b16 %v815
    %v1238 = vunpack.c.h.b16 %v815
    %v1239 = vunpack.c.l.b16 %v816
    %v1240 = vunpack.c.h.b16 %v816
    %v1241 = vunpack.c.l.b16 %v817
    %v1242 = vunpack.c.h.b16 %v817
    %v1243 = vunpack.c.l.b16 %v818
    %v1244 = vunpack.c.h.b16 %v818
    %v1245 = vunpack.c.l.b16 %v819
    %v1246 = vunpack.c.h.b16 %v819
    %v1247 = vunpack.c.l.b16 %v820
    %v1248 = vunpack.c.h.b16 %v820
    %v1249 = vunpack.c.l.b16 %v821
    %v1250 = vunpack.c.h.b16 %v821
    %v1251 = vunpack.c.l.b16 %v822
    %v1252 = vunpack.c.h.b16 %v822
    %v1253 = vunpack.c.l.b16 %v823
    %v1254 = vunpack.c.h.b16 %v823
    %v1255 = vunpack.c.l.b16 %v824
    %v1256 = vunpack.c.h.b16 %v824
    %v1257 = vunpack.c.l.b16 %v825
    %v1258 = vunpack.c.h.b16 %v825
    %v1259 = vunpack.c.l.b16 %v826
    %v1260 = vunpack.c.h.b16 %v826
    %v1261 = vunpack.c.l.b16 %v827
    %v1262 = vunpack.c.h.b16 %v827
    %v1263 = vunpack.c.l.b16 %v828
    %v1264 = vunpack.c.h.b16 %v828
    %v1265 = vunpack.c.l.b16 %v829
    %v1266 = vunpack.c.h.b16 %v829
    %v1267 = vunpack.c.l.b16 %v830
    %v1268 = vunpack.c.h.b16 %v830
    %v1269 = vunpack.c.l.b16 %v831
    %v1270 = vunpack.c.h.b16 %v831
    %v1271 = vunpack.c.l.b16 %v832
    %v1272 = vunpack.c.h.b16 %v832
    %v1273 = vunpack.c.l.b16 %v833
    %v1274 = vunpack.c.h.b16 %v833
    %v1275 = vunpack.c.l.b16 %v834
    %v1276 = vunpack.c.h.b16 %v834
    %v1277 = vunpack.c.l.b16 %v835
    %v1278 = vunpack.c.h.b16 %v835
    %v1279 = vunpack.c.l.b16 %v836
    %v1280 = vunpack.c.h.b16 %v836
    %v1281 = vunpack.c.l.b16 %v837
    %v1282 = vunpack.c.h.b16 %v837
    %v1283 = vunpack.c.l.b16 %v838
    %v1284 = vunpack.c.h.b16 %v838
    %v1285 = vunpack.c.l.b16 %v839
    %v1286 = vunpack.c.h.b16 %v839
    %v1287 = vunpack.c.l.b16 %v840
    %v1288 = vunpack.c.h.b16 %v840
    %v1289 = vunpack.c.l.b16 %v841
    %v1290 = vunpack.c.h.b16 %v841
    %v1291 = vunpack.c.l.b16 %v842
    %v1292 = vunpack.c.h.b16 %v842
    %v1293 = vunpack.c.l.b16 %v843
    %v1294 = vunpack.c.h.b16 %v843
    %v1295 = vunpack.c.l.b16 %v844
    %v1296 = vunpack.c.h.b16 %v844
    %v1297 = vunpack.c.l.b16 %v845
    %v1298 = vunpack.c.h.b16 %v845
    %v1299 = vunpack.c.l.b16 %v846
    %v1300 = vunpack.c.h.b16 %v846
    %v1301 = vunpack.c.l.b16 %v847
    %v1302 = vunpack.c.h.b16 %v847
    %v1303 = vunpack.c.l.b16 %v848
    %v1304 = vunpack.c.h.b16 %v848
    %v1305 = vunpack.c.l.b16 %v849
    %v1306 = vunpack.c.h.b16 %v849
    %v1307 = vunpack.c.l.b16 %v850
    %v1308 = vunpack.c.h.b16 %v850
    %v1309 = vunpack.c.l.b16 %v851
    %v1310 = vunpack.c.h.b16 %v851
    %v1311 = vunpack.c.l.b16 %v852
    %v1312 = vunpack.c.h.b16 %v852
    %v1313 = vunpack.c.l.b16 %v853
    %v1314 = vunpack.c.h.b16 %v853
    %v1315 = vunpack.c.l.b16 %v854
    %v1316 = vunpack.c.h.b16 %v854
    %v1317 = vunpack.c.l.b16 %v855
    %v1318 = vunpack.c.h.b16 %v855
    %v1319 = vunpack.c.l.b16 %v856
    %v1320 = vunpack.c.h.b16 %v856
    %v1321 = vunpack.c.l.b16 %v857
    %v1322 = vunpack.c.h.b16 %v857
    %v1323 = vunpack.c.l.b16 %v858
    %v1324 = vunpack.c.h.b16 %v858
    %v1325 = vunpack.c.l.b16 %v859
    %v1326 = vunpack.c.h.b16 %v859
    %v1327 = vunpack.c.l.b16 %v860
    %v1328 = vunpack.c.h.b16 %v860
    %v1329 = vunpack.c.l.b16 %v861
    %v1330 = vunpack.c.h.b16 %v861
    %v1331 = vpack.c.b16 %v1091, %v1075
    %v1332 = vpack.c.b16 %v1092, %v1076
    %v1333 = vpack.c.b16 %v1093, %v1077
    %v1334 = vpack.c.b16 %v1094, %v1078
    %v1335 = vpack.c.b16 %v1095, %v1079
    %v1336 = vpack.c.b16 %v1096, %v1080
    %v1337 = vpack.c.b16 %v1097, %v1081
    %v1338 = vpack.c.b16 %v1098, %v1082
    %v1339 = vpack.c.b16 %v1099, %v1083
    %v1340 = vpack.c.b16 %v1100, %v1084
    %v1341 = vpack.c.b16 %v1101, %v1085
    %v1342 = vpack.c.b16 %v1102, %v1086
    %v1343 = vpack.c.b16 %v1103, %v1087
    %v1344 = vpack.c.b16 %v1104, %v1088
    %v1345 = vpack.c.b16 %v1105, %v1089
    %v1346 = vpack.c.b16 %v1106, %v1090
    %v1347 = vpack.c.b16 %v1123, %v1107
    %v1348 = vpack.c.b16 %v1124, %v1108
    %v1349 = vpack.c.b16 %v1125, %v1109
    %v1350 = vpack.c.b16 %v1126, %v1110
    %v1351 = vpack.c.b16 %v1127, %v1111
    %v1352 = vpack.c.b16 %v1128, %v1112
    %v1353 = vpack.c.b16 %v1129, %v1113
    %v1354 = vpack.c.b16 %v1130, %v1114
    %v1355 = vpack.c.b16 %v1131, %v1115
    %v1356 = vpack.c.b16 %v1132, %v1116
    %v1357 = vpack.c.b16 %v1133, %v1117
    %v1358 = vpack.c.b16 %v1134, %v1118
    %v1359 = vpack.c.b16 %v1135, %v1119
    %v1360 = vpack.c.b16 %v1136, %v1120
    %v1361 = vpack.c.b16 %v1137, %v1121
    %v1362 = vpack.c.b16 %v1138, %v1122
    %v1363 = vpack.c.b16 %v1155, %v1139
    %v1364 = vpack.c.b16 %v1156, %v1140
    %v1365 = vpack.c.b16 %v1157, %v1141
    %v1366 = vpack.c.b16 %v1158, %v1142
    %v1367 = vpack.c.b16 %v1159, %v1143
    %v1368 = vpack.c.b16 %v1160, %v1144
    %v1369 = vpack.c.b16 %v1161, %v1145
    %v1370 = vpack.c.b16 %v1162, %v1146
    %v1371 = vpack.c.b16 %v1163, %v1147
    %v1372 = vpack.c.b16 %v1164, %v1148
    %v1373 = vpack.c.b16 %v1165, %v1149
    %v1374 = vpack.c.b16 %v1166, %v1150
    %v1375 = vpack.c.b16 %v1167, %v1151
    %v1376 = vpack.c.b16 %v1168, %v1152
    %v1377 = vpack.c.b16 %v1169, %v1153
    %v1378 = vpack.c.b16 %v1170, %v1154
    %v1379 = vpack.c.b16 %v1187, %v1171
    %v1380 = vpack.c.b16 %v1188, %v1172
    %v1381 = vpack.c.b16 %v1189, %v1173
    %v1382 = vpack.c.b16 %v1190, %v1174
    %v1383 = vpack.c.b16 %v1191, %v1175
    %v1384 = vpack.c.b16 %v1192, %v1176
    %v1385 = vpack.c.b16 %v1193, %v1177
    %v1386 = vpack.c.b16 %v1194, %v1178
    %v1387 = vpack.c.b16 %v1195, %v1179
    %v1388 = vpack.c.b16 %v1196, %v1180
    %v1389 = vpack.c.b16 %v1197, %v1181
    %v1390 = vpack.c.b16 %v1198, %v1182
    %v1391 = vpack.c.b16 %v1199, %v1183
    %v1392 = vpack.c.b16 %v1200, %v1184
    %v1393 = vpack.c.b16 %v1201, %v1185
    %v1394 = vpack.c.b16 %v1202, %v1186
    %v1395 = vpack.c.b16 %v1219, %v1203
    %v1396 = vpack.c.b16 %v1220, %v1204
    %v1397 = vpack.c.b16 %v1221, %v1205
    %v1398 = vpack.c.b16 %v1222, %v1206
    %v1399 = vpack.c.b16 %v1223, %v1207
    %v1400 = vpack.c.b16 %v1224, %v1208
    %v1401 = vpack.c.b16 %v1225, %v1209
    %v1402 = vpack.c.b16 %v1226, %v1210
    %v1403 = vpack.c.b16 %v1227, %v1211
    %v1404 = vpack.c.b16 %v1228, %v1212
    %v1405 = vpack.c.b16 %v1229, %v1213
    %v1406 = vpack.c.b16 %v1230, %v1214
    %v1407 = vpack.c.b16 %v1231, %v1215
    %v1408 = vpack.c.b16 %v1232, %v1216
    %v1409 = vpack.c.b16 %v1233, %v1217
    %v1410 = vpack.c.b16 %v1234, %v1218
    %v1411 = vpack.c.b16 %v1251, %v1235
    %v1412 = vpack.c.b16 %v1252, %v1236
    %v1413 = vpack.c.b16 %v1253, %v1237
    %v1414 = vpack.c.b16 %v1254, %v1238
    %v1415 = vpack.c.b16 %v1255, %v1239
    %v1416 = vpack.c.b16 %v1256, %v1240
    %v1417 = vpack.c.b16 %v1257, %v1241
    %v1418 = vpack.c.b16 %v1258, %v1242
    %v1419 = vpack.c.b16 %v1259, %v1243
    %v1420 = vpack.c.b16 %v1260, %v1244
    %v1421 = vpack.c.b16 %v1261, %v1245
    %v1422 = vpack.c.b16 %v1262, %v1246
    %v1423 = vpack.c.b16 %v1263, %v1247
    %v1424 = vpack.c.b16 %v1264, %v1248
    %v1425 = vpack.c.b16 %v1265, %v1249
    %v1426 = vpack.c.b16 %v1266, %v1250
    %v1427 = vpack.c.b16 %v1283, %v1267
    %v1428 = vpack.c.b16 %v1284, %v1268
    %v1429 = vpack.c.b16 %v1285, %v1269
    %v1430 = vpack.c.b16 %v1286, %v1270
    %v1431 = vpack.c.b16 %v1287, %v1271
    %v1432 = vpack.c.b16 %v1288, %v1272
    %v1433 = vpack.c.b16 %v1289, %v1273
    %v1434 = vpack.c.b16 %v1290, %v1274
    %v1435 = vpack.c.b16 %v1291, %v1275
    %v1436 = vpack.c.b16 %v1292, %v1276
    %v1437 = vpack.c.b16 %v1293, %v1277
    %v1438 = vpack.c.b16 %v1294, %v1278
    %v1439 = vpack.c.b16 %v1295, %v1279
    %v1440 = vpack.c.b16 %v1296, %v1280
    %v1441 = vpack.c.b16 %v1297, %v1281
    %v1442 = vpack.c.b16 %v1298, %v1282
    %v1443 = vpack.c.b16 %v1315, %v1299
    %v1444 = vpack.c.b16 %v1316, %v1300
    %v1445 = vpack.c.b16 %v1317, %v1301
    %v1446 = vpack.c.b16 %v1318, %v1302
    %v1447 = vpack.c.b16 %v1319, %v1303
    %v1448 = vpack.c.b16 %v1320, %v1304
    %v1449 = vpack.c.b16 %v1321, %v1305
    %v1450 = vpack.c.b16 %v1322, %v1306
    %v1451 = vpack.c.b16 %v1323, %v1307
    %v1452 = vpack.c.b16 %v1324, %v1308
    %v1453 = vpack.c.b16 %v1325, %v1309
    %v1454 = vpack.c.b16 %v1326, %v1310
    %v1455 = vpack.c.b16 %v1327, %v1311
    %v1456 = vpack.c.b16 %v1328, %v1312
    %v1457 = vpack.c.b16 %v1329, %v1313
    %v1458 = vpack.c.b16 %v1330, %v1314
    %1587 = vmatprep.subr.bf16.mxu0 %v1332
    %1588 = vmatpush1.bf16.msra.mxu0 %v1331
    %1589 = vmatprep.subr.bf16.mxu0 %v1348
    %1590 = vmatpush1.bf16.msra.mxu0 %v1347
    %1591 = vmatprep.subr.bf16.mxu0 %v1364
    %1592 = vmatpush1.bf16.msra.mxu0 %v1363
    %1593 = vmatprep.subr.bf16.mxu0 %v1380
    %1594 = vmatpush1.bf16.msra.mxu0 %v1379
    %1595 = vmatprep.subr.bf16.mxu0 %v1396
    %1596 = vmatpush1.bf16.msra.mxu0 %v1395
    %1597 = vmatprep.subr.bf16.mxu0 %v1412
    %1598 = vmatpush1.bf16.msra.mxu0 %v1411
    %1599 = vmatprep.subr.bf16.mxu0 %v1428
    %1600 = vmatpush1.bf16.msra.mxu0 %v1427
    %1601 = vmatprep.subr.bf16.mxu0 %v1444
    %1602 = vmatpush1.bf16.msra.mxu0 %v1443
    %1603 = vmatprep.subr.bf16.mxu0 0
    %1604 = vmatpush1.bf16.msra.mxu0 0
    %1605 = vmatprep.subr.bf16.mxu0 0
    %1606 = vmatpush1.bf16.msra.mxu0 0
    %1607 = vmatprep.subr.bf16.mxu0 0
    %1608 = vmatpush1.bf16.msra.mxu0 0
    %1609 = vmatprep.subr.bf16.mxu0 0
    %1610 = vmatpush1.bf16.msra.mxu0 0
    %1611 = vmatprep.subr.bf16.mxu0 0
    %1612 = vmatpush1.bf16.msra.mxu0 0
    %1613 = vmatprep.subr.bf16.mxu0 0
    %1614 = vmatpush1.bf16.msra.mxu0 0
    %1615 = vmatprep.subr.bf16.mxu0 0
    %1616 = vmatpush1.bf16.msra.mxu0 0
    %1617 = vmatprep.subr.bf16.mxu0 0
    %1618 = vmatpush1.bf16.msra.mxu0 0
    %1619 = vmatprep.mubr.bf16.mxu0 0
    %1620 = vmatmul.mubr.bf16.gmra.mrb[0].mxu0 %v862
    %v1621 = vpop.f32.mrb[0].mxu0
    %v1622 = vadd.f32 %v870, %v1621
    %v1623 = vpop.f32.mrb[0].mxu0
    %v1624 = vadd.f32 %v874, %v1623
    %v1625 = vpop.f32.mrb[0].mxu0
    %v1626 = vadd.f32 %v870, %v1625
    %v1627 = vpop.f32.mrb[0].mxu0
    %v1628 = vadd.f32 %v874, %v1627
    %1629 = vdwg.mxu0
    %1630 = vmatprep.subr.bf16.mxu0 %v1334
    %1631 = vmatpush1.bf16.msra.mxu0 %v1333
    %1632 = vmatprep.subr.bf16.mxu0 %v1350
    %1633 = vmatpush1.bf16.msra.mxu0 %v1349
    %1634 = vmatprep.subr.bf16.mxu0 %v1366
    %1635 = vmatpush1.bf16.msra.mxu0 %v1365
    %1636 = vmatprep.subr.bf16.mxu0 %v1382
    %1637 = vmatpush1.bf16.msra.mxu0 %v1381
    %1638 = vmatprep.subr.bf16.mxu0 %v1398
    %1639 = vmatpush1.bf16.msra.mxu0 %v1397
    %1640 = vmatprep.subr.bf16.mxu0 %v1414
    %1641 = vmatpush1.bf16.msra.mxu0 %v1413
    %1642 = vmatprep.subr.bf16.mxu0 %v1430
    %1643 = vmatpush1.bf16.msra.mxu0 %v1429
    %1644 = vmatprep.subr.bf16.mxu0 %v1446
    %1645 = vmatpush1.bf16.msra.mxu0 %v1445
    %1646 = vmatprep.subr.bf16.mxu0 0
    %1647 = vmatpush1.bf16.msra.mxu0 0
    %1648 = vmatprep.subr.bf16.mxu0 0
    %1649 = vmatpush1.bf16.msra.mxu0 0
    %1650 = vmatprep.subr.bf16.mxu0 0
    %1651 = vmatpush1.bf16.msra.mxu0 0
    %1652 = vmatprep.subr.bf16.mxu0 0
    %1653 = vmatpush1.bf16.msra.mxu0 0
    %1654 = vmatprep.subr.bf16.mxu0 0
    %1655 = vmatpush1.bf16.msra.mxu0 0
    %1656 = vmatprep.subr.bf16.mxu0 0
    %1657 = vmatpush1.bf16.msra.mxu0 0
    %1658 = vmatprep.subr.bf16.mxu0 0
    %1659 = vmatpush1.bf16.msra.mxu0 0
    %1660 = vmatprep.subr.bf16.mxu0 0
    %1661 = vmatpush1.bf16.msra.mxu0 0
    %1662 = vmatprep.mubr.bf16.mxu0 0
    %1663 = vmatmul.mubr.bf16.gmra.mrb[0].mxu0 %v862
    %v1664 = vpop.f32.mrb[0].mxu0
    %v1665 = vadd.f32 %v878, %v1664
    %v1666 = vpop.f32.mrb[0].mxu0
    %v1667 = vadd.f32 %v882, %v1666
    %v1668 = vpop.f32.mrb[0].mxu0
    %v1669 = vadd.f32 %v878, %v1668
    %v1670 = vpop.f32.mrb[0].mxu0
    %v1671 = vadd.f32 %v882, %v1670
    %1672 = vdwg.mxu0
    %1673 = vmatprep.subr.bf16.mxu0 %v1336
    %1674 = vmatpush1.bf16.msra.mxu0 %v1335
    %1675 = vmatprep.subr.bf16.mxu0 %v1352
    %1676 = vmatpush1.bf16.msra.mxu0 %v1351
    %1677 = vmatprep.subr.bf16.mxu0 %v1368
    %1678 = vmatpush1.bf16.msra.mxu0 %v1367
    %1679 = vmatprep.subr.bf16.mxu0 %v1384
    %1680 = vmatpush1.bf16.msra.mxu0 %v1383
    %1681 = vmatprep.subr.bf16.mxu0 %v1400
    %1682 = vmatpush1.bf16.msra.mxu0 %v1399
    %1683 = vmatprep.subr.bf16.mxu0 %v1416
    %1684 = vmatpush1.bf16.msra.mxu0 %v1415
    %1685 = vmatprep.subr.bf16.mxu0 %v1432
    %1686 = vmatpush1.bf16.msra.mxu0 %v1431
    %1687 = vmatprep.subr.bf16.mxu0 %v1448
    %1688 = vmatpush1.bf16.msra.mxu0 %v1447
    %1689 = vmatprep.subr.bf16.mxu0 0
    %1690 = vmatpush1.bf16.msra.mxu0 0
    %1691 = vmatprep.subr.bf16.mxu0 0
    %1692 = vmatpush1.bf16.msra.mxu0 0
    %1693 = vmatprep.subr.bf16.mxu0 0
    %1694 = vmatpush1.bf16.msra.mxu0 0
    %1695 = vmatprep.subr.bf16.mxu0 0
    %1696 = vmatpush1.bf16.msra.mxu0 0
    %1697 = vmatprep.subr.bf16.mxu0 0
    %1698 = vmatpush1.bf16.msra.mxu0 0
    %1699 = vmatprep.subr.bf16.mxu0 0
    %1700 = vmatpush1.bf16.msra.mxu0 0
    %1701 = vmatprep.subr.bf16.mxu0 0
    %1702 = vmatpush1.bf16.msra.mxu0 0
    %1703 = vmatprep.subr.bf16.mxu0 0
    %1704 = vmatpush1.bf16.msra.mxu0 0
    %1705 = vmatprep.mubr.bf16.mxu0 0
    %1706 = vmatmul.mubr.bf16.gmra.mrb[0].mxu0 %v862
    %v1707 = vpop.f32.mrb[0].mxu0
    %v1708 = vadd.f32 %v886, %v1707
    %v1709 = vpop.f32.mrb[0].mxu0
    %v1710 = vadd.f32 %v890, %v1709
    %v1711 = vpop.f32.mrb[0].mxu0
    %v1712 = vadd.f32 %v886, %v1711
    %v1713 = vpop.f32.mrb[0].mxu0
    %v1714 = vadd.f32 %v890, %v1713
    %1715 = vdwg.mxu0
    %1716 = vmatprep.subr.bf16.mxu0 %v1338
    %1717 = vmatpush1.bf16.msra.mxu0 %v1337
    %1718 = vmatprep.subr.bf16.mxu0 %v1354
    %1719 = vmatpush1.bf16.msra.mxu0 %v1353
    %1720 = vmatprep.subr.bf16.mxu0 %v1370
    %1721 = vmatpush1.bf16.msra.mxu0 %v1369
    %1722 = vmatprep.subr.bf16.mxu0 %v1386
    %1723 = vmatpush1.bf16.msra.mxu0 %v1385
    %1724 = vmatprep.subr.bf16.mxu0 %v1402
    %1725 = vmatpush1.bf16.msra.mxu0 %v1401
    %1726 = vmatprep.subr.bf16.mxu0 %v1418
    %1727 = vmatpush1.bf16.msra.mxu0 %v1417
    %1728 = vmatprep.subr.bf16.mxu0 %v1434
    %1729 = vmatpush1.bf16.msra.mxu0 %v1433
    %1730 = vmatprep.subr.bf16.mxu0 %v1450
    %1731 = vmatpush1.bf16.msra.mxu0 %v1449
    %1732 = vmatprep.subr.bf16.mxu0 0
    %1733 = vmatpush1.bf16.msra.mxu0 0
    %1734 = vmatprep.subr.bf16.mxu0 0
    %1735 = vmatpush1.bf16.msra.mxu0 0
    %1736 = vmatprep.subr.bf16.mxu0 0
    %1737 = vmatpush1.bf16.msra.mxu0 0
    %1738 = vmatprep.subr.bf16.mxu0 0
    %1739 = vmatpush1.bf16.msra.mxu0 0
    %1740 = vmatprep.subr.bf16.mxu0 0
    %1741 = vmatpush1.bf16.msra.mxu0 0
    %1742 = vmatprep.subr.bf16.mxu0 0
    %1743 = vmatpush1.bf16.msra.mxu0 0
    %1744 = vmatprep.subr.bf16.mxu0 0
    %1745 = vmatpush1.bf16.msra.mxu0 0
    %1746 = vmatprep.subr.bf16.mxu0 0
    %1747 = vmatpush1.bf16.msra.mxu0 0
    %1748 = vmatprep.mubr.bf16.mxu0 0
    %1749 = vmatmul.mubr.bf16.gmra.mrb[0].mxu0 %v862
    %v1750 = vpop.f32.mrb[0].mxu0
    %v1751 = vadd.f32 %v894, %v1750
    %v1752 = vpop.f32.mrb[0].mxu0
    %v1753 = vadd.f32 %v898, %v1752
    %v1754 = vpop.f32.mrb[0].mxu0
    %v1755 = vadd.f32 %v894, %v1754
    %v1756 = vpop.f32.mrb[0].mxu0
    %v1757 = vadd.f32 %v898, %v1756
    %1758 = vdwg.mxu0
    %1759 = vmatprep.subr.bf16.mxu0 %v1340
    %1760 = vmatpush1.bf16.msra.mxu0 %v1339
    %1761 = vmatprep.subr.bf16.mxu0 %v1356
    %1762 = vmatpush1.bf16.msra.mxu0 %v1355
    %1763 = vmatprep.subr.bf16.mxu0 %v1372
    %1764 = vmatpush1.bf16.msra.mxu0 %v1371
    %1765 = vmatprep.subr.bf16.mxu0 %v1388
    %1766 = vmatpush1.bf16.msra.mxu0 %v1387
    %1767 = vmatprep.subr.bf16.mxu0 %v1404
    %1768 = vmatpush1.bf16.msra.mxu0 %v1403
    %1769 = vmatprep.subr.bf16.mxu0 %v1420
    %1770 = vmatpush1.bf16.msra.mxu0 %v1419
    %1771 = vmatprep.subr.bf16.mxu0 %v1436
    %1772 = vmatpush1.bf16.msra.mxu0 %v1435
    %1773 = vmatprep.subr.bf16.mxu0 %v1452
    %1774 = vmatpush1.bf16.msra.mxu0 %v1451
    %1775 = vmatprep.subr.bf16.mxu0 0
    %1776 = vmatpush1.bf16.msra.mxu0 0
    %1777 = vmatprep.subr.bf16.mxu0 0
    %1778 = vmatpush1.bf16.msra.mxu0 0
    %1779 = vmatprep.subr.bf16.mxu0 0
    %1780 = vmatpush1.bf16.msra.mxu0 0
    %1781 = vmatprep.subr.bf16.mxu0 0
    %1782 = vmatpush1.bf16.msra.mxu0 0
    %1783 = vmatprep.subr.bf16.mxu0 0
    %1784 = vmatpush1.bf16.msra.mxu0 0
    %1785 = vmatprep.subr.bf16.mxu0 0
    %1786 = vmatpush1.bf16.msra.mxu0 0
    %1787 = vmatprep.subr.bf16.mxu0 0
    %1788 = vmatpush1.bf16.msra.mxu0 0
    %1789 = vmatprep.subr.bf16.mxu0 0
    %1790 = vmatpush1.bf16.msra.mxu0 0
    %1791 = vmatprep.mubr.bf16.mxu0 0
    %1792 = vmatmul.mubr.bf16.gmra.mrb[0].mxu0 %v862
    %v1793 = vpop.f32.mrb[0].mxu0
    %v1794 = vadd.f32 %v902, %v1793
    %v1795 = vpop.f32.mrb[0].mxu0
    %v1796 = vadd.f32 %v906, %v1795
    %v1797 = vpop.f32.mrb[0].mxu0
    %v1798 = vadd.f32 %v902, %v1797
    %v1799 = vpop.f32.mrb[0].mxu0
    %v1800 = vadd.f32 %v906, %v1799
    %1801 = vdwg.mxu0
    %1802 = vmatprep.subr.bf16.mxu0 %v1342
    %1803 = vmatpush1.bf16.msra.mxu0 %v1341
    %1804 = vmatprep.subr.bf16.mxu0 %v1358
    %1805 = vmatpush1.bf16.msra.mxu0 %v1357
    %1806 = vmatprep.subr.bf16.mxu0 %v1374
    %1807 = vmatpush1.bf16.msra.mxu0 %v1373
    %1808 = vmatprep.subr.bf16.mxu0 %v1390
    %1809 = vmatpush1.bf16.msra.mxu0 %v1389
    %1810 = vmatprep.subr.bf16.mxu0 %v1406
    %1811 = vmatpush1.bf16.msra.mxu0 %v1405
    %1812 = vmatprep.subr.bf16.mxu0 %v1422
    %1813 = vmatpush1.bf16.msra.mxu0 %v1421
    %1814 = vmatprep.subr.bf16.mxu0 %v1438
    %1815 = vmatpush1.bf16.msra.mxu0 %v1437
    %1816 = vmatprep.subr.bf16.mxu0 %v1454
    %1817 = vmatpush1.bf16.msra.mxu0 %v1453
    %1818 = vmatprep.subr.bf16.mxu0 0
    %1819 = vmatpush1.bf16.msra.mxu0 0
    %1820 = vmatprep.subr.bf16.mxu0 0
    %1821 = vmatpush1.bf16.msra.mxu0 0
    %1822 = vmatprep.subr.bf16.mxu0 0
    %1823 = vmatpush1.bf16.msra.mxu0 0
    %1824 = vmatprep.subr.bf16.mxu0 0
    %1825 = vmatpush1.bf16.msra.mxu0 0
    %1826 = vmatprep.subr.bf16.mxu0 0
    %1827 = vmatpush1.bf16.msra.mxu0 0
    %1828 = vmatprep.subr.bf16.mxu0 0
    %1829 = vmatpush1.bf16.msra.mxu0 0
    %1830 = vmatprep.subr.bf16.mxu0 0
    %1831 = vmatpush1.bf16.msra.mxu0 0
    %1832 = vmatprep.subr.bf16.mxu0 0
    %1833 = vmatpush1.bf16.msra.mxu0 0
    %1834 = vmatprep.mubr.bf16.mxu0 0
    %1835 = vmatmul.mubr.bf16.gmra.mrb[0].mxu0 %v862
    %v1836 = vpop.f32.mrb[0].mxu0
    %v1837 = vadd.f32 %v910, %v1836
    %v1838 = vpop.f32.mrb[0].mxu0
    %v1839 = vadd.f32 %v914, %v1838
    %v1840 = vpop.f32.mrb[0].mxu0
    %v1841 = vadd.f32 %v910, %v1840
    %v1842 = vpop.f32.mrb[0].mxu0
    %v1843 = vadd.f32 %v914, %v1842
    %1844 = vdwg.mxu0
    %1845 = vmatprep.subr.bf16.mxu0 %v1344
    %1846 = vmatpush1.bf16.msra.mxu0 %v1343
    %1847 = vmatprep.subr.bf16.mxu0 %v1360
    %1848 = vmatpush1.bf16.msra.mxu0 %v1359
    %1849 = vmatprep.subr.bf16.mxu0 %v1376
    %1850 = vmatpush1.bf16.msra.mxu0 %v1375
    %1851 = vmatprep.subr.bf16.mxu0 %v1392
    %1852 = vmatpush1.bf16.msra.mxu0 %v1391
    %1853 = vmatprep.subr.bf16.mxu0 %v1408
    %1854 = vmatpush1.bf16.msra.mxu0 %v1407
    %1855 = vmatprep.subr.bf16.mxu0 %v1424
    %1856 = vmatpush1.bf16.msra.mxu0 %v1423
    %1857 = vmatprep.subr.bf16.mxu0 %v1440
    %1858 = vmatpush1.bf16.msra.mxu0 %v1439
    %1859 = vmatprep.subr.bf16.mxu0 %v1456
    %1860 = vmatpush1.bf16.msra.mxu0 %v1455
    %1861 = vmatprep.subr.bf16.mxu0 0
    %1862 = vmatpush1.bf16.msra.mxu0 0
    %1863 = vmatprep.subr.bf16.mxu0 0
    %1864 = vmatpush1.bf16.msra.mxu0 0
    %1865 = vmatprep.subr.bf16.mxu0 0
    %1866 = vmatpush1.bf16.msra.mxu0 0
    %1867 = vmatprep.subr.bf16.mxu0 0
    %1868 = vmatpush1.bf16.msra.mxu0 0
    %1869 = vmatprep.subr.bf16.mxu0 0
    %1870 = vmatpush1.bf16.msra.mxu0 0
    %1871 = vmatprep.subr.bf16.mxu0 0
    %1872 = vmatpush1.bf16.msra.mxu0 0
    %1873 = vmatprep.subr.bf16.mxu0 0
    %1874 = vmatpush1.bf16.msra.mxu0 0
    %1875 = vmatprep.subr.bf16.mxu0 0
    %1876 = vmatpush1.bf16.msra.mxu0 0
    %1877 = vmatprep.mubr.bf16.mxu0 0
    %1878 = vmatmul.mubr.bf16.gmra.mrb[0].mxu0 %v862
    %v1879 = vpop.f32.mrb[0].mxu0
    %v1880 = vadd.f32 %v918, %v1879
    %v1881 = vpop.f32.mrb[0].mxu0
    %v1882 = vadd.f32 %v922, %v1881
    %v1883 = vpop.f32.mrb[0].mxu0
    %v1884 = vadd.f32 %v918, %v1883
    %v1885 = vpop.f32.mrb[0].mxu0
    %v1886 = vadd.f32 %v922, %v1885
    %1887 = vdwg.mxu0
    %1888 = vmatprep.subr.bf16.mxu0 %v1346
    %1889 = vmatpush1.bf16.msra.mxu0 %v1345
    %1890 = vmatprep.subr.bf16.mxu0 %v1362
    %1891 = vmatpush1.bf16.msra.mxu0 %v1361
    %1892 = vmatprep.subr.bf16.mxu0 %v1378
    %1893 = vmatpush1.bf16.msra.mxu0 %v1377
    %1894 = vmatprep.subr.bf16.mxu0 %v1394
    %1895 = vmatpush1.bf16.msra.mxu0 %v1393
    %1896 = vmatprep.subr.bf16.mxu0 %v1410
    %1897 = vmatpush1.bf16.msra.mxu0 %v1409
    %1898 = vmatprep.subr.bf16.mxu0 %v1426
    %1899 = vmatpush1.bf16.msra.mxu0 %v1425
    %1900 = vmatprep.subr.bf16.mxu0 %v1442
    %1901 = vmatpush1.bf16.msra.mxu0 %v1441
    %1902 = vmatprep.subr.bf16.mxu0 %v1458
    %1903 = vmatpush1.bf16.msra.mxu0 %v1457
    %1904 = vmatprep.subr.bf16.mxu0 0
    %1905 = vmatpush1.bf16.msra.mxu0 0
    %1906 = vmatprep.subr.bf16.mxu0 0
    %1907 = vmatpush1.bf16.msra.mxu0 0
    %1908 = vmatprep.subr.bf16.mxu0 0
    %1909 = vmatpush1.bf16.msra.mxu0 0
    %1910 = vmatprep.subr.bf16.mxu0 0
    %1911 = vmatpush1.bf16.msra.mxu0 0
    %1912 = vmatprep.subr.bf16.mxu0 0
    %1913 = vmatpush1.bf16.msra.mxu0 0
    %1914 = vmatprep.subr.bf16.mxu0 0
    %1915 = vmatpush1.bf16.msra.mxu0 0
    %1916 = vmatprep.subr.bf16.mxu0 0
    %1917 = vmatpush1.bf16.msra.mxu0 0
    %1918 = vmatprep.subr.bf16.mxu0 0
    %1919 = vmatpush1.bf16.msra.mxu0 0
    %1920 = vmatprep.mubr.bf16.mxu0 0
    %1921 = vmatmul.mubr.bf16.gmra.mrb[0].mxu0 %v862
    %v1922 = vpop.f32.mrb[0].mxu0
    %v1923 = vadd.f32 %v926, %v1922
    %v1924 = vpop.f32.mrb[0].mxu0
    %v1925 = vadd.f32 %v930, %v1924
    %v1926 = vpop.f32.mrb[0].mxu0
    %v1927 = vadd.f32 %v926, %v1926
    %v1928 = vpop.f32.mrb[0].mxu0
    %v1929 = vadd.f32 %v930, %v1928
    %1930 = vdwg.mxu0
    %v1931 = vmax.f32 %v1622, 0.0
    %v1932 = vmax.f32 %v1624, 0.0
    %v1933 = vmax.f32 %v1665, 0.0
    %v1934 = vmax.f32 %v1667, 0.0
    %v1935 = vmax.f32 %v1708, 0.0
    %v1936 = vmax.f32 %v1710, 0.0
    %v1937 = vmax.f32 %v1751, 0.0
    %v1938 = vmax.f32 %v1753, 0.0
    %v1939 = vmax.f32 %v1794, 0.0
    %v1940 = vmax.f32 %v1796, 0.0
    %v1941 = vmax.f32 %v1837, 0.0
    %v1942 = vmax.f32 %v1839, 0.0
    %v1943 = vmax.f32 %v1880, 0.0
    %v1944 = vmax.f32 %v1882, 0.0
    %v1945 = vmax.f32 %v1923, 0.0
    %v1946 = vmax.f32 %v1925, 0.0
    %v1947 = vmax.f32 %v1626, 0.0
    %v1948 = vmax.f32 %v1628, 0.0
    %v1949 = vmax.f32 %v1669, 0.0
    %v1950 = vmax.f32 %v1671, 0.0
    %v1951 = vmax.f32 %v1712, 0.0
    %v1952 = vmax.f32 %v1714, 0.0
    %v1953 = vmax.f32 %v1755, 0.0
    %v1954 = vmax.f32 %v1757, 0.0
    %v1955 = vmax.f32 %v1798, 0.0
    %v1956 = vmax.f32 %v1800, 0.0
    %v1957 = vmax.f32 %v1841, 0.0
    %v1958 = vmax.f32 %v1843, 0.0
    %v1959 = vmax.f32 %v1884, 0.0
    %v1960 = vmax.f32 %v1886, 0.0
    %v1961 = vmax.f32 %v1927, 0.0
    %v1962 = vmax.f32 %v1929, 0.0
    %v1963 = vld [vmem:[#allocation8] sm:$0xf]
    %v1964 = vld [vmem:[#allocation8 + $0x4] sm:$0xf]
    %v1965 = vld [vmem:[#allocation8 + $0x8] sm:$0xf]
    %v1966 = vld [vmem:[#allocation8 + $0xc] sm:$0xf]
    %v1967 = vld [vmem:[#allocation8 + $0x10] sm:$0xf]
    %v1968 = vld [vmem:[#allocation8 + $0x14] sm:$0xf]
    %v1969 = vld [vmem:[#allocation8 + $0x18] sm:$0xf]
    %v1970 = vld [vmem:[#allocation8 + $0x1c] sm:$0xf]
    %v1971 = vld [vmem:[#allocation8 + $0x20] sm:$0xf]
    %v1972 = vld [vmem:[#allocation8 + $0x24] sm:$0xf]
    %v1973 = vld [vmem:[#allocation8 + $0x28] sm:$0xf]
    %v1974 = vld [vmem:[#allocation8 + $0x2c] sm:$0xf]
    %v1975 = vld [vmem:[#allocation8 + $0x30] sm:$0xf]
    %v1976 = vld [vmem:[#allocation8 + $0x34] sm:$0xf]
    %v1977 = vld [vmem:[#allocation8 + $0x38] sm:$0xf]
    %v1978 = vld [vmem:[#allocation8 + $0x3c] sm:$0xf]
    %v1979 = vld [vmem:[#allocation8 + $0x40] sm:$0xf]
    %v1980 = vld [vmem:[#allocation8 + $0x44] sm:$0xf]
    %v1981 = vld [vmem:[#allocation8 + $0x48] sm:$0xf]
    %v1982 = vld [vmem:[#allocation8 + $0x4c] sm:$0xf]
    %v1983 = vld [vmem:[#allocation8 + $0x50] sm:$0xf]
    %v1984 = vld [vmem:[#allocation8 + $0x54] sm:$0xf]
    %v1985 = vld [vmem:[#allocation8 + $0x58] sm:$0xf]
    %v1986 = vld [vmem:[#allocation8 + $0x5c] sm:$0xf]
    %v1987 = vld [vmem:[#allocation8 + $0x60] sm:$0xf]
    %v1988 = vld [vmem:[#allocation8 + $0x64] sm:$0xf]
    %v1989 = vld [vmem:[#allocation8 + $0x68] sm:$0xf]
    %v1990 = vld [vmem:[#allocation8 + $0x6c] sm:$0xf]
    %v1991 = vld [vmem:[#allocation8 + $0x70] sm:$0xf]
    %v1992 = vld [vmem:[#allocation8 + $0x74] sm:$0xf]
    %v1993 = vld [vmem:[#allocation8 + $0x78] sm:$0xf]
    %v1994 = vld [vmem:[#allocation8 + $0x7c] sm:$0xf]
    %v1995 = vld [vmem:[#allocation8 + $0x80] sm:$0xf]
    %v1996 = vld [vmem:[#allocation8 + $0x84] sm:$0xf]
    %v1997 = vld [vmem:[#allocation8 + $0x88] sm:$0xf]
    %v1998 = vld [vmem:[#allocation8 + $0x8c] sm:$0xf]
    %v1999 = vld [vmem:[#allocation8 + $0x90] sm:$0xf]
    %v2000 = vld [vmem:[#allocation8 + $0x94] sm:$0xf]
    %v2001 = vld [vmem:[#allocation8 + $0x98] sm:$0xf]
    %v2002 = vld [vmem:[#allocation8 + $0x9c] sm:$0xf]
    %v2003 = vld [vmem:[#allocation8 + $0xa0] sm:$0xf]
    %v2004 = vld [vmem:[#allocation8 + $0xa4] sm:$0xf]
    %v2005 = vld [vmem:[#allocation8 + $0xa8] sm:$0xf]
    %v2006 = vld [vmem:[#allocation8 + $0xac] sm:$0xf]
    %v2007 = vld [vmem:[#allocation8 + $0xb0] sm:$0xf]
    %v2008 = vld [vmem:[#allocation8 + $0xb4] sm:$0xf]
    %v2009 = vld [vmem:[#allocation8 + $0xb8] sm:$0xf]
    %v2010 = vld [vmem:[#allocation8 + $0xbc] sm:$0xf]
    %v2011 = vld [vmem:[#allocation8 + $0xc0] sm:$0xf]
    %v2012 = vld [vmem:[#allocation8 + $0xc4] sm:$0xf]
    %v2013 = vld [vmem:[#allocation8 + $0xc8] sm:$0xf]
    %v2014 = vld [vmem:[#allocation8 + $0xcc] sm:$0xf]
    %v2015 = vld [vmem:[#allocation8 + $0xd0] sm:$0xf]
    %v2016 = vld [vmem:[#allocation8 + $0xd4] sm:$0xf]
    %v2017 = vld [vmem:[#allocation8 + $0xd8] sm:$0xf]
    %v2018 = vld [vmem:[#allocation8 + $0xdc] sm:$0xf]
    %v2019 = vld [vmem:[#allocation8 + $0xe0] sm:$0xf]
    %v2020 = vld [vmem:[#allocation8 + $0xe4] sm:$0xf]
    %v2021 = vld [vmem:[#allocation8 + $0xe8] sm:$0xf]
    %v2022 = vld [vmem:[#allocation8 + $0xec] sm:$0xf]
    %v2023 = vld [vmem:[#allocation8 + $0xf0] sm:$0xf]
    %v2024 = vld [vmem:[#allocation8 + $0xf4] sm:$0xf]
    %v2025 = vld [vmem:[#allocation8 + $0xf8] sm:$0xf]
    %v2026 = vld [vmem:[#allocation8 + $0xfc] sm:$0xf]
    %v2027 = vld [vmem:[#allocation8 + $0x100] sm:$0xf]
    %v2028 = vld [vmem:[#allocation8 + $0x104] sm:$0xf]
    %v2029 = vld [vmem:[#allocation8 + $0x108] sm:$0xf]
    %v2030 = vld [vmem:[#allocation8 + $0x10c] sm:$0xf]
    %v2031 = vld [vmem:[#allocation8 + $0x110] sm:$0xf]
    %v2032 = vld [vmem:[#allocation8 + $0x114] sm:$0xf]
    %v2033 = vld [vmem:[#allocation8 + $0x118] sm:$0xf]
    %v2034 = vld [vmem:[#allocation8 + $0x11c] sm:$0xf]
    %v2035 = vld [vmem:[#allocation8 + $0x120] sm:$0xf]
    %v2036 = vld [vmem:[#allocation8 + $0x124] sm:$0xf]
    %v2037 = vld [vmem:[#allocation8 + $0x128] sm:$0xf]
    %v2038 = vld [vmem:[#allocation8 + $0x12c] sm:$0xf]
    %v2039 = vld [vmem:[#allocation8 + $0x130] sm:$0xf]
    %v2040 = vld [vmem:[#allocation8 + $0x134] sm:$0xf]
    %v2041 = vld [vmem:[#allocation8 + $0x138] sm:$0xf]
    %v2042 = vld [vmem:[#allocation8 + $0x13c] sm:$0xf]
    %v2043 = vld [vmem:[#allocation8 + $0x140] sm:$0xf]
    %v2044 = vld [vmem:[#allocation8 + $0x144] sm:$0xf]
    %v2045 = vld [vmem:[#allocation8 + $0x148] sm:$0xf]
    %v2046 = vld [vmem:[#allocation8 + $0x14c] sm:$0xf]
    %v2047 = vld [vmem:[#allocation8 + $0x150] sm:$0xf]
    %v2048 = vld [vmem:[#allocation8 + $0x154] sm:$0xf]
    %v2049 = vld [vmem:[#allocation8 + $0x158] sm:$0xf]
    %v2050 = vld [vmem:[#allocation8 + $0x15c] sm:$0xf]
    %v2051 = vld [vmem:[#allocation8 + $0x160] sm:$0xf]
    %v2052 = vld [vmem:[#allocation8 + $0x164] sm:$0xf]
    %v2053 = vld [vmem:[#allocation8 + $0x168] sm:$0xf]
    %v2054 = vld [vmem:[#allocation8 + $0x16c] sm:$0xf]
    %v2055 = vld [vmem:[#allocation8 + $0x170] sm:$0xf]
    %v2056 = vld [vmem:[#allocation8 + $0x174] sm:$0xf]
    %v2057 = vld [vmem:[#allocation8 + $0x178] sm:$0xf]
    %v2058 = vld [vmem:[#allocation8 + $0x17c] sm:$0xf]
    %v2059 = vld [vmem:[#allocation8 + $0x180] sm:$0xf]
    %v2060 = vld [vmem:[#allocation8 + $0x184] sm:$0xf]
    %v2061 = vld [vmem:[#allocation8 + $0x188] sm:$0xf]
    %v2062 = vld [vmem:[#allocation8 + $0x18c] sm:$0xf]
    %v2063 = vld [vmem:[#allocation8 + $0x190] sm:$0xf]
    %v2064 = vld [vmem:[#allocation8 + $0x194] sm:$0xf]
    %v2065 = vld [vmem:[#allocation8 + $0x198] sm:$0xf]
    %v2066 = vld [vmem:[#allocation8 + $0x19c] sm:$0xf]
    %v2067 = vld [vmem:[#allocation8 + $0x1a0] sm:$0xf]
    %v2068 = vld [vmem:[#allocation8 + $0x1a4] sm:$0xf]
    %v2069 = vld [vmem:[#allocation8 + $0x1a8] sm:$0xf]
    %v2070 = vld [vmem:[#allocation8 + $0x1ac] sm:$0xf]
    %v2071 = vld [vmem:[#allocation8 + $0x1b0] sm:$0xf]
    %v2072 = vld [vmem:[#allocation8 + $0x1b4] sm:$0xf]
    %v2073 = vld [vmem:[#allocation8 + $0x1b8] sm:$0xf]
    %v2074 = vld [vmem:[#allocation8 + $0x1bc] sm:$0xf]
    %v2075 = vld [vmem:[#allocation8 + $0x1c0] sm:$0xf]
    %v2076 = vld [vmem:[#allocation8 + $0x1c4] sm:$0xf]
    %v2077 = vld [vmem:[#allocation8 + $0x1c8] sm:$0xf]
    %v2078 = vld [vmem:[#allocation8 + $0x1cc] sm:$0xf]
    %v2079 = vld [vmem:[#allocation8 + $0x1d0] sm:$0xf]
    %v2080 = vld [vmem:[#allocation8 + $0x1d4] sm:$0xf]
    %v2081 = vld [vmem:[#allocation8 + $0x1d8] sm:$0xf]
    %v2082 = vld [vmem:[#allocation8 + $0x1dc] sm:$0xf]
    %v2083 = vld [vmem:[#allocation8 + $0x1e0] sm:$0xf]
    %v2084 = vld [vmem:[#allocation8 + $0x1e4] sm:$0xf]
    %v2085 = vld [vmem:[#allocation8 + $0x1e8] sm:$0xf]
    %v2086 = vld [vmem:[#allocation8 + $0x1ec] sm:$0xf]
    %v2087 = vld [vmem:[#allocation8 + $0x1f0] sm:$0xf]
    %v2088 = vld [vmem:[#allocation8 + $0x1f4] sm:$0xf]
    %v2089 = vld [vmem:[#allocation8 + $0x1f8] sm:$0xf]
    %v2090 = vld [vmem:[#allocation8 + $0x1fc] sm:$0xf]
    %v2091 = vld [vmem:[#allocation8 + $0x200] sm:$0xf]
    %v2092 = vld [vmem:[#allocation8 + $0x204] sm:$0xf]
    %v2093 = vld [vmem:[#allocation8 + $0x208] sm:$0xf]
    %v2094 = vld [vmem:[#allocation8 + $0x20c] sm:$0xf]
    %v2095 = vld [vmem:[#allocation8 + $0x210] sm:$0xf]
    %v2096 = vld [vmem:[#allocation8 + $0x214] sm:$0xf]
    %v2097 = vld [vmem:[#allocation8 + $0x218] sm:$0xf]
    %v2098 = vld [vmem:[#allocation8 + $0x21c] sm:$0xf]
    %v2099 = vld [vmem:[#allocation8 + $0x220] sm:$0xf]
    %v2100 = vld [vmem:[#allocation8 + $0x224] sm:$0xf]
    %v2101 = vld [vmem:[#allocation8 + $0x228] sm:$0xf]
    %v2102 = vld [vmem:[#allocation8 + $0x22c] sm:$0xf]
    %v2103 = vld [vmem:[#allocation8 + $0x230] sm:$0xf]
    %v2104 = vld [vmem:[#allocation8 + $0x234] sm:$0xf]
    %v2105 = vld [vmem:[#allocation8 + $0x238] sm:$0xf]
    %v2106 = vld [vmem:[#allocation8 + $0x23c] sm:$0xf]
    %v2107 = vld [vmem:[#allocation8 + $0x240] sm:$0xf]
    %v2108 = vld [vmem:[#allocation8 + $0x244] sm:$0xf]
    %v2109 = vld [vmem:[#allocation8 + $0x248] sm:$0xf]
    %v2110 = vld [vmem:[#allocation8 + $0x24c] sm:$0xf]
    %v2111 = vld [vmem:[#allocation8 + $0x250] sm:$0xf]
    %v2112 = vld [vmem:[#allocation8 + $0x254] sm:$0xf]
    %v2113 = vld [vmem:[#allocation8 + $0x258] sm:$0xf]
    %v2114 = vld [vmem:[#allocation8 + $0x25c] sm:$0xf]
    %v2115 = vld [vmem:[#allocation8 + $0x260] sm:$0xf]
    %v2116 = vld [vmem:[#allocation8 + $0x264] sm:$0xf]
    %v2117 = vld [vmem:[#allocation8 + $0x268] sm:$0xf]
    %v2118 = vld [vmem:[#allocation8 + $0x26c] sm:$0xf]
    %v2119 = vld [vmem:[#allocation8 + $0x270] sm:$0xf]
    %v2120 = vld [vmem:[#allocation8 + $0x274] sm:$0xf]
    %v2121 = vld [vmem:[#allocation8 + $0x278] sm:$0xf]
    %v2122 = vld [vmem:[#allocation8 + $0x27c] sm:$0xf]
    %v2123 = vld [vmem:[#allocation8 + $0x280] sm:$0xf]
    %v2124 = vld [vmem:[#allocation8 + $0x284] sm:$0xf]
    %v2125 = vld [vmem:[#allocation8 + $0x288] sm:$0xf]
    %v2126 = vld [vmem:[#allocation8 + $0x28c] sm:$0xf]
    %v2127 = vld [vmem:[#allocation8 + $0x290] sm:$0xf]
    %v2128 = vld [vmem:[#allocation8 + $0x294] sm:$0xf]
    %v2129 = vld [vmem:[#allocation8 + $0x298] sm:$0xf]
    %v2130 = vld [vmem:[#allocation8 + $0x29c] sm:$0xf]
    %v2131 = vld [vmem:[#allocation8 + $0x2a0] sm:$0xf]
    %v2132 = vld [vmem:[#allocation8 + $0x2a4] sm:$0xf]
    %v2133 = vld [vmem:[#allocation8 + $0x2a8] sm:$0xf]
    %v2134 = vld [vmem:[#allocation8 + $0x2ac] sm:$0xf]
    %v2135 = vld [vmem:[#allocation8 + $0x2b0] sm:$0xf]
    %v2136 = vld [vmem:[#allocation8 + $0x2b4] sm:$0xf]
    %v2137 = vld [vmem:[#allocation8 + $0x2b8] sm:$0xf]
    %v2138 = vld [vmem:[#allocation8 + $0x2bc] sm:$0xf]
    %v2139 = vld [vmem:[#allocation8 + $0x2c0] sm:$0xf]
    %v2140 = vld [vmem:[#allocation8 + $0x2c4] sm:$0xf]
    %v2141 = vld [vmem:[#allocation8 + $0x2c8] sm:$0xf]
    %v2142 = vld [vmem:[#allocation8 + $0x2cc] sm:$0xf]
    %v2143 = vld [vmem:[#allocation8 + $0x2d0] sm:$0xf]
    %v2144 = vld [vmem:[#allocation8 + $0x2d4] sm:$0xf]
    %v2145 = vld [vmem:[#allocation8 + $0x2d8] sm:$0xf]
    %v2146 = vld [vmem:[#allocation8 + $0x2dc] sm:$0xf]
    %v2147 = vld [vmem:[#allocation8 + $0x2e0] sm:$0xf]
    %v2148 = vld [vmem:[#allocation8 + $0x2e4] sm:$0xf]
    %v2149 = vld [vmem:[#allocation8 + $0x2e8] sm:$0xf]
    %v2150 = vld [vmem:[#allocation8 + $0x2ec] sm:$0xf]
    %v2151 = vld [vmem:[#allocation8 + $0x2f0] sm:$0xf]
    %v2152 = vld [vmem:[#allocation8 + $0x2f4] sm:$0xf]
    %v2153 = vld [vmem:[#allocation8 + $0x2f8] sm:$0xf]
    %v2154 = vld [vmem:[#allocation8 + $0x2fc] sm:$0xf]
    %v2155 = vld [vmem:[#allocation8 + $0x300] sm:$0xf]
    %v2156 = vld [vmem:[#allocation8 + $0x304] sm:$0xf]
    %v2157 = vld [vmem:[#allocation8 + $0x308] sm:$0xf]
    %v2158 = vld [vmem:[#allocation8 + $0x30c] sm:$0xf]
    %v2159 = vld [vmem:[#allocation8 + $0x310] sm:$0xf]
    %v2160 = vld [vmem:[#allocation8 + $0x314] sm:$0xf]
    %v2161 = vld [vmem:[#allocation8 + $0x318] sm:$0xf]
    %v2162 = vld [vmem:[#allocation8 + $0x31c] sm:$0xf]
    %v2163 = vld [vmem:[#allocation8 + $0x320] sm:$0xf]
    %v2164 = vld [vmem:[#allocation8 + $0x324] sm:$0xf]
    %v2165 = vld [vmem:[#allocation8 + $0x328] sm:$0xf]
    %v2166 = vld [vmem:[#allocation8 + $0x32c] sm:$0xf]
    %v2167 = vld [vmem:[#allocation8 + $0x330] sm:$0xf]
    %v2168 = vld [vmem:[#allocation8 + $0x334] sm:$0xf]
    %v2169 = vld [vmem:[#allocation8 + $0x338] sm:$0xf]
    %v2170 = vld [vmem:[#allocation8 + $0x33c] sm:$0xf]
    %v2171 = vld [vmem:[#allocation8 + $0x340] sm:$0xf]
    %v2172 = vld [vmem:[#allocation8 + $0x344] sm:$0xf]
    %v2173 = vld [vmem:[#allocation8 + $0x348] sm:$0xf]
    %v2174 = vld [vmem:[#allocation8 + $0x34c] sm:$0xf]
    %v2175 = vld [vmem:[#allocation8 + $0x350] sm:$0xf]
    %v2176 = vld [vmem:[#allocation8 + $0x354] sm:$0xf]
    %v2177 = vld [vmem:[#allocation8 + $0x358] sm:$0xf]
    %v2178 = vld [vmem:[#allocation8 + $0x35c] sm:$0xf]
    %v2179 = vld [vmem:[#allocation8 + $0x360] sm:$0xf]
    %v2180 = vld [vmem:[#allocation8 + $0x364] sm:$0xf]
    %v2181 = vld [vmem:[#allocation8 + $0x368] sm:$0xf]
    %v2182 = vld [vmem:[#allocation8 + $0x36c] sm:$0xf]
    %v2183 = vld [vmem:[#allocation8 + $0x370] sm:$0xf]
    %v2184 = vld [vmem:[#allocation8 + $0x374] sm:$0xf]
    %v2185 = vld [vmem:[#allocation8 + $0x378] sm:$0xf]
    %v2186 = vld [vmem:[#allocation8 + $0x37c] sm:$0xf]
    %v2187 = vld [vmem:[#allocation8 + $0x380] sm:$0xf]
    %v2188 = vld [vmem:[#allocation8 + $0x384] sm:$0xf]
    %v2189 = vld [vmem:[#allocation8 + $0x388] sm:$0xf]
    %v2190 = vld [vmem:[#allocation8 + $0x38c] sm:$0xf]
    %v2191 = vld [vmem:[#allocation8 + $0x390] sm:$0xf]
    %v2192 = vld [vmem:[#allocation8 + $0x394] sm:$0xf]
    %v2193 = vld [vmem:[#allocation8 + $0x398] sm:$0xf]
    %v2194 = vld [vmem:[#allocation8 + $0x39c] sm:$0xf]
    %v2195 = vld [vmem:[#allocation8 + $0x3a0] sm:$0xf]
    %v2196 = vld [vmem:[#allocation8 + $0x3a4] sm:$0xf]
    %v2197 = vld [vmem:[#allocation8 + $0x3a8] sm:$0xf]
    %v2198 = vld [vmem:[#allocation8 + $0x3ac] sm:$0xf]
    %v2199 = vld [vmem:[#allocation8 + $0x3b0] sm:$0xf]
    %v2200 = vld [vmem:[#allocation8 + $0x3b4] sm:$0xf]
    %v2201 = vld [vmem:[#allocation8 + $0x3b8] sm:$0xf]
    %v2202 = vld [vmem:[#allocation8 + $0x3bc] sm:$0xf]
    %v2203 = vld [vmem:[#allocation8 + $0x3c0] sm:$0xf]
    %v2204 = vld [vmem:[#allocation8 + $0x3c4] sm:$0xf]
    %v2205 = vld [vmem:[#allocation8 + $0x3c8] sm:$0xf]
    %v2206 = vld [vmem:[#allocation8 + $0x3cc] sm:$0xf]
    %v2207 = vld [vmem:[#allocation8 + $0x3d0] sm:$0xf]
    %v2208 = vld [vmem:[#allocation8 + $0x3d4] sm:$0xf]
    %v2209 = vld [vmem:[#allocation8 + $0x3d8] sm:$0xf]
    %v2210 = vld [vmem:[#allocation8 + $0x3dc] sm:$0xf]
    %v2211 = vld [vmem:[#allocation8 + $0x3e0] sm:$0xf]
    %v2212 = vld [vmem:[#allocation8 + $0x3e4] sm:$0xf]
    %v2213 = vld [vmem:[#allocation8 + $0x3e8] sm:$0xf]
    %v2214 = vld [vmem:[#allocation8 + $0x3ec] sm:$0xf]
    %v2215 = vld [vmem:[#allocation8 + $0x3f0] sm:$0xf]
    %v2216 = vld [vmem:[#allocation8 + $0x3f4] sm:$0xf]
    %v2217 = vld [vmem:[#allocation8 + $0x3f8] sm:$0xf]
    %v2218 = vld [vmem:[#allocation8 + $0x3fc] sm:$0xf]
    %v2219 = vpack.c.bf16 %v1947, %v1931
    %v2220 = vpack.c.bf16 %v1948, %v1932
    %v2221 = vpack.c.bf16 %v1949, %v1933
    %v2222 = vpack.c.bf16 %v1950, %v1934
    %v2223 = vpack.c.bf16 %v1951, %v1935
    %v2224 = vpack.c.bf16 %v1952, %v1936
    %v2225 = vpack.c.bf16 %v1953, %v1937
    %v2226 = vpack.c.bf16 %v1954, %v1938
    %v2227 = vpack.c.bf16 %v1955, %v1939
    %v2228 = vpack.c.bf16 %v1956, %v1940
    %v2229 = vpack.c.bf16 %v1957, %v1941
    %v2230 = vpack.c.bf16 %v1958, %v1942
    %v2231 = vpack.c.bf16 %v1959, %v1943
    %v2232 = vpack.c.bf16 %v1960, %v1944
    %v2233 = vpack.c.bf16 %v1961, %v1945
    %v2234 = vpack.c.bf16 %v1962, %v1946
    %v2235 = vld [vmem:[%s11] sm:$0x1]
    %v2237 = vlaneseq
    %v2238 = vshrl.u32 %v2237, 7
    %v2239 = vsub.s32 0, %v2238
    %v2240 = vrot.slane %v2235, %v2239
    %v2498 = vunpack.c.l.b16 %v1963
    %v2499 = vunpack.c.l.b16 %v1964
    %v2500 = vunpack.c.l.b16 %v1965
    %v2501 = vunpack.c.l.b16 %v1966
    %v2502 = vunpack.c.l.b16 %v1967
    %v2503 = vunpack.c.l.b16 %v1968
    %v2504 = vunpack.c.l.b16 %v1969
    %v2505 = vunpack.c.l.b16 %v1970
    %v2506 = vunpack.c.l.b16 %v1971
    %v2507 = vunpack.c.l.b16 %v1972
    %v2508 = vunpack.c.l.b16 %v1973
    %v2509 = vunpack.c.l.b16 %v1974
    %v2510 = vunpack.c.l.b16 %v1975
    %v2511 = vunpack.c.l.b16 %v1976
    %v2512 = vunpack.c.l.b16 %v1977
    %v2513 = vunpack.c.l.b16 %v1978
    %v2514 = vunpack.c.l.b16 %v1979
    %v2515 = vunpack.c.l.b16 %v1980
    %v2516 = vunpack.c.l.b16 %v1981
    %v2517 = vunpack.c.l.b16 %v1982
    %v2518 = vunpack.c.l.b16 %v1983
    %v2519 = vunpack.c.l.b16 %v1984
    %v2520 = vunpack.c.l.b16 %v1985
    %v2521 = vunpack.c.l.b16 %v1986
    %v2522 = vunpack.c.l.b16 %v1987
    %v2523 = vunpack.c.l.b16 %v1988
    %v2524 = vunpack.c.l.b16 %v1989
    %v2525 = vunpack.c.l.b16 %v1990
    %v2526 = vunpack.c.l.b16 %v1991
    %v2527 = vunpack.c.l.b16 %v1992
    %v2528 = vunpack.c.l.b16 %v1993
    %v2529 = vunpack.c.l.b16 %v1994
    %v2530 = vunpack.c.l.b16 %v1995
    %v2531 = vunpack.c.l.b16 %v1996
    %v2532 = vunpack.c.l.b16 %v1997
    %v2533 = vunpack.c.l.b16 %v1998
    %v2534 = vunpack.c.l.b16 %v1999
    %v2535 = vunpack.c.l.b16 %v2000
    %v2536 = vunpack.c.l.b16 %v2001
    %v2537 = vunpack.c.l.b16 %v2002
    %v2538 = vunpack.c.l.b16 %v2003
    %v2539 = vunpack.c.l.b16 %v2004
    %v2540 = vunpack.c.l.b16 %v2005
    %v2541 = vunpack.c.l.b16 %v2006
    %v2542 = vunpack.c.l.b16 %v2007
    %v2543 = vunpack.c.l.b16 %v2008
    %v2544 = vunpack.c.l.b16 %v2009
    %v2545 = vunpack.c.l.b16 %v2010
    %v2546 = vunpack.c.l.b16 %v2011
    %v2547 = vunpack.c.l.b16 %v2012
    %v2548 = vunpack.c.l.b16 %v2013
    %v2549 = vunpack.c.l.b16 %v2014
    %v2550 = vunpack.c.l.b16 %v2015
    %v2551 = vunpack.c.l.b16 %v2016
    %v2552 = vunpack.c.l.b16 %v2017
    %v2553 = vunpack.c.l.b16 %v2018
    %v2554 = vunpack.c.l.b16 %v2019
    %v2555 = vunpack.c.l.b16 %v2020
    %v2556 = vunpack.c.l.b16 %v2021
    %v2557 = vunpack.c.l.b16 %v2022
    %v2558 = vunpack.c.l.b16 %v2023
    %v2559 = vunpack.c.l.b16 %v2024
    %v2560 = vunpack.c.l.b16 %v2025
    %v2561 = vunpack.c.l.b16 %v2026
    %v2562 = vunpack.c.l.b16 %v2027
    %v2563 = vunpack.c.l.b16 %v2028
    %v2564 = vunpack.c.l.b16 %v2029
    %v2565 = vunpack.c.l.b16 %v2030
    %v2566 = vunpack.c.l.b16 %v2031
    %v2567 = vunpack.c.l.b16 %v2032
    %v2568 = vunpack.c.l.b16 %v2033
    %v2569 = vunpack.c.l.b16 %v2034
    %v2570 = vunpack.c.l.b16 %v2035
    %v2571 = vunpack.c.l.b16 %v2036
    %v2572 = vunpack.c.l.b16 %v2037
    %v2573 = vunpack.c.l.b16 %v2038
    %v2574 = vunpack.c.l.b16 %v2039
    %v2575 = vunpack.c.l.b16 %v2040
    %v2576 = vunpack.c.l.b16 %v2041
    %v2577 = vunpack.c.l.b16 %v2042
    %v2578 = vunpack.c.l.b16 %v2043
    %v2579 = vunpack.c.l.b16 %v2044
    %v2580 = vunpack.c.l.b16 %v2045
    %v2581 = vunpack.c.l.b16 %v2046
    %v2582 = vunpack.c.l.b16 %v2047
    %v2583 = vunpack.c.l.b16 %v2048
    %v2584 = vunpack.c.l.b16 %v2049
    %v2585 = vunpack.c.l.b16 %v2050
    %v2586 = vunpack.c.l.b16 %v2051
    %v2587 = vunpack.c.l.b16 %v2052
    %v2588 = vunpack.c.l.b16 %v2053
    %v2589 = vunpack.c.l.b16 %v2054
    %v2590 = vunpack.c.l.b16 %v2055
    %v2591 = vunpack.c.l.b16 %v2056
    %v2592 = vunpack.c.l.b16 %v2057
    %v2593 = vunpack.c.l.b16 %v2058
    %v2594 = vunpack.c.l.b16 %v2059
    %v2595 = vunpack.c.l.b16 %v2060
    %v2596 = vunpack.c.l.b16 %v2061
    %v2597 = vunpack.c.l.b16 %v2062
    %v2598 = vunpack.c.l.b16 %v2063
    %v2599 = vunpack.c.l.b16 %v2064
    %v2600 = vunpack.c.l.b16 %v2065
    %v2601 = vunpack.c.l.b16 %v2066
    %v2602 = vunpack.c.l.b16 %v2067
    %v2603 = vunpack.c.l.b16 %v2068
    %v2604 = vunpack.c.l.b16 %v2069
    %v2605 = vunpack.c.l.b16 %v2070
    %v2606 = vunpack.c.l.b16 %v2071
    %v2607 = vunpack.c.l.b16 %v2072
    %v2608 = vunpack.c.l.b16 %v2073
    %v2609 = vunpack.c.l.b16 %v2074
    %v2610 = vunpack.c.l.b16 %v2075
    %v2611 = vunpack.c.l.b16 %v2076
    %v2612 = vunpack.c.l.b16 %v2077
    %v2613 = vunpack.c.l.b16 %v2078
    %v2614 = vunpack.c.l.b16 %v2079
    %v2615 = vunpack.c.l.b16 %v2080
    %v2616 = vunpack.c.l.b16 %v2081
    %v2617 = vunpack.c.l.b16 %v2082
    %v2618 = vunpack.c.l.b16 %v2083
    %v2619 = vunpack.c.l.b16 %v2084
    %v2620 = vunpack.c.l.b16 %v2085
    %v2621 = vunpack.c.l.b16 %v2086
    %v2622 = vunpack.c.l.b16 %v2087
    %v2623 = vunpack.c.l.b16 %v2088
    %v2624 = vunpack.c.l.b16 %v2089
    %v2625 = vunpack.c.l.b16 %v2090
    %v2626 = vunpack.c.l.b16 %v2091
    %v2627 = vunpack.c.l.b16 %v2092
    %v2628 = vunpack.c.l.b16 %v2093
    %v2629 = vunpack.c.l.b16 %v2094
    %v2630 = vunpack.c.l.b16 %v2095
    %v2631 = vunpack.c.l.b16 %v2096
    %v2632 = vunpack.c.l.b16 %v2097
    %v2633 = vunpack.c.l.b16 %v2098
    %v2634 = vunpack.c.l.b16 %v2099
    %v2635 = vunpack.c.l.b16 %v2100
    %v2636 = vunpack.c.l.b16 %v2101
    %v2637 = vunpack.c.l.b16 %v2102
    %v2638 = vunpack.c.l.b16 %v2103
    %v2639 = vunpack.c.l.b16 %v2104
    %v2640 = vunpack.c.l.b16 %v2105
    %v2641 = vunpack.c.l.b16 %v2106
    %v2642 = vunpack.c.l.b16 %v2107
    %v2643 = vunpack.c.l.b16 %v2108
    %v2644 = vunpack.c.l.b16 %v2109
    %v2645 = vunpack.c.l.b16 %v2110
    %v2646 = vunpack.c.l.b16 %v2111
    %v2647 = vunpack.c.l.b16 %v2112
    %v2648 = vunpack.c.l.b16 %v2113
    %v2649 = vunpack.c.l.b16 %v2114
    %v2650 = vunpack.c.l.b16 %v2115
    %v2651 = vunpack.c.l.b16 %v2116
    %v2652 = vunpack.c.l.b16 %v2117
    %v2653 = vunpack.c.l.b16 %v2118
    %v2654 = vunpack.c.l.b16 %v2119
    %v2655 = vunpack.c.l.b16 %v2120
    %v2656 = vunpack.c.l.b16 %v2121
    %v2657 = vunpack.c.l.b16 %v2122
    %v2658 = vunpack.c.l.b16 %v2123
    %v2659 = vunpack.c.l.b16 %v2124
    %v2660 = vunpack.c.l.b16 %v2125
    %v2661 = vunpack.c.l.b16 %v2126
    %v2662 = vunpack.c.l.b16 %v2127
    %v2663 = vunpack.c.l.b16 %v2128
    %v2664 = vunpack.c.l.b16 %v2129
    %v2665 = vunpack.c.l.b16 %v2130
    %v2666 = vunpack.c.l.b16 %v2131
    %v2667 = vunpack.c.l.b16 %v2132
    %v2668 = vunpack.c.l.b16 %v2133
    %v2669 = vunpack.c.l.b16 %v2134
    %v2670 = vunpack.c.l.b16 %v2135
    %v2671 = vunpack.c.l.b16 %v2136
    %v2672 = vunpack.c.l.b16 %v2137
    %v2673 = vunpack.c.l.b16 %v2138
    %v2674 = vunpack.c.l.b16 %v2139
    %v2675 = vunpack.c.l.b16 %v2140
    %v2676 = vunpack.c.l.b16 %v2141
    %v2677 = vunpack.c.l.b16 %v2142
    %v2678 = vunpack.c.l.b16 %v2143
    %v2679 = vunpack.c.l.b16 %v2144
    %v2680 = vunpack.c.l.b16 %v2145
    %v2681 = vunpack.c.l.b16 %v2146
    %v2682 = vunpack.c.l.b16 %v2147
    %v2683 = vunpack.c.l.b16 %v2148
    %v2684 = vunpack.c.l.b16 %v2149
    %v2685 = vunpack.c.l.b16 %v2150
    %v2686 = vunpack.c.l.b16 %v2151
    %v2687 = vunpack.c.l.b16 %v2152
    %v2688 = vunpack.c.l.b16 %v2153
    %v2689 = vunpack.c.l.b16 %v2154
    %v2690 = vunpack.c.l.b16 %v2155
    %v2691 = vunpack.c.l.b16 %v2156
    %v2692 = vunpack.c.l.b16 %v2157
    %v2693 = vunpack.c.l.b16 %v2158
    %v2694 = vunpack.c.l.b16 %v2159
    %v2695 = vunpack.c.l.b16 %v2160
    %v2696 = vunpack.c.l.b16 %v2161
    %v2697 = vunpack.c.l.b16 %v2162
    %v2698 = vunpack.c.l.b16 %v2163
    %v2699 = vunpack.c.l.b16 %v2164
    %v2700 = vunpack.c.l.b16 %v2165
    %v2701 = vunpack.c.l.b16 %v2166
    %v2702 = vunpack.c.l.b16 %v2167
    %v2703 = vunpack.c.l.b16 %v2168
    %v2704 = vunpack.c.l.b16 %v2169
    %v2705 = vunpack.c.l.b16 %v2170
    %v2706 = vunpack.c.l.b16 %v2171
    %v2707 = vunpack.c.l.b16 %v2172
    %v2708 = vunpack.c.l.b16 %v2173
    %v2709 = vunpack.c.l.b16 %v2174
    %v2710 = vunpack.c.l.b16 %v2175
    %v2711 = vunpack.c.l.b16 %v2176
    %v2712 = vunpack.c.l.b16 %v2177
    %v2713 = vunpack.c.l.b16 %v2178
    %v2714 = vunpack.c.l.b16 %v2179
    %v2715 = vunpack.c.l.b16 %v2180
    %v2716 = vunpack.c.l.b16 %v2181
    %v2717 = vunpack.c.l.b16 %v2182
    %v2718 = vunpack.c.l.b16 %v2183
    %v2719 = vunpack.c.l.b16 %v2184
    %v2720 = vunpack.c.l.b16 %v2185
    %v2721 = vunpack.c.l.b16 %v2186
    %v2722 = vunpack.c.l.b16 %v2187
    %v2723 = vunpack.c.l.b16 %v2188
    %v2724 = vunpack.c.l.b16 %v2189
    %v2725 = vunpack.c.l.b16 %v2190
    %v2726 = vunpack.c.l.b16 %v2191
    %v2727 = vunpack.c.l.b16 %v2192
    %v2728 = vunpack.c.l.b16 %v2193
    %v2729 = vunpack.c.l.b16 %v2194
    %v2730 = vunpack.c.l.b16 %v2195
    %v2731 = vunpack.c.l.b16 %v2196
    %v2732 = vunpack.c.l.b16 %v2197
    %v2733 = vunpack.c.l.b16 %v2198
    %v2734 = vunpack.c.l.b16 %v2199
    %v2735 = vunpack.c.l.b16 %v2200
    %v2736 = vunpack.c.l.b16 %v2201
    %v2737 = vunpack.c.l.b16 %v2202
    %v2738 = vunpack.c.l.b16 %v2203
    %v2739 = vunpack.c.l.b16 %v2204
    %v2740 = vunpack.c.l.b16 %v2205
    %v2741 = vunpack.c.l.b16 %v2206
    %v2742 = vunpack.c.l.b16 %v2207
    %v2743 = vunpack.c.l.b16 %v2208
    %v2744 = vunpack.c.l.b16 %v2209
    %v2745 = vunpack.c.l.b16 %v2210
    %v2746 = vunpack.c.l.b16 %v2211
    %v2747 = vunpack.c.l.b16 %v2212
    %v2748 = vunpack.c.l.b16 %v2213
    %v2749 = vunpack.c.l.b16 %v2214
    %v2750 = vunpack.c.l.b16 %v2215
    %v2751 = vunpack.c.l.b16 %v2216
    %v2752 = vunpack.c.l.b16 %v2217
    %v2753 = vunpack.c.l.b16 %v2218
    %v2754 = vpack.c.b16 %v2499, %v2498
    %v2755 = vpack.c.b16 %v2501, %v2500
    %v2756 = vpack.c.b16 %v2503, %v2502
    %v2757 = vpack.c.b16 %v2505, %v2504
    %v2758 = vpack.c.b16 %v2507, %v2506
    %v2759 = vpack.c.b16 %v2509, %v2508
    %v2760 = vpack.c.b16 %v2511, %v2510
    %v2761 = vpack.c.b16 %v2513, %v2512
    %v2762 = vpack.c.b16 %v2515, %v2514
    %v2763 = vpack.c.b16 %v2517, %v2516
    %v2764 = vpack.c.b16 %v2519, %v2518
    %v2765 = vpack.c.b16 %v2521, %v2520
    %v2766 = vpack.c.b16 %v2523, %v2522
    %v2767 = vpack.c.b16 %v2525, %v2524
    %v2768 = vpack.c.b16 %v2527, %v2526
    %v2769 = vpack.c.b16 %v2529, %v2528
    %v2770 = vpack.c.b16 %v2531, %v2530
    %v2771 = vpack.c.b16 %v2533, %v2532
    %v2772 = vpack.c.b16 %v2535, %v2534
    %v2773 = vpack.c.b16 %v2537, %v2536
    %v2774 = vpack.c.b16 %v2539, %v2538
    %v2775 = vpack.c.b16 %v2541, %v2540
    %v2776 = vpack.c.b16 %v2543, %v2542
    %v2777 = vpack.c.b16 %v2545, %v2544
    %v2778 = vpack.c.b16 %v2547, %v2546
    %v2779 = vpack.c.b16 %v2549, %v2548
    %v2780 = vpack.c.b16 %v2551, %v2550
    %v2781 = vpack.c.b16 %v2553, %v2552
    %v2782 = vpack.c.b16 %v2555, %v2554
    %v2783 = vpack.c.b16 %v2557, %v2556
    %v2784 = vpack.c.b16 %v2559, %v2558
    %v2785 = vpack.c.b16 %v2561, %v2560
    %v2786 = vpack.c.b16 %v2563, %v2562
    %v2787 = vpack.c.b16 %v2565, %v2564
    %v2788 = vpack.c.b16 %v2567, %v2566
    %v2789 = vpack.c.b16 %v2569, %v2568
    %v2790 = vpack.c.b16 %v2571, %v2570
    %v2791 = vpack.c.b16 %v2573, %v2572
    %v2792 = vpack.c.b16 %v2575, %v2574
    %v2793 = vpack.c.b16 %v2577, %v2576
    %v2794 = vpack.c.b16 %v2579, %v2578
    %v2795 = vpack.c.b16 %v2581, %v2580
    %v2796 = vpack.c.b16 %v2583, %v2582
    %v2797 = vpack.c.b16 %v2585, %v2584
    %v2798 = vpack.c.b16 %v2587, %v2586
    %v2799 = vpack.c.b16 %v2589, %v2588
    %v2800 = vpack.c.b16 %v2591, %v2590
    %v2801 = vpack.c.b16 %v2593, %v2592
    %v2802 = vpack.c.b16 %v2595, %v2594
    %v2803 = vpack.c.b16 %v2597, %v2596
    %v2804 = vpack.c.b16 %v2599, %v2598
    %v2805 = vpack.c.b16 %v2601, %v2600
    %v2806 = vpack.c.b16 %v2603, %v2602
    %v2807 = vpack.c.b16 %v2605, %v2604
    %v2808 = vpack.c.b16 %v2607, %v2606
    %v2809 = vpack.c.b16 %v2609, %v2608
    %v2810 = vpack.c.b16 %v2611, %v2610
    %v2811 = vpack.c.b16 %v2613, %v2612
    %v2812 = vpack.c.b16 %v2615, %v2614
    %v2813 = vpack.c.b16 %v2617, %v2616
    %v2814 = vpack.c.b16 %v2619, %v2618
    %v2815 = vpack.c.b16 %v2621, %v2620
    %v2816 = vpack.c.b16 %v2623, %v2622
    %v2817 = vpack.c.b16 %v2625, %v2624
    %v2818 = vpack.c.b16 %v2627, %v2626
    %v2819 = vpack.c.b16 %v2629, %v2628
    %v2820 = vpack.c.b16 %v2631, %v2630
    %v2821 = vpack.c.b16 %v2633, %v2632
    %v2822 = vpack.c.b16 %v2635, %v2634
    %v2823 = vpack.c.b16 %v2637, %v2636
    %v2824 = vpack.c.b16 %v2639, %v2638
    %v2825 = vpack.c.b16 %v2641, %v2640
    %v2826 = vpack.c.b16 %v2643, %v2642
    %v2827 = vpack.c.b16 %v2645, %v2644
    %v2828 = vpack.c.b16 %v2647, %v2646
    %v2829 = vpack.c.b16 %v2649, %v2648
    %v2830 = vpack.c.b16 %v2651, %v2650
    %v2831 = vpack.c.b16 %v2653, %v2652
    %v2832 = vpack.c.b16 %v2655, %v2654
    %v2833 = vpack.c.b16 %v2657, %v2656
    %v2834 = vpack.c.b16 %v2659, %v2658
    %v2835 = vpack.c.b16 %v2661, %v2660
    %v2836 = vpack.c.b16 %v2663, %v2662
    %v2837 = vpack.c.b16 %v2665, %v2664
    %v2838 = vpack.c.b16 %v2667, %v2666
    %v2839 = vpack.c.b16 %v2669, %v2668
    %v2840 = vpack.c.b16 %v2671, %v2670
    %v2841 = vpack.c.b16 %v2673, %v2672
    %v2842 = vpack.c.b16 %v2675, %v2674
    %v2843 = vpack.c.b16 %v2677, %v2676
    %v2844 = vpack.c.b16 %v2679, %v2678
    %v2845 = vpack.c.b16 %v2681, %v2680
    %v2846 = vpack.c.b16 %v2683, %v2682
    %v2847 = vpack.c.b16 %v2685, %v2684
    %v2848 = vpack.c.b16 %v2687, %v2686
    %v2849 = vpack.c.b16 %v2689, %v2688
    %v2850 = vpack.c.b16 %v2691, %v2690
    %v2851 = vpack.c.b16 %v2693, %v2692
    %v2852 = vpack.c.b16 %v2695, %v2694
    %v2853 = vpack.c.b16 %v2697, %v2696
    %v2854 = vpack.c.b16 %v2699, %v2698
    %v2855 = vpack.c.b16 %v2701, %v2700
    %v2856 = vpack.c.b16 %v2703, %v2702
    %v2857 = vpack.c.b16 %v2705, %v2704
    %v2858 = vpack.c.b16 %v2707, %v2706
    %v2859 = vpack.c.b16 %v2709, %v2708
    %v2860 = vpack.c.b16 %v2711, %v2710
    %v2861 = vpack.c.b16 %v2713, %v2712
    %v2862 = vpack.c.b16 %v2715, %v2714
    %v2863 = vpack.c.b16 %v2717, %v2716
    %v2864 = vpack.c.b16 %v2719, %v2718
    %v2865 = vpack.c.b16 %v2721, %v2720
    %v2866 = vpack.c.b16 %v2723, %v2722
    %v2867 = vpack.c.b16 %v2725, %v2724
    %v2868 = vpack.c.b16 %v2727, %v2726
    %v2869 = vpack.c.b16 %v2729, %v2728
    %v2870 = vpack.c.b16 %v2731, %v2730
    %v2871 = vpack.c.b16 %v2733, %v2732
    %v2872 = vpack.c.b16 %v2735, %v2734
    %v2873 = vpack.c.b16 %v2737, %v2736
    %v2874 = vpack.c.b16 %v2739, %v2738
    %v2875 = vpack.c.b16 %v2741, %v2740
    %v2876 = vpack.c.b16 %v2743, %v2742
    %v2877 = vpack.c.b16 %v2745, %v2744
    %v2878 = vpack.c.b16 %v2747, %v2746
    %v2879 = vpack.c.b16 %v2749, %v2748
    %v2880 = vpack.c.b16 %v2751, %v2750
    %v2881 = vpack.c.b16 %v2753, %v2752
    %3010 = vmatprep.subr.bf16.mxu0 0
    %3011 = vmatpush1.bf16.msra.mxu0 %v2754
    %3012 = vmatprep.subr.bf16.mxu0 0
    %3013 = vmatpush1.bf16.msra.mxu0 %v2755
    %3014 = vmatprep.subr.bf16.mxu0 0
    %3015 = vmatpush1.bf16.msra.mxu0 %v2756
    %3016 = vmatprep.subr.bf16.mxu0 0
    %3017 = vmatpush1.bf16.msra.mxu0 %v2757
    %3018 = vmatprep.subr.bf16.mxu0 0
    %3019 = vmatpush1.bf16.msra.mxu0 %v2758
    %3020 = vmatprep.subr.bf16.mxu0 0
    %3021 = vmatpush1.bf16.msra.mxu0 %v2759
    %3022 = vmatprep.subr.bf16.mxu0 0
    %3023 = vmatpush1.bf16.msra.mxu0 %v2760
    %3024 = vmatprep.subr.bf16.mxu0 0
    %3025 = vmatpush1.bf16.msra.mxu0 %v2761
    %3026 = vmatprep.subr.bf16.mxu0 0
    %3027 = vmatpush1.bf16.msra.mxu0 %v2762
    %3028 = vmatprep.subr.bf16.mxu0 0
    %3029 = vmatpush1.bf16.msra.mxu0 %v2763
    %3030 = vmatprep.subr.bf16.mxu0 0
    %3031 = vmatpush1.bf16.msra.mxu0 %v2764
    %3032 = vmatprep.subr.bf16.mxu0 0
    %3033 = vmatpush1.bf16.msra.mxu0 %v2765
    %3034 = vmatprep.subr.bf16.mxu0 0
    %3035 = vmatpush1.bf16.msra.mxu0 %v2766
    %3036 = vmatprep.subr.bf16.mxu0 0
    %3037 = vmatpush1.bf16.msra.mxu0 %v2767
    %3038 = vmatprep.subr.bf16.mxu0 0
    %3039 = vmatpush1.bf16.msra.mxu0 %v2768
    %3040 = vmatprep.subr.bf16.mxu0 0
    %3041 = vmatpush1.bf16.msra.mxu0 %v2769
    %3042 = vmatprep.mubr.bf16.mxu0 %v2220
    %3043 = vmatmul.mubr.bf16.gmra.mrb[0].mxu0 %v2219
    %v3044 = vpop.f32.mrb[0].mxu0
    %v3045 = vadd.f32 %v2240, %v3044
    %v3046 = vpop.f32.mrb[0].mxu0
    %v3047 = vpop.f32.mrb[0].mxu0
    %v3048 = vadd.f32 %v2240, %v3047
    %v3049 = vpop.f32.mrb[0].mxu0
    %3050 = vdwg.mxu0
    %3051 = vmatprep.subr.bf16.mxu0 0
    %3052 = vmatpush1.bf16.msra.mxu0 %v2770
    %3053 = vmatprep.subr.bf16.mxu0 0
    %3054 = vmatpush1.bf16.msra.mxu0 %v2771
    %3055 = vmatprep.subr.bf16.mxu0 0
    %3056 = vmatpush1.bf16.msra.mxu0 %v2772
    %3057 = vmatprep.subr.bf16.mxu0 0
    %3058 = vmatpush1.bf16.msra.mxu0 %v2773
    %3059 = vmatprep.subr.bf16.mxu0 0
    %3060 = vmatpush1.bf16.msra.mxu0 %v2774
    %3061 = vmatprep.subr.bf16.mxu0 0
    %3062 = vmatpush1.bf16.msra.mxu0 %v2775
    %3063 = vmatprep.subr.bf16.mxu0 0
    %3064 = vmatpush1.bf16.msra.mxu0 %v2776
    %3065 = vmatprep.subr.bf16.mxu0 0
    %3066 = vmatpush1.bf16.msra.mxu0 %v2777
    %3067 = vmatprep.subr.bf16.mxu0 0
    %3068 = vmatpush1.bf16.msra.mxu0 %v2778
    %3069 = vmatprep.subr.bf16.mxu0 0
    %3070 = vmatpush1.bf16.msra.mxu0 %v2779
    %3071 = vmatprep.subr.bf16.mxu0 0
    %3072 = vmatpush1.bf16.msra.mxu0 %v2780
    %3073 = vmatprep.subr.bf16.mxu0 0
    %3074 = vmatpush1.bf16.msra.mxu0 %v2781
    %3075 = vmatprep.subr.bf16.mxu0 0
    %3076 = vmatpush1.bf16.msra.mxu0 %v2782
    %3077 = vmatprep.subr.bf16.mxu0 0
    %3078 = vmatpush1.bf16.msra.mxu0 %v2783
    %3079 = vmatprep.subr.bf16.mxu0 0
    %3080 = vmatpush1.bf16.msra.mxu0 %v2784
    %3081 = vmatprep.subr.bf16.mxu0 0
    %3082 = vmatpush1.bf16.msra.mxu0 %v2785
    %3083 = vmatprep.mubr.bf16.mxu0 %v2222
    %3084 = vmatmul.mubr.bf16.gmra.mrb[0].mxu0 %v2221
    %v3085 = vpop.f32.mrb[0].mxu0
    %v3086 = vadd.f32 %v3045, %v3085
    %v3087 = vpop.f32.mrb[0].mxu0
    %v3088 = vpop.f32.mrb[0].mxu0
    %v3089 = vadd.f32 %v3048, %v3088
    %v3090 = vpop.f32.mrb[0].mxu0
    %3091 = vdwg.mxu0
    %3092 = vmatprep.subr.bf16.mxu0 0
    %3093 = vmatpush1.bf16.msra.mxu0 %v2786
    %3094 = vmatprep.subr.bf16.mxu0 0
    %3095 = vmatpush1.bf16.msra.mxu0 %v2787
    %3096 = vmatprep.subr.bf16.mxu0 0
    %3097 = vmatpush1.bf16.msra.mxu0 %v2788
    %3098 = vmatprep.subr.bf16.mxu0 0
    %3099 = vmatpush1.bf16.msra.mxu0 %v2789
    %3100 = vmatprep.subr.bf16.mxu0 0
    %3101 = vmatpush1.bf16.msra.mxu0 %v2790
    %3102 = vmatprep.subr.bf16.mxu0 0
    %3103 = vmatpush1.bf16.msra.mxu0 %v2791
    %3104 = vmatprep.subr.bf16.mxu0 0
    %3105 = vmatpush1.bf16.msra.mxu0 %v2792
    %3106 = vmatprep.subr.bf16.mxu0 0
    %3107 = vmatpush1.bf16.msra.mxu0 %v2793
    %3108 = vmatprep.subr.bf16.mxu0 0
    %3109 = vmatpush1.bf16.msra.mxu0 %v2794
    %3110 = vmatprep.subr.bf16.mxu0 0
    %3111 = vmatpush1.bf16.msra.mxu0 %v2795
    %3112 = vmatprep.subr.bf16.mxu0 0
    %3113 = vmatpush1.bf16.msra.mxu0 %v2796
    %3114 = vmatprep.subr.bf16.mxu0 0
    %3115 = vmatpush1.bf16.msra.mxu0 %v2797
    %3116 = vmatprep.subr.bf16.mxu0 0
    %3117 = vmatpush1.bf16.msra.mxu0 %v2798
    %3118 = vmatprep.subr.bf16.mxu0 0
    %3119 = vmatpush1.bf16.msra.mxu0 %v2799
    %3120 = vmatprep.subr.bf16.mxu0 0
    %3121 = vmatpush1.bf16.msra.mxu0 %v2800
    %3122 = vmatprep.subr.bf16.mxu0 0
    %3123 = vmatpush1.bf16.msra.mxu0 %v2801
    %3124 = vmatprep.mubr.bf16.mxu0 %v2224
    %3125 = vmatmul.mubr.bf16.gmra.mrb[0].mxu0 %v2223
    %v3126 = vpop.f32.mrb[0].mxu0
    %v3127 = vadd.f32 %v3086, %v3126
    %v3128 = vpop.f32.mrb[0].mxu0
    %v3129 = vpop.f32.mrb[0].mxu0
    %v3130 = vadd.f32 %v3089, %v3129
    %v3131 = vpop.f32.mrb[0].mxu0
    %3132 = vdwg.mxu0
    %3133 = vmatprep.subr.bf16.mxu0 0
    %3134 = vmatpush1.bf16.msra.mxu0 %v2802
    %3135 = vmatprep.subr.bf16.mxu0 0
    %3136 = vmatpush1.bf16.msra.mxu0 %v2803
    %3137 = vmatprep.subr.bf16.mxu0 0
    %3138 = vmatpush1.bf16.msra.mxu0 %v2804
    %3139 = vmatprep.subr.bf16.mxu0 0
    %3140 = vmatpush1.bf16.msra.mxu0 %v2805
    %3141 = vmatprep.subr.bf16.mxu0 0
    %3142 = vmatpush1.bf16.msra.mxu0 %v2806
    %3143 = vmatprep.subr.bf16.mxu0 0
    %3144 = vmatpush1.bf16.msra.mxu0 %v2807
    %3145 = vmatprep.subr.bf16.mxu0 0
    %3146 = vmatpush1.bf16.msra.mxu0 %v2808
    %3147 = vmatprep.subr.bf16.mxu0 0
    %3148 = vmatpush1.bf16.msra.mxu0 %v2809
    %3149 = vmatprep.subr.bf16.mxu0 0
    %3150 = vmatpush1.bf16.msra.mxu0 %v2810
    %3151 = vmatprep.subr.bf16.mxu0 0
    %3152 = vmatpush1.bf16.msra.mxu0 %v2811
    %3153 = vmatprep.subr.bf16.mxu0 0
    %3154 = vmatpush1.bf16.msra.mxu0 %v2812
    %3155 = vmatprep.subr.bf16.mxu0 0
    %3156 = vmatpush1.bf16.msra.mxu0 %v2813
    %3157 = vmatprep.subr.bf16.mxu0 0
    %3158 = vmatpush1.bf16.msra.mxu0 %v2814
    %3159 = vmatprep.subr.bf16.mxu0 0
    %3160 = vmatpush1.bf16.msra.mxu0 %v2815
    %3161 = vmatprep.subr.bf16.mxu0 0
    %3162 = vmatpush1.bf16.msra.mxu0 %v2816
    %3163 = vmatprep.subr.bf16.mxu0 0
    %3164 = vmatpush1.bf16.msra.mxu0 %v2817
    %3165 = vmatprep.mubr.bf16.mxu0 %v2226
    %3166 = vmatmul.mubr.bf16.gmra.mrb[0].mxu0 %v2225
    %v3167 = vpop.f32.mrb[0].mxu0
    %v3168 = vadd.f32 %v3127, %v3167
    %v3169 = vpop.f32.mrb[0].mxu0
    %v3170 = vpop.f32.mrb[0].mxu0
    %v3171 = vadd.f32 %v3130, %v3170
    %v3172 = vpop.f32.mrb[0].mxu0
    %3173 = vdwg.mxu0
    %3174 = vmatprep.subr.bf16.mxu0 0
    %3175 = vmatpush1.bf16.msra.mxu0 %v2818
    %3176 = vmatprep.subr.bf16.mxu0 0
    %3177 = vmatpush1.bf16.msra.mxu0 %v2819
    %3178 = vmatprep.subr.bf16.mxu0 0
    %3179 = vmatpush1.bf16.msra.mxu0 %v2820
    %3180 = vmatprep.subr.bf16.mxu0 0
    %3181 = vmatpush1.bf16.msra.mxu0 %v2821
    %3182 = vmatprep.subr.bf16.mxu0 0
    %3183 = vmatpush1.bf16.msra.mxu0 %v2822
    %3184 = vmatprep.subr.bf16.mxu0 0
    %3185 = vmatpush1.bf16.msra.mxu0 %v2823
    %3186 = vmatprep.subr.bf16.mxu0 0
    %3187 = vmatpush1.bf16.msra.mxu0 %v2824
    %3188 = vmatprep.subr.bf16.mxu0 0
    %3189 = vmatpush1.bf16.msra.mxu0 %v2825
    %3190 = vmatprep.subr.bf16.mxu0 0
    %3191 = vmatpush1.bf16.msra.mxu0 %v2826
    %3192 = vmatprep.subr.bf16.mxu0 0
    %3193 = vmatpush1.bf16.msra.mxu0 %v2827
    %3194 = vmatprep.subr.bf16.mxu0 0
    %3195 = vmatpush1.bf16.msra.mxu0 %v2828
    %3196 = vmatprep.subr.bf16.mxu0 0
    %3197 = vmatpush1.bf16.msra.mxu0 %v2829
    %3198 = vmatprep.subr.bf16.mxu0 0
    %3199 = vmatpush1.bf16.msra.mxu0 %v2830
    %3200 = vmatprep.subr.bf16.mxu0 0
    %3201 = vmatpush1.bf16.msra.mxu0 %v2831
    %3202 = vmatprep.subr.bf16.mxu0 0
    %3203 = vmatpush1.bf16.msra.mxu0 %v2832
    %3204 = vmatprep.subr.bf16.mxu0 0
    %3205 = vmatpush1.bf16.msra.mxu0 %v2833
    %3206 = vmatprep.mubr.bf16.mxu0 %v2228
    %3207 = vmatmul.mubr.bf16.gmra.mrb[0].mxu0 %v2227
    %v3208 = vpop.f32.mrb[0].mxu0
    %v3209 = vadd.f32 %v3168, %v3208
    %v3210 = vpop.f32.mrb[0].mxu0
    %v3211 = vpop.f32.mrb[0].mxu0
    %v3212 = vadd.f32 %v3171, %v3211
    %v3213 = vpop.f32.mrb[0].mxu0
    %3214 = vdwg.mxu0
    %3215 = vmatprep.subr.bf16.mxu0 0
    %3216 = vmatpush1.bf16.msra.mxu0 %v2834
    %3217 = vmatprep.subr.bf16.mxu0 0
    %3218 = vmatpush1.bf16.msra.mxu0 %v2835
    %3219 = vmatprep.subr.bf16.mxu0 0
    %3220 = vmatpush1.bf16.msra.mxu0 %v2836
    %3221 = vmatprep.subr.bf16.mxu0 0
    %3222 = vmatpush1.bf16.msra.mxu0 %v2837
    %3223 = vmatprep.subr.bf16.mxu0 0
    %3224 = vmatpush1.bf16.msra.mxu0 %v2838
    %3225 = vmatprep.subr.bf16.mxu0 0
    %3226 = vmatpush1.bf16.msra.mxu0 %v2839
    %3227 = vmatprep.subr.bf16.mxu0 0
    %3228 = vmatpush1.bf16.msra.mxu0 %v2840
    %3229 = vmatprep.subr.bf16.mxu0 0
    %3230 = vmatpush1.bf16.msra.mxu0 %v2841
    %3231 = vmatprep.subr.bf16.mxu0 0
    %3232 = vmatpush1.bf16.msra.mxu0 %v2842
    %3233 = vmatprep.subr.bf16.mxu0 0
    %3234 = vmatpush1.bf16.msra.mxu0 %v2843
    %3235 = vmatprep.subr.bf16.mxu0 0
    %3236 = vmatpush1.bf16.msra.mxu0 %v2844
    %3237 = vmatprep.subr.bf16.mxu0 0
    %3238 = vmatpush1.bf16.msra.mxu0 %v2845
    %3239 = vmatprep.subr.bf16.mxu0 0
    %3240 = vmatpush1.bf16.msra.mxu0 %v2846
    %3241 = vmatprep.subr.bf16.mxu0 0
    %3242 = vmatpush1.bf16.msra.mxu0 %v2847
    %3243 = vmatprep.subr.bf16.mxu0 0
    %3244 = vmatpush1.bf16.msra.mxu0 %v2848
    %3245 = vmatprep.subr.bf16.mxu0 0
    %3246 = vmatpush1.bf16.msra.mxu0 %v2849
    %3247 = vmatprep.mubr.bf16.mxu0 %v2230
    %3248 = vmatmul.mubr.bf16.gmra.mrb[0].mxu0 %v2229
    %v3249 = vpop.f32.mrb[0].mxu0
    %v3250 = vadd.f32 %v3209, %v3249
    %v3251 = vpop.f32.mrb[0].mxu0
    %v3252 = vpop.f32.mrb[0].mxu0
    %v3253 = vadd.f32 %v3212, %v3252
    %v3254 = vpop.f32.mrb[0].mxu0
    %3255 = vdwg.mxu0
    %3256 = vmatprep.subr.bf16.mxu0 0
    %3257 = vmatpush1.bf16.msra.mxu0 %v2850
    %3258 = vmatprep.subr.bf16.mxu0 0
    %3259 = vmatpush1.bf16.msra.mxu0 %v2851
    %3260 = vmatprep.subr.bf16.mxu0 0
    %3261 = vmatpush1.bf16.msra.mxu0 %v2852
    %3262 = vmatprep.subr.bf16.mxu0 0
    %3263 = vmatpush1.bf16.msra.mxu0 %v2853
    %3264 = vmatprep.subr.bf16.mxu0 0
    %3265 = vmatpush1.bf16.msra.mxu0 %v2854
    %3266 = vmatprep.subr.bf16.mxu0 0
    %3267 = vmatpush1.bf16.msra.mxu0 %v2855
    %3268 = vmatprep.subr.bf16.mxu0 0
    %3269 = vmatpush1.bf16.msra.mxu0 %v2856
    %3270 = vmatprep.subr.bf16.mxu0 0
    %3271 = vmatpush1.bf16.msra.mxu0 %v2857
    %3272 = vmatprep.subr.bf16.mxu0 0
    %3273 = vmatpush1.bf16.msra.mxu0 %v2858
    %3274 = vmatprep.subr.bf16.mxu0 0
    %3275 = vmatpush1.bf16.msra.mxu0 %v2859
    %3276 = vmatprep.subr.bf16.mxu0 0
    %3277 = vmatpush1.bf16.msra.mxu0 %v2860
    %3278 = vmatprep.subr.bf16.mxu0 0
    %3279 = vmatpush1.bf16.msra.mxu0 %v2861
    %3280 = vmatprep.subr.bf16.mxu0 0
    %3281 = vmatpush1.bf16.msra.mxu0 %v2862
    %3282 = vmatprep.subr.bf16.mxu0 0
    %3283 = vmatpush1.bf16.msra.mxu0 %v2863
    %3284 = vmatprep.subr.bf16.mxu0 0
    %3285 = vmatpush1.bf16.msra.mxu0 %v2864
    %3286 = vmatprep.subr.bf16.mxu0 0
    %3287 = vmatpush1.bf16.msra.mxu0 %v2865
    %3288 = vmatprep.mubr.bf16.mxu0 %v2232
    %3289 = vmatmul.mubr.bf16.gmra.mrb[0].mxu0 %v2231
    %v3290 = vpop.f32.mrb[0].mxu0
    %v3291 = vadd.f32 %v3250, %v3290
    %v3292 = vpop.f32.mrb[0].mxu0
    %v3293 = vpop.f32.mrb[0].mxu0
    %v3294 = vadd.f32 %v3253, %v3293
    %v3295 = vpop.f32.mrb[0].mxu0
    %3296 = vdwg.mxu0
    %3297 = vmatprep.subr.bf16.mxu0 0
    %3298 = vmatpush1.bf16.msra.mxu0 %v2866
    %3299 = vmatprep.subr.bf16.mxu0 0
    %3300 = vmatpush1.bf16.msra.mxu0 %v2867
    %3301 = vmatprep.subr.bf16.mxu0 0
    %3302 = vmatpush1.bf16.msra.mxu0 %v2868
    %3303 = vmatprep.subr.bf16.mxu0 0
    %3304 = vmatpush1.bf16.msra.mxu0 %v2869
    %3305 = vmatprep.subr.bf16.mxu0 0
    %3306 = vmatpush1.bf16.msra.mxu0 %v2870
    %3307 = vmatprep.subr.bf16.mxu0 0
    %3308 = vmatpush1.bf16.msra.mxu0 %v2871
    %3309 = vmatprep.subr.bf16.mxu0 0
    %3310 = vmatpush1.bf16.msra.mxu0 %v2872
    %3311 = vmatprep.subr.bf16.mxu0 0
    %3312 = vmatpush1.bf16.msra.mxu0 %v2873
    %3313 = vmatprep.subr.bf16.mxu0 0
    %3314 = vmatpush1.bf16.msra.mxu0 %v2874
    %3315 = vmatprep.subr.bf16.mxu0 0
    %3316 = vmatpush1.bf16.msra.mxu0 %v2875
    %3317 = vmatprep.subr.bf16.mxu0 0
    %3318 = vmatpush1.bf16.msra.mxu0 %v2876
    %3319 = vmatprep.subr.bf16.mxu0 0
    %3320 = vmatpush1.bf16.msra.mxu0 %v2877
    %3321 = vmatprep.subr.bf16.mxu0 0
    %3322 = vmatpush1.bf16.msra.mxu0 %v2878
    %3323 = vmatprep.subr.bf16.mxu0 0
    %3324 = vmatpush1.bf16.msra.mxu0 %v2879
    %3325 = vmatprep.subr.bf16.mxu0 0
    %3326 = vmatpush1.bf16.msra.mxu0 %v2880
    %3327 = vmatprep.subr.bf16.mxu0 0
    %3328 = vmatpush1.bf16.msra.mxu0 %v2881
    %3329 = vmatprep.mubr.bf16.mxu0 %v2234
    %3330 = vmatmul.mubr.bf16.gmra.mrb[0].mxu0 %v2233
    %v3331 = vpop.f32.mrb[0].mxu0
    %v3332 = vadd.f32 %v3291, %v3331
    %v3333 = vpop.f32.mrb[0].mxu0
    %v3334 = vpop.f32.mrb[0].mxu0
    %v3335 = vadd.f32 %v3294, %v3334
    %v3336 = vpop.f32.mrb[0].mxu0
    %3337 = vdwg.mxu0
    %v3338 = vadd.f32 %v732, %v3332
    %v3339 = vadd.f32 %v733, %v3335
    %v3340 = vld [vmem:[#allocation10] sm:$0x1]
    %v3341 = vld [vmem:[%s13] sm:$0x1]
    %3342 = vadd.xlane.f32.xlu0 %v3338
    %v3343 = vpop.xlane.xlu0 %3342
    %3344 = vadd.xlane.f32.xlu0 %v3339
    %v3345 = vpop.xlane.xlu0 %3344
    %v3346 = vmul.f32 %v3343, %v699
    %v3347 = vmul.f32 %v3345, %v699
    %v3348 = vsub.f32 %v3338, %v3346
    %v3349 = vsub.f32 %v3339, %v3347
    %v3350 = vmul.f32 %v3348, %v3348
    %v3351 = vmul.f32 %v3349, %v3349
    %3352 = vadd.xlane.f32.xlu0 %v3350
    %v3353 = vpop.xlane.xlu0 %3352
    %3354 = vadd.xlane.f32.xlu0 %v3351
    %v3355 = vpop.xlane.xlu0 %3354
    %v3356 = vmul.f32 %v3353, %v699
    %v3357 = vmul.f32 %v3355, %v699
    %v3358 = vadd.f32 %v3356, 1e-05
    %v3359 = vadd.f32 %v3357, 1e-05
    %v3360 = vrsqrt.pop %v3358
    %v3361 = vrsqrt.pop %v3359
    %v3362 = vmul.f32 %v3348, %v3360
    %v3363 = vmul.f32 %v3349, %v3361
    %v3365 = vlaneseq
    %v3366 = vshrl.u32 %v3365, 7
    %v3367 = vsub.s32 0, %v3366
    %v3368 = vrot.slane %v3340, %v3367
    %v3370 = vmul.f32 %v3362, %v3368
    %v3371 = vmul.f32 %v3363, %v3368
    %v3373 = vlaneseq
    %v3374 = vshrl.u32 %v3373, 7
    %v3375 = vsub.s32 0, %v3374
    %v3376 = vrot.slane %v3341, %v3375
    %v3378 = vadd.f32 %v3370, %v3376
    %v3379 = vadd.f32 %v3371, %v3376
    %v3380 = vld [vmem:[#allocation11] sm:$0xff]
    %v3381 = vld [vmem:[#allocation11 + $0x8] sm:$0xff]
    %v3382 = vld [vmem:[#allocation11 + $0x10] sm:$0xff]
    %v3383 = vld [vmem:[#allocation11 + $0x18] sm:$0xff]
    %v3384 = vld [vmem:[#allocation11 + $0x20] sm:$0xff]
    %v3385 = vld [vmem:[#allocation11 + $0x28] sm:$0xff]
    %v3386 = vld [vmem:[#allocation11 + $0x30] sm:$0xff]
    %v3387 = vld [vmem:[#allocation11 + $0x38] sm:$0xff]
    %v3388 = vld [vmem:[#allocation11 + $0x40] sm:$0xff]
    %v3389 = vld [vmem:[#allocation11 + $0x48] sm:$0xff]
    %v3390 = vld [vmem:[#allocation11 + $0x50] sm:$0xff]
    %v3391 = vld [vmem:[#allocation11 + $0x58] sm:$0xff]
    %v3392 = vld [vmem:[#allocation11 + $0x60] sm:$0xff]
    %v3393 = vld [vmem:[#allocation11 + $0x68] sm:$0xff]
    %v3394 = vld [vmem:[#allocation11 + $0x70] sm:$0xff]
    %v3395 = vld [vmem:[#allocation11 + $0x78] sm:$0xff]
    %v3396 = vld [vmem:[#allocation11 + $0x80] sm:$0xff]
    %v3397 = vld [vmem:[#allocation11 + $0x88] sm:$0xff]
    %v3398 = vld [vmem:[#allocation11 + $0x90] sm:$0xff]
    %v3399 = vld [vmem:[#allocation11 + $0x98] sm:$0xff]
    %v3400 = vld [vmem:[#allocation11 + $0xa0] sm:$0xff]
    %v3401 = vld [vmem:[#allocation11 + $0xa8] sm:$0xff]
    %v3402 = vld [vmem:[#allocation11 + $0xb0] sm:$0xff]
    %v3403 = vld [vmem:[#allocation11 + $0xb8] sm:$0xff]
    %v3404 = vld [vmem:[#allocation11 + $0xc0] sm:$0xff]
    %v3405 = vld [vmem:[#allocation11 + $0xc8] sm:$0xff]
    %v3406 = vld [vmem:[#allocation11 + $0xd0] sm:$0xff]
    %v3407 = vld [vmem:[#allocation11 + $0xd8] sm:$0xff]
    %v3408 = vld [vmem:[#allocation11 + $0xe0] sm:$0xff]
    %v3409 = vld [vmem:[#allocation11 + $0xe8] sm:$0xff]
    %v3410 = vld [vmem:[#allocation11 + $0xf0] sm:$0xff]
    %v3411 = vld [vmem:[#allocation11 + $0xf8] sm:$0xff]
    %v3412 = vld [vmem:[#allocation11 + $0x100] sm:$0xff]
    %v3413 = vld [vmem:[#allocation11 + $0x108] sm:$0xff]
    %v3414 = vld [vmem:[#allocation11 + $0x110] sm:$0xff]
    %v3415 = vld [vmem:[#allocation11 + $0x118] sm:$0xff]
    %v3416 = vld [vmem:[#allocation11 + $0x120] sm:$0xff]
    %v3417 = vld [vmem:[#allocation11 + $0x128] sm:$0xff]
    %v3418 = vld [vmem:[#allocation11 + $0x130] sm:$0xff]
    %v3419 = vld [vmem:[#allocation11 + $0x138] sm:$0xff]
    %v3420 = vld [vmem:[#allocation11 + $0x140] sm:$0xff]
    %v3421 = vld [vmem:[#allocation11 + $0x148] sm:$0xff]
    %v3422 = vld [vmem:[#allocation11 + $0x150] sm:$0xff]
    %v3423 = vld [vmem:[#allocation11 + $0x158] sm:$0xff]
    %v3424 = vld [vmem:[#allocation11 + $0x160] sm:$0xff]
    %v3425 = vld [vmem:[#allocation11 + $0x168] sm:$0xff]
    %v3426 = vld [vmem:[#allocation11 + $0x170] sm:$0xff]
    %v3427 = vld [vmem:[#allocation11 + $0x178] sm:$0xff]
    %v3428 = vld [vmem:[#allocation11 + $0x180] sm:$0xff]
    %v3429 = vld [vmem:[#allocation11 + $0x188] sm:$0xff]
    %v3430 = vld [vmem:[#allocation11 + $0x190] sm:$0xff]
    %v3431 = vld [vmem:[#allocation11 + $0x198] sm:$0xff]
    %v3432 = vld [vmem:[#allocation11 + $0x1a0] sm:$0xff]
    %v3433 = vld [vmem:[#allocation11 + $0x1a8] sm:$0xff]
    %v3434 = vld [vmem:[#allocation11 + $0x1b0] sm:$0xff]
    %v3435 = vld [vmem:[#allocation11 + $0x1b8] sm:$0xff]
    %v3436 = vld [vmem:[#allocation11 + $0x1c0] sm:$0xff]
    %v3437 = vld [vmem:[#allocation11 + $0x1c8] sm:$0xff]
    %v3438 = vld [vmem:[#allocation11 + $0x1d0] sm:$0xff]
    %v3439 = vld [vmem:[#allocation11 + $0x1d8] sm:$0xff]
    %v3440 = vld [vmem:[#allocation11 + $0x1e0] sm:$0xff]
    %v3441 = vld [vmem:[#allocation11 + $0x1e8] sm:$0xff]
    %v3442 = vld [vmem:[#allocation11 + $0x1f0] sm:$0xff]
    %v3443 = vld [vmem:[#allocation11 + $0x1f8] sm:$0xff]
    %v3444 = vpack.c.bf16 %v3379, %v3378
    %v3445 = vld [vmem:[%s16] sm:$0xff]
    %v3447 = vlaneseq
    %v3448 = vshrl.u32 %v3447, 7
    %v3449 = vsub.s32 0, %v3448
    %v3450 = vrot.slane %v3445, %v3449
    %v3451 = vlaneseq
    %v3452 = vshrl.u32 %v3451, 7
    %v3453 = vsub.s32 1, %v3452
    %v3454 = vrot.slane %v3445, %v3453
    %v3455 = vlaneseq
    %v3456 = vshrl.u32 %v3455, 7
    %v3457 = vsub.s32 2, %v3456
    %v3458 = vrot.slane %v3445, %v3457
    %v3459 = vlaneseq
    %v3460 = vshrl.u32 %v3459, 7
    %v3461 = vsub.s32 3, %v3460
    %v3462 = vrot.slane %v3445, %v3461
    %v3463 = vlaneseq
    %v3464 = vshrl.u32 %v3463, 7
    %v3465 = vsub.s32 4, %v3464
    %v3466 = vrot.slane %v3445, %v3465
    %v3467 = vlaneseq
    %v3468 = vshrl.u32 %v3467, 7
    %v3469 = vsub.s32 5, %v3468
    %v3470 = vrot.slane %v3445, %v3469
    %v3471 = vlaneseq
    %v3472 = vshrl.u32 %v3471, 7
    %v3473 = vsub.s32 6, %v3472
    %v3474 = vrot.slane %v3445, %v3473
    %v3475 = vlaneseq
    %v3476 = vshrl.u32 %v3475, 7
    %v3477 = vsub.s32 7, %v3476
    %v3478 = vrot.slane %v3445, %v3477
    %v3551 = vunpack.c.l.b16 %v3380
    %v3552 = vunpack.c.h.b16 %v3380
    %v3553 = vunpack.c.l.b16 %v3381
    %v3554 = vunpack.c.h.b16 %v3381
    %v3555 = vunpack.c.l.b16 %v3382
    %v3556 = vunpack.c.h.b16 %v3382
    %v3557 = vunpack.c.l.b16 %v3383
    %v3558 = vunpack.c.h.b16 %v3383
    %v3559 = vunpack.c.l.b16 %v3384
    %v3560 = vunpack.c.h.b16 %v3384
    %v3561 = vunpack.c.l.b16 %v3385
    %v3562 = vunpack.c.h.b16 %v3385
    %v3563 = vunpack.c.l.b16 %v3386
    %v3564 = vunpack.c.h.b16 %v3386
    %v3565 = vunpack.c.l.b16 %v3387
    %v3566 = vunpack.c.h.b16 %v3387
    %v3567 = vunpack.c.l.b16 %v3388
    %v3568 = vunpack.c.h.b16 %v3388
    %v3569 = vunpack.c.l.b16 %v3389
    %v3570 = vunpack.c.h.b16 %v3389
    %v3571 = vunpack.c.l.b16 %v3390
    %v3572 = vunpack.c.h.b16 %v3390
    %v3573 = vunpack.c.l.b16 %v3391
    %v3574 = vunpack.c.h.b16 %v3391
    %v3575 = vunpack.c.l.b16 %v3392
    %v3576 = vunpack.c.h.b16 %v3392
    %v3577 = vunpack.c.l.b16 %v3393
    %v3578 = vunpack.c.h.b16 %v3393
    %v3579 = vunpack.c.l.b16 %v3394
    %v3580 = vunpack.c.h.b16 %v3394
    %v3581 = vunpack.c.l.b16 %v3395
    %v3582 = vunpack.c.h.b16 %v3395
    %v3583 = vunpack.c.l.b16 %v3396
    %v3584 = vunpack.c.h.b16 %v3396
    %v3585 = vunpack.c.l.b16 %v3397
    %v3586 = vunpack.c.h.b16 %v3397
    %v3587 = vunpack.c.l.b16 %v3398
    %v3588 = vunpack.c.h.b16 %v3398
    %v3589 = vunpack.c.l.b16 %v3399
    %v3590 = vunpack.c.h.b16 %v3399
    %v3591 = vunpack.c.l.b16 %v3400
    %v3592 = vunpack.c.h.b16 %v3400
    %v3593 = vunpack.c.l.b16 %v3401
    %v3594 = vunpack.c.h.b16 %v3401
    %v3595 = vunpack.c.l.b16 %v3402
    %v3596 = vunpack.c.h.b16 %v3402
    %v3597 = vunpack.c.l.b16 %v3403
    %v3598 = vunpack.c.h.b16 %v3403
    %v3599 = vunpack.c.l.b16 %v3404
    %v3600 = vunpack.c.h.b16 %v3404
    %v3601 = vunpack.c.l.b16 %v3405
    %v3602 = vunpack.c.h.b16 %v3405
    %v3603 = vunpack.c.l.b16 %v3406
    %v3604 = vunpack.c.h.b16 %v3406
    %v3605 = vunpack.c.l.b16 %v3407
    %v3606 = vunpack.c.h.b16 %v3407
    %v3607 = vunpack.c.l.b16 %v3408
    %v3608 = vunpack.c.h.b16 %v3408
    %v3609 = vunpack.c.l.b16 %v3409
    %v3610 = vunpack.c.h.b16 %v3409
    %v3611 = vunpack.c.l.b16 %v3410
    %v3612 = vunpack.c.h.b16 %v3410
    %v3613 = vunpack.c.l.b16 %v3411
    %v3614 = vunpack.c.h.b16 %v3411
    %v3615 = vunpack.c.l.b16 %v3412
    %v3616 = vunpack.c.h.b16 %v3412
    %v3617 = vunpack.c.l.b16 %v3413
    %v3618 = vunpack.c.h.b16 %v3413
    %v3619 = vunpack.c.l.b16 %v3414
    %v3620 = vunpack.c.h.b16 %v3414
    %v3621 = vunpack.c.l.b16 %v3415
    %v3622 = vunpack.c.h.b16 %v3415
    %v3623 = vunpack.c.l.b16 %v3416
    %v3624 = vunpack.c.h.b16 %v3416
    %v3625 = vunpack.c.l.b16 %v3417
    %v3626 = vunpack.c.h.b16 %v3417
    %v3627 = vunpack.c.l.b16 %v3418
    %v3628 = vunpack.c.h.b16 %v3418
    %v3629 = vunpack.c.l.b16 %v3419
    %v3630 = vunpack.c.h.b16 %v3419
    %v3631 = vunpack.c.l.b16 %v3420
    %v3632 = vunpack.c.h.b16 %v3420
    %v3633 = vunpack.c.l.b16 %v3421
    %v3634 = vunpack.c.h.b16 %v3421
    %v3635 = vunpack.c.l.b16 %v3422
    %v3636 = vunpack.c.h.b16 %v3422
    %v3637 = vunpack.c.l.b16 %v3423
    %v3638 = vunpack.c.h.b16 %v3423
    %v3639 = vunpack.c.l.b16 %v3424
    %v3640 = vunpack.c.h.b16 %v3424
    %v3641 = vunpack.c.l.b16 %v3425
    %v3642 = vunpack.c.h.b16 %v3425
    %v3643 = vunpack.c.l.b16 %v3426
    %v3644 = vunpack.c.h.b16 %v3426
    %v3645 = vunpack.c.l.b16 %v3427
    %v3646 = vunpack.c.h.b16 %v3427
    %v3647 = vunpack.c.l.b16 %v3428
    %v3648 = vunpack.c.h.b16 %v3428
    %v3649 = vunpack.c.l.b16 %v3429
    %v3650 = vunpack.c.h.b16 %v3429
    %v3651 = vunpack.c.l.b16 %v3430
    %v3652 = vunpack.c.h.b16 %v3430
    %v3653 = vunpack.c.l.b16 %v3431
    %v3654 = vunpack.c.h.b16 %v3431
    %v3655 = vunpack.c.l.b16 %v3432
    %v3656 = vunpack.c.h.b16 %v3432
    %v3657 = vunpack.c.l.b16 %v3433
    %v3658 = vunpack.c.h.b16 %v3433
    %v3659 = vunpack.c.l.b16 %v3434
    %v3660 = vunpack.c.h.b16 %v3434
    %v3661 = vunpack.c.l.b16 %v3435
    %v3662 = vunpack.c.h.b16 %v3435
    %v3663 = vunpack.c.l.b16 %v3436
    %v3664 = vunpack.c.h.b16 %v3436
    %v3665 = vunpack.c.l.b16 %v3437
    %v3666 = vunpack.c.h.b16 %v3437
    %v3667 = vunpack.c.l.b16 %v3438
    %v3668 = vunpack.c.h.b16 %v3438
    %v3669 = vunpack.c.l.b16 %v3439
    %v3670 = vunpack.c.h.b16 %v3439
    %v3671 = vunpack.c.l.b16 %v3440
    %v3672 = vunpack.c.h.b16 %v3440
    %v3673 = vunpack.c.l.b16 %v3441
    %v3674 = vunpack.c.h.b16 %v3441
    %v3675 = vunpack.c.l.b16 %v3442
    %v3676 = vunpack.c.h.b16 %v3442
    %v3677 = vunpack.c.l.b16 %v3443
    %v3678 = vunpack.c.h.b16 %v3443
    %v3679 = vpack.c.b16 %v3559, %v3551
    %v3680 = vpack.c.b16 %v3560, %v3552
    %v3681 = vpack.c.b16 %v3561, %v3553
    %v3682 = vpack.c.b16 %v3562, %v3554
    %v3683 = vpack.c.b16 %v3563, %v3555
    %v3684 = vpack.c.b16 %v3564, %v3556
    %v3685 = vpack.c.b16 %v3565, %v3557
    %v3686 = vpack.c.b16 %v3566, %v3558
    %v3687 = vpack.c.b16 %v3575, %v3567
    %v3688 = vpack.c.b16 %v3576, %v3568
    %v3689 = vpack.c.b16 %v3577, %v3569
    %v3690 = vpack.c.b16 %v3578, %v3570
    %v3691 = vpack.c.b16 %v3579, %v3571
    %v3692 = vpack.c.b16 %v3580, %v3572
    %v3693 = vpack.c.b16 %v3581, %v3573
    %v3694 = vpack.c.b16 %v3582, %v3574
    %v3695 = vpack.c.b16 %v3591, %v3583
    %v3696 = vpack.c.b16 %v3592, %v3584
    %v3697 = vpack.c.b16 %v3593, %v3585
    %v3698 = vpack.c.b16 %v3594, %v3586
    %v3699 = vpack.c.b16 %v3595, %v3587
    %v3700 = vpack.c.b16 %v3596, %v3588
    %v3701 = vpack.c.b16 %v3597, %v3589
    %v3702 = vpack.c.b16 %v3598, %v3590
    %v3703 = vpack.c.b16 %v3607, %v3599
    %v3704 = vpack.c.b16 %v3608, %v3600
    %v3705 = vpack.c.b16 %v3609, %v3601
    %v3706 = vpack.c.b16 %v3610, %v3602
    %v3707 = vpack.c.b16 %v3611, %v3603
    %v3708 = vpack.c.b16 %v3612, %v3604
    %v3709 = vpack.c.b16 %v3613, %v3605
    %v3710 = vpack.c.b16 %v3614, %v3606
    %v3711 = vpack.c.b16 %v3623, %v3615
    %v3712 = vpack.c.b16 %v3624, %v3616
    %v3713 = vpack.c.b16 %v3625, %v3617
    %v3714 = vpack.c.b16 %v3626, %v3618
    %v3715 = vpack.c.b16 %v3627, %v3619
    %v3716 = vpack.c.b16 %v3628, %v3620
    %v3717 = vpack.c.b16 %v3629, %v3621
    %v3718 = vpack.c.b16 %v3630, %v3622
    %v3719 = vpack.c.b16 %v3639, %v3631
    %v3720 = vpack.c.b16 %v3640, %v3632
    %v3721 = vpack.c.b16 %v3641, %v3633
    %v3722 = vpack.c.b16 %v3642, %v3634
    %v3723 = vpack.c.b16 %v3643, %v3635
    %v3724 = vpack.c.b16 %v3644, %v3636
    %v3725 = vpack.c.b16 %v3645, %v3637
    %v3726 = vpack.c.b16 %v3646, %v3638
    %v3727 = vpack.c.b16 %v3655, %v3647
    %v3728 = vpack.c.b16 %v3656, %v3648
    %v3729 = vpack.c.b16 %v3657, %v3649
    %v3730 = vpack.c.b16 %v3658, %v3650
    %v3731 = vpack.c.b16 %v3659, %v3651
    %v3732 = vpack.c.b16 %v3660, %v3652
    %v3733 = vpack.c.b16 %v3661, %v3653
    %v3734 = vpack.c.b16 %v3662, %v3654
    %v3735 = vpack.c.b16 %v3671, %v3663
    %v3736 = vpack.c.b16 %v3672, %v3664
    %v3737 = vpack.c.b16 %v3673, %v3665
    %v3738 = vpack.c.b16 %v3674, %v3666
    %v3739 = vpack.c.b16 %v3675, %v3667
    %v3740 = vpack.c.b16 %v3676, %v3668
    %v3741 = vpack.c.b16 %v3677, %v3669
    %v3742 = vpack.c.b16 %v3678, %v3670
    %3807 = vmatprep.subr.bf16.mxu0 %v3680
    %3808 = vmatpush1.bf16.msra.mxu0 %v3679
    %3809 = vmatprep.subr.bf16.mxu0 %v3688
    %3810 = vmatpush1.bf16.msra.mxu0 %v3687
    %3811 = vmatprep.subr.bf16.mxu0 %v3696
    %3812 = vmatpush1.bf16.msra.mxu0 %v3695
    %3813 = vmatprep.subr.bf16.mxu0 %v3704
    %3814 = vmatpush1.bf16.msra.mxu0 %v3703
    %3815 = vmatprep.subr.bf16.mxu0 %v3712
    %3816 = vmatpush1.bf16.msra.mxu0 %v3711
    %3817 = vmatprep.subr.bf16.mxu0 %v3720
    %3818 = vmatpush1.bf16.msra.mxu0 %v3719
    %3819 = vmatprep.subr.bf16.mxu0 %v3728
    %3820 = vmatpush1.bf16.msra.mxu0 %v3727
    %3821 = vmatprep.subr.bf16.mxu0 %v3736
    %3822 = vmatpush1.bf16.msra.mxu0 %v3735
    %3823 = vmatprep.subr.bf16.mxu0 0
    %3824 = vmatpush1.bf16.msra.mxu0 0
    %3825 = vmatprep.subr.bf16.mxu0 0
    %3826 = vmatpush1.bf16.msra.mxu0 0
    %3827 = vmatprep.subr.bf16.mxu0 0
    %3828 = vmatpush1.bf16.msra.mxu0 0
    %3829 = vmatprep.subr.bf16.mxu0 0
    %3830 = vmatpush1.bf16.msra.mxu0 0
    %3831 = vmatprep.subr.bf16.mxu0 0
    %3832 = vmatpush1.bf16.msra.mxu0 0
    %3833 = vmatprep.subr.bf16.mxu0 0
    %3834 = vmatpush1.bf16.msra.mxu0 0
    %3835 = vmatprep.subr.bf16.mxu0 0
    %3836 = vmatpush1.bf16.msra.mxu0 0
    %3837 = vmatprep.subr.bf16.mxu0 0
    %3838 = vmatpush1.bf16.msra.mxu0 0
    %3839 = vmatprep.mubr.bf16.mxu0 0
    %3840 = vmatmul.mubr.bf16.gmra.mrb[0].mxu0 %v3444
    %v3841 = vpop.f32.mrb[0].mxu0
    %v3842 = vadd.f32 %v3450, %v3841
    %v3843 = vpop.f32.mrb[0].mxu0
    %v3844 = vadd.f32 %v3454, %v3843
    %v3845 = vpop.f32.mrb[0].mxu0
    %v3846 = vadd.f32 %v3450, %v3845
    %v3847 = vpop.f32.mrb[0].mxu0
    %v3848 = vadd.f32 %v3454, %v3847
    %3849 = vdwg.mxu0
    %3850 = vmatprep.subr.bf16.mxu0 %v3682
    %3851 = vmatpush1.bf16.msra.mxu0 %v3681
    %3852 = vmatprep.subr.bf16.mxu0 %v3690
    %3853 = vmatpush1.bf16.msra.mxu0 %v3689
    %3854 = vmatprep.subr.bf16.mxu0 %v3698
    %3855 = vmatpush1.bf16.msra.mxu0 %v3697
    %3856 = vmatprep.subr.bf16.mxu0 %v3706
    %3857 = vmatpush1.bf16.msra.mxu0 %v3705
    %3858 = vmatprep.subr.bf16.mxu0 %v3714
    %3859 = vmatpush1.bf16.msra.mxu0 %v3713
    %3860 = vmatprep.subr.bf16.mxu0 %v3722
    %3861 = vmatpush1.bf16.msra.mxu0 %v3721
    %3862 = vmatprep.subr.bf16.mxu0 %v3730
    %3863 = vmatpush1.bf16.msra.mxu0 %v3729
    %3864 = vmatprep.subr.bf16.mxu0 %v3738
    %3865 = vmatpush1.bf16.msra.mxu0 %v3737
    %3866 = vmatprep.subr.bf16.mxu0 0
    %3867 = vmatpush1.bf16.msra.mxu0 0
    %3868 = vmatprep.subr.bf16.mxu0 0
    %3869 = vmatpush1.bf16.msra.mxu0 0
    %3870 = vmatprep.subr.bf16.mxu0 0
    %3871 = vmatpush1.bf16.msra.mxu0 0
    %3872 = vmatprep.subr.bf16.mxu0 0
    %3873 = vmatpush1.bf16.msra.mxu0 0
    %3874 = vmatprep.subr.bf16.mxu0 0
    %3875 = vmatpush1.bf16.msra.mxu0 0
    %3876 = vmatprep.subr.bf16.mxu0 0
    %3877 = vmatpush1.bf16.msra.mxu0 0
    %3878 = vmatprep.subr.bf16.mxu0 0
    %3879 = vmatpush1.bf16.msra.mxu0 0
    %3880 = vmatprep.subr.bf16.mxu0 0
    %3881 = vmatpush1.bf16.msra.mxu0 0
    %3882 = vmatprep.mubr.bf16.mxu0 0
    %3883 = vmatmul.mubr.bf16.gmra.mrb[0].mxu0 %v3444
    %v3884 = vpop.f32.mrb[0].mxu0
    %v3885 = vadd.f32 %v3458, %v3884
    %v3886 = vpop.f32.mrb[0].mxu0
    %v3887 = vadd.f32 %v3462, %v3886
    %v3888 = vpop.f32.mrb[0].mxu0
    %v3889 = vadd.f32 %v3458, %v3888
    %v3890 = vpop.f32.mrb[0].mxu0
    %v3891 = vadd.f32 %v3462, %v3890
    %3892 = vdwg.mxu0
    %3893 = vmatprep.subr.bf16.mxu0 %v3684
    %3894 = vmatpush1.bf16.msra.mxu0 %v3683
    %3895 = vmatprep.subr.bf16.mxu0 %v3692
    %3896 = vmatpush1.bf16.msra.mxu0 %v3691
    %3897 = vmatprep.subr.bf16.mxu0 %v3700
    %3898 = vmatpush1.bf16.msra.mxu0 %v3699
    %3899 = vmatprep.subr.bf16.mxu0 %v3708
    %3900 = vmatpush1.bf16.msra.mxu0 %v3707
    %3901 = vmatprep.subr.bf16.mxu0 %v3716
    %3902 = vmatpush1.bf16.msra.mxu0 %v3715
    %3903 = vmatprep.subr.bf16.mxu0 %v3724
    %3904 = vmatpush1.bf16.msra.mxu0 %v3723
    %3905 = vmatprep.subr.bf16.mxu0 %v3732
    %3906 = vmatpush1.bf16.msra.mxu0 %v3731
    %3907 = vmatprep.subr.bf16.mxu0 %v3740
    %3908 = vmatpush1.bf16.msra.mxu0 %v3739
    %3909 = vmatprep.subr.bf16.mxu0 0
    %3910 = vmatpush1.bf16.msra.mxu0 0
    %3911 = vmatprep.subr.bf16.mxu0 0
    %3912 = vmatpush1.bf16.msra.mxu0 0
    %3913 = vmatprep.subr.bf16.mxu0 0
    %3914 = vmatpush1.bf16.msra.mxu0 0
    %3915 = vmatprep.subr.bf16.mxu0 0
    %3916 = vmatpush1.bf16.msra.mxu0 0
    %3917 = vmatprep.subr.bf16.mxu0 0
    %3918 = vmatpush1.bf16.msra.mxu0 0
    %3919 = vmatprep.subr.bf16.mxu0 0
    %3920 = vmatpush1.bf16.msra.mxu0 0
    %3921 = vmatprep.subr.bf16.mxu0 0
    %3922 = vmatpush1.bf16.msra.mxu0 0
    %3923 = vmatprep.subr.bf16.mxu0 0
    %3924 = vmatpush1.bf16.msra.mxu0 0
    %3925 = vmatprep.mubr.bf16.mxu0 0
    %3926 = vmatmul.mubr.bf16.gmra.mrb[0].mxu0 %v3444
    %v3927 = vpop.f32.mrb[0].mxu0
    %v3928 = vadd.f32 %v3466, %v3927
    %v3929 = vpop.f32.mrb[0].mxu0
    %v3930 = vadd.f32 %v3470, %v3929
    %v3931 = vpop.f32.mrb[0].mxu0
    %v3932 = vadd.f32 %v3466, %v3931
    %v3933 = vpop.f32.mrb[0].mxu0
    %v3934 = vadd.f32 %v3470, %v3933
    %3935 = vdwg.mxu0
    %3936 = vmatprep.subr.bf16.mxu0 %v3686
    %3937 = vmatpush1.bf16.msra.mxu0 %v3685
    %3938 = vmatprep.subr.bf16.mxu0 %v3694
    %3939 = vmatpush1.bf16.msra.mxu0 %v3693
    %3940 = vmatprep.subr.bf16.mxu0 %v3702
    %3941 = vmatpush1.bf16.msra.mxu0 %v3701
    %3942 = vmatprep.subr.bf16.mxu0 %v3710
    %3943 = vmatpush1.bf16.msra.mxu0 %v3709
    %3944 = vmatprep.subr.bf16.mxu0 %v3718
    %3945 = vmatpush1.bf16.msra.mxu0 %v3717
    %3946 = vmatprep.subr.bf16.mxu0 %v3726
    %3947 = vmatpush1.bf16.msra.mxu0 %v3725
    %3948 = vmatprep.subr.bf16.mxu0 %v3734
    %3949 = vmatpush1.bf16.msra.mxu0 %v3733
    %3950 = vmatprep.subr.bf16.mxu0 %v3742
    %3951 = vmatpush1.bf16.msra.mxu0 %v3741
    %3952 = vmatprep.subr.bf16.mxu0 0
    %3953 = vmatpush1.bf16.msra.mxu0 0
    %3954 = vmatprep.subr.bf16.mxu0 0
    %3955 = vmatpush1.bf16.msra.mxu0 0
    %3956 = vmatprep.subr.bf16.mxu0 0
    %3957 = vmatpush1.bf16.msra.mxu0 0
    %3958 = vmatprep.subr.bf16.mxu0 0
    %3959 = vmatpush1.bf16.msra.mxu0 0
    %3960 = vmatprep.subr.bf16.mxu0 0
    %3961 = vmatpush1.bf16.msra.mxu0 0
    %3962 = vmatprep.subr.bf16.mxu0 0
    %3963 = vmatpush1.bf16.msra.mxu0 0
    %3964 = vmatprep.subr.bf16.mxu0 0
    %3965 = vmatpush1.bf16.msra.mxu0 0
    %3966 = vmatprep.subr.bf16.mxu0 0
    %3967 = vmatpush1.bf16.msra.mxu0 0
    %3968 = vmatprep.mubr.bf16.mxu0 0
    %3969 = vmatmul.mubr.bf16.gmra.mrb[0].mxu0 %v3444
    %v3970 = vpop.f32.mrb[0].mxu0
    %v3971 = vadd.f32 %v3474, %v3970
    %v3972 = vpop.f32.mrb[0].mxu0
    %v3973 = vadd.f32 %v3478, %v3972
    %v3974 = vpop.f32.mrb[0].mxu0
    %v3975 = vadd.f32 %v3474, %v3974
    %v3976 = vpop.f32.mrb[0].mxu0
    %v3977 = vadd.f32 %v3478, %v3976
    %3978 = vdwg.mxu0
    %v3979 = vld [vmem:[#allocation13] sm:$0xff]
    %v3980 = vld [vmem:[#allocation13 + $0x8] sm:$0xff]
    %v3981 = vld [vmem:[#allocation13 + $0x10] sm:$0xff]
    %v3982 = vld [vmem:[#allocation13 + $0x18] sm:$0xff]
    %v3983 = vld [vmem:[#allocation13 + $0x20] sm:$0xff]
    %v3984 = vld [vmem:[#allocation13 + $0x28] sm:$0xff]
    %v3985 = vld [vmem:[#allocation13 + $0x30] sm:$0xff]
    %v3986 = vld [vmem:[#allocation13 + $0x38] sm:$0xff]
    %v3987 = vld [vmem:[#allocation13 + $0x40] sm:$0xff]
    %v3988 = vld [vmem:[#allocation13 + $0x48] sm:$0xff]
    %v3989 = vld [vmem:[#allocation13 + $0x50] sm:$0xff]
    %v3990 = vld [vmem:[#allocation13 + $0x58] sm:$0xff]
    %v3991 = vld [vmem:[#allocation13 + $0x60] sm:$0xff]
    %v3992 = vld [vmem:[#allocation13 + $0x68] sm:$0xff]
    %v3993 = vld [vmem:[#allocation13 + $0x70] sm:$0xff]
    %v3994 = vld [vmem:[#allocation13 + $0x78] sm:$0xff]
    %v3995 = vld [vmem:[#allocation13 + $0x80] sm:$0xff]
    %v3996 = vld [vmem:[#allocation13 + $0x88] sm:$0xff]
    %v3997 = vld [vmem:[#allocation13 + $0x90] sm:$0xff]
    %v3998 = vld [vmem:[#allocation13 + $0x98] sm:$0xff]
    %v3999 = vld [vmem:[#allocation13 + $0xa0] sm:$0xff]
    %v4000 = vld [vmem:[#allocation13 + $0xa8] sm:$0xff]
    %v4001 = vld [vmem:[#allocation13 + $0xb0] sm:$0xff]
    %v4002 = vld [vmem:[#allocation13 + $0xb8] sm:$0xff]
    %v4003 = vld [vmem:[#allocation13 + $0xc0] sm:$0xff]
    %v4004 = vld [vmem:[#allocation13 + $0xc8] sm:$0xff]
    %v4005 = vld [vmem:[#allocation13 + $0xd0] sm:$0xff]
    %v4006 = vld [vmem:[#allocation13 + $0xd8] sm:$0xff]
    %v4007 = vld [vmem:[#allocation13 + $0xe0] sm:$0xff]
    %v4008 = vld [vmem:[#allocation13 + $0xe8] sm:$0xff]
    %v4009 = vld [vmem:[#allocation13 + $0xf0] sm:$0xff]
    %v4010 = vld [vmem:[#allocation13 + $0xf8] sm:$0xff]
    %v4011 = vld [vmem:[#allocation13 + $0x100] sm:$0xff]
    %v4012 = vld [vmem:[#allocation13 + $0x108] sm:$0xff]
    %v4013 = vld [vmem:[#allocation13 + $0x110] sm:$0xff]
    %v4014 = vld [vmem:[#allocation13 + $0x118] sm:$0xff]
    %v4015 = vld [vmem:[#allocation13 + $0x120] sm:$0xff]
    %v4016 = vld [vmem:[#allocation13 + $0x128] sm:$0xff]
    %v4017 = vld [vmem:[#allocation13 + $0x130] sm:$0xff]
    %v4018 = vld [vmem:[#allocation13 + $0x138] sm:$0xff]
    %v4019 = vld [vmem:[#allocation13 + $0x140] sm:$0xff]
    %v4020 = vld [vmem:[#allocation13 + $0x148] sm:$0xff]
    %v4021 = vld [vmem:[#allocation13 + $0x150] sm:$0xff]
    %v4022 = vld [vmem:[#allocation13 + $0x158] sm:$0xff]
    %v4023 = vld [vmem:[#allocation13 + $0x160] sm:$0xff]
    %v4024 = vld [vmem:[#allocation13 + $0x168] sm:$0xff]
    %v4025 = vld [vmem:[#allocation13 + $0x170] sm:$0xff]
    %v4026 = vld [vmem:[#allocation13 + $0x178] sm:$0xff]
    %v4027 = vld [vmem:[#allocation13 + $0x180] sm:$0xff]
    %v4028 = vld [vmem:[#allocation13 + $0x188] sm:$0xff]
    %v4029 = vld [vmem:[#allocation13 + $0x190] sm:$0xff]
    %v4030 = vld [vmem:[#allocation13 + $0x198] sm:$0xff]
    %v4031 = vld [vmem:[#allocation13 + $0x1a0] sm:$0xff]
    %v4032 = vld [vmem:[#allocation13 + $0x1a8] sm:$0xff]
    %v4033 = vld [vmem:[#allocation13 + $0x1b0] sm:$0xff]
    %v4034 = vld [vmem:[#allocation13 + $0x1b8] sm:$0xff]
    %v4035 = vld [vmem:[#allocation13 + $0x1c0] sm:$0xff]
    %v4036 = vld [vmem:[#allocation13 + $0x1c8] sm:$0xff]
    %v4037 = vld [vmem:[#allocation13 + $0x1d0] sm:$0xff]
    %v4038 = vld [vmem:[#allocation13 + $0x1d8] sm:$0xff]
    %v4039 = vld [vmem:[#allocation13 + $0x1e0] sm:$0xff]
    %v4040 = vld [vmem:[#allocation13 + $0x1e8] sm:$0xff]
    %v4041 = vld [vmem:[#allocation13 + $0x1f0] sm:$0xff]
    %v4042 = vld [vmem:[#allocation13 + $0x1f8] sm:$0xff]
    %v4043 = vld [vmem:[#allocation13 + $0x200] sm:$0xff]
    %v4044 = vld [vmem:[#allocation13 + $0x208] sm:$0xff]
    %v4045 = vld [vmem:[#allocation13 + $0x210] sm:$0xff]
    %v4046 = vld [vmem:[#allocation13 + $0x218] sm:$0xff]
    %v4047 = vld [vmem:[#allocation13 + $0x220] sm:$0xff]
    %v4048 = vld [vmem:[#allocation13 + $0x228] sm:$0xff]
    %v4049 = vld [vmem:[#allocation13 + $0x230] sm:$0xff]
    %v4050 = vld [vmem:[#allocation13 + $0x238] sm:$0xff]
    %v4051 = vld [vmem:[#allocation13 + $0x240] sm:$0xff]
    %v4052 = vld [vmem:[#allocation13 + $0x248] sm:$0xff]
    %v4053 = vld [vmem:[#allocation13 + $0x250] sm:$0xff]
    %v4054 = vld [vmem:[#allocation13 + $0x258] sm:$0xff]
    %v4055 = vld [vmem:[#allocation13 + $0x260] sm:$0xff]
    %v4056 = vld [vmem:[#allocation13 + $0x268] sm:$0xff]
    %v4057 = vld [vmem:[#allocation13 + $0x270] sm:$0xff]
    %v4058 = vld [vmem:[#allocation13 + $0x278] sm:$0xff]
    %v4059 = vld [vmem:[#allocation13 + $0x280] sm:$0xff]
    %v4060 = vld [vmem:[#allocation13 + $0x288] sm:$0xff]
    %v4061 = vld [vmem:[#allocation13 + $0x290] sm:$0xff]
    %v4062 = vld [vmem:[#allocation13 + $0x298] sm:$0xff]
    %v4063 = vld [vmem:[#allocation13 + $0x2a0] sm:$0xff]
    %v4064 = vld [vmem:[#allocation13 + $0x2a8] sm:$0xff]
    %v4065 = vld [vmem:[#allocation13 + $0x2b0] sm:$0xff]
    %v4066 = vld [vmem:[#allocation13 + $0x2b8] sm:$0xff]
    %v4067 = vld [vmem:[#allocation13 + $0x2c0] sm:$0xff]
    %v4068 = vld [vmem:[#allocation13 + $0x2c8] sm:$0xff]
    %v4069 = vld [vmem:[#allocation13 + $0x2d0] sm:$0xff]
    %v4070 = vld [vmem:[#allocation13 + $0x2d8] sm:$0xff]
    %v4071 = vld [vmem:[#allocation13 + $0x2e0] sm:$0xff]
    %v4072 = vld [vmem:[#allocation13 + $0x2e8] sm:$0xff]
    %v4073 = vld [vmem:[#allocation13 + $0x2f0] sm:$0xff]
    %v4074 = vld [vmem:[#allocation13 + $0x2f8] sm:$0xff]
    %v4075 = vld [vmem:[#allocation13 + $0x300] sm:$0xff]
    %v4076 = vld [vmem:[#allocation13 + $0x308] sm:$0xff]
    %v4077 = vld [vmem:[#allocation13 + $0x310] sm:$0xff]
    %v4078 = vld [vmem:[#allocation13 + $0x318] sm:$0xff]
    %v4079 = vld [vmem:[#allocation13 + $0x320] sm:$0xff]
    %v4080 = vld [vmem:[#allocation13 + $0x328] sm:$0xff]
    %v4081 = vld [vmem:[#allocation13 + $0x330] sm:$0xff]
    %v4082 = vld [vmem:[#allocation13 + $0x338] sm:$0xff]
    %v4083 = vld [vmem:[#allocation13 + $0x340] sm:$0xff]
    %v4084 = vld [vmem:[#allocation13 + $0x348] sm:$0xff]
    %v4085 = vld [vmem:[#allocation13 + $0x350] sm:$0xff]
    %v4086 = vld [vmem:[#allocation13 + $0x358] sm:$0xff]
    %v4087 = vld [vmem:[#allocation13 + $0x360] sm:$0xff]
    %v4088 = vld [vmem:[#allocation13 + $0x368] sm:$0xff]
    %v4089 = vld [vmem:[#allocation13 + $0x370] sm:$0xff]
    %v4090 = vld [vmem:[#allocation13 + $0x378] sm:$0xff]
    %v4091 = vld [vmem:[#allocation13 + $0x380] sm:$0xff]
    %v4092 = vld [vmem:[#allocation13 + $0x388] sm:$0xff]
    %v4093 = vld [vmem:[#allocation13 + $0x390] sm:$0xff]
    %v4094 = vld [vmem:[#allocation13 + $0x398] sm:$0xff]
    %v4095 = vld [vmem:[#allocation13 + $0x3a0] sm:$0xff]
    %v4096 = vld [vmem:[#allocation13 + $0x3a8] sm:$0xff]
    %v4097 = vld [vmem:[#allocation13 + $0x3b0] sm:$0xff]
    %v4098 = vld [vmem:[#allocation13 + $0x3b8] sm:$0xff]
    %v4099 = vld [vmem:[#allocation13 + $0x3c0] sm:$0xff]
    %v4100 = vld [vmem:[#allocation13 + $0x3c8] sm:$0xff]
    %v4101 = vld [vmem:[#allocation13 + $0x3d0] sm:$0xff]
    %v4102 = vld [vmem:[#allocation13 + $0x3d8] sm:$0xff]
    %v4103 = vld [vmem:[#allocation13 + $0x3e0] sm:$0xff]
    %v4104 = vld [vmem:[#allocation13 + $0x3e8] sm:$0xff]
    %v4105 = vld [vmem:[#allocation13 + $0x3f0] sm:$0xff]
    %v4106 = vld [vmem:[#allocation13 + $0x3f8] sm:$0xff]
    %v4115 = vrot.slane %v3846, 7
    %v4116 = vrot.slane %v3848, 7
    %v4117 = vrot.slane %v3889, 7
    %v4118 = vrot.slane %v3891, 7
    %v4119 = vrot.slane %v3932, 7
    %v4120 = vrot.slane %v3934, 7
    %v4121 = vrot.slane %v3975, 7
    %v4122 = vrot.slane %v3977, 7
    %vm4131 = vcmask 1040384
    %v4132 = vsel %vm4131, %v3842, %v4115
    %v4133 = vsel %vm4131, %v3844, %v4116
    %v4134 = vsel %vm4131, %v3885, %v4117
    %v4135 = vsel %vm4131, %v3887, %v4118
    %v4136 = vsel %vm4131, %v3928, %v4119
    %v4137 = vsel %vm4131, %v3930, %v4120
    %v4138 = vsel %vm4131, %v3971, %v4121
    %v4139 = vsel %vm4131, %v3973, %v4122
    %v4268 = vunpack.c.l.b16 %v3979
    %v4269 = vunpack.c.h.b16 %v3979
    %v4270 = vunpack.c.l.b16 %v3980
    %v4271 = vunpack.c.h.b16 %v3980
    %v4272 = vunpack.c.l.b16 %v3981
    %v4273 = vunpack.c.h.b16 %v3981
    %v4274 = vunpack.c.l.b16 %v3982
    %v4275 = vunpack.c.h.b16 %v3982
    %v4276 = vunpack.c.l.b16 %v3983
    %v4277 = vunpack.c.h.b16 %v3983
    %v4278 = vunpack.c.l.b16 %v3984
    %v4279 = vunpack.c.h.b16 %v3984
    %v4280 = vunpack.c.l.b16 %v3985
    %v4281 = vunpack.c.h.b16 %v3985
    %v4282 = vunpack.c.l.b16 %v3986
    %v4283 = vunpack.c.h.b16 %v3986
    %v4284 = vunpack.c.l.b16 %v3987
    %v4285 = vunpack.c.h.b16 %v3987
    %v4286 = vunpack.c.l.b16 %v3988
    %v4287 = vunpack.c.h.b16 %v3988
    %v4288 = vunpack.c.l.b16 %v3989
    %v4289 = vunpack.c.h.b16 %v3989
    %v4290 = vunpack.c.l.b16 %v3990
    %v4291 = vunpack.c.h.b16 %v3990
    %v4292 = vunpack.c.l.b16 %v3991
    %v4293 = vunpack.c.h.b16 %v3991
    %v4294 = vunpack.c.l.b16 %v3992
    %v4295 = vunpack.c.h.b16 %v3992
    %v4296 = vunpack.c.l.b16 %v3993
    %v4297 = vunpack.c.h.b16 %v3993
    %v4298 = vunpack.c.l.b16 %v3994
    %v4299 = vunpack.c.h.b16 %v3994
    %v4300 = vunpack.c.l.b16 %v3995
    %v4301 = vunpack.c.h.b16 %v3995
    %v4302 = vunpack.c.l.b16 %v3996
    %v4303 = vunpack.c.h.b16 %v3996
    %v4304 = vunpack.c.l.b16 %v3997
    %v4305 = vunpack.c.h.b16 %v3997
    %v4306 = vunpack.c.l.b16 %v3998
    %v4307 = vunpack.c.h.b16 %v3998
    %v4308 = vunpack.c.l.b16 %v3999
    %v4309 = vunpack.c.h.b16 %v3999
    %v4310 = vunpack.c.l.b16 %v4000
    %v4311 = vunpack.c.h.b16 %v4000
    %v4312 = vunpack.c.l.b16 %v4001
    %v4313 = vunpack.c.h.b16 %v4001
    %v4314 = vunpack.c.l.b16 %v4002
    %v4315 = vunpack.c.h.b16 %v4002
    %v4316 = vunpack.c.l.b16 %v4003
    %v4317 = vunpack.c.h.b16 %v4003
    %v4318 = vunpack.c.l.b16 %v4004
    %v4319 = vunpack.c.h.b16 %v4004
    %v4320 = vunpack.c.l.b16 %v4005
    %v4321 = vunpack.c.h.b16 %v4005
    %v4322 = vunpack.c.l.b16 %v4006
    %v4323 = vunpack.c.h.b16 %v4006
    %v4324 = vunpack.c.l.b16 %v4007
    %v4325 = vunpack.c.h.b16 %v4007
    %v4326 = vunpack.c.l.b16 %v4008
    %v4327 = vunpack.c.h.b16 %v4008
    %v4328 = vunpack.c.l.b16 %v4009
    %v4329 = vunpack.c.h.b16 %v4009
    %v4330 = vunpack.c.l.b16 %v4010
    %v4331 = vunpack.c.h.b16 %v4010
    %v4332 = vunpack.c.l.b16 %v4011
    %v4333 = vunpack.c.h.b16 %v4011
    %v4334 = vunpack.c.l.b16 %v4012
    %v4335 = vunpack.c.h.b16 %v4012
    %v4336 = vunpack.c.l.b16 %v4013
    %v4337 = vunpack.c.h.b16 %v4013
    %v4338 = vunpack.c.l.b16 %v4014
    %v4339 = vunpack.c.h.b16 %v4014
    %v4340 = vunpack.c.l.b16 %v4015
    %v4341 = vunpack.c.h.b16 %v4015
    %v4342 = vunpack.c.l.b16 %v4016
    %v4343 = vunpack.c.h.b16 %v4016
    %v4344 = vunpack.c.l.b16 %v4017
    %v4345 = vunpack.c.h.b16 %v4017
    %v4346 = vunpack.c.l.b16 %v4018
    %v4347 = vunpack.c.h.b16 %v4018
    %v4348 = vunpack.c.l.b16 %v4019
    %v4349 = vunpack.c.h.b16 %v4019
    %v4350 = vunpack.c.l.b16 %v4020
    %v4351 = vunpack.c.h.b16 %v4020
    %v4352 = vunpack.c.l.b16 %v4021
    %v4353 = vunpack.c.h.b16 %v4021
    %v4354 = vunpack.c.l.b16 %v4022
    %v4355 = vunpack.c.h.b16 %v4022
    %v4356 = vunpack.c.l.b16 %v4023
    %v4357 = vunpack.c.h.b16 %v4023
    %v4358 = vunpack.c.l.b16 %v4024
    %v4359 = vunpack.c.h.b16 %v4024
    %v4360 = vunpack.c.l.b16 %v4025
    %v4361 = vunpack.c.h.b16 %v4025
    %v4362 = vunpack.c.l.b16 %v4026
    %v4363 = vunpack.c.h.b16 %v4026
    %v4364 = vunpack.c.l.b16 %v4027
    %v4365 = vunpack.c.h.b16 %v4027
    %v4366 = vunpack.c.l.b16 %v4028
    %v4367 = vunpack.c.h.b16 %v4028
    %v4368 = vunpack.c.l.b16 %v4029
    %v4369 = vunpack.c.h.b16 %v4029
    %v4370 = vunpack.c.l.b16 %v4030
    %v4371 = vunpack.c.h.b16 %v4030
    %v4372 = vunpack.c.l.b16 %v4031
    %v4373 = vunpack.c.h.b16 %v4031
    %v4374 = vunpack.c.l.b16 %v4032
    %v4375 = vunpack.c.h.b16 %v4032
    %v4376 = vunpack.c.l.b16 %v4033
    %v4377 = vunpack.c.h.b16 %v4033
    %v4378 = vunpack.c.l.b16 %v4034
    %v4379 = vunpack.c.h.b16 %v4034
    %v4380 = vunpack.c.l.b16 %v4035
    %v4381 = vunpack.c.h.b16 %v4035
    %v4382 = vunpack.c.l.b16 %v4036
    %v4383 = vunpack.c.h.b16 %v4036
    %v4384 = vunpack.c.l.b16 %v4037
    %v4385 = vunpack.c.h.b16 %v4037
    %v4386 = vunpack.c.l.b16 %v4038
    %v4387 = vunpack.c.h.b16 %v4038
    %v4388 = vunpack.c.l.b16 %v4039
    %v4389 = vunpack.c.h.b16 %v4039
    %v4390 = vunpack.c.l.b16 %v4040
    %v4391 = vunpack.c.h.b16 %v4040
    %v4392 = vunpack.c.l.b16 %v4041
    %v4393 = vunpack.c.h.b16 %v4041
    %v4394 = vunpack.c.l.b16 %v4042
    %v4395 = vunpack.c.h.b16 %v4042
    %v4396 = vunpack.c.l.b16 %v4043
    %v4397 = vunpack.c.h.b16 %v4043
    %v4398 = vunpack.c.l.b16 %v4044
    %v4399 = vunpack.c.h.b16 %v4044
    %v4400 = vunpack.c.l.b16 %v4045
    %v4401 = vunpack.c.h.b16 %v4045
    %v4402 = vunpack.c.l.b16 %v4046
    %v4403 = vunpack.c.h.b16 %v4046
    %v4404 = vunpack.c.l.b16 %v4047
    %v4405 = vunpack.c.h.b16 %v4047
    %v4406 = vunpack.c.l.b16 %v4048
    %v4407 = vunpack.c.h.b16 %v4048
    %v4408 = vunpack.c.l.b16 %v4049
    %v4409 = vunpack.c.h.b16 %v4049
    %v4410 = vunpack.c.l.b16 %v4050
    %v4411 = vunpack.c.h.b16 %v4050
    %v4412 = vunpack.c.l.b16 %v4051
    %v4413 = vunpack.c.h.b16 %v4051
    %v4414 = vunpack.c.l.b16 %v4052
    %v4415 = vunpack.c.h.b16 %v4052
    %v4416 = vunpack.c.l.b16 %v4053
    %v4417 = vunpack.c.h.b16 %v4053
    %v4418 = vunpack.c.l.b16 %v4054
    %v4419 = vunpack.c.h.b16 %v4054
    %v4420 = vunpack.c.l.b16 %v4055
    %v4421 = vunpack.c.h.b16 %v4055
    %v4422 = vunpack.c.l.b16 %v4056
    %v4423 = vunpack.c.h.b16 %v4056
    %v4424 = vunpack.c.l.b16 %v4057
    %v4425 = vunpack.c.h.b16 %v4057
    %v4426 = vunpack.c.l.b16 %v4058
    %v4427 = vunpack.c.h.b16 %v4058
    %v4428 = vunpack.c.l.b16 %v4059
    %v4429 = vunpack.c.h.b16 %v4059
    %v4430 = vunpack.c.l.b16 %v4060
    %v4431 = vunpack.c.h.b16 %v4060
    %v4432 = vunpack.c.l.b16 %v4061
    %v4433 = vunpack.c.h.b16 %v4061
    %v4434 = vunpack.c.l.b16 %v4062
    %v4435 = vunpack.c.h.b16 %v4062
    %v4436 = vunpack.c.l.b16 %v4063
    %v4437 = vunpack.c.h.b16 %v4063
    %v4438 = vunpack.c.l.b16 %v4064
    %v4439 = vunpack.c.h.b16 %v4064
    %v4440 = vunpack.c.l.b16 %v4065
    %v4441 = vunpack.c.h.b16 %v4065
    %v4442 = vunpack.c.l.b16 %v4066
    %v4443 = vunpack.c.h.b16 %v4066
    %v4444 = vunpack.c.l.b16 %v4067
    %v4445 = vunpack.c.h.b16 %v4067
    %v4446 = vunpack.c.l.b16 %v4068
    %v4447 = vunpack.c.h.b16 %v4068
    %v4448 = vunpack.c.l.b16 %v4069
    %v4449 = vunpack.c.h.b16 %v4069
    %v4450 = vunpack.c.l.b16 %v4070
    %v4451 = vunpack.c.h.b16 %v4070
    %v4452 = vunpack.c.l.b16 %v4071
    %v4453 = vunpack.c.h.b16 %v4071
    %v4454 = vunpack.c.l.b16 %v4072
    %v4455 = vunpack.c.h.b16 %v4072
    %v4456 = vunpack.c.l.b16 %v4073
    %v4457 = vunpack.c.h.b16 %v4073
    %v4458 = vunpack.c.l.b16 %v4074
    %v4459 = vunpack.c.h.b16 %v4074
    %v4460 = vunpack.c.l.b16 %v4075
    %v4461 = vunpack.c.h.b16 %v4075
    %v4462 = vunpack.c.l.b16 %v4076
    %v4463 = vunpack.c.h.b16 %v4076
    %v4464 = vunpack.c.l.b16 %v4077
    %v4465 = vunpack.c.h.b16 %v4077
    %v4466 = vunpack.c.l.b16 %v4078
    %v4467 = vunpack.c.h.b16 %v4078
    %v4468 = vunpack.c.l.b16 %v4079
    %v4469 = vunpack.c.h.b16 %v4079
    %v4470 = vunpack.c.l.b16 %v4080
    %v4471 = vunpack.c.h.b16 %v4080
    %v4472 = vunpack.c.l.b16 %v4081
    %v4473 = vunpack.c.h.b16 %v4081
    %v4474 = vunpack.c.l.b16 %v4082
    %v4475 = vunpack.c.h.b16 %v4082
    %v4476 = vunpack.c.l.b16 %v4083
    %v4477 = vunpack.c.h.b16 %v4083
    %v4478 = vunpack.c.l.b16 %v4084
    %v4479 = vunpack.c.h.b16 %v4084
    %v4480 = vunpack.c.l.b16 %v4085
    %v4481 = vunpack.c.h.b16 %v4085
    %v4482 = vunpack.c.l.b16 %v4086
    %v4483 = vunpack.c.h.b16 %v4086
    %v4484 = vunpack.c.l.b16 %v4087
    %v4485 = vunpack.c.h.b16 %v4087
    %v4486 = vunpack.c.l.b16 %v4088
    %v4487 = vunpack.c.h.b16 %v4088
    %v4488 = vunpack.c.l.b16 %v4089
    %v4489 = vunpack.c.h.b16 %v4089
    %v4490 = vunpack.c.l.b16 %v4090
    %v4491 = vunpack.c.h.b16 %v4090
    %v4492 = vunpack.c.l.b16 %v4091
    %v4493 = vunpack.c.h.b16 %v4091
    %v4494 = vunpack.c.l.b16 %v4092
    %v4495 = vunpack.c.h.b16 %v4092
    %v4496 = vunpack.c.l.b16 %v4093
    %v4497 = vunpack.c.h.b16 %v4093
    %v4498 = vunpack.c.l.b16 %v4094
    %v4499 = vunpack.c.h.b16 %v4094
    %v4500 = vunpack.c.l.b16 %v4095
    %v4501 = vunpack.c.h.b16 %v4095
    %v4502 = vunpack.c.l.b16 %v4096
    %v4503 = vunpack.c.h.b16 %v4096
    %v4504 = vunpack.c.l.b16 %v4097
    %v4505 = vunpack.c.h.b16 %v4097
    %v4506 = vunpack.c.l.b16 %v4098
    %v4507 = vunpack.c.h.b16 %v4098
    %v4508 = vunpack.c.l.b16 %v4099
    %v4509 = vunpack.c.h.b16 %v4099
    %v4510 = vunpack.c.l.b16 %v4100
    %v4511 = vunpack.c.h.b16 %v4100
    %v4512 = vunpack.c.l.b16 %v4101
    %v4513 = vunpack.c.h.b16 %v4101
    %v4514 = vunpack.c.l.b16 %v4102
    %v4515 = vunpack.c.h.b16 %v4102
    %v4516 = vunpack.c.l.b16 %v4103
    %v4517 = vunpack.c.h.b16 %v4103
    %v4518 = vunpack.c.l.b16 %v4104
    %v4519 = vunpack.c.h.b16 %v4104
    %v4520 = vunpack.c.l.b16 %v4105
    %v4521 = vunpack.c.h.b16 %v4105
    %v4522 = vunpack.c.l.b16 %v4106
    %v4523 = vunpack.c.h.b16 %v4106
    %v4524 = vpack.c.b16 %v4276, %v4268
    %v4525 = vpack.c.b16 %v4277, %v4269
    %v4526 = vpack.c.b16 %v4278, %v4270
    %v4527 = vpack.c.b16 %v4279, %v4271
    %v4528 = vpack.c.b16 %v4280, %v4272
    %v4529 = vpack.c.b16 %v4281, %v4273
    %v4530 = vpack.c.b16 %v4282, %v4274
    %v4531 = vpack.c.b16 %v4283, %v4275
    %v4532 = vpack.c.b16 %v4292, %v4284
    %v4533 = vpack.c.b16 %v4293, %v4285
    %v4534 = vpack.c.b16 %v4294, %v4286
    %v4535 = vpack.c.b16 %v4295, %v4287
    %v4536 = vpack.c.b16 %v4296, %v4288
    %v4537 = vpack.c.b16 %v4297, %v4289
    %v4538 = vpack.c.b16 %v4298, %v4290
    %v4539 = vpack.c.b16 %v4299, %v4291
    %v4540 = vpack.c.b16 %v4308, %v4300
    %v4541 = vpack.c.b16 %v4309, %v4301
    %v4542 = vpack.c.b16 %v4310, %v4302
    %v4543 = vpack.c.b16 %v4311, %v4303
    %v4544 = vpack.c.b16 %v4312, %v4304
    %v4545 = vpack.c.b16 %v4313, %v4305
    %v4546 = vpack.c.b16 %v4314, %v4306
    %v4547 = vpack.c.b16 %v4315, %v4307
    %v4548 = vpack.c.b16 %v4324, %v4316
    %v4549 = vpack.c.b16 %v4325, %v4317
    %v4550 = vpack.c.b16 %v4326, %v4318
    %v4551 = vpack.c.b16 %v4327, %v4319
    %v4552 = vpack.c.b16 %v4328, %v4320
    %v4553 = vpack.c.b16 %v4329, %v4321
    %v4554 = vpack.c.b16 %v4330, %v4322
    %v4555 = vpack.c.b16 %v4331, %v4323
    %v4556 = vpack.c.b16 %v4340, %v4332
    %v4557 = vpack.c.b16 %v4341, %v4333
    %v4558 = vpack.c.b16 %v4342, %v4334
    %v4559 = vpack.c.b16 %v4343, %v4335
    %v4560 = vpack.c.b16 %v4344, %v4336
    %v4561 = vpack.c.b16 %v4345, %v4337
    %v4562 = vpack.c.b16 %v4346, %v4338
    %v4563 = vpack.c.b16 %v4347, %v4339
    %v4564 = vpack.c.b16 %v4356, %v4348
    %v4565 = vpack.c.b16 %v4357, %v4349
    %v4566 = vpack.c.b16 %v4358, %v4350
    %v4567 = vpack.c.b16 %v4359, %v4351
    %v4568 = vpack.c.b16 %v4360, %v4352
    %v4569 = vpack.c.b16 %v4361, %v4353
    %v4570 = vpack.c.b16 %v4362, %v4354
    %v4571 = vpack.c.b16 %v4363, %v4355
    %v4572 = vpack.c.b16 %v4372, %v4364
    %v4573 = vpack.c.b16 %v4373, %v4365
    %v4574 = vpack.c.b16 %v4374, %v4366
    %v4575 = vpack.c.b16 %v4375, %v4367
    %v4576 = vpack.c.b16 %v4376, %v4368
    %v4577 = vpack.c.b16 %v4377, %v4369
    %v4578 = vpack.c.b16 %v4378, %v4370
    %v4579 = vpack.c.b16 %v4379, %v4371
    %v4580 = vpack.c.b16 %v4388, %v4380
    %v4581 = vpack.c.b16 %v4389, %v4381
    %v4582 = vpack.c.b16 %v4390, %v4382
    %v4583 = vpack.c.b16 %v4391, %v4383
    %v4584 = vpack.c.b16 %v4392, %v4384
    %v4585 = vpack.c.b16 %v4393, %v4385
    %v4586 = vpack.c.b16 %v4394, %v4386
    %v4587 = vpack.c.b16 %v4395, %v4387
    %v4588 = vpack.c.b16 %v4404, %v4396
    %v4589 = vpack.c.b16 %v4405, %v4397
    %v4590 = vpack.c.b16 %v4406, %v4398
    %v4591 = vpack.c.b16 %v4407, %v4399
    %v4592 = vpack.c.b16 %v4408, %v4400
    %v4593 = vpack.c.b16 %v4409, %v4401
    %v4594 = vpack.c.b16 %v4410, %v4402
    %v4595 = vpack.c.b16 %v4411, %v4403
    %v4596 = vpack.c.b16 %v4420, %v4412
    %v4597 = vpack.c.b16 %v4421, %v4413
    %v4598 = vpack.c.b16 %v4422, %v4414
    %v4599 = vpack.c.b16 %v4423, %v4415
    %v4600 = vpack.c.b16 %v4424, %v4416
    %v4601 = vpack.c.b16 %v4425, %v4417
    %v4602 = vpack.c.b16 %v4426, %v4418
    %v4603 = vpack.c.b16 %v4427, %v4419
    %v4604 = vpack.c.b16 %v4436, %v4428
    %v4605 = vpack.c.b16 %v4437, %v4429
    %v4606 = vpack.c.b16 %v4438, %v4430
    %v4607 = vpack.c.b16 %v4439, %v4431
    %v4608 = vpack.c.b16 %v4440, %v4432
    %v4609 = vpack.c.b16 %v4441, %v4433
    %v4610 = vpack.c.b16 %v4442, %v4434
    %v4611 = vpack.c.b16 %v4443, %v4435
    %v4612 = vpack.c.b16 %v4452, %v4444
    %v4613 = vpack.c.b16 %v4453, %v4445
    %v4614 = vpack.c.b16 %v4454, %v4446
    %v4615 = vpack.c.b16 %v4455, %v4447
    %v4616 = vpack.c.b16 %v4456, %v4448
    %v4617 = vpack.c.b16 %v4457, %v4449
    %v4618 = vpack.c.b16 %v4458, %v4450
    %v4619 = vpack.c.b16 %v4459, %v4451
    %v4620 = vpack.c.b16 %v4468, %v4460
    %v4621 = vpack.c.b16 %v4469, %v4461
    %v4622 = vpack.c.b16 %v4470, %v4462
    %v4623 = vpack.c.b16 %v4471, %v4463
    %v4624 = vpack.c.b16 %v4472, %v4464
    %v4625 = vpack.c.b16 %v4473, %v4465
    %v4626 = vpack.c.b16 %v4474, %v4466
    %v4627 = vpack.c.b16 %v4475, %v4467
    %v4628 = vpack.c.b16 %v4484, %v4476
    %v4629 = vpack.c.b16 %v4485, %v4477
    %v4630 = vpack.c.b16 %v4486, %v4478
    %v4631 = vpack.c.b16 %v4487, %v4479
    %v4632 = vpack.c.b16 %v4488, %v4480
    %v4633 = vpack.c.b16 %v4489, %v4481
    %v4634 = vpack.c.b16 %v4490, %v4482
    %v4635 = vpack.c.b16 %v4491, %v4483
    %v4636 = vpack.c.b16 %v4500, %v4492
    %v4637 = vpack.c.b16 %v4501, %v4493
    %v4638 = vpack.c.b16 %v4502, %v4494
    %v4639 = vpack.c.b16 %v4503, %v4495
    %v4640 = vpack.c.b16 %v4504, %v4496
    %v4641 = vpack.c.b16 %v4505, %v4497
    %v4642 = vpack.c.b16 %v4506, %v4498
    %v4643 = vpack.c.b16 %v4507, %v4499
    %v4644 = vpack.c.b16 %v4516, %v4508
    %v4645 = vpack.c.b16 %v4517, %v4509
    %v4646 = vpack.c.b16 %v4518, %v4510
    %v4647 = vpack.c.b16 %v4519, %v4511
    %v4648 = vpack.c.b16 %v4520, %v4512
    %v4649 = vpack.c.b16 %v4521, %v4513
    %v4650 = vpack.c.b16 %v4522, %v4514
    %v4651 = vpack.c.b16 %v4523, %v4515
    %4780 = vmatprep.subr.bf16.mxu0 %v4525
    %4781 = vmatpush1.bf16.msra.mxu0 %v4524
    %4782 = vmatprep.subr.bf16.mxu0 %v4533
    %4783 = vmatpush1.bf16.msra.mxu0 %v4532
    %4784 = vmatprep.subr.bf16.mxu0 %v4541
    %4785 = vmatpush1.bf16.msra.mxu0 %v4540
    %4786 = vmatprep.subr.bf16.mxu0 %v4549
    %4787 = vmatpush1.bf16.msra.mxu0 %v4548
    %4788 = vmatprep.subr.bf16.mxu0 %v4557
    %4789 = vmatpush1.bf16.msra.mxu0 %v4556
    %4790 = vmatprep.subr.bf16.mxu0 %v4565
    %4791 = vmatpush1.bf16.msra.mxu0 %v4564
    %4792 = vmatprep.subr.bf16.mxu0 %v4573
    %4793 = vmatpush1.bf16.msra.mxu0 %v4572
    %4794 = vmatprep.subr.bf16.mxu0 %v4581
    %4795 = vmatpush1.bf16.msra.mxu0 %v4580
    %4796 = vmatprep.subr.bf16.mxu0 %v4589
    %4797 = vmatpush1.bf16.msra.mxu0 %v4588
    %4798 = vmatprep.subr.bf16.mxu0 %v4597
    %4799 = vmatpush1.bf16.msra.mxu0 %v4596
    %4800 = vmatprep.subr.bf16.mxu0 %v4605
    %4801 = vmatpush1.bf16.msra.mxu0 %v4604
    %4802 = vmatprep.subr.bf16.mxu0 %v4613
    %4803 = vmatpush1.bf16.msra.mxu0 %v4612
    %4804 = vmatprep.subr.bf16.mxu0 %v4621
    %4805 = vmatpush1.bf16.msra.mxu0 %v4620
    %4806 = vmatprep.subr.bf16.mxu0 %v4629
    %4807 = vmatpush1.bf16.msra.mxu0 %v4628
    %4808 = vmatprep.subr.bf16.mxu0 %v4637
    %4809 = vmatpush1.bf16.msra.mxu0 %v4636
    %4810 = vmatprep.subr.bf16.mxu0 %v4645
    %4811 = vmatpush1.bf16.msra.mxu0 %v4644
    %4812 = vmatprep.mubr.bf16.mxu0 0
    %4813 = vmatmul.mubr.bf16.gmra.mrb[0].mxu0 0
    %v4814 = vpop.f32.mrb[0].mxu0
    %v4815 = vadd.f32 0.0, %v4814
    %v4816 = vpop.f32.mrb[0].mxu0
    %v4817 = vadd.f32 0.0, %v4816
    %v4818 = vpop.f32.mrb[0].mxu0
    %v4819 = vpop.f32.mrb[0].mxu0
    %4820 = vdwg.mxu0
    %4821 = vmatprep.subr.bf16.mxu0 %v4527
    %4822 = vmatpush1.bf16.msra.mxu0 %v4526
    %4823 = vmatprep.subr.bf16.mxu0 %v4535
    %4824 = vmatpush1.bf16.msra.mxu0 %v4534
    %4825 = vmatprep.subr.bf16.mxu0 %v4543
    %4826 = vmatpush1.bf16.msra.mxu0 %v4542
    %4827 = vmatprep.subr.bf16.mxu0 %v4551
    %4828 = vmatpush1.bf16.msra.mxu0 %v4550
    %4829 = vmatprep.subr.bf16.mxu0 %v4559
    %4830 = vmatpush1.bf16.msra.mxu0 %v4558
    %4831 = vmatprep.subr.bf16.mxu0 %v4567
    %4832 = vmatpush1.bf16.msra.mxu0 %v4566
    %4833 = vmatprep.subr.bf16.mxu0 %v4575
    %4834 = vmatpush1.bf16.msra.mxu0 %v4574
    %4835 = vmatprep.subr.bf16.mxu0 %v4583
    %4836 = vmatpush1.bf16.msra.mxu0 %v4582
    %4837 = vmatprep.subr.bf16.mxu0 %v4591
    %4838 = vmatpush1.bf16.msra.mxu0 %v4590
    %4839 = vmatprep.subr.bf16.mxu0 %v4599
    %4840 = vmatpush1.bf16.msra.mxu0 %v4598
    %4841 = vmatprep.subr.bf16.mxu0 %v4607
    %4842 = vmatpush1.bf16.msra.mxu0 %v4606
    %4843 = vmatprep.subr.bf16.mxu0 %v4615
    %4844 = vmatpush1.bf16.msra.mxu0 %v4614
    %4845 = vmatprep.subr.bf16.mxu0 %v4623
    %4846 = vmatpush1.bf16.msra.mxu0 %v4622
    %4847 = vmatprep.subr.bf16.mxu0 %v4631
    %4848 = vmatpush1.bf16.msra.mxu0 %v4630
    %4849 = vmatprep.subr.bf16.mxu0 %v4639
    %4850 = vmatpush1.bf16.msra.mxu0 %v4638
    %4851 = vmatprep.subr.bf16.mxu0 %v4647
    %4852 = vmatpush1.bf16.msra.mxu0 %v4646
    %4853 = vmatprep.mubr.bf16.mxu0 0
    %4854 = vmatmul.mubr.bf16.gmra.mrb[0].mxu0 0
    %v4855 = vpop.f32.mrb[0].mxu0
    %v4856 = vadd.f32 0.0, %v4855
    %v4857 = vpop.f32.mrb[0].mxu0
    %v4858 = vadd.f32 0.0, %v4857
    %v4859 = vpop.f32.mrb[0].mxu0
    %v4860 = vpop.f32.mrb[0].mxu0
    %4861 = vdwg.mxu0
    %4862 = vmatprep.subr.bf16.mxu0 %v4529
    %4863 = vmatpush1.bf16.msra.mxu0 %v4528
    %4864 = vmatprep.subr.bf16.mxu0 %v4537
    %4865 = vmatpush1.bf16.msra.mxu0 %v4536
    %4866 = vmatprep.subr.bf16.mxu0 %v4545
    %4867 = vmatpush1.bf16.msra.mxu0 %v4544
    %4868 = vmatprep.subr.bf16.mxu0 %v4553
    %4869 = vmatpush1.bf16.msra.mxu0 %v4552
    %4870 = vmatprep.subr.bf16.mxu0 %v4561
    %4871 = vmatpush1.bf16.msra.mxu0 %v4560
    %4872 = vmatprep.subr.bf16.mxu0 %v4569
    %4873 = vmatpush1.bf16.msra.mxu0 %v4568
    %4874 = vmatprep.subr.bf16.mxu0 %v4577
    %4875 = vmatpush1.bf16.msra.mxu0 %v4576
    %4876 = vmatprep.subr.bf16.mxu0 %v4585
    %4877 = vmatpush1.bf16.msra.mxu0 %v4584
    %4878 = vmatprep.subr.bf16.mxu0 %v4593
    %4879 = vmatpush1.bf16.msra.mxu0 %v4592
    %4880 = vmatprep.subr.bf16.mxu0 %v4601
    %4881 = vmatpush1.bf16.msra.mxu0 %v4600
    %4882 = vmatprep.subr.bf16.mxu0 %v4609
    %4883 = vmatpush1.bf16.msra.mxu0 %v4608
    %4884 = vmatprep.subr.bf16.mxu0 %v4617
    %4885 = vmatpush1.bf16.msra.mxu0 %v4616
    %4886 = vmatprep.subr.bf16.mxu0 %v4625
    %4887 = vmatpush1.bf16.msra.mxu0 %v4624
    %4888 = vmatprep.subr.bf16.mxu0 %v4633
    %4889 = vmatpush1.bf16.msra.mxu0 %v4632
    %4890 = vmatprep.subr.bf16.mxu0 %v4641
    %4891 = vmatpush1.bf16.msra.mxu0 %v4640
    %4892 = vmatprep.subr.bf16.mxu0 %v4649
    %4893 = vmatpush1.bf16.msra.mxu0 %v4648
    %4894 = vmatprep.mubr.bf16.mxu0 0
    %4895 = vmatmul.mubr.bf16.gmra.mrb[0].mxu0 0
    %v4896 = vpop.f32.mrb[0].mxu0
    %v4897 = vadd.f32 0.0, %v4896
    %v4898 = vpop.f32.mrb[0].mxu0
    %v4899 = vadd.f32 0.0, %v4898
    %v4900 = vpop.f32.mrb[0].mxu0
    %v4901 = vpop.f32.mrb[0].mxu0
    %4902 = vdwg.mxu0
    %4903 = vmatprep.subr.bf16.mxu0 %v4531
    %4904 = vmatpush1.bf16.msra.mxu0 %v4530
    %4905 = vmatprep.subr.bf16.mxu0 %v4539
    %4906 = vmatpush1.bf16.msra.mxu0 %v4538
    %4907 = vmatprep.subr.bf16.mxu0 %v4547
    %4908 = vmatpush1.bf16.msra.mxu0 %v4546
    %4909 = vmatprep.subr.bf16.mxu0 %v4555
    %4910 = vmatpush1.bf16.msra.mxu0 %v4554
    %4911 = vmatprep.subr.bf16.mxu0 %v4563
    %4912 = vmatpush1.bf16.msra.mxu0 %v4562
    %4913 = vmatprep.subr.bf16.mxu0 %v4571
    %4914 = vmatpush1.bf16.msra.mxu0 %v4570
    %4915 = vmatprep.subr.bf16.mxu0 %v4579
    %4916 = vmatpush1.bf16.msra.mxu0 %v4578
    %4917 = vmatprep.subr.bf16.mxu0 %v4587
    %4918 = vmatpush1.bf16.msra.mxu0 %v4586
    %4919 = vmatprep.subr.bf16.mxu0 %v4595
    %4920 = vmatpush1.bf16.msra.mxu0 %v4594
    %4921 = vmatprep.subr.bf16.mxu0 %v4603
    %4922 = vmatpush1.bf16.msra.mxu0 %v4602
    %4923 = vmatprep.subr.bf16.mxu0 %v4611
    %4924 = vmatpush1.bf16.msra.mxu0 %v4610
    %4925 = vmatprep.subr.bf16.mxu0 %v4619
    %4926 = vmatpush1.bf16.msra.mxu0 %v4618
    %4927 = vmatprep.subr.bf16.mxu0 %v4627
    %4928 = vmatpush1.bf16.msra.mxu0 %v4626
    %4929 = vmatprep.subr.bf16.mxu0 %v4635
    %4930 = vmatpush1.bf16.msra.mxu0 %v4634
    %4931 = vmatprep.subr.bf16.mxu0 %v4643
    %4932 = vmatpush1.bf16.msra.mxu0 %v4642
    %4933 = vmatprep.subr.bf16.mxu0 %v4651
    %4934 = vmatpush1.bf16.msra.mxu0 %v4650
    %4935 = vmatprep.mubr.bf16.mxu0 0
    %4936 = vmatmul.mubr.bf16.gmra.mrb[0].mxu0 0
    %v4937 = vpop.f32.mrb[0].mxu0
    %v4938 = vadd.f32 0.0, %v4937
    %v4939 = vpop.f32.mrb[0].mxu0
    %v4940 = vadd.f32 0.0, %v4939
    %v4941 = vpop.f32.mrb[0].mxu0
    %v4942 = vpop.f32.mrb[0].mxu0
    %4943 = vdwg.mxu0
    %v4944 = vadd.f32 %v4132, %v4815
    %v4945 = vadd.f32 %v4133, %v4817
    %v4946 = vadd.f32 %v4134, %v4856
    %v4947 = vadd.f32 %v4135, %v4858
    %v4948 = vadd.f32 %v4136, %v4897
    %v4949 = vadd.f32 %v4137, %v4899
    %v4950 = vadd.f32 %v4138, %v4938
    %v4951 = vadd.f32 %v4139, %v4940
    %v4952 = vxor.u32 %v4944, 2147483648
    %v4953 = vxor.u32 %v4945, 2147483648
    %v4954 = vmul.f32 %v4952, 1.442695
    %v4955 = vpow.pop %v4954
    %v4956 = vmul.f32 %v4953, 1.442695
    %v4957 = vpow.pop %v4956
    %v4958 = vadd.f32 %v4955, 1.0
    %v4959 = vadd.f32 %v4957, 1.0
    %v4960 = vrcp.pop %v4958
    %v4961 = vmul.f32 1.0, %v4960
    %v4962 = vrcp.pop %v4959
    %v4963 = vmul.f32 1.0, %v4962
    %v4964 = vxor.u32 %v4946, 2147483648
    %v4965 = vxor.u32 %v4947, 2147483648
    %v4966 = vmul.f32 %v4964, 1.442695
    %v4967 = vpow.pop %v4966
    %v4968 = vmul.f32 %v4965, 1.442695
    %v4969 = vpow.pop %v4968
    %v4970 = vadd.f32 %v4967, 1.0
    %v4971 = vadd.f32 %v4969, 1.0
    %v4972 = vrcp.pop %v4970
    %v4973 = vmul.f32 1.0, %v4972
    %v4974 = vrcp.pop %v4971
    %v4975 = vmul.f32 1.0, %v4974
    %v4976 = vtanh.pop %v4948
    %v4977 = vtanh.pop %v4949
    %v4978 = vxor.u32 %v4950, 2147483648
    %v4979 = vxor.u32 %v4951, 2147483648
    %v4980 = vmul.f32 %v4978, 1.442695
    %v4981 = vpow.pop %v4980
    %v4982 = vmul.f32 %v4979, 1.442695
    %v4983 = vpow.pop %v4982
    %v4984 = vadd.f32 %v4981, 1.0
    %v4985 = vadd.f32 %v4983, 1.0
    %v4986 = vrcp.pop %v4984
    %v4987 = vmul.f32 1.0, %v4986
    %v4988 = vrcp.pop %v4985
    %v4989 = vmul.f32 1.0, %v4988
    %v4990 = vmul.f32 %v4973, 0.0
    %v4991 = vmul.f32 %v4975, 0.0
    %v4992 = vmul.f32 %v4961, %v4976
    %v4993 = vmul.f32 %v4963, %v4977
    %v4994 = vadd.f32 %v4990, %v4992
    %v4995 = vadd.f32 %v4991, %v4993
    %v4996 = vtanh.pop %v4994
    %v4997 = vtanh.pop %v4995
    %v4998 = vmul.f32 %v4987, %v4996
    %v4999 = vmul.f32 %v4989, %v4997
    %v5008 = vrot.slane %v3842, 1
    %v5009 = vrot.slane %v3844, 1
    %v5010 = vrot.slane %v3885, 1
    %v5011 = vrot.slane %v3887, 1
    %v5012 = vrot.slane %v3928, 1
    %v5013 = vrot.slane %v3930, 1
    %v5014 = vrot.slane %v3971, 1
    %v5015 = vrot.slane %v3973, 1
    %v5024 = vsel %vm4131, %v5008, %v3846
    %v5025 = vsel %vm4131, %v5009, %v3848
    %v5026 = vsel %vm4131, %v5010, %v3889
    %v5027 = vsel %vm4131, %v5011, %v3891
    %v5028 = vsel %vm4131, %v5012, %v3932
    %v5029 = vsel %vm4131, %v5013, %v3934
    %v5030 = vsel %vm4131, %v5014, %v3975
    %v5031 = vsel %vm4131, %v5015, %v3977
    %v5032 = vpack.c.bf16 %v4998, %v4998
    %v5033 = vpack.c.bf16 %v4999, %v4999
    %5034 = vmatprep.subr.bf16.mxu0 %v4525
    %5035 = vmatpush1.bf16.msra.mxu0 %v4524
    %5036 = vmatprep.subr.bf16.mxu0 %v4533
    %5037 = vmatpush1.bf16.msra.mxu0 %v4532
    %5038 = vmatprep.subr.bf16.mxu0 %v4541
    %5039 = vmatpush1.bf16.msra.mxu0 %v4540
    %5040 = vmatprep.subr.bf16.mxu0 %v4549
    %5041 = vmatpush1.bf16.msra.mxu0 %v4548
    %5042 = vmatprep.subr.bf16.mxu0 %v4557
    %5043 = vmatpush1.bf16.msra.mxu0 %v4556
    %5044 = vmatprep.subr.bf16.mxu0 %v4565
    %5045 = vmatpush1.bf16.msra.mxu0 %v4564
    %5046 = vmatprep.subr.bf16.mxu0 %v4573
    %5047 = vmatpush1.bf16.msra.mxu0 %v4572
    %5048 = vmatprep.subr.bf16.mxu0 %v4581
    %5049 = vmatpush1.bf16.msra.mxu0 %v4580
    %5050 = vmatprep.subr.bf16.mxu0 %v4589
    %5051 = vmatpush1.bf16.msra.mxu0 %v4588
    %5052 = vmatprep.subr.bf16.mxu0 %v4597
    %5053 = vmatpush1.bf16.msra.mxu0 %v4596
    %5054 = vmatprep.subr.bf16.mxu0 %v4605
    %5055 = vmatpush1.bf16.msra.mxu0 %v4604
    %5056 = vmatprep.subr.bf16.mxu0 %v4613
    %5057 = vmatpush1.bf16.msra.mxu0 %v4612
    %5058 = vmatprep.subr.bf16.mxu0 %v4621
    %5059 = vmatpush1.bf16.msra.mxu0 %v4620
    %5060 = vmatprep.subr.bf16.mxu0 %v4629
    %5061 = vmatpush1.bf16.msra.mxu0 %v4628
    %5062 = vmatprep.subr.bf16.mxu0 %v4637
    %5063 = vmatpush1.bf16.msra.mxu0 %v4636
    %5064 = vmatprep.subr.bf16.mxu0 %v4645
    %5065 = vmatpush1.bf16.msra.mxu0 %v4644
    %5066 = vmatprep.mubr.bf16.mxu0 %v5033
    %5067 = vmatmul.mubr.bf16.gmra.mrb[0].mxu0 %v5032
    %v5068 = vpop.f32.mrb[0].mxu0
    %v5069 = vadd.f32 0.0, %v5068
    %v5070 = vpop.f32.mrb[0].mxu0
    %v5071 = vadd.f32 0.0, %v5070
    %v5072 = vpop.f32.mrb[0].mxu0
    %v5073 = vpop.f32.mrb[0].mxu0
    %5074 = vdwg.mxu0
    %5075 = vmatprep.subr.bf16.mxu0 %v4527
    %5076 = vmatpush1.bf16.msra.mxu0 %v4526
    %5077 = vmatprep.subr.bf16.mxu0 %v4535
    %5078 = vmatpush1.bf16.msra.mxu0 %v4534
    %5079 = vmatprep.subr.bf16.mxu0 %v4543
    %5080 = vmatpush1.bf16.msra.mxu0 %v4542
    %5081 = vmatprep.subr.bf16.mxu0 %v4551
    %5082 = vmatpush1.bf16.msra.mxu0 %v4550
    %5083 = vmatprep.subr.bf16.mxu0 %v4559
    %5084 = vmatpush1.bf16.msra.mxu0 %v4558
    %5085 = vmatprep.subr.bf16.mxu0 %v4567
    %5086 = vmatpush1.bf16.msra.mxu0 %v4566
    %5087 = vmatprep.subr.bf16.mxu0 %v4575
    %5088 = vmatpush1.bf16.msra.mxu0 %v4574
    %5089 = vmatprep.subr.bf16.mxu0 %v4583
    %5090 = vmatpush1.bf16.msra.mxu0 %v4582
    %5091 = vmatprep.subr.bf16.mxu0 %v4591
    %5092 = vmatpush1.bf16.msra.mxu0 %v4590
    %5093 = vmatprep.subr.bf16.mxu0 %v4599
    %5094 = vmatpush1.bf16.msra.mxu0 %v4598
    %5095 = vmatprep.subr.bf16.mxu0 %v4607
    %5096 = vmatpush1.bf16.msra.mxu0 %v4606
    %5097 = vmatprep.subr.bf16.mxu0 %v4615
    %5098 = vmatpush1.bf16.msra.mxu0 %v4614
    %5099 = vmatprep.subr.bf16.mxu0 %v4623
    %5100 = vmatpush1.bf16.msra.mxu0 %v4622
    %5101 = vmatprep.subr.bf16.mxu0 %v4631
    %5102 = vmatpush1.bf16.msra.mxu0 %v4630
    %5103 = vmatprep.subr.bf16.mxu0 %v4639
    %5104 = vmatpush1.bf16.msra.mxu0 %v4638
    %5105 = vmatprep.subr.bf16.mxu0 %v4647
    %5106 = vmatpush1.bf16.msra.mxu0 %v4646
    %5107 = vmatprep.mubr.bf16.mxu0 %v5033
    %5108 = vmatmul.mubr.bf16.gmra.mrb[0].mxu0 %v5032
    %v5109 = vpop.f32.mrb[0].mxu0
    %v5110 = vadd.f32 0.0, %v5109
    %v5111 = vpop.f32.mrb[0].mxu0
    %v5112 = vadd.f32 0.0, %v5111
    %v5113 = vpop.f32.mrb[0].mxu0
    %v5114 = vpop.f32.mrb[0].mxu0
    %5115 = vdwg.mxu0
    %5116 = vmatprep.subr.bf16.mxu0 %v4529
    %5117 = vmatpush1.bf16.msra.mxu0 %v4528
    %5118 = vmatprep.subr.bf16.mxu0 %v4537
    %5119 = vmatpush1.bf16.msra.mxu0 %v4536
    %5120 = vmatprep.subr.bf16.mxu0 %v4545
    %5121 = vmatpush1.bf16.msra.mxu0 %v4544
    %5122 = vmatprep.subr.bf16.mxu0 %v4553
    %5123 = vmatpush1.bf16.msra.mxu0 %v4552
    %5124 = vmatprep.subr.bf16.mxu0 %v4561
    %5125 = vmatpush1.bf16.msra.mxu0 %v4560
    %5126 = vmatprep.subr.bf16.mxu0 %v4569
    %5127 = vmatpush1.bf16.msra.mxu0 %v4568
    %5128 = vmatprep.subr.bf16.mxu0 %v4577
    %5129 = vmatpush1.bf16.msra.mxu0 %v4576
    %5130 = vmatprep.subr.bf16.mxu0 %v4585
    %5131 = vmatpush1.bf16.msra.mxu0 %v4584
    %5132 = vmatprep.subr.bf16.mxu0 %v4593
    %5133 = vmatpush1.bf16.msra.mxu0 %v4592
    %5134 = vmatprep.subr.bf16.mxu0 %v4601
    %5135 = vmatpush1.bf16.msra.mxu0 %v4600
    %5136 = vmatprep.subr.bf16.mxu0 %v4609
    %5137 = vmatpush1.bf16.msra.mxu0 %v4608
    %5138 = vmatprep.subr.bf16.mxu0 %v4617
    %5139 = vmatpush1.bf16.msra.mxu0 %v4616
    %5140 = vmatprep.subr.bf16.mxu0 %v4625
    %5141 = vmatpush1.bf16.msra.mxu0 %v4624
    %5142 = vmatprep.subr.bf16.mxu0 %v4633
    %5143 = vmatpush1.bf16.msra.mxu0 %v4632
    %5144 = vmatprep.subr.bf16.mxu0 %v4641
    %5145 = vmatpush1.bf16.msra.mxu0 %v4640
    %5146 = vmatprep.subr.bf16.mxu0 %v4649
    %5147 = vmatpush1.bf16.msra.mxu0 %v4648
    %5148 = vmatprep.mubr.bf16.mxu0 %v5033
    %5149 = vmatmul.mubr.bf16.gmra.mrb[0].mxu0 %v5032
    %v5150 = vpop.f32.mrb[0].mxu0
    %v5151 = vadd.f32 0.0, %v5150
    %v5152 = vpop.f32.mrb[0].mxu0
    %v5153 = vadd.f32 0.0, %v5152
    %v5154 = vpop.f32.mrb[0].mxu0
    %v5155 = vpop.f32.mrb[0].mxu0
    %5156 = vdwg.mxu0
    %5157 = vmatprep.subr.bf16.mxu0 %v4531
    %5158 = vmatpush1.bf16.msra.mxu0 %v4530
    %5159 = vmatprep.subr.bf16.mxu0 %v4539
    %5160 = vmatpush1.bf16.msra.mxu0 %v4538
    %5161 = vmatprep.subr.bf16.mxu0 %v4547
    %5162 = vmatpush1.bf16.msra.mxu0 %v4546
    %5163 = vmatprep.subr.bf16.mxu0 %v4555
    %5164 = vmatpush1.bf16.msra.mxu0 %v4554
    %5165 = vmatprep.subr.bf16.mxu0 %v4563
    %5166 = vmatpush1.bf16.msra.mxu0 %v4562
    %5167 = vmatprep.subr.bf16.mxu0 %v4571
    %5168 = vmatpush1.bf16.msra.mxu0 %v4570
    %5169 = vmatprep.subr.bf16.mxu0 %v4579
    %5170 = vmatpush1.bf16.msra.mxu0 %v4578
    %5171 = vmatprep.subr.bf16.mxu0 %v4587
    %5172 = vmatpush1.bf16.msra.mxu0 %v4586
    %5173 = vmatprep.subr.bf16.mxu0 %v4595
    %5174 = vmatpush1.bf16.msra.mxu0 %v4594
    %5175 = vmatprep.subr.bf16.mxu0 %v4603
    %5176 = vmatpush1.bf16.msra.mxu0 %v4602
    %5177 = vmatprep.subr.bf16.mxu0 %v4611
    %5178 = vmatpush1.bf16.msra.mxu0 %v4610
    %5179 = vmatprep.subr.bf16.mxu0 %v4619
    %5180 = vmatpush1.bf16.msra.mxu0 %v4618
    %5181 = vmatprep.subr.bf16.mxu0 %v4627
    %5182 = vmatpush1.bf16.msra.mxu0 %v4626
    %5183 = vmatprep.subr.bf16.mxu0 %v4635
    %5184 = vmatpush1.bf16.msra.mxu0 %v4634
    %5185 = vmatprep.subr.bf16.mxu0 %v4643
    %5186 = vmatpush1.bf16.msra.mxu0 %v4642
    %5187 = vmatprep.subr.bf16.mxu0 %v4651
    %5188 = vmatpush1.bf16.msra.mxu0 %v4650
    %5189 = vmatprep.mubr.bf16.mxu0 %v5033
    %5190 = vmatmul.mubr.bf16.gmra.mrb[0].mxu0 %v5032
    %v5191 = vpop.f32.mrb[0].mxu0
    %v5192 = vadd.f32 0.0, %v5191
    %v5193 = vpop.f32.mrb[0].mxu0
    %v5194 = vadd.f32 0.0, %v5193
    %v5195 = vpop.f32.mrb[0].mxu0
    %v5196 = vpop.f32.mrb[0].mxu0
    %5197 = vdwg.mxu0
    %v5198 = vadd.f32 %v5024, %v5069
    %v5199 = vadd.f32 %v5025, %v5071
    %v5200 = vadd.f32 %v5026, %v5110
    %v5201 = vadd.f32 %v5027, %v5112
    %v5202 = vadd.f32 %v5028, %v5151
    %v5203 = vadd.f32 %v5029, %v5153
    %v5204 = vadd.f32 %v5030, %v5192
    %v5205 = vadd.f32 %v5031, %v5194
    %v5206 = vxor.u32 %v5198, 2147483648
    %v5207 = vxor.u32 %v5199, 2147483648
    %v5208 = vmul.f32 %v5206, 1.442695
    %v5209 = vpow.pop %v5208
    %v5210 = vmul.f32 %v5207, 1.442695
    %v5211 = vpow.pop %v5210
    %v5212 = vadd.f32 %v5209, 1.0
    %v5213 = vadd.f32 %v5211, 1.0
    %v5214 = vrcp.pop %v5212
    %v5215 = vmul.f32 1.0, %v5214
    %v5216 = vrcp.pop %v5213
    %v5217 = vmul.f32 1.0, %v5216
    %v5218 = vxor.u32 %v5200, 2147483648
    %v5219 = vxor.u32 %v5201, 2147483648
    %v5220 = vmul.f32 %v5218, 1.442695
    %v5221 = vpow.pop %v5220
    %v5222 = vmul.f32 %v5219, 1.442695
    %v5223 = vpow.pop %v5222
    %v5224 = vadd.f32 %v5221, 1.0
    %v5225 = vadd.f32 %v5223, 1.0
    %v5226 = vrcp.pop %v5224
    %v5227 = vmul.f32 1.0, %v5226
    %v5228 = vrcp.pop %v5225
    %v5229 = vmul.f32 1.0, %v5228
    %v5230 = vtanh.pop %v5202
    %v5231 = vtanh.pop %v5203
    %v5232 = vxor.u32 %v5204, 2147483648
    %v5233 = vxor.u32 %v5205, 2147483648
    %v5234 = vmul.f32 %v5232, 1.442695
    %v5235 = vpow.pop %v5234
    %v5236 = vmul.f32 %v5233, 1.442695
    %v5237 = vpow.pop %v5236
    %v5238 = vadd.f32 %v5235, 1.0
    %v5239 = vadd.f32 %v5237, 1.0
    %v5240 = vrcp.pop %v5238
    %v5241 = vmul.f32 1.0, %v5240
    %v5242 = vrcp.pop %v5239
    %v5243 = vmul.f32 1.0, %v5242
    %v5244 = vmul.f32 %v5227, %v4994
    %v5245 = vmul.f32 %v5229, %v4995
    %v5246 = vmul.f32 %v5215, %v5230
    %v5247 = vmul.f32 %v5217, %v5231
    %v5248 = vadd.f32 %v5244, %v5246
    %v5249 = vadd.f32 %v5245, %v5247
    %v5250 = vtanh.pop %v5248
    %v5251 = vtanh.pop %v5249
    %v5252 = vmul.f32 %v5241, %v5250
    %v5253 = vmul.f32 %v5243, %v5251
    %v5254 = vrot.slane %v3842, 2
    %v5255 = vrot.slane %v3844, 2
    %v5256 = vrot.slane %v3885, 2
    %v5257 = vrot.slane %v3887, 2
    %v5258 = vrot.slane %v3928, 2
    %v5259 = vrot.slane %v3930, 2
    %v5260 = vrot.slane %v3971, 2
    %v5261 = vrot.slane %v3973, 2
    %v5270 = vrot.slane %v3846, 1
    %v5271 = vrot.slane %v3848, 1
    %v5272 = vrot.slane %v3889, 1
    %v5273 = vrot.slane %v3891, 1
    %v5274 = vrot.slane %v3932, 1
    %v5275 = vrot.slane %v3934, 1
    %v5276 = vrot.slane %v3975, 1
    %v5277 = vrot.slane %v3977, 1
    %v5286 = vsel %vm4131, %v5254, %v5270
    %v5287 = vsel %vm4131, %v5255, %v5271
    %v5288 = vsel %vm4131, %v5256, %v5272
    %v5289 = vsel %vm4131, %v5257, %v5273
    %v5290 = vsel %vm4131, %v5258, %v5274
    %v5291 = vsel %vm4131, %v5259, %v5275
    %v5292 = vsel %vm4131, %v5260, %v5276
    %v5293 = vsel %vm4131, %v5261, %v5277
    %v5294 = vpack.c.bf16 %v5252, %v5252
    %v5295 = vpack.c.bf16 %v5253, %v5253
    %5296 = vmatprep.subr.bf16.mxu0 %v4525
    %5297 = vmatpush1.bf16.msra.mxu0 %v4524
    %5298 = vmatprep.subr.bf16.mxu0 %v4533
    %5299 = vmatpush1.bf16.msra.mxu0 %v4532
    %5300 = vmatprep.subr.bf16.mxu0 %v4541
    %5301 = vmatpush1.bf16.msra.mxu0 %v4540
    %5302 = vmatprep.subr.bf16.mxu0 %v4549
    %5303 = vmatpush1.bf16.msra.mxu0 %v4548
    %5304 = vmatprep.subr.bf16.mxu0 %v4557
    %5305 = vmatpush1.bf16.msra.mxu0 %v4556
    %5306 = vmatprep.subr.bf16.mxu0 %v4565
    %5307 = vmatpush1.bf16.msra.mxu0 %v4564
    %5308 = vmatprep.subr.bf16.mxu0 %v4573
    %5309 = vmatpush1.bf16.msra.mxu0 %v4572
    %5310 = vmatprep.subr.bf16.mxu0 %v4581
    %5311 = vmatpush1.bf16.msra.mxu0 %v4580
    %5312 = vmatprep.subr.bf16.mxu0 %v4589
    %5313 = vmatpush1.bf16.msra.mxu0 %v4588
    %5314 = vmatprep.subr.bf16.mxu0 %v4597
    %5315 = vmatpush1.bf16.msra.mxu0 %v4596
    %5316 = vmatprep.subr.bf16.mxu0 %v4605
    %5317 = vmatpush1.bf16.msra.mxu0 %v4604
    %5318 = vmatprep.subr.bf16.mxu0 %v4613
    %5319 = vmatpush1.bf16.msra.mxu0 %v4612
    %5320 = vmatprep.subr.bf16.mxu0 %v4621
    %5321 = vmatpush1.bf16.msra.mxu0 %v4620
    %5322 = vmatprep.subr.bf16.mxu0 %v4629
    %5323 = vmatpush1.bf16.msra.mxu0 %v4628
    %5324 = vmatprep.subr.bf16.mxu0 %v4637
    %5325 = vmatpush1.bf16.msra.mxu0 %v4636
    %5326 = vmatprep.subr.bf16.mxu0 %v4645
    %5327 = vmatpush1.bf16.msra.mxu0 %v4644
    %5328 = vmatprep.mubr.bf16.mxu0 %v5295
    %5329 = vmatmul.mubr.bf16.gmra.mrb[0].mxu0 %v5294
    %v5330 = vpop.f32.mrb[0].mxu0
    %v5331 = vadd.f32 0.0, %v5330
    %v5332 = vpop.f32.mrb[0].mxu0
    %v5333 = vadd.f32 0.0, %v5332
    %v5334 = vpop.f32.mrb[0].mxu0
    %v5335 = vpop.f32.mrb[0].mxu0
    %5336 = vdwg.mxu0
    %5337 = vmatprep.subr.bf16.mxu0 %v4527
    %5338 = vmatpush1.bf16.msra.mxu0 %v4526
    %5339 = vmatprep.subr.bf16.mxu0 %v4535
    %5340 = vmatpush1.bf16.msra.mxu0 %v4534
    %5341 = vmatprep.subr.bf16.mxu0 %v4543
    %5342 = vmatpush1.bf16.msra.mxu0 %v4542
    %5343 = vmatprep.subr.bf16.mxu0 %v4551
    %5344 = vmatpush1.bf16.msra.mxu0 %v4550
    %5345 = vmatprep.subr.bf16.mxu0 %v4559
    %5346 = vmatpush1.bf16.msra.mxu0 %v4558
    %5347 = vmatprep.subr.bf16.mxu0 %v4567
    %5348 = vmatpush1.bf16.msra.mxu0 %v4566
    %5349 = vmatprep.subr.bf16.mxu0 %v4575
    %5350 = vmatpush1.bf16.msra.mxu0 %v4574
    %5351 = vmatprep.subr.bf16.mxu0 %v4583
    %5352 = vmatpush1.bf16.msra.mxu0 %v4582
    %5353 = vmatprep.subr.bf16.mxu0 %v4591
    %5354 = vmatpush1.bf16.msra.mxu0 %v4590
    %5355 = vmatprep.subr.bf16.mxu0 %v4599
    %5356 = vmatpush1.bf16.msra.mxu0 %v4598
    %5357 = vmatprep.subr.bf16.mxu0 %v4607
    %5358 = vmatpush1.bf16.msra.mxu0 %v4606
    %5359 = vmatprep.subr.bf16.mxu0 %v4615
    %5360 = vmatpush1.bf16.msra.mxu0 %v4614
    %5361 = vmatprep.subr.bf16.mxu0 %v4623
    %5362 = vmatpush1.bf16.msra.mxu0 %v4622
    %5363 = vmatprep.subr.bf16.mxu0 %v4631
    %5364 = vmatpush1.bf16.msra.mxu0 %v4630
    %5365 = vmatprep.subr.bf16.mxu0 %v4639
    %5366 = vmatpush1.bf16.msra.mxu0 %v4638
    %5367 = vmatprep.subr.bf16.mxu0 %v4647
    %5368 = vmatpush1.bf16.msra.mxu0 %v4646
    %5369 = vmatprep.mubr.bf16.mxu0 %v5295
    %5370 = vmatmul.mubr.bf16.gmra.mrb[0].mxu0 %v5294
    %v5371 = vpop.f32.mrb[0].mxu0
    %v5372 = vadd.f32 0.0, %v5371
    %v5373 = vpop.f32.mrb[0].mxu0
    %v5374 = vadd.f32 0.0, %v5373
    %v5375 = vpop.f32.mrb[0].mxu0
    %v5376 = vpop.f32.mrb[0].mxu0
    %5377 = vdwg.mxu0
    %5378 = vmatprep.subr.bf16.mxu0 %v4529
    %5379 = vmatpush1.bf16.msra.mxu0 %v4528
    %5380 = vmatprep.subr.bf16.mxu0 %v4537
    %5381 = vmatpush1.bf16.msra.mxu0 %v4536
    %5382 = vmatprep.subr.bf16.mxu0 %v4545
    %5383 = vmatpush1.bf16.msra.mxu0 %v4544
    %5384 = vmatprep.subr.bf16.mxu0 %v4553
    %5385 = vmatpush1.bf16.msra.mxu0 %v4552
    %5386 = vmatprep.subr.bf16.mxu0 %v4561
    %5387 = vmatpush1.bf16.msra.mxu0 %v4560
    %5388 = vmatprep.subr.bf16.mxu0 %v4569
    %5389 = vmatpush1.bf16.msra.mxu0 %v4568
    %5390 = vmatprep.subr.bf16.mxu0 %v4577
    %5391 = vmatpush1.bf16.msra.mxu0 %v4576
    %5392 = vmatprep.subr.bf16.mxu0 %v4585
    %5393 = vmatpush1.bf16.msra.mxu0 %v4584
    %5394 = vmatprep.subr.bf16.mxu0 %v4593
    %5395 = vmatpush1.bf16.msra.mxu0 %v4592
    %5396 = vmatprep.subr.bf16.mxu0 %v4601
    %5397 = vmatpush1.bf16.msra.mxu0 %v4600
    %5398 = vmatprep.subr.bf16.mxu0 %v4609
    %5399 = vmatpush1.bf16.msra.mxu0 %v4608
    %5400 = vmatprep.subr.bf16.mxu0 %v4617
    %5401 = vmatpush1.bf16.msra.mxu0 %v4616
    %5402 = vmatprep.subr.bf16.mxu0 %v4625
    %5403 = vmatpush1.bf16.msra.mxu0 %v4624
    %5404 = vmatprep.subr.bf16.mxu0 %v4633
    %5405 = vmatpush1.bf16.msra.mxu0 %v4632
    %5406 = vmatprep.subr.bf16.mxu0 %v4641
    %5407 = vmatpush1.bf16.msra.mxu0 %v4640
    %5408 = vmatprep.subr.bf16.mxu0 %v4649
    %5409 = vmatpush1.bf16.msra.mxu0 %v4648
    %5410 = vmatprep.mubr.bf16.mxu0 %v5295
    %5411 = vmatmul.mubr.bf16.gmra.mrb[0].mxu0 %v5294
    %v5412 = vpop.f32.mrb[0].mxu0
    %v5413 = vadd.f32 0.0, %v5412
    %v5414 = vpop.f32.mrb[0].mxu0
    %v5415 = vadd.f32 0.0, %v5414
    %v5416 = vpop.f32.mrb[0].mxu0
    %v5417 = vpop.f32.mrb[0].mxu0
    %5418 = vdwg.mxu0
    %5419 = vmatprep.subr.bf16.mxu0 %v4531
    %5420 = vmatpush1.bf16.msra.mxu0 %v4530
    %5421 = vmatprep.subr.bf16.mxu0 %v4539
    %5422 = vmatpush1.bf16.msra.mxu0 %v4538
    %5423 = vmatprep.subr.bf16.mxu0 %v4547
    %5424 = vmatpush1.bf16.msra.mxu0 %v4546
    %5425 = vmatprep.subr.bf16.mxu0 %v4555
    %5426 = vmatpush1.bf16.msra.mxu0 %v4554
    %5427 = vmatprep.subr.bf16.mxu0 %v4563
    %5428 = vmatpush1.bf16.msra.mxu0 %v4562
    %5429 = vmatprep.subr.bf16.mxu0 %v4571
    %5430 = vmatpush1.bf16.msra.mxu0 %v4570
    %5431 = vmatprep.subr.bf16.mxu0 %v4579
    %5432 = vmatpush1.bf16.msra.mxu0 %v4578
    %5433 = vmatprep.subr.bf16.mxu0 %v4587
    %5434 = vmatpush1.bf16.msra.mxu0 %v4586
    %5435 = vmatprep.subr.bf16.mxu0 %v4595
    %5436 = vmatpush1.bf16.msra.mxu0 %v4594
    %5437 = vmatprep.subr.bf16.mxu0 %v4603
    %5438 = vmatpush1.bf16.msra.mxu0 %v4602
    %5439 = vmatprep.subr.bf16.mxu0 %v4611
    %5440 = vmatpush1.bf16.msra.mxu0 %v4610
    %5441 = vmatprep.subr.bf16.mxu0 %v4619
    %5442 = vmatpush1.bf16.msra.mxu0 %v4618
    %5443 = vmatprep.subr.bf16.mxu0 %v4627
    %5444 = vmatpush1.bf16.msra.mxu0 %v4626
    %5445 = vmatprep.subr.bf16.mxu0 %v4635
    %5446 = vmatpush1.bf16.msra.mxu0 %v4634
    %5447 = vmatprep.subr.bf16.mxu0 %v4643
    %5448 = vmatpush1.bf16.msra.mxu0 %v4642
    %5449 = vmatprep.subr.bf16.mxu0 %v4651
    %5450 = vmatpush1.bf16.msra.mxu0 %v4650
    %5451 = vmatprep.mubr.bf16.mxu0 %v5295
    %5452 = vmatmul.mubr.bf16.gmra.mrb[0].mxu0 %v5294
    %v5453 = vpop.f32.mrb[0].mxu0
    %v5454 = vadd.f32 0.0, %v5453
    %v5455 = vpop.f32.mrb[0].mxu0
    %v5456 = vadd.f32 0.0, %v5455
    %v5457 = vpop.f32.mrb[0].mxu0
    %v5458 = vpop.f32.mrb[0].mxu0
    %5459 = vdwg.mxu0
    %v5460 = vadd.f32 %v5286, %v5331
    %v5461 = vadd.f32 %v5287, %v5333
    %v5462 = vadd.f32 %v5288, %v5372
    %v5463 = vadd.f32 %v5289, %v5374
    %v5464 = vadd.f32 %v5290, %v5413
    %v5465 = vadd.f32 %v5291, %v5415
    %v5466 = vadd.f32 %v5292, %v5454
    %v5467 = vadd.f32 %v5293, %v5456
    %v5468 = vxor.u32 %v5460, 2147483648
    %v5469 = vxor.u32 %v5461, 2147483648
    %v5470 = vmul.f32 %v5468, 1.442695
    %v5471 = vpow.pop %v5470
    %v5472 = vmul.f32 %v5469, 1.442695
    %v5473 = vpow.pop %v5472
    %v5474 = vadd.f32 %v5471, 1.0
    %v5475 = vadd.f32 %v5473, 1.0
    %v5476 = vrcp.pop %v5474
    %v5477 = vmul.f32 1.0, %v5476
    %v5478 = vrcp.pop %v5475
    %v5479 = vmul.f32 1.0, %v5478
    %v5480 = vxor.u32 %v5462, 2147483648
    %v5481 = vxor.u32 %v5463, 2147483648
    %v5482 = vmul.f32 %v5480, 1.442695
    %v5483 = vpow.pop %v5482
    %v5484 = vmul.f32 %v5481, 1.442695
    %v5485 = vpow.pop %v5484
    %v5486 = vadd.f32 %v5483, 1.0
    %v5487 = vadd.f32 %v5485, 1.0
    %v5488 = vrcp.pop %v5486
    %v5489 = vmul.f32 1.0, %v5488
    %v5490 = vrcp.pop %v5487
    %v5491 = vmul.f32 1.0, %v5490
    %v5492 = vtanh.pop %v5464
    %v5493 = vtanh.pop %v5465
    %v5494 = vxor.u32 %v5466, 2147483648
    %v5495 = vxor.u32 %v5467, 2147483648
    %v5496 = vmul.f32 %v5494, 1.442695
    %v5497 = vpow.pop %v5496
    %v5498 = vmul.f32 %v5495, 1.442695
    %v5499 = vpow.pop %v5498
    %v5500 = vadd.f32 %v5497, 1.0
    %v5501 = vadd.f32 %v5499, 1.0
    %v5502 = vrcp.pop %v5500
    %v5503 = vmul.f32 1.0, %v5502
    %v5504 = vrcp.pop %v5501
    %v5505 = vmul.f32 1.0, %v5504
    %v5506 = vmul.f32 %v5489, %v5248
    %v5507 = vmul.f32 %v5491, %v5249
    %v5508 = vmul.f32 %v5477, %v5492
    %v5509 = vmul.f32 %v5479, %v5493
    %v5510 = vadd.f32 %v5506, %v5508
    %v5511 = vadd.f32 %v5507, %v5509
    %v5512 = vtanh.pop %v5510
    %v5513 = vtanh.pop %v5511
    %v5514 = vmul.f32 %v5503, %v5512
    %v5515 = vmul.f32 %v5505, %v5513
    %v5516 = vrot.slane %v3842, 3
    %v5517 = vrot.slane %v3844, 3
    %v5518 = vrot.slane %v3885, 3
    %v5519 = vrot.slane %v3887, 3
    %v5520 = vrot.slane %v3928, 3
    %v5521 = vrot.slane %v3930, 3
    %v5522 = vrot.slane %v3971, 3
    %v5523 = vrot.slane %v3973, 3
    %v5532 = vrot.slane %v3846, 2
    %v5533 = vrot.slane %v3848, 2
    %v5534 = vrot.slane %v3889, 2
    %v5535 = vrot.slane %v3891, 2
    %v5536 = vrot.slane %v3932, 2
    %v5537 = vrot.slane %v3934, 2
    %v5538 = vrot.slane %v3975, 2
    %v5539 = vrot.slane %v3977, 2
    %v5548 = vsel %vm4131, %v5516, %v5532
    %v5549 = vsel %vm4131, %v5517, %v5533
    %v5550 = vsel %vm4131, %v5518, %v5534
    %v5551 = vsel %vm4131, %v5519, %v5535
    %v5552 = vsel %vm4131, %v5520, %v5536
    %v5553 = vsel %vm4131, %v5521, %v5537
    %v5554 = vsel %vm4131, %v5522, %v5538
    %v5555 = vsel %vm4131, %v5523, %v5539
    %v5556 = vpack.c.bf16 %v5514, %v5514
    %v5557 = vpack.c.bf16 %v5515, %v5515
    %5558 = vmatprep.subr.bf16.mxu0 %v4525
    %5559 = vmatpush1.bf16.msra.mxu0 %v4524
    %5560 = vmatprep.subr.bf16.mxu0 %v4533
    %5561 = vmatpush1.bf16.msra.mxu0 %v4532
    %5562 = vmatprep.subr.bf16.mxu0 %v4541
    %5563 = vmatpush1.bf16.msra.mxu0 %v4540
    %5564 = vmatprep.subr.bf16.mxu0 %v4549
    %5565 = vmatpush1.bf16.msra.mxu0 %v4548
    %5566 = vmatprep.subr.bf16.mxu0 %v4557
    %5567 = vmatpush1.bf16.msra.mxu0 %v4556
    %5568 = vmatprep.subr.bf16.mxu0 %v4565
    %5569 = vmatpush1.bf16.msra.mxu0 %v4564
    %5570 = vmatprep.subr.bf16.mxu0 %v4573
    %5571 = vmatpush1.bf16.msra.mxu0 %v4572
    %5572 = vmatprep.subr.bf16.mxu0 %v4581
    %5573 = vmatpush1.bf16.msra.mxu0 %v4580
    %5574 = vmatprep.subr.bf16.mxu0 %v4589
    %5575 = vmatpush1.bf16.msra.mxu0 %v4588
    %5576 = vmatprep.subr.bf16.mxu0 %v4597
    %5577 = vmatpush1.bf16.msra.mxu0 %v4596
    %5578 = vmatprep.subr.bf16.mxu0 %v4605
    %5579 = vmatpush1.bf16.msra.mxu0 %v4604
    %5580 = vmatprep.subr.bf16.mxu0 %v4613
    %5581 = vmatpush1.bf16.msra.mxu0 %v4612
    %5582 = vmatprep.subr.bf16.mxu0 %v4621
    %5583 = vmatpush1.bf16.msra.mxu0 %v4620
    %5584 = vmatprep.subr.bf16.mxu0 %v4629
    %5585 = vmatpush1.bf16.msra.mxu0 %v4628
    %5586 = vmatprep.subr.bf16.mxu0 %v4637
    %5587 = vmatpush1.bf16.msra.mxu0 %v4636
    %5588 = vmatprep.subr.bf16.mxu0 %v4645
    %5589 = vmatpush1.bf16.msra.mxu0 %v4644
    %5590 = vmatprep.mubr.bf16.mxu0 %v5557
    %5591 = vmatmul.mubr.bf16.gmra.mrb[0].mxu0 %v5556
    %v5592 = vpop.f32.mrb[0].mxu0
    %v5593 = vadd.f32 0.0, %v5592
    %v5594 = vpop.f32.mrb[0].mxu0
    %v5595 = vadd.f32 0.0, %v5594
    %v5596 = vpop.f32.mrb[0].mxu0
    %v5597 = vpop.f32.mrb[0].mxu0
    %5598 = vdwg.mxu0
    %5599 = vmatprep.subr.bf16.mxu0 %v4527
    %5600 = vmatpush1.bf16.msra.mxu0 %v4526
    %5601 = vmatprep.subr.bf16.mxu0 %v4535
    %5602 = vmatpush1.bf16.msra.mxu0 %v4534
    %5603 = vmatprep.subr.bf16.mxu0 %v4543
    %5604 = vmatpush1.bf16.msra.mxu0 %v4542
    %5605 = vmatprep.subr.bf16.mxu0 %v4551
    %5606 = vmatpush1.bf16.msra.mxu0 %v4550
    %5607 = vmatprep.subr.bf16.mxu0 %v4559
    %5608 = vmatpush1.bf16.msra.mxu0 %v4558
    %5609 = vmatprep.subr.bf16.mxu0 %v4567
    %5610 = vmatpush1.bf16.msra.mxu0 %v4566
    %5611 = vmatprep.subr.bf16.mxu0 %v4575
    %5612 = vmatpush1.bf16.msra.mxu0 %v4574
    %5613 = vmatprep.subr.bf16.mxu0 %v4583
    %5614 = vmatpush1.bf16.msra.mxu0 %v4582
    %5615 = vmatprep.subr.bf16.mxu0 %v4591
    %5616 = vmatpush1.bf16.msra.mxu0 %v4590
    %5617 = vmatprep.subr.bf16.mxu0 %v4599
    %5618 = vmatpush1.bf16.msra.mxu0 %v4598
    %5619 = vmatprep.subr.bf16.mxu0 %v4607
    %5620 = vmatpush1.bf16.msra.mxu0 %v4606
    %5621 = vmatprep.subr.bf16.mxu0 %v4615
    %5622 = vmatpush1.bf16.msra.mxu0 %v4614
    %5623 = vmatprep.subr.bf16.mxu0 %v4623
    %5624 = vmatpush1.bf16.msra.mxu0 %v4622
    %5625 = vmatprep.subr.bf16.mxu0 %v4631
    %5626 = vmatpush1.bf16.msra.mxu0 %v4630
    %5627 = vmatprep.subr.bf16.mxu0 %v4639
    %5628 = vmatpush1.bf16.msra.mxu0 %v4638
    %5629 = vmatprep.subr.bf16.mxu0 %v4647
    %5630 = vmatpush1.bf16.msra.mxu0 %v4646
    %5631 = vmatprep.mubr.bf16.mxu0 %v5557
    %5632 = vmatmul.mubr.bf16.gmra.mrb[0].mxu0 %v5556
    %v5633 = vpop.f32.mrb[0].mxu0
    %v5634 = vadd.f32 0.0, %v5633
    %v5635 = vpop.f32.mrb[0].mxu0
    %v5636 = vadd.f32 0.0, %v5635
    %v5637 = vpop.f32.mrb[0].mxu0
    %v5638 = vpop.f32.mrb[0].mxu0
    %5639 = vdwg.mxu0
    %5640 = vmatprep.subr.bf16.mxu0 %v4529
    %5641 = vmatpush1.bf16.msra.mxu0 %v4528
    %5642 = vmatprep.subr.bf16.mxu0 %v4537
    %5643 = vmatpush1.bf16.msra.mxu0 %v4536
    %5644 = vmatprep.subr.bf16.mxu0 %v4545
    %5645 = vmatpush1.bf16.msra.mxu0 %v4544
    %5646 = vmatprep.subr.bf16.mxu0 %v4553
    %5647 = vmatpush1.bf16.msra.mxu0 %v4552
    %5648 = vmatprep.subr.bf16.mxu0 %v4561
    %5649 = vmatpush1.bf16.msra.mxu0 %v4560
    %5650 = vmatprep.subr.bf16.mxu0 %v4569
    %5651 = vmatpush1.bf16.msra.mxu0 %v4568
    %5652 = vmatprep.subr.bf16.mxu0 %v4577
    %5653 = vmatpush1.bf16.msra.mxu0 %v4576
    %5654 = vmatprep.subr.bf16.mxu0 %v4585
    %5655 = vmatpush1.bf16.msra.mxu0 %v4584
    %5656 = vmatprep.subr.bf16.mxu0 %v4593
    %5657 = vmatpush1.bf16.msra.mxu0 %v4592
    %5658 = vmatprep.subr.bf16.mxu0 %v4601
    %5659 = vmatpush1.bf16.msra.mxu0 %v4600
    %5660 = vmatprep.subr.bf16.mxu0 %v4609
    %5661 = vmatpush1.bf16.msra.mxu0 %v4608
    %5662 = vmatprep.subr.bf16.mxu0 %v4617
    %5663 = vmatpush1.bf16.msra.mxu0 %v4616
    %5664 = vmatprep.subr.bf16.mxu0 %v4625
    %5665 = vmatpush1.bf16.msra.mxu0 %v4624
    %5666 = vmatprep.subr.bf16.mxu0 %v4633
    %5667 = vmatpush1.bf16.msra.mxu0 %v4632
    %5668 = vmatprep.subr.bf16.mxu0 %v4641
    %5669 = vmatpush1.bf16.msra.mxu0 %v4640
    %5670 = vmatprep.subr.bf16.mxu0 %v4649
    %5671 = vmatpush1.bf16.msra.mxu0 %v4648
    %5672 = vmatprep.mubr.bf16.mxu0 %v5557
    %5673 = vmatmul.mubr.bf16.gmra.mrb[0].mxu0 %v5556
    %v5674 = vpop.f32.mrb[0].mxu0
    %v5675 = vadd.f32 0.0, %v5674
    %v5676 = vpop.f32.mrb[0].mxu0
    %v5677 = vadd.f32 0.0, %v5676
    %v5678 = vpop.f32.mrb[0].mxu0
    %v5679 = vpop.f32.mrb[0].mxu0
    %5680 = vdwg.mxu0
    %5681 = vmatprep.subr.bf16.mxu0 %v4531
    %5682 = vmatpush1.bf16.msra.mxu0 %v4530
    %5683 = vmatprep.subr.bf16.mxu0 %v4539
    %5684 = vmatpush1.bf16.msra.mxu0 %v4538
    %5685 = vmatprep.subr.bf16.mxu0 %v4547
    %5686 = vmatpush1.bf16.msra.mxu0 %v4546
    %5687 = vmatprep.subr.bf16.mxu0 %v4555
    %5688 = vmatpush1.bf16.msra.mxu0 %v4554
    %5689 = vmatprep.subr.bf16.mxu0 %v4563
    %5690 = vmatpush1.bf16.msra.mxu0 %v4562
    %5691 = vmatprep.subr.bf16.mxu0 %v4571
    %5692 = vmatpush1.bf16.msra.mxu0 %v4570
    %5693 = vmatprep.subr.bf16.mxu0 %v4579
    %5694 = vmatpush1.bf16.msra.mxu0 %v4578
    %5695 = vmatprep.subr.bf16.mxu0 %v4587
    %5696 = vmatpush1.bf16.msra.mxu0 %v4586
    %5697 = vmatprep.subr.bf16.mxu0 %v4595
    %5698 = vmatpush1.bf16.msra.mxu0 %v4594
    %5699 = vmatprep.subr.bf16.mxu0 %v4603
    %5700 = vmatpush1.bf16.msra.mxu0 %v4602
    %5701 = vmatprep.subr.bf16.mxu0 %v4611
    %5702 = vmatpush1.bf16.msra.mxu0 %v4610
    %5703 = vmatprep.subr.bf16.mxu0 %v4619
    %5704 = vmatpush1.bf16.msra.mxu0 %v4618
    %5705 = vmatprep.subr.bf16.mxu0 %v4627
    %5706 = vmatpush1.bf16.msra.mxu0 %v4626
    %5707 = vmatprep.subr.bf16.mxu0 %v4635
    %5708 = vmatpush1.bf16.msra.mxu0 %v4634
    %5709 = vmatprep.subr.bf16.mxu0 %v4643
    %5710 = vmatpush1.bf16.msra.mxu0 %v4642
    %5711 = vmatprep.subr.bf16.mxu0 %v4651
    %5712 = vmatpush1.bf16.msra.mxu0 %v4650
    %5713 = vmatprep.mubr.bf16.mxu0 %v5557
    %5714 = vmatmul.mubr.bf16.gmra.mrb[0].mxu0 %v5556
    %v5715 = vpop.f32.mrb[0].mxu0
    %v5716 = vadd.f32 0.0, %v5715
    %v5717 = vpop.f32.mrb[0].mxu0
    %v5718 = vadd.f32 0.0, %v5717
    %v5719 = vpop.f32.mrb[0].mxu0
    %v5720 = vpop.f32.mrb[0].mxu0
    %5721 = vdwg.mxu0
    %v5722 = vadd.f32 %v5548, %v5593
    %v5723 = vadd.f32 %v5549, %v5595
    %v5724 = vadd.f32 %v5550, %v5634
    %v5725 = vadd.f32 %v5551, %v5636
    %v5726 = vadd.f32 %v5552, %v5675
    %v5727 = vadd.f32 %v5553, %v5677
    %v5728 = vadd.f32 %v5554, %v5716
    %v5729 = vadd.f32 %v5555, %v5718
    %v5730 = vxor.u32 %v5722, 2147483648
    %v5731 = vxor.u32 %v5723, 2147483648
    %v5732 = vmul.f32 %v5730, 1.442695
    %v5733 = vpow.pop %v5732
    %v5734 = vmul.f32 %v5731, 1.442695
    %v5735 = vpow.pop %v5734
    %v5736 = vadd.f32 %v5733, 1.0
    %v5737 = vadd.f32 %v5735, 1.0
    %v5738 = vrcp.pop %v5736
    %v5739 = vmul.f32 1.0, %v5738
    %v5740 = vrcp.pop %v5737
    %v5741 = vmul.f32 1.0, %v5740
    %v5742 = vxor.u32 %v5724, 2147483648
    %v5743 = vxor.u32 %v5725, 2147483648
    %v5744 = vmul.f32 %v5742, 1.442695
    %v5745 = vpow.pop %v5744
    %v5746 = vmul.f32 %v5743, 1.442695
    %v5747 = vpow.pop %v5746
    %v5748 = vadd.f32 %v5745, 1.0
    %v5749 = vadd.f32 %v5747, 1.0
    %v5750 = vrcp.pop %v5748
    %v5751 = vmul.f32 1.0, %v5750
    %v5752 = vrcp.pop %v5749
    %v5753 = vmul.f32 1.0, %v5752
    %v5754 = vtanh.pop %v5726
    %v5755 = vtanh.pop %v5727
    %v5756 = vxor.u32 %v5728, 2147483648
    %v5757 = vxor.u32 %v5729, 2147483648
    %v5758 = vmul.f32 %v5756, 1.442695
    %v5759 = vpow.pop %v5758
    %v5760 = vmul.f32 %v5757, 1.442695
    %v5761 = vpow.pop %v5760
    %v5762 = vadd.f32 %v5759, 1.0
    %v5763 = vadd.f32 %v5761, 1.0
    %v5764 = vrcp.pop %v5762
    %v5765 = vmul.f32 1.0, %v5764
    %v5766 = vrcp.pop %v5763
    %v5767 = vmul.f32 1.0, %v5766
    %v5768 = vmul.f32 %v5751, %v5510
    %v5769 = vmul.f32 %v5753, %v5511
    %v5770 = vmul.f32 %v5739, %v5754
    %v5771 = vmul.f32 %v5741, %v5755
    %v5772 = vadd.f32 %v5768, %v5770
    %v5773 = vadd.f32 %v5769, %v5771
    %v5774 = vtanh.pop %v5772
    %v5775 = vtanh.pop %v5773
    %v5776 = vmul.f32 %v5765, %v5774
    %v5777 = vmul.f32 %v5767, %v5775
    %v5778 = vrot.slane %v3842, 4
    %v5779 = vrot.slane %v3844, 4
    %v5780 = vrot.slane %v3885, 4
    %v5781 = vrot.slane %v3887, 4
    %v5782 = vrot.slane %v3928, 4
    %v5783 = vrot.slane %v3930, 4
    %v5784 = vrot.slane %v3971, 4
    %v5785 = vrot.slane %v3973, 4
    %v5794 = vrot.slane %v3846, 3
    %v5795 = vrot.slane %v3848, 3
    %v5796 = vrot.slane %v3889, 3
    %v5797 = vrot.slane %v3891, 3
    %v5798 = vrot.slane %v3932, 3
    %v5799 = vrot.slane %v3934, 3
    %v5800 = vrot.slane %v3975, 3
    %v5801 = vrot.slane %v3977, 3
    %v5810 = vsel %vm4131, %v5778, %v5794
    %v5811 = vsel %vm4131, %v5779, %v5795
    %v5812 = vsel %vm4131, %v5780, %v5796
    %v5813 = vsel %vm4131, %v5781, %v5797
    %v5814 = vsel %vm4131, %v5782, %v5798
    %v5815 = vsel %vm4131, %v5783, %v5799
    %v5816 = vsel %vm4131, %v5784, %v5800
    %v5817 = vsel %vm4131, %v5785, %v5801
    %v5818 = vpack.c.bf16 %v5776, %v5776
    %v5819 = vpack.c.bf16 %v5777, %v5777
    %5820 = vmatprep.subr.bf16.mxu0 %v4525
    %5821 = vmatpush1.bf16.msra.mxu0 %v4524
    %5822 = vmatprep.subr.bf16.mxu0 %v4533
    %5823 = vmatpush1.bf16.msra.mxu0 %v4532
    %5824 = vmatprep.subr.bf16.mxu0 %v4541
    %5825 = vmatpush1.bf16.msra.mxu0 %v4540
    %5826 = vmatprep.subr.bf16.mxu0 %v4549
    %5827 = vmatpush1.bf16.msra.mxu0 %v4548
    %5828 = vmatprep.subr.bf16.mxu0 %v4557
    %5829 = vmatpush1.bf16.msra.mxu0 %v4556
    %5830 = vmatprep.subr.bf16.mxu0 %v4565
    %5831 = vmatpush1.bf16.msra.mxu0 %v4564
    %5832 = vmatprep.subr.bf16.mxu0 %v4573
    %5833 = vmatpush1.bf16.msra.mxu0 %v4572
    %5834 = vmatprep.subr.bf16.mxu0 %v4581
    %5835 = vmatpush1.bf16.msra.mxu0 %v4580
    %5836 = vmatprep.subr.bf16.mxu0 %v4589
    %5837 = vmatpush1.bf16.msra.mxu0 %v4588
    %5838 = vmatprep.subr.bf16.mxu0 %v4597
    %5839 = vmatpush1.bf16.msra.mxu0 %v4596
    %5840 = vmatprep.subr.bf16.mxu0 %v4605
    %5841 = vmatpush1.bf16.msra.mxu0 %v4604
    %5842 = vmatprep.subr.bf16.mxu0 %v4613
    %5843 = vmatpush1.bf16.msra.mxu0 %v4612
    %5844 = vmatprep.subr.bf16.mxu0 %v4621
    %5845 = vmatpush1.bf16.msra.mxu0 %v4620
    %5846 = vmatprep.subr.bf16.mxu0 %v4629
    %5847 = vmatpush1.bf16.msra.mxu0 %v4628
    %5848 = vmatprep.subr.bf16.mxu0 %v4637
    %5849 = vmatpush1.bf16.msra.mxu0 %v4636
    %5850 = vmatprep.subr.bf16.mxu0 %v4645
    %5851 = vmatpush1.bf16.msra.mxu0 %v4644
    %5852 = vmatprep.mubr.bf16.mxu0 %v5819
    %5853 = vmatmul.mubr.bf16.gmra.mrb[0].mxu0 %v5818
    %v5854 = vpop.f32.mrb[0].mxu0
    %v5855 = vadd.f32 0.0, %v5854
    %v5856 = vpop.f32.mrb[0].mxu0
    %v5857 = vadd.f32 0.0, %v5856
    %v5858 = vpop.f32.mrb[0].mxu0
    %v5859 = vpop.f32.mrb[0].mxu0
    %5860 = vdwg.mxu0
    %5861 = vmatprep.subr.bf16.mxu0 %v4527
    %5862 = vmatpush1.bf16.msra.mxu0 %v4526
    %5863 = vmatprep.subr.bf16.mxu0 %v4535
    %5864 = vmatpush1.bf16.msra.mxu0 %v4534
    %5865 = vmatprep.subr.bf16.mxu0 %v4543
    %5866 = vmatpush1.bf16.msra.mxu0 %v4542
    %5867 = vmatprep.subr.bf16.mxu0 %v4551
    %5868 = vmatpush1.bf16.msra.mxu0 %v4550
    %5869 = vmatprep.subr.bf16.mxu0 %v4559
    %5870 = vmatpush1.bf16.msra.mxu0 %v4558
    %5871 = vmatprep.subr.bf16.mxu0 %v4567
    %5872 = vmatpush1.bf16.msra.mxu0 %v4566
    %5873 = vmatprep.subr.bf16.mxu0 %v4575
    %5874 = vmatpush1.bf16.msra.mxu0 %v4574
    %5875 = vmatprep.subr.bf16.mxu0 %v4583
    %5876 = vmatpush1.bf16.msra.mxu0 %v4582
    %5877 = vmatprep.subr.bf16.mxu0 %v4591
    %5878 = vmatpush1.bf16.msra.mxu0 %v4590
    %5879 = vmatprep.subr.bf16.mxu0 %v4599
    %5880 = vmatpush1.bf16.msra.mxu0 %v4598
    %5881 = vmatprep.subr.bf16.mxu0 %v4607
    %5882 = vmatpush1.bf16.msra.mxu0 %v4606
    %5883 = vmatprep.subr.bf16.mxu0 %v4615
    %5884 = vmatpush1.bf16.msra.mxu0 %v4614
    %5885 = vmatprep.subr.bf16.mxu0 %v4623
    %5886 = vmatpush1.bf16.msra.mxu0 %v4622
    %5887 = vmatprep.subr.bf16.mxu0 %v4631
    %5888 = vmatpush1.bf16.msra.mxu0 %v4630
    %5889 = vmatprep.subr.bf16.mxu0 %v4639
    %5890 = vmatpush1.bf16.msra.mxu0 %v4638
    %5891 = vmatprep.subr.bf16.mxu0 %v4647
    %5892 = vmatpush1.bf16.msra.mxu0 %v4646
    %5893 = vmatprep.mubr.bf16.mxu0 %v5819
    %5894 = vmatmul.mubr.bf16.gmra.mrb[0].mxu0 %v5818
    %v5895 = vpop.f32.mrb[0].mxu0
    %v5896 = vadd.f32 0.0, %v5895
    %v5897 = vpop.f32.mrb[0].mxu0
    %v5898 = vadd.f32 0.0, %v5897
    %v5899 = vpop.f32.mrb[0].mxu0
    %v5900 = vpop.f32.mrb[0].mxu0
    %5901 = vdwg.mxu0
    %5902 = vmatprep.subr.bf16.mxu0 %v4529
    %5903 = vmatpush1.bf16.msra.mxu0 %v4528
    %5904 = vmatprep.subr.bf16.mxu0 %v4537
    %5905 = vmatpush1.bf16.msra.mxu0 %v4536
    %5906 = vmatprep.subr.bf16.mxu0 %v4545
    %5907 = vmatpush1.bf16.msra.mxu0 %v4544
    %5908 = vmatprep.subr.bf16.mxu0 %v4553
    %5909 = vmatpush1.bf16.msra.mxu0 %v4552
    %5910 = vmatprep.subr.bf16.mxu0 %v4561
    %5911 = vmatpush1.bf16.msra.mxu0 %v4560
    %5912 = vmatprep.subr.bf16.mxu0 %v4569
    %5913 = vmatpush1.bf16.msra.mxu0 %v4568
    %5914 = vmatprep.subr.bf16.mxu0 %v4577
    %5915 = vmatpush1.bf16.msra.mxu0 %v4576
    %5916 = vmatprep.subr.bf16.mxu0 %v4585
    %5917 = vmatpush1.bf16.msra.mxu0 %v4584
    %5918 = vmatprep.subr.bf16.mxu0 %v4593
    %5919 = vmatpush1.bf16.msra.mxu0 %v4592
    %5920 = vmatprep.subr.bf16.mxu0 %v4601
    %5921 = vmatpush1.bf16.msra.mxu0 %v4600
    %5922 = vmatprep.subr.bf16.mxu0 %v4609
    %5923 = vmatpush1.bf16.msra.mxu0 %v4608
    %5924 = vmatprep.subr.bf16.mxu0 %v4617
    %5925 = vmatpush1.bf16.msra.mxu0 %v4616
    %5926 = vmatprep.subr.bf16.mxu0 %v4625
    %5927 = vmatpush1.bf16.msra.mxu0 %v4624
    %5928 = vmatprep.subr.bf16.mxu0 %v4633
    %5929 = vmatpush1.bf16.msra.mxu0 %v4632
    %5930 = vmatprep.subr.bf16.mxu0 %v4641
    %5931 = vmatpush1.bf16.msra.mxu0 %v4640
    %5932 = vmatprep.subr.bf16.mxu0 %v4649
    %5933 = vmatpush1.bf16.msra.mxu0 %v4648
    %5934 = vmatprep.mubr.bf16.mxu0 %v5819
    %5935 = vmatmul.mubr.bf16.gmra.mrb[0].mxu0 %v5818
    %v5936 = vpop.f32.mrb[0].mxu0
    %v5937 = vadd.f32 0.0, %v5936
    %v5938 = vpop.f32.mrb[0].mxu0
    %v5939 = vadd.f32 0.0, %v5938
    %v5940 = vpop.f32.mrb[0].mxu0
    %v5941 = vpop.f32.mrb[0].mxu0
    %5942 = vdwg.mxu0
    %5943 = vmatprep.subr.bf16.mxu0 %v4531
    %5944 = vmatpush1.bf16.msra.mxu0 %v4530
    %5945 = vmatprep.subr.bf16.mxu0 %v4539
    %5946 = vmatpush1.bf16.msra.mxu0 %v4538
    %5947 = vmatprep.subr.bf16.mxu0 %v4547
    %5948 = vmatpush1.bf16.msra.mxu0 %v4546
    %5949 = vmatprep.subr.bf16.mxu0 %v4555
    %5950 = vmatpush1.bf16.msra.mxu0 %v4554
    %5951 = vmatprep.subr.bf16.mxu0 %v4563
    %5952 = vmatpush1.bf16.msra.mxu0 %v4562
    %5953 = vmatprep.subr.bf16.mxu0 %v4571
    %5954 = vmatpush1.bf16.msra.mxu0 %v4570
    %5955 = vmatprep.subr.bf16.mxu0 %v4579
    %5956 = vmatpush1.bf16.msra.mxu0 %v4578
    %5957 = vmatprep.subr.bf16.mxu0 %v4587
    %5958 = vmatpush1.bf16.msra.mxu0 %v4586
    %5959 = vmatprep.subr.bf16.mxu0 %v4595
    %5960 = vmatpush1.bf16.msra.mxu0 %v4594
    %5961 = vmatprep.subr.bf16.mxu0 %v4603
    %5962 = vmatpush1.bf16.msra.mxu0 %v4602
    %5963 = vmatprep.subr.bf16.mxu0 %v4611
    %5964 = vmatpush1.bf16.msra.mxu0 %v4610
    %5965 = vmatprep.subr.bf16.mxu0 %v4619
    %5966 = vmatpush1.bf16.msra.mxu0 %v4618
    %5967 = vmatprep.subr.bf16.mxu0 %v4627
    %5968 = vmatpush1.bf16.msra.mxu0 %v4626
    %5969 = vmatprep.subr.bf16.mxu0 %v4635
    %5970 = vmatpush1.bf16.msra.mxu0 %v4634
    %5971 = vmatprep.subr.bf16.mxu0 %v4643
    %5972 = vmatpush1.bf16.msra.mxu0 %v4642
    %5973 = vmatprep.subr.bf16.mxu0 %v4651
    %5974 = vmatpush1.bf16.msra.mxu0 %v4650
    %5975 = vmatprep.mubr.bf16.mxu0 %v5819
    %5976 = vmatmul.mubr.bf16.gmra.mrb[0].mxu0 %v5818
    %v5977 = vpop.f32.mrb[0].mxu0
    %v5978 = vadd.f32 0.0, %v5977
    %v5979 = vpop.f32.mrb[0].mxu0
    %v5980 = vadd.f32 0.0, %v5979
    %v5981 = vpop.f32.mrb[0].mxu0
    %v5982 = vpop.f32.mrb[0].mxu0
    %5983 = vdwg.mxu0
    %v5984 = vadd.f32 %v5810, %v5855
    %v5985 = vadd.f32 %v5811, %v5857
    %v5986 = vadd.f32 %v5812, %v5896
    %v5987 = vadd.f32 %v5813, %v5898
    %v5988 = vadd.f32 %v5814, %v5937
    %v5989 = vadd.f32 %v5815, %v5939
    %v5990 = vadd.f32 %v5816, %v5978
    %v5991 = vadd.f32 %v5817, %v5980
    %v5992 = vxor.u32 %v5984, 2147483648
    %v5993 = vxor.u32 %v5985, 2147483648
    %v5994 = vmul.f32 %v5992, 1.442695
    %v5995 = vpow.pop %v5994
    %v5996 = vmul.f32 %v5993, 1.442695
    %v5997 = vpow.pop %v5996
    %v5998 = vadd.f32 %v5995, 1.0
    %v5999 = vadd.f32 %v5997, 1.0
    %v6000 = vrcp.pop %v5998
    %v6001 = vmul.f32 1.0, %v6000
    %v6002 = vrcp.pop %v5999
    %v6003 = vmul.f32 1.0, %v6002
    %v6004 = vxor.u32 %v5986, 2147483648
    %v6005 = vxor.u32 %v5987, 2147483648
    %v6006 = vmul.f32 %v6004, 1.442695
    %v6007 = vpow.pop %v6006
    %v6008 = vmul.f32 %v6005, 1.442695
    %v6009 = vpow.pop %v6008
    %v6010 = vadd.f32 %v6007, 1.0
    %v6011 = vadd.f32 %v6009, 1.0
    %v6012 = vrcp.pop %v6010
    %v6013 = vmul.f32 1.0, %v6012
    %v6014 = vrcp.pop %v6011
    %v6015 = vmul.f32 1.0, %v6014
    %v6016 = vtanh.pop %v5988
    %v6017 = vtanh.pop %v5989
    %v6018 = vxor.u32 %v5990, 2147483648
    %v6019 = vxor.u32 %v5991, 2147483648
    %v6020 = vmul.f32 %v6018, 1.442695
    %v6021 = vpow.pop %v6020
    %v6022 = vmul.f32 %v6019, 1.442695
    %v6023 = vpow.pop %v6022
    %v6024 = vadd.f32 %v6021, 1.0
    %v6025 = vadd.f32 %v6023, 1.0
    %v6026 = vrcp.pop %v6024
    %v6027 = vmul.f32 1.0, %v6026
    %v6028 = vrcp.pop %v6025
    %v6029 = vmul.f32 1.0, %v6028
    %v6030 = vmul.f32 %v6013, %v5772
    %v6031 = vmul.f32 %v6015, %v5773
    %v6032 = vmul.f32 %v6001, %v6016
    %v6033 = vmul.f32 %v6003, %v6017
    %v6034 = vadd.f32 %v6030, %v6032
    %v6035 = vadd.f32 %v6031, %v6033
    %v6036 = vtanh.pop %v6034
    %v6037 = vtanh.pop %v6035
    %v6038 = vmul.f32 %v6027, %v6036
    %v6039 = vmul.f32 %v6029, %v6037
    %v6040 = vrot.slane %v3842, 5
    %v6041 = vrot.slane %v3844, 5
    %v6042 = vrot.slane %v3885, 5
    %v6043 = vrot.slane %v3887, 5
    %v6044 = vrot.slane %v3928, 5
    %v6045 = vrot.slane %v3930, 5
    %v6046 = vrot.slane %v3971, 5
    %v6047 = vrot.slane %v3973, 5
    %v6056 = vrot.slane %v3846, 4
    %v6057 = vrot.slane %v3848, 4
    %v6058 = vrot.slane %v3889, 4
    %v6059 = vrot.slane %v3891, 4
    %v6060 = vrot.slane %v3932, 4
    %v6061 = vrot.slane %v3934, 4
    %v6062 = vrot.slane %v3975, 4
    %v6063 = vrot.slane %v3977, 4
    %v6072 = vsel %vm4131, %v6040, %v6056
    %v6073 = vsel %vm4131, %v6041, %v6057
    %v6074 = vsel %vm4131, %v6042, %v6058
    %v6075 = vsel %vm4131, %v6043, %v6059
    %v6076 = vsel %vm4131, %v6044, %v6060
    %v6077 = vsel %vm4131, %v6045, %v6061
    %v6078 = vsel %vm4131, %v6046, %v6062
    %v6079 = vsel %vm4131, %v6047, %v6063
    %v6080 = vpack.c.bf16 %v6038, %v6038
    %v6081 = vpack.c.bf16 %v6039, %v6039
    %6082 = vmatprep.subr.bf16.mxu0 %v4525
    %6083 = vmatpush1.bf16.msra.mxu0 %v4524
    %6084 = vmatprep.subr.bf16.mxu0 %v4533
    %6085 = vmatpush1.bf16.msra.mxu0 %v4532
    %6086 = vmatprep.subr.bf16.mxu0 %v4541
    %6087 = vmatpush1.bf16.msra.mxu0 %v4540
    %6088 = vmatprep.subr.bf16.mxu0 %v4549
    %6089 = vmatpush1.bf16.msra.mxu0 %v4548
    %6090 = vmatprep.subr.bf16.mxu0 %v4557
    %6091 = vmatpush1.bf16.msra.mxu0 %v4556
    %6092 = vmatprep.subr.bf16.mxu0 %v4565
    %6093 = vmatpush1.bf16.msra.mxu0 %v4564
    %6094 = vmatprep.subr.bf16.mxu0 %v4573
    %6095 = vmatpush1.bf16.msra.mxu0 %v4572
    %6096 = vmatprep.subr.bf16.mxu0 %v4581
    %6097 = vmatpush1.bf16.msra.mxu0 %v4580
    %6098 = vmatprep.subr.bf16.mxu0 %v4589
    %6099 = vmatpush1.bf16.msra.mxu0 %v4588
    %6100 = vmatprep.subr.bf16.mxu0 %v4597
    %6101 = vmatpush1.bf16.msra.mxu0 %v4596
    %6102 = vmatprep.subr.bf16.mxu0 %v4605
    %6103 = vmatpush1.bf16.msra.mxu0 %v4604
    %6104 = vmatprep.subr.bf16.mxu0 %v4613
    %6105 = vmatpush1.bf16.msra.mxu0 %v4612
    %6106 = vmatprep.subr.bf16.mxu0 %v4621
    %6107 = vmatpush1.bf16.msra.mxu0 %v4620
    %6108 = vmatprep.subr.bf16.mxu0 %v4629
    %6109 = vmatpush1.bf16.msra.mxu0 %v4628
    %6110 = vmatprep.subr.bf16.mxu0 %v4637
    %6111 = vmatpush1.bf16.msra.mxu0 %v4636
    %6112 = vmatprep.subr.bf16.mxu0 %v4645
    %6113 = vmatpush1.bf16.msra.mxu0 %v4644
    %6114 = vmatprep.mubr.bf16.mxu0 %v6081
    %6115 = vmatmul.mubr.bf16.gmra.mrb[0].mxu0 %v6080
    %v6116 = vpop.f32.mrb[0].mxu0
    %v6117 = vadd.f32 0.0, %v6116
    %v6118 = vpop.f32.mrb[0].mxu0
    %v6119 = vadd.f32 0.0, %v6118
    %v6120 = vpop.f32.mrb[0].mxu0
    %v6121 = vpop.f32.mrb[0].mxu0
    %6122 = vdwg.mxu0
    %6123 = vmatprep.subr.bf16.mxu0 %v4527
    %6124 = vmatpush1.bf16.msra.mxu0 %v4526
    %6125 = vmatprep.subr.bf16.mxu0 %v4535
    %6126 = vmatpush1.bf16.msra.mxu0 %v4534
    %6127 = vmatprep.subr.bf16.mxu0 %v4543
    %6128 = vmatpush1.bf16.msra.mxu0 %v4542
    %6129 = vmatprep.subr.bf16.mxu0 %v4551
    %6130 = vmatpush1.bf16.msra.mxu0 %v4550
    %6131 = vmatprep.subr.bf16.mxu0 %v4559
    %6132 = vmatpush1.bf16.msra.mxu0 %v4558
    %6133 = vmatprep.subr.bf16.mxu0 %v4567
    %6134 = vmatpush1.bf16.msra.mxu0 %v4566
    %6135 = vmatprep.subr.bf16.mxu0 %v4575
    %6136 = vmatpush1.bf16.msra.mxu0 %v4574
    %6137 = vmatprep.subr.bf16.mxu0 %v4583
    %6138 = vmatpush1.bf16.msra.mxu0 %v4582
    %6139 = vmatprep.subr.bf16.mxu0 %v4591
    %6140 = vmatpush1.bf16.msra.mxu0 %v4590
    %6141 = vmatprep.subr.bf16.mxu0 %v4599
    %6142 = vmatpush1.bf16.msra.mxu0 %v4598
    %6143 = vmatprep.subr.bf16.mxu0 %v4607
    %6144 = vmatpush1.bf16.msra.mxu0 %v4606
    %6145 = vmatprep.subr.bf16.mxu0 %v4615
    %6146 = vmatpush1.bf16.msra.mxu0 %v4614
    %6147 = vmatprep.subr.bf16.mxu0 %v4623
    %6148 = vmatpush1.bf16.msra.mxu0 %v4622
    %6149 = vmatprep.subr.bf16.mxu0 %v4631
    %6150 = vmatpush1.bf16.msra.mxu0 %v4630
    %6151 = vmatprep.subr.bf16.mxu0 %v4639
    %6152 = vmatpush1.bf16.msra.mxu0 %v4638
    %6153 = vmatprep.subr.bf16.mxu0 %v4647
    %6154 = vmatpush1.bf16.msra.mxu0 %v4646
    %6155 = vmatprep.mubr.bf16.mxu0 %v6081
    %6156 = vmatmul.mubr.bf16.gmra.mrb[0].mxu0 %v6080
    %v6157 = vpop.f32.mrb[0].mxu0
    %v6158 = vadd.f32 0.0, %v6157
    %v6159 = vpop.f32.mrb[0].mxu0
    %v6160 = vadd.f32 0.0, %v6159
    %v6161 = vpop.f32.mrb[0].mxu0
    %v6162 = vpop.f32.mrb[0].mxu0
    %6163 = vdwg.mxu0
    %6164 = vmatprep.subr.bf16.mxu0 %v4529
    %6165 = vmatpush1.bf16.msra.mxu0 %v4528
    %6166 = vmatprep.subr.bf16.mxu0 %v4537
    %6167 = vmatpush1.bf16.msra.mxu0 %v4536
    %6168 = vmatprep.subr.bf16.mxu0 %v4545
    %6169 = vmatpush1.bf16.msra.mxu0 %v4544
    %6170 = vmatprep.subr.bf16.mxu0 %v4553
    %6171 = vmatpush1.bf16.msra.mxu0 %v4552
    %6172 = vmatprep.subr.bf16.mxu0 %v4561
    %6173 = vmatpush1.bf16.msra.mxu0 %v4560
    %6174 = vmatprep.subr.bf16.mxu0 %v4569
    %6175 = vmatpush1.bf16.msra.mxu0 %v4568
    %6176 = vmatprep.subr.bf16.mxu0 %v4577
    %6177 = vmatpush1.bf16.msra.mxu0 %v4576
    %6178 = vmatprep.subr.bf16.mxu0 %v4585
    %6179 = vmatpush1.bf16.msra.mxu0 %v4584
    %6180 = vmatprep.subr.bf16.mxu0 %v4593
    %6181 = vmatpush1.bf16.msra.mxu0 %v4592
    %6182 = vmatprep.subr.bf16.mxu0 %v4601
    %6183 = vmatpush1.bf16.msra.mxu0 %v4600
    %6184 = vmatprep.subr.bf16.mxu0 %v4609
    %6185 = vmatpush1.bf16.msra.mxu0 %v4608
    %6186 = vmatprep.subr.bf16.mxu0 %v4617
    %6187 = vmatpush1.bf16.msra.mxu0 %v4616
    %6188 = vmatprep.subr.bf16.mxu0 %v4625
    %6189 = vmatpush1.bf16.msra.mxu0 %v4624
    %6190 = vmatprep.subr.bf16.mxu0 %v4633
    %6191 = vmatpush1.bf16.msra.mxu0 %v4632
    %6192 = vmatprep.subr.bf16.mxu0 %v4641
    %6193 = vmatpush1.bf16.msra.mxu0 %v4640
    %6194 = vmatprep.subr.bf16.mxu0 %v4649
    %6195 = vmatpush1.bf16.msra.mxu0 %v4648
    %6196 = vmatprep.mubr.bf16.mxu0 %v6081
    %6197 = vmatmul.mubr.bf16.gmra.mrb[0].mxu0 %v6080
    %v6198 = vpop.f32.mrb[0].mxu0
    %v6199 = vadd.f32 0.0, %v6198
    %v6200 = vpop.f32.mrb[0].mxu0
    %v6201 = vadd.f32 0.0, %v6200
    %v6202 = vpop.f32.mrb[0].mxu0
    %v6203 = vpop.f32.mrb[0].mxu0
    %6204 = vdwg.mxu0
    %6205 = vmatprep.subr.bf16.mxu0 %v4531
    %6206 = vmatpush1.bf16.msra.mxu0 %v4530
    %6207 = vmatprep.subr.bf16.mxu0 %v4539
    %6208 = vmatpush1.bf16.msra.mxu0 %v4538
    %6209 = vmatprep.subr.bf16.mxu0 %v4547
    %6210 = vmatpush1.bf16.msra.mxu0 %v4546
    %6211 = vmatprep.subr.bf16.mxu0 %v4555
    %6212 = vmatpush1.bf16.msra.mxu0 %v4554
    %6213 = vmatprep.subr.bf16.mxu0 %v4563
    %6214 = vmatpush1.bf16.msra.mxu0 %v4562
    %6215 = vmatprep.subr.bf16.mxu0 %v4571
    %6216 = vmatpush1.bf16.msra.mxu0 %v4570
    %6217 = vmatprep.subr.bf16.mxu0 %v4579
    %6218 = vmatpush1.bf16.msra.mxu0 %v4578
    %6219 = vmatprep.subr.bf16.mxu0 %v4587
    %6220 = vmatpush1.bf16.msra.mxu0 %v4586
    %6221 = vmatprep.subr.bf16.mxu0 %v4595
    %6222 = vmatpush1.bf16.msra.mxu0 %v4594
    %6223 = vmatprep.subr.bf16.mxu0 %v4603
    %6224 = vmatpush1.bf16.msra.mxu0 %v4602
    %6225 = vmatprep.subr.bf16.mxu0 %v4611
    %6226 = vmatpush1.bf16.msra.mxu0 %v4610
    %6227 = vmatprep.subr.bf16.mxu0 %v4619
    %6228 = vmatpush1.bf16.msra.mxu0 %v4618
    %6229 = vmatprep.subr.bf16.mxu0 %v4627
    %6230 = vmatpush1.bf16.msra.mxu0 %v4626
    %6231 = vmatprep.subr.bf16.mxu0 %v4635
    %6232 = vmatpush1.bf16.msra.mxu0 %v4634
    %6233 = vmatprep.subr.bf16.mxu0 %v4643
    %6234 = vmatpush1.bf16.msra.mxu0 %v4642
    %6235 = vmatprep.subr.bf16.mxu0 %v4651
    %6236 = vmatpush1.bf16.msra.mxu0 %v4650
    %6237 = vmatprep.mubr.bf16.mxu0 %v6081
    %6238 = vmatmul.mubr.bf16.gmra.mrb[0].mxu0 %v6080
    %v6239 = vpop.f32.mrb[0].mxu0
    %v6240 = vadd.f32 0.0, %v6239
    %v6241 = vpop.f32.mrb[0].mxu0
    %v6242 = vadd.f32 0.0, %v6241
    %v6243 = vpop.f32.mrb[0].mxu0
    %v6244 = vpop.f32.mrb[0].mxu0
    %6245 = vdwg.mxu0
    %v6246 = vadd.f32 %v6072, %v6117
    %v6247 = vadd.f32 %v6073, %v6119
    %v6248 = vadd.f32 %v6074, %v6158
    %v6249 = vadd.f32 %v6075, %v6160
    %v6250 = vadd.f32 %v6076, %v6199
    %v6251 = vadd.f32 %v6077, %v6201
    %v6252 = vadd.f32 %v6078, %v6240
    %v6253 = vadd.f32 %v6079, %v6242
    %v6254 = vxor.u32 %v6246, 2147483648
    %v6255 = vxor.u32 %v6247, 2147483648
    %v6256 = vmul.f32 %v6254, 1.442695
    %v6257 = vpow.pop %v6256
    %v6258 = vmul.f32 %v6255, 1.442695
    %v6259 = vpow.pop %v6258
    %v6260 = vadd.f32 %v6257, 1.0
    %v6261 = vadd.f32 %v6259, 1.0
    %v6262 = vrcp.pop %v6260
    %v6263 = vmul.f32 1.0, %v6262
    %v6264 = vrcp.pop %v6261
    %v6265 = vmul.f32 1.0, %v6264
    %v6266 = vxor.u32 %v6248, 2147483648
    %v6267 = vxor.u32 %v6249, 2147483648
    %v6268 = vmul.f32 %v6266, 1.442695
    %v6269 = vpow.pop %v6268
    %v6270 = vmul.f32 %v6267, 1.442695
    %v6271 = vpow.pop %v6270
    %v6272 = vadd.f32 %v6269, 1.0
    %v6273 = vadd.f32 %v6271, 1.0
    %v6274 = vrcp.pop %v6272
    %v6275 = vmul.f32 1.0, %v6274
    %v6276 = vrcp.pop %v6273
    %v6277 = vmul.f32 1.0, %v6276
    %v6278 = vtanh.pop %v6250
    %v6279 = vtanh.pop %v6251
    %v6280 = vxor.u32 %v6252, 2147483648
    %v6281 = vxor.u32 %v6253, 2147483648
    %v6282 = vmul.f32 %v6280, 1.442695
    %v6283 = vpow.pop %v6282
    %v6284 = vmul.f32 %v6281, 1.442695
    %v6285 = vpow.pop %v6284
    %v6286 = vadd.f32 %v6283, 1.0
    %v6287 = vadd.f32 %v6285, 1.0
    %v6288 = vrcp.pop %v6286
    %v6289 = vmul.f32 1.0, %v6288
    %v6290 = vrcp.pop %v6287
    %v6291 = vmul.f32 1.0, %v6290
    %v6292 = vmul.f32 %v6275, %v6034
    %v6293 = vmul.f32 %v6277, %v6035
    %v6294 = vmul.f32 %v6263, %v6278
    %v6295 = vmul.f32 %v6265, %v6279
    %v6296 = vadd.f32 %v6292, %v6294
    %v6297 = vadd.f32 %v6293, %v6295
    %v6298 = vtanh.pop %v6296
    %v6299 = vtanh.pop %v6297
    %v6300 = vmul.f32 %v6289, %v6298
    %v6301 = vmul.f32 %v6291, %v6299
    %v6302 = vrot.slane %v3842, 6
    %v6303 = vrot.slane %v3844, 6
    %v6304 = vrot.slane %v3885, 6
    %v6305 = vrot.slane %v3887, 6
    %v6306 = vrot.slane %v3928, 6
    %v6307 = vrot.slane %v3930, 6
    %v6308 = vrot.slane %v3971, 6
    %v6309 = vrot.slane %v3973, 6
    %v6318 = vrot.slane %v3846, 5
    %v6319 = vrot.slane %v3848, 5
    %v6320 = vrot.slane %v3889, 5
    %v6321 = vrot.slane %v3891, 5
    %v6322 = vrot.slane %v3932, 5
    %v6323 = vrot.slane %v3934, 5
    %v6324 = vrot.slane %v3975, 5
    %v6325 = vrot.slane %v3977, 5
    %v6334 = vsel %vm4131, %v6302, %v6318
    %v6335 = vsel %vm4131, %v6303, %v6319
    %v6336 = vsel %vm4131, %v6304, %v6320
    %v6337 = vsel %vm4131, %v6305, %v6321
    %v6338 = vsel %vm4131, %v6306, %v6322
    %v6339 = vsel %vm4131, %v6307, %v6323
    %v6340 = vsel %vm4131, %v6308, %v6324
    %v6341 = vsel %vm4131, %v6309, %v6325
    %v6342 = vpack.c.bf16 %v6300, %v6300
    %v6343 = vpack.c.bf16 %v6301, %v6301
    %6344 = vmatprep.subr.bf16.mxu0 %v4525
    %6345 = vmatpush1.bf16.msra.mxu0 %v4524
    %6346 = vmatprep.subr.bf16.mxu0 %v4533
    %6347 = vmatpush1.bf16.msra.mxu0 %v4532
    %6348 = vmatprep.subr.bf16.mxu0 %v4541
    %6349 = vmatpush1.bf16.msra.mxu0 %v4540
    %6350 = vmatprep.subr.bf16.mxu0 %v4549
    %6351 = vmatpush1.bf16.msra.mxu0 %v4548
    %6352 = vmatprep.subr.bf16.mxu0 %v4557
    %6353 = vmatpush1.bf16.msra.mxu0 %v4556
    %6354 = vmatprep.subr.bf16.mxu0 %v4565
    %6355 = vmatpush1.bf16.msra.mxu0 %v4564
    %6356 = vmatprep.subr.bf16.mxu0 %v4573
    %6357 = vmatpush1.bf16.msra.mxu0 %v4572
    %6358 = vmatprep.subr.bf16.mxu0 %v4581
    %6359 = vmatpush1.bf16.msra.mxu0 %v4580
    %6360 = vmatprep.subr.bf16.mxu0 %v4589
    %6361 = vmatpush1.bf16.msra.mxu0 %v4588
    %6362 = vmatprep.subr.bf16.mxu0 %v4597
    %6363 = vmatpush1.bf16.msra.mxu0 %v4596
    %6364 = vmatprep.subr.bf16.mxu0 %v4605
    %6365 = vmatpush1.bf16.msra.mxu0 %v4604
    %6366 = vmatprep.subr.bf16.mxu0 %v4613
    %6367 = vmatpush1.bf16.msra.mxu0 %v4612
    %6368 = vmatprep.subr.bf16.mxu0 %v4621
    %6369 = vmatpush1.bf16.msra.mxu0 %v4620
    %6370 = vmatprep.subr.bf16.mxu0 %v4629
    %6371 = vmatpush1.bf16.msra.mxu0 %v4628
    %6372 = vmatprep.subr.bf16.mxu0 %v4637
    %6373 = vmatpush1.bf16.msra.mxu0 %v4636
    %6374 = vmatprep.subr.bf16.mxu0 %v4645
    %6375 = vmatpush1.bf16.msra.mxu0 %v4644
    %6376 = vmatprep.mubr.bf16.mxu0 %v6343
    %6377 = vmatmul.mubr.bf16.gmra.mrb[0].mxu0 %v6342
    %v6378 = vpop.f32.mrb[0].mxu0
    %v6379 = vadd.f32 0.0, %v6378
    %v6380 = vpop.f32.mrb[0].mxu0
    %v6381 = vadd.f32 0.0, %v6380
    %v6382 = vpop.f32.mrb[0].mxu0
    %v6383 = vpop.f32.mrb[0].mxu0
    %6384 = vdwg.mxu0
    %6385 = vmatprep.subr.bf16.mxu0 %v4527
    %6386 = vmatpush1.bf16.msra.mxu0 %v4526
    %6387 = vmatprep.subr.bf16.mxu0 %v4535
    %6388 = vmatpush1.bf16.msra.mxu0 %v4534
    %6389 = vmatprep.subr.bf16.mxu0 %v4543
    %6390 = vmatpush1.bf16.msra.mxu0 %v4542
    %6391 = vmatprep.subr.bf16.mxu0 %v4551
    %6392 = vmatpush1.bf16.msra.mxu0 %v4550
    %6393 = vmatprep.subr.bf16.mxu0 %v4559
    %6394 = vmatpush1.bf16.msra.mxu0 %v4558
    %6395 = vmatprep.subr.bf16.mxu0 %v4567
    %6396 = vmatpush1.bf16.msra.mxu0 %v4566
    %6397 = vmatprep.subr.bf16.mxu0 %v4575
    %6398 = vmatpush1.bf16.msra.mxu0 %v4574
    %6399 = vmatprep.subr.bf16.mxu0 %v4583
    %6400 = vmatpush1.bf16.msra.mxu0 %v4582
    %6401 = vmatprep.subr.bf16.mxu0 %v4591
    %6402 = vmatpush1.bf16.msra.mxu0 %v4590
    %6403 = vmatprep.subr.bf16.mxu0 %v4599
    %6404 = vmatpush1.bf16.msra.mxu0 %v4598
    %6405 = vmatprep.subr.bf16.mxu0 %v4607
    %6406 = vmatpush1.bf16.msra.mxu0 %v4606
    %6407 = vmatprep.subr.bf16.mxu0 %v4615
    %6408 = vmatpush1.bf16.msra.mxu0 %v4614
    %6409 = vmatprep.subr.bf16.mxu0 %v4623
    %6410 = vmatpush1.bf16.msra.mxu0 %v4622
    %6411 = vmatprep.subr.bf16.mxu0 %v4631
    %6412 = vmatpush1.bf16.msra.mxu0 %v4630
    %6413 = vmatprep.subr.bf16.mxu0 %v4639
    %6414 = vmatpush1.bf16.msra.mxu0 %v4638
    %6415 = vmatprep.subr.bf16.mxu0 %v4647
    %6416 = vmatpush1.bf16.msra.mxu0 %v4646
    %6417 = vmatprep.mubr.bf16.mxu0 %v6343
    %6418 = vmatmul.mubr.bf16.gmra.mrb[0].mxu0 %v6342
    %v6419 = vpop.f32.mrb[0].mxu0
    %v6420 = vadd.f32 0.0, %v6419
    %v6421 = vpop.f32.mrb[0].mxu0
    %v6422 = vadd.f32 0.0, %v6421
    %v6423 = vpop.f32.mrb[0].mxu0
    %v6424 = vpop.f32.mrb[0].mxu0
    %6425 = vdwg.mxu0
    %6426 = vmatprep.subr.bf16.mxu0 %v4529
    %6427 = vmatpush1.bf16.msra.mxu0 %v4528
    %6428 = vmatprep.subr.bf16.mxu0 %v4537
    %6429 = vmatpush1.bf16.msra.mxu0 %v4536
    %6430 = vmatprep.subr.bf16.mxu0 %v4545
    %6431 = vmatpush1.bf16.msra.mxu0 %v4544
    %6432 = vmatprep.subr.bf16.mxu0 %v4553
    %6433 = vmatpush1.bf16.msra.mxu0 %v4552
    %6434 = vmatprep.subr.bf16.mxu0 %v4561
    %6435 = vmatpush1.bf16.msra.mxu0 %v4560
    %6436 = vmatprep.subr.bf16.mxu0 %v4569
    %6437 = vmatpush1.bf16.msra.mxu0 %v4568
    %6438 = vmatprep.subr.bf16.mxu0 %v4577
    %6439 = vmatpush1.bf16.msra.mxu0 %v4576
    %6440 = vmatprep.subr.bf16.mxu0 %v4585
    %6441 = vmatpush1.bf16.msra.mxu0 %v4584
    %6442 = vmatprep.subr.bf16.mxu0 %v4593
    %6443 = vmatpush1.bf16.msra.mxu0 %v4592
    %6444 = vmatprep.subr.bf16.mxu0 %v4601
    %6445 = vmatpush1.bf16.msra.mxu0 %v4600
    %6446 = vmatprep.subr.bf16.mxu0 %v4609
    %6447 = vmatpush1.bf16.msra.mxu0 %v4608
    %6448 = vmatprep.subr.bf16.mxu0 %v4617
    %6449 = vmatpush1.bf16.msra.mxu0 %v4616
    %6450 = vmatprep.subr.bf16.mxu0 %v4625
    %6451 = vmatpush1.bf16.msra.mxu0 %v4624
    %6452 = vmatprep.subr.bf16.mxu0 %v4633
    %6453 = vmatpush1.bf16.msra.mxu0 %v4632
    %6454 = vmatprep.subr.bf16.mxu0 %v4641
    %6455 = vmatpush1.bf16.msra.mxu0 %v4640
    %6456 = vmatprep.subr.bf16.mxu0 %v4649
    %6457 = vmatpush1.bf16.msra.mxu0 %v4648
    %6458 = vmatprep.mubr.bf16.mxu0 %v6343
    %6459 = vmatmul.mubr.bf16.gmra.mrb[0].mxu0 %v6342
    %v6460 = vpop.f32.mrb[0].mxu0
    %v6461 = vadd.f32 0.0, %v6460
    %v6462 = vpop.f32.mrb[0].mxu0
    %v6463 = vadd.f32 0.0, %v6462
    %v6464 = vpop.f32.mrb[0].mxu0
    %v6465 = vpop.f32.mrb[0].mxu0
    %6466 = vdwg.mxu0
    %6467 = vmatprep.subr.bf16.mxu0 %v4531
    %6468 = vmatpush1.bf16.msra.mxu0 %v4530
    %6469 = vmatprep.subr.bf16.mxu0 %v4539
    %6470 = vmatpush1.bf16.msra.mxu0 %v4538
    %6471 = vmatprep.subr.bf16.mxu0 %v4547
    %6472 = vmatpush1.bf16.msra.mxu0 %v4546
    %6473 = vmatprep.subr.bf16.mxu0 %v4555
    %6474 = vmatpush1.bf16.msra.mxu0 %v4554
    %6475 = vmatprep.subr.bf16.mxu0 %v4563
    %6476 = vmatpush1.bf16.msra.mxu0 %v4562
    %6477 = vmatprep.subr.bf16.mxu0 %v4571
    %6478 = vmatpush1.bf16.msra.mxu0 %v4570
    %6479 = vmatprep.subr.bf16.mxu0 %v4579
    %6480 = vmatpush1.bf16.msra.mxu0 %v4578
    %6481 = vmatprep.subr.bf16.mxu0 %v4587
    %6482 = vmatpush1.bf16.msra.mxu0 %v4586
    %6483 = vmatprep.subr.bf16.mxu0 %v4595
    %6484 = vmatpush1.bf16.msra.mxu0 %v4594
    %6485 = vmatprep.subr.bf16.mxu0 %v4603
    %6486 = vmatpush1.bf16.msra.mxu0 %v4602
    %6487 = vmatprep.subr.bf16.mxu0 %v4611
    %6488 = vmatpush1.bf16.msra.mxu0 %v4610
    %6489 = vmatprep.subr.bf16.mxu0 %v4619
    %6490 = vmatpush1.bf16.msra.mxu0 %v4618
    %6491 = vmatprep.subr.bf16.mxu0 %v4627
    %6492 = vmatpush1.bf16.msra.mxu0 %v4626
    %6493 = vmatprep.subr.bf16.mxu0 %v4635
    %6494 = vmatpush1.bf16.msra.mxu0 %v4634
    %6495 = vmatprep.subr.bf16.mxu0 %v4643
    %6496 = vmatpush1.bf16.msra.mxu0 %v4642
    %6497 = vmatprep.subr.bf16.mxu0 %v4651
    %6498 = vmatpush1.bf16.msra.mxu0 %v4650
    %6499 = vmatprep.mubr.bf16.mxu0 %v6343
    %6500 = vmatmul.mubr.bf16.gmra.mrb[0].mxu0 %v6342
    %v6501 = vpop.f32.mrb[0].mxu0
    %v6502 = vadd.f32 0.0, %v6501
    %v6503 = vpop.f32.mrb[0].mxu0
    %v6504 = vadd.f32 0.0, %v6503
    %v6505 = vpop.f32.mrb[0].mxu0
    %v6506 = vpop.f32.mrb[0].mxu0
    %6507 = vdwg.mxu0
    %v6508 = vadd.f32 %v6334, %v6379
    %v6509 = vadd.f32 %v6335, %v6381
    %v6510 = vadd.f32 %v6336, %v6420
    %v6511 = vadd.f32 %v6337, %v6422
    %v6512 = vadd.f32 %v6338, %v6461
    %v6513 = vadd.f32 %v6339, %v6463
    %v6514 = vadd.f32 %v6340, %v6502
    %v6515 = vadd.f32 %v6341, %v6504
    %v6516 = vxor.u32 %v6508, 2147483648
    %v6517 = vxor.u32 %v6509, 2147483648
    %v6518 = vmul.f32 %v6516, 1.442695
    %v6519 = vpow.pop %v6518
    %v6520 = vmul.f32 %v6517, 1.442695
    %v6521 = vpow.pop %v6520
    %v6522 = vadd.f32 %v6519, 1.0
    %v6523 = vadd.f32 %v6521, 1.0
    %v6524 = vrcp.pop %v6522
    %v6525 = vmul.f32 1.0, %v6524
    %v6526 = vrcp.pop %v6523
    %v6527 = vmul.f32 1.0, %v6526
    %v6528 = vxor.u32 %v6510, 2147483648
    %v6529 = vxor.u32 %v6511, 2147483648
    %v6530 = vmul.f32 %v6528, 1.442695
    %v6531 = vpow.pop %v6530
    %v6532 = vmul.f32 %v6529, 1.442695
    %v6533 = vpow.pop %v6532
    %v6534 = vadd.f32 %v6531, 1.0
    %v6535 = vadd.f32 %v6533, 1.0
    %v6536 = vrcp.pop %v6534
    %v6537 = vmul.f32 1.0, %v6536
    %v6538 = vrcp.pop %v6535
    %v6539 = vmul.f32 1.0, %v6538
    %v6540 = vtanh.pop %v6512
    %v6541 = vtanh.pop %v6513
    %v6542 = vxor.u32 %v6514, 2147483648
    %v6543 = vxor.u32 %v6515, 2147483648
    %v6544 = vmul.f32 %v6542, 1.442695
    %v6545 = vpow.pop %v6544
    %v6546 = vmul.f32 %v6543, 1.442695
    %v6547 = vpow.pop %v6546
    %v6548 = vadd.f32 %v6545, 1.0
    %v6549 = vadd.f32 %v6547, 1.0
    %v6550 = vrcp.pop %v6548
    %v6551 = vmul.f32 1.0, %v6550
    %v6552 = vrcp.pop %v6549
    %v6553 = vmul.f32 1.0, %v6552
    %v6554 = vmul.f32 %v6537, %v6296
    %v6555 = vmul.f32 %v6539, %v6297
    %v6556 = vmul.f32 %v6525, %v6540
    %v6557 = vmul.f32 %v6527, %v6541
    %v6558 = vadd.f32 %v6554, %v6556
    %v6559 = vadd.f32 %v6555, %v6557
    %v6560 = vtanh.pop %v6558
    %v6561 = vtanh.pop %v6559
    %v6562 = vmul.f32 %v6551, %v6560
    %v6563 = vmul.f32 %v6553, %v6561
    %v6564 = vrot.slane %v3842, 7
    %v6565 = vrot.slane %v3844, 7
    %v6566 = vrot.slane %v3885, 7
    %v6567 = vrot.slane %v3887, 7
    %v6568 = vrot.slane %v3928, 7
    %v6569 = vrot.slane %v3930, 7
    %v6570 = vrot.slane %v3971, 7
    %v6571 = vrot.slane %v3973, 7
    %v6580 = vrot.slane %v3846, 6
    %v6581 = vrot.slane %v3848, 6
    %v6582 = vrot.slane %v3889, 6
    %v6583 = vrot.slane %v3891, 6
    %v6584 = vrot.slane %v3932, 6
    %v6585 = vrot.slane %v3934, 6
    %v6586 = vrot.slane %v3975, 6
    %v6587 = vrot.slane %v3977, 6
    %v6596 = vsel %vm4131, %v6564, %v6580
    %v6597 = vsel %vm4131, %v6565, %v6581
    %v6598 = vsel %vm4131, %v6566, %v6582
    %v6599 = vsel %vm4131, %v6567, %v6583
    %v6600 = vsel %vm4131, %v6568, %v6584
    %v6601 = vsel %vm4131, %v6569, %v6585
    %v6602 = vsel %vm4131, %v6570, %v6586
    %v6603 = vsel %vm4131, %v6571, %v6587
    %v6604 = vpack.c.bf16 %v6562, %v6562
    %v6605 = vpack.c.bf16 %v6563, %v6563
    %6606 = vmatprep.subr.bf16.mxu0 %v4525
    %6607 = vmatpush1.bf16.msra.mxu0 %v4524
    %6608 = vmatprep.subr.bf16.mxu0 %v4533
    %6609 = vmatpush1.bf16.msra.mxu0 %v4532
    %6610 = vmatprep.subr.bf16.mxu0 %v4541
    %6611 = vmatpush1.bf16.msra.mxu0 %v4540
    %6612 = vmatprep.subr.bf16.mxu0 %v4549
    %6613 = vmatpush1.bf16.msra.mxu0 %v4548
    %6614 = vmatprep.subr.bf16.mxu0 %v4557
    %6615 = vmatpush1.bf16.msra.mxu0 %v4556
    %6616 = vmatprep.subr.bf16.mxu0 %v4565
    %6617 = vmatpush1.bf16.msra.mxu0 %v4564
    %6618 = vmatprep.subr.bf16.mxu0 %v4573
    %6619 = vmatpush1.bf16.msra.mxu0 %v4572
    %6620 = vmatprep.subr.bf16.mxu0 %v4581
    %6621 = vmatpush1.bf16.msra.mxu0 %v4580
    %6622 = vmatprep.subr.bf16.mxu0 %v4589
    %6623 = vmatpush1.bf16.msra.mxu0 %v4588
    %6624 = vmatprep.subr.bf16.mxu0 %v4597
    %6625 = vmatpush1.bf16.msra.mxu0 %v4596
    %6626 = vmatprep.subr.bf16.mxu0 %v4605
    %6627 = vmatpush1.bf16.msra.mxu0 %v4604
    %6628 = vmatprep.subr.bf16.mxu0 %v4613
    %6629 = vmatpush1.bf16.msra.mxu0 %v4612
    %6630 = vmatprep.subr.bf16.mxu0 %v4621
    %6631 = vmatpush1.bf16.msra.mxu0 %v4620
    %6632 = vmatprep.subr.bf16.mxu0 %v4629
    %6633 = vmatpush1.bf16.msra.mxu0 %v4628
    %6634 = vmatprep.subr.bf16.mxu0 %v4637
    %6635 = vmatpush1.bf16.msra.mxu0 %v4636
    %6636 = vmatprep.subr.bf16.mxu0 %v4645
    %6637 = vmatpush1.bf16.msra.mxu0 %v4644
    %6638 = vmatprep.mubr.bf16.mxu0 %v6605
    %6639 = vmatmul.mubr.bf16.gmra.mrb[0].mxu0 %v6604
    %v6640 = vpop.f32.mrb[0].mxu0
    %v6641 = vadd.f32 0.0, %v6640
    %v6642 = vpop.f32.mrb[0].mxu0
    %v6643 = vadd.f32 0.0, %v6642
    %v6644 = vpop.f32.mrb[0].mxu0
    %v6645 = vpop.f32.mrb[0].mxu0
    %6646 = vdwg.mxu0
    %6647 = vmatprep.subr.bf16.mxu0 %v4527
    %6648 = vmatpush1.bf16.msra.mxu0 %v4526
    %6649 = vmatprep.subr.bf16.mxu0 %v4535
    %6650 = vmatpush1.bf16.msra.mxu0 %v4534
    %6651 = vmatprep.subr.bf16.mxu0 %v4543
    %6652 = vmatpush1.bf16.msra.mxu0 %v4542
    %6653 = vmatprep.subr.bf16.mxu0 %v4551
    %6654 = vmatpush1.bf16.msra.mxu0 %v4550
    %6655 = vmatprep.subr.bf16.mxu0 %v4559
    %6656 = vmatpush1.bf16.msra.mxu0 %v4558
    %6657 = vmatprep.subr.bf16.mxu0 %v4567
    %6658 = vmatpush1.bf16.msra.mxu0 %v4566
    %6659 = vmatprep.subr.bf16.mxu0 %v4575
    %6660 = vmatpush1.bf16.msra.mxu0 %v4574
    %6661 = vmatprep.subr.bf16.mxu0 %v4583
    %6662 = vmatpush1.bf16.msra.mxu0 %v4582
    %6663 = vmatprep.subr.bf16.mxu0 %v4591
    %6664 = vmatpush1.bf16.msra.mxu0 %v4590
    %6665 = vmatprep.subr.bf16.mxu0 %v4599
    %6666 = vmatpush1.bf16.msra.mxu0 %v4598
    %6667 = vmatprep.subr.bf16.mxu0 %v4607
    %6668 = vmatpush1.bf16.msra.mxu0 %v4606
    %6669 = vmatprep.subr.bf16.mxu0 %v4615
    %6670 = vmatpush1.bf16.msra.mxu0 %v4614
    %6671 = vmatprep.subr.bf16.mxu0 %v4623
    %6672 = vmatpush1.bf16.msra.mxu0 %v4622
    %6673 = vmatprep.subr.bf16.mxu0 %v4631
    %6674 = vmatpush1.bf16.msra.mxu0 %v4630
    %6675 = vmatprep.subr.bf16.mxu0 %v4639
    %6676 = vmatpush1.bf16.msra.mxu0 %v4638
    %6677 = vmatprep.subr.bf16.mxu0 %v4647
    %6678 = vmatpush1.bf16.msra.mxu0 %v4646
    %6679 = vmatprep.mubr.bf16.mxu0 %v6605
    %6680 = vmatmul.mubr.bf16.gmra.mrb[0].mxu0 %v6604
    %v6681 = vpop.f32.mrb[0].mxu0
    %v6682 = vadd.f32 0.0, %v6681
    %v6683 = vpop.f32.mrb[0].mxu0
    %v6684 = vadd.f32 0.0, %v6683
    %v6685 = vpop.f32.mrb[0].mxu0
    %v6686 = vpop.f32.mrb[0].mxu0
    %6687 = vdwg.mxu0
    %6688 = vmatprep.subr.bf16.mxu0 %v4529
    %6689 = vmatpush1.bf16.msra.mxu0 %v4528
    %6690 = vmatprep.subr.bf16.mxu0 %v4537
    %6691 = vmatpush1.bf16.msra.mxu0 %v4536
    %6692 = vmatprep.subr.bf16.mxu0 %v4545
    %6693 = vmatpush1.bf16.msra.mxu0 %v4544
    %6694 = vmatprep.subr.bf16.mxu0 %v4553
    %6695 = vmatpush1.bf16.msra.mxu0 %v4552
    %6696 = vmatprep.subr.bf16.mxu0 %v4561
    %6697 = vmatpush1.bf16.msra.mxu0 %v4560
    %6698 = vmatprep.subr.bf16.mxu0 %v4569
    %6699 = vmatpush1.bf16.msra.mxu0 %v4568
    %6700 = vmatprep.subr.bf16.mxu0 %v4577
    %6701 = vmatpush1.bf16.msra.mxu0 %v4576
    %6702 = vmatprep.subr.bf16.mxu0 %v4585
    %6703 = vmatpush1.bf16.msra.mxu0 %v4584
    %6704 = vmatprep.subr.bf16.mxu0 %v4593
    %6705 = vmatpush1.bf16.msra.mxu0 %v4592
    %6706 = vmatprep.subr.bf16.mxu0 %v4601
    %6707 = vmatpush1.bf16.msra.mxu0 %v4600
    %6708 = vmatprep.subr.bf16.mxu0 %v4609
    %6709 = vmatpush1.bf16.msra.mxu0 %v4608
    %6710 = vmatprep.subr.bf16.mxu0 %v4617
    %6711 = vmatpush1.bf16.msra.mxu0 %v4616
    %6712 = vmatprep.subr.bf16.mxu0 %v4625
    %6713 = vmatpush1.bf16.msra.mxu0 %v4624
    %6714 = vmatprep.subr.bf16.mxu0 %v4633
    %6715 = vmatpush1.bf16.msra.mxu0 %v4632
    %6716 = vmatprep.subr.bf16.mxu0 %v4641
    %6717 = vmatpush1.bf16.msra.mxu0 %v4640
    %6718 = vmatprep.subr.bf16.mxu0 %v4649
    %6719 = vmatpush1.bf16.msra.mxu0 %v4648
    %6720 = vmatprep.mubr.bf16.mxu0 %v6605
    %6721 = vmatmul.mubr.bf16.gmra.mrb[0].mxu0 %v6604
    %v6722 = vpop.f32.mrb[0].mxu0
    %v6723 = vadd.f32 0.0, %v6722
    %v6724 = vpop.f32.mrb[0].mxu0
    %v6725 = vadd.f32 0.0, %v6724
    %v6726 = vpop.f32.mrb[0].mxu0
    %v6727 = vpop.f32.mrb[0].mxu0
    %6728 = vdwg.mxu0
    %6729 = vmatprep.subr.bf16.mxu0 %v4531
    %6730 = vmatpush1.bf16.msra.mxu0 %v4530
    %6731 = vmatprep.subr.bf16.mxu0 %v4539
    %6732 = vmatpush1.bf16.msra.mxu0 %v4538
    %6733 = vmatprep.subr.bf16.mxu0 %v4547
    %6734 = vmatpush1.bf16.msra.mxu0 %v4546
    %6735 = vmatprep.subr.bf16.mxu0 %v4555
    %6736 = vmatpush1.bf16.msra.mxu0 %v4554
    %6737 = vmatprep.subr.bf16.mxu0 %v4563
    %6738 = vmatpush1.bf16.msra.mxu0 %v4562
    %6739 = vmatprep.subr.bf16.mxu0 %v4571
    %6740 = vmatpush1.bf16.msra.mxu0 %v4570
    %6741 = vmatprep.subr.bf16.mxu0 %v4579
    %6742 = vmatpush1.bf16.msra.mxu0 %v4578
    %6743 = vmatprep.subr.bf16.mxu0 %v4587
    %6744 = vmatpush1.bf16.msra.mxu0 %v4586
    %6745 = vmatprep.subr.bf16.mxu0 %v4595
    %6746 = vmatpush1.bf16.msra.mxu0 %v4594
    %6747 = vmatprep.subr.bf16.mxu0 %v4603
    %6748 = vmatpush1.bf16.msra.mxu0 %v4602
    %6749 = vmatprep.subr.bf16.mxu0 %v4611
    %6750 = vmatpush1.bf16.msra.mxu0 %v4610
    %6751 = vmatprep.subr.bf16.mxu0 %v4619
    %6752 = vmatpush1.bf16.msra.mxu0 %v4618
    %6753 = vmatprep.subr.bf16.mxu0 %v4627
    %6754 = vmatpush1.bf16.msra.mxu0 %v4626
    %6755 = vmatprep.subr.bf16.mxu0 %v4635
    %6756 = vmatpush1.bf16.msra.mxu0 %v4634
    %6757 = vmatprep.subr.bf16.mxu0 %v4643
    %6758 = vmatpush1.bf16.msra.mxu0 %v4642
    %6759 = vmatprep.subr.bf16.mxu0 %v4651
    %6760 = vmatpush1.bf16.msra.mxu0 %v4650
    %6761 = vmatprep.mubr.bf16.mxu0 %v6605
    %6762 = vmatmul.mubr.bf16.gmra.mrb[0].mxu0 %v6604
    %v6763 = vpop.f32.mrb[0].mxu0
    %v6764 = vadd.f32 0.0, %v6763
    %v6765 = vpop.f32.mrb[0].mxu0
    %v6766 = vadd.f32 0.0, %v6765
    %v6767 = vpop.f32.mrb[0].mxu0
    %v6768 = vpop.f32.mrb[0].mxu0
    %6769 = vdwg.mxu0
    %v6770 = vadd.f32 %v6596, %v6641
    %v6771 = vadd.f32 %v6597, %v6643
    %v6772 = vadd.f32 %v6598, %v6682
    %v6773 = vadd.f32 %v6599, %v6684
    %v6774 = vadd.f32 %v6600, %v6723
    %v6775 = vadd.f32 %v6601, %v6725
    %v6776 = vadd.f32 %v6602, %v6764
    %v6777 = vadd.f32 %v6603, %v6766
    %v6778 = vxor.u32 %v6770, 2147483648
    %v6779 = vxor.u32 %v6771, 2147483648
    %v6780 = vmul.f32 %v6778, 1.442695
    %v6781 = vpow.pop %v6780
    %v6782 = vmul.f32 %v6779, 1.442695
    %v6783 = vpow.pop %v6782
    %v6784 = vadd.f32 %v6781, 1.0
    %v6785 = vadd.f32 %v6783, 1.0
    %v6786 = vrcp.pop %v6784
    %v6787 = vmul.f32 1.0, %v6786
    %v6788 = vrcp.pop %v6785
    %v6789 = vmul.f32 1.0, %v6788
    %v6790 = vxor.u32 %v6772, 2147483648
    %v6791 = vxor.u32 %v6773, 2147483648
    %v6792 = vmul.f32 %v6790, 1.442695
    %v6793 = vpow.pop %v6792
    %v6794 = vmul.f32 %v6791, 1.442695
    %v6795 = vpow.pop %v6794
    %v6796 = vadd.f32 %v6793, 1.0
    %v6797 = vadd.f32 %v6795, 1.0
    %v6798 = vrcp.pop %v6796
    %v6799 = vmul.f32 1.0, %v6798
    %v6800 = vrcp.pop %v6797
    %v6801 = vmul.f32 1.0, %v6800
    %v6802 = vtanh.pop %v6774
    %v6803 = vtanh.pop %v6775
    %v6804 = vxor.u32 %v6776, 2147483648
    %v6805 = vxor.u32 %v6777, 2147483648
    %v6806 = vmul.f32 %v6804, 1.442695
    %v6807 = vpow.pop %v6806
    %v6808 = vmul.f32 %v6805, 1.442695
    %v6809 = vpow.pop %v6808
    %v6810 = vadd.f32 %v6807, 1.0
    %v6811 = vadd.f32 %v6809, 1.0
    %v6812 = vrcp.pop %v6810
    %v6813 = vmul.f32 1.0, %v6812
    %v6814 = vrcp.pop %v6811
    %v6815 = vmul.f32 1.0, %v6814
    %v6816 = vmul.f32 %v6799, %v6558
    %v6817 = vmul.f32 %v6801, %v6559
    %v6818 = vmul.f32 %v6787, %v6802
    %v6819 = vmul.f32 %v6789, %v6803
    %v6820 = vadd.f32 %v6816, %v6818
    %v6821 = vadd.f32 %v6817, %v6819
    %v6822 = vtanh.pop %v6820
    %v6823 = vtanh.pop %v6821
    %v6824 = vmul.f32 %v6813, %v6822
    %v6825 = vmul.f32 %v6815, %v6823
    %v6826 = vld [vmem:[#allocation14] sm:$0xf]
    %v6827 = vld [vmem:[#allocation14 + $0x4] sm:$0xf]
    %v6828 = vld [vmem:[#allocation14 + $0x8] sm:$0xf]
    %v6829 = vld [vmem:[#allocation14 + $0xc] sm:$0xf]
    %v6830 = vld [vmem:[#allocation14 + $0x10] sm:$0xf]
    %v6831 = vld [vmem:[#allocation14 + $0x14] sm:$0xf]
    %v6832 = vld [vmem:[#allocation14 + $0x18] sm:$0xf]
    %v6833 = vld [vmem:[#allocation14 + $0x1c] sm:$0xf]
    %v6834 = vld [vmem:[#allocation14 + $0x20] sm:$0xf]
    %v6835 = vld [vmem:[#allocation14 + $0x24] sm:$0xf]
    %v6836 = vld [vmem:[#allocation14 + $0x28] sm:$0xf]
    %v6837 = vld [vmem:[#allocation14 + $0x2c] sm:$0xf]
    %v6838 = vld [vmem:[#allocation14 + $0x30] sm:$0xf]
    %v6839 = vld [vmem:[#allocation14 + $0x34] sm:$0xf]
    %v6840 = vld [vmem:[#allocation14 + $0x38] sm:$0xf]
    %v6841 = vld [vmem:[#allocation14 + $0x3c] sm:$0xf]
    %v6842 = vld [vmem:[#allocation14 + $0x40] sm:$0xf]
    %v6843 = vld [vmem:[#allocation14 + $0x44] sm:$0xf]
    %v6844 = vld [vmem:[#allocation14 + $0x48] sm:$0xf]
    %v6845 = vld [vmem:[#allocation14 + $0x4c] sm:$0xf]
    %v6846 = vld [vmem:[#allocation14 + $0x50] sm:$0xf]
    %v6847 = vld [vmem:[#allocation14 + $0x54] sm:$0xf]
    %v6848 = vld [vmem:[#allocation14 + $0x58] sm:$0xf]
    %v6849 = vld [vmem:[#allocation14 + $0x5c] sm:$0xf]
    %v6850 = vld [vmem:[#allocation14 + $0x60] sm:$0xf]
    %v6851 = vld [vmem:[#allocation14 + $0x64] sm:$0xf]
    %v6852 = vld [vmem:[#allocation14 + $0x68] sm:$0xf]
    %v6853 = vld [vmem:[#allocation14 + $0x6c] sm:$0xf]
    %v6854 = vld [vmem:[#allocation14 + $0x70] sm:$0xf]
    %v6855 = vld [vmem:[#allocation14 + $0x74] sm:$0xf]
    %v6856 = vld [vmem:[#allocation14 + $0x78] sm:$0xf]
    %v6857 = vld [vmem:[#allocation14 + $0x7c] sm:$0xf]
    %v6858 = vpack.c.bf16 %v6824, %v6824
    %v6859 = vpack.c.bf16 %v6825, %v6825
    %v6860 = vld [vmem:[%s18] sm:$0x1]
    %v6862 = vlaneseq
    %v6863 = vshrl.u32 %v6862, 7
    %v6864 = vsub.s32 0, %v6863
    %v6865 = vrot.slane %v6860, %v6864
    %v6899 = vunpack.c.l.b16 %v6826
    %v6900 = vunpack.c.l.b16 %v6827
    %v6901 = vunpack.c.l.b16 %v6828
    %v6902 = vunpack.c.l.b16 %v6829
    %v6903 = vunpack.c.l.b16 %v6830
    %v6904 = vunpack.c.l.b16 %v6831
    %v6905 = vunpack.c.l.b16 %v6832
    %v6906 = vunpack.c.l.b16 %v6833
    %v6907 = vunpack.c.l.b16 %v6834
    %v6908 = vunpack.c.l.b16 %v6835
    %v6909 = vunpack.c.l.b16 %v6836
    %v6910 = vunpack.c.l.b16 %v6837
    %v6911 = vunpack.c.l.b16 %v6838
    %v6912 = vunpack.c.l.b16 %v6839
    %v6913 = vunpack.c.l.b16 %v6840
    %v6914 = vunpack.c.l.b16 %v6841
    %v6915 = vunpack.c.l.b16 %v6842
    %v6916 = vunpack.c.l.b16 %v6843
    %v6917 = vunpack.c.l.b16 %v6844
    %v6918 = vunpack.c.l.b16 %v6845
    %v6919 = vunpack.c.l.b16 %v6846
    %v6920 = vunpack.c.l.b16 %v6847
    %v6921 = vunpack.c.l.b16 %v6848
    %v6922 = vunpack.c.l.b16 %v6849
    %v6923 = vunpack.c.l.b16 %v6850
    %v6924 = vunpack.c.l.b16 %v6851
    %v6925 = vunpack.c.l.b16 %v6852
    %v6926 = vunpack.c.l.b16 %v6853
    %v6927 = vunpack.c.l.b16 %v6854
    %v6928 = vunpack.c.l.b16 %v6855
    %v6929 = vunpack.c.l.b16 %v6856
    %v6930 = vunpack.c.l.b16 %v6857
    %v6931 = vpack.c.b16 %v6900, %v6899
    %v6932 = vpack.c.b16 %v6902, %v6901
    %v6933 = vpack.c.b16 %v6904, %v6903
    %v6934 = vpack.c.b16 %v6906, %v6905
    %v6935 = vpack.c.b16 %v6908, %v6907
    %v6936 = vpack.c.b16 %v6910, %v6909
    %v6937 = vpack.c.b16 %v6912, %v6911
    %v6938 = vpack.c.b16 %v6914, %v6913
    %v6939 = vpack.c.b16 %v6916, %v6915
    %v6940 = vpack.c.b16 %v6918, %v6917
    %v6941 = vpack.c.b16 %v6920, %v6919
    %v6942 = vpack.c.b16 %v6922, %v6921
    %v6943 = vpack.c.b16 %v6924, %v6923
    %v6944 = vpack.c.b16 %v6926, %v6925
    %v6945 = vpack.c.b16 %v6928, %v6927
    %v6946 = vpack.c.b16 %v6930, %v6929
    %6963 = vmatprep.subr.bf16.mxu0 0
    %6964 = vmatpush1.bf16.msra.mxu0 %v6931
    %6965 = vmatprep.subr.bf16.mxu0 0
    %6966 = vmatpush1.bf16.msra.mxu0 %v6932
    %6967 = vmatprep.subr.bf16.mxu0 0
    %6968 = vmatpush1.bf16.msra.mxu0 %v6933
    %6969 = vmatprep.subr.bf16.mxu0 0
    %6970 = vmatpush1.bf16.msra.mxu0 %v6934
    %6971 = vmatprep.subr.bf16.mxu0 0
    %6972 = vmatpush1.bf16.msra.mxu0 %v6935
    %6973 = vmatprep.subr.bf16.mxu0 0
    %6974 = vmatpush1.bf16.msra.mxu0 %v6936
    %6975 = vmatprep.subr.bf16.mxu0 0
    %6976 = vmatpush1.bf16.msra.mxu0 %v6937
    %6977 = vmatprep.subr.bf16.mxu0 0
    %6978 = vmatpush1.bf16.msra.mxu0 %v6938
    %6979 = vmatprep.subr.bf16.mxu0 0
    %6980 = vmatpush1.bf16.msra.mxu0 %v6939
    %6981 = vmatprep.subr.bf16.mxu0 0
    %6982 = vmatpush1.bf16.msra.mxu0 %v6940
    %6983 = vmatprep.subr.bf16.mxu0 0
    %6984 = vmatpush1.bf16.msra.mxu0 %v6941
    %6985 = vmatprep.subr.bf16.mxu0 0
    %6986 = vmatpush1.bf16.msra.mxu0 %v6942
    %6987 = vmatprep.subr.bf16.mxu0 0
    %6988 = vmatpush1.bf16.msra.mxu0 %v6943
    %6989 = vmatprep.subr.bf16.mxu0 0
    %6990 = vmatpush1.bf16.msra.mxu0 %v6944
    %6991 = vmatprep.subr.bf16.mxu0 0
    %6992 = vmatpush1.bf16.msra.mxu0 %v6945
    %6993 = vmatprep.subr.bf16.mxu0 0
    %6994 = vmatpush1.bf16.msra.mxu0 %v6946
    %6995 = vmatprep.mubr.bf16.mxu0 %v6859
    %6996 = vmatmul.mubr.bf16.gmra.mrb[0].mxu0 %v6858
    %v6997 = vpop.f32.mrb[0].mxu0
    %v6998 = vadd.f32 %v6865, %v6997
    %v6999 = vpop.f32.mrb[0].mxu0
    %v7000 = vpop.f32.mrb[0].mxu0
    %v7001 = vpop.f32.mrb[0].mxu0
    %7002 = vdwg.mxu0
    %v7003 = vxor.u32 %v6998, 2147483648
    %v7004 = vmul.f32 %v7003, 1.442695
    %v7005 = vpow.pop %v7004
    %v7006 = vadd.f32 %v7005, 1.0
    %v7007 = vrcp.pop %v7006
    %v7008 = vmul.f32 1.0, %v7007
    %7009 = vst [vmem:[#allocation16] sm:$0x3] %v7008
    // Predicated region
    $region110: #{transformer_lstm_forward.1} parent=1 // pred_check
      _
    $region111: #{transformer_lstm_forward.1} parent=1 // pred_check_branch
      %7011 = sbr.rel (0) target = $region113
    $region112: #{transformer_lstm_forward.1} parent=1 // pred_region
      %s7013 = ssub.s32 32, 32
      %7014 = vsyncadd [#allocation4], %s7013
      %s7016 = sshll.u32 [#allocation16], 4
      %s7017 = int_to_ptr.vmem [resolvable:$true] %s7016
      %7019 = dma.vmem_to_hbm [thread:$0]  %s7017, 32, %s19, [#allocation4]
    $region113: #{transformer_lstm_forward.1} parent=1 // pred_fallthru
      _
    // Predicated region
    $region114: #{transformer_lstm_forward.1} parent=1 // pred_check
      _
    $region115: #{transformer_lstm_forward.1} parent=1 // pred_check_branch
      %7021 = sbr.rel (0) target = $region117
    $region116: #{transformer_lstm_forward.1} parent=1 // pred_region
      %7022 = dma.done [#allocation4], 32
    $region117: #{transformer_lstm_forward.1} parent=1 // pred_fallthru
      _
    %7023 = vsyncpa [#allocation3], 1
    %7024 = vsyncpa [#allocation6], 1
    %7025 = vsyncpa [#allocation9], 1
    %7026 = vsyncpa [#allocation12], 1
    %7027 = vsyncpa [#allocation15], 1
    %7028 = vsyncpa [#allocation4], 1

</llo_original>
